<compile_context>
chip_gen: v7x
topology: tpu7x:2x2x1
jax: 0.10.0
libtpu: 0.0.40
codegen_flags: <defaults>
</compile_context>

<pallas_src>
import math
import jax
import jax.numpy as jnp
from jax.experimental import pallas as pl
from jax.experimental.pallas import tpu as pltpu

LOGTWOPI = math.log(2.0 * math.pi)
_SQRT1_2 = 1.0 / math.sqrt(2.0)


def _erf(x):
    # Abramowitz & Stegun 7.1.26 rational approximation (|err| <= 1.5e-7),
    # built only from ops with guaranteed Mosaic lowerings.
    a1, a2, a3, a4, a5 = (0.254829592, -0.284496736, 1.421413741,
                          -1.453152027, 1.061405429)
    p = 0.3275911
    sgn = jnp.where(x >= 0.0, 1.0, -1.0)
    ax = jnp.abs(x)
    t = 1.0 / (1.0 + p * ax)
    poly = ((((a5 * t + a4) * t + a3) * t + a2) * t + a1) * t
    return sgn * (1.0 - poly * jnp.exp(-ax * ax))


def _gelu(x):
    # exact (erf-based) GELU, matching torch.nn.GELU() default.
    return 0.5 * x * (1.0 + _erf(x * _SQRT1_2))


def _dot(a, b):
    return jnp.dot(a, b, preferred_element_type=jnp.float32)


# ---------------------------------------------------------------------------
# Pallas kernel: one grid cell = (batch block, block of TT trajectory steps)
# Everything inside is [features (sublanes), batch (lanes)].
# ---------------------------------------------------------------------------
def _make_gfn_kernel(T, TT, D, log_var_range, t_scale):
    dt = 1.0 / T
    sqrt_dt = math.sqrt(dt)
    log_dt = math.log(dt)
    log_pf_std2 = math.log(math.sqrt(t_scale)) * 2.0   # np.log(pf_std_per_traj)*2
    c_pf = LOGTWOPI + log_dt                           # constant in logpf

    def kernel(coef_ref, logbv_ref, istd_ref,          # SMEM (T,) step tables
               s0_ref, noise_ref, tproj_ref,           # VMEM blocks
               ws1, bs1, ws2, bs2,                     # transposed weights
               wj1s, wj2, bj2, wj3, bj3,
               states_ref, logpf_ref, logpb_ref,       # VMEM out blocks
               s_scr):                                  # carry across time blocks
        gt = pl.program_id(1)                           # time-block index

        @pl.when(gt == 0)
        def _():                                        # start of a trajectory
            s_scr[...] = s0_ref[...]

        # time projection for this block, fully precomputed in the wrapper:
        # (hidden, TT) with features in sublanes, steps in lanes.
        tp = tproj_ref[0]
        ws1_w = ws1[...]                                # (hidden, D) -- tiny

        s = s_scr[...]                                  # (D, BT)

        for j in range(TT):                             # static unroll
            idx = gt * TT + j                           # global step i
            eps = noise_ref[j]                          # (D, BT) pre-sampled N(0,1)

            # StateEncoding layer 1: K = D is tiny -> VPU broadcast-FMAs
            pre = bs1[...]                              # (hidden, 1) -> broadcasts
            for d in range(D):
                pre = pre + ws1_w[:, d:d + 1] * s[d:d + 1, :]
            h = _gelu(pre)                              # (hidden, BT)

            s_emb = _dot(ws2[...], h) + bs2[...]        # (s_emb, BT)

            # JointPolicy (time part pre-added; single fused output head)
            h1 = _gelu(_dot(wj1s[...], s_emb) + tp[:, j:j + 1])
            h2 = _gelu(_dot(wj2[...], h1) + bj2[...])
            head = _dot(wj3[...], h2) + bj3[...]        # (2D, BT)
            pf_mean = head[:D, :]
            pflogvars = jnp.tanh(head[D:, :]) * log_var_range + log_pf_std2

            # sample next state (exploration_std=None, pis=False)
            std = sqrt_dt * jnp.exp(0.5 * pflogvars)
            s_new = s + dt * pf_mean + std * eps

            # forward log-prob: (s_new - s - dt*pf_mean)/std == eps identically
            pf = -0.5 * jnp.sum(eps * eps + c_pf + pflogvars, axis=0)   # (BT,)

            # backward kernel (learn_pb=False): back_mean = s_new * i/(i+1),
            # back_var = t_scale*dt*i/(i+1); index-only scalars from SMEM.
            coef = coef_ref[idx]
            logbv = logbv_ref[idx]
            istd = istd_ref[idx]
            nb = (s - s_new * coef) * istd
            pb = -0.5 * jnp.sum(nb * nb + LOGTWOPI + logbv, axis=0)
            if j == 0:
                pb = jnp.where(gt > 0, pb, jnp.zeros_like(pb))   # row i=0 is 0

            # lane-dense per-step stores (batch in lanes -> full-lane vst)
            states_ref[j, :, :] = s_new
            logpf_ref[j, :] = pf
            logpb_ref[j, :] = pb
            s = s_new

        s_scr[...] = s

    return kernel


# ---------------------------------------------------------------------------
# Parameters (deterministic init, PyTorch nn.Linear-style uniform bounds)
# Weights are stored [fan_in, fan_out] (x @ W), biases as [1, fan_out].
# ---------------------------------------------------------------------------
def init_gfn_params(key, dim, s_emb_dim, hidden_dim, harmonics_dim, t_dim):
    def linear(k, fan_in, fan_out):
        kw, kb = jax.random.split(k)
        bound = 1.0 / math.sqrt(fan_in)
        w = jax.random.uniform(kw, (fan_in, fan_out), jnp.float32, -bound, bound)
        b = jax.random.uniform(kb, (1, fan_out), jnp.float32, -bound, bound)
        return w, b

    keys = jax.random.split(key, 7)
    wt1, bt1 = linear(keys[0], 2 * harmonics_dim, hidden_dim)   # TimeEncoding
    wt2, bt2 = linear(keys[1], hidden_dim, t_dim)
    ws1, bs1 = linear(keys[2], dim, hidden_dim)                 # StateEncoding
    ws2, bs2 = linear(keys[3], hidden_dim, s_emb_dim)
    wj1, bj1 = linear(keys[4], s_emb_dim + t_dim, hidden_dim)   # JointPolicy
    wj2, bj2 = linear(keys[5], hidden_dim, hidden_dim)
    wj3, bj3 = linear(keys[6], hidden_dim, 2 * dim)             # fused head
    flow = jnp.zeros((1, 1), jnp.float32)   # self.flow_model = Parameter(0.0)
    return dict(
        wt1=wt1, bt1=bt1, wt2=wt2, bt2=bt2,
        ws1=ws1, bs1=bs1, ws2=ws2, bs2=bs2,
        wj1s=wj1[:s_emb_dim], wj1t=wj1[s_emb_dim:], bj1=bj1,
        wj2=wj2, bj2=bj2,
        wj3=wj3, bj3=bj3,
        flow=flow,
    )


# ---------------------------------------------------------------------------
# Wrapper around pallas_call
# ---------------------------------------------------------------------------
def gfn_forward(params, s0, noise, *, harmonics_dim, t_dim,
                log_var_range=4.0, t_scale=1.0,
                steps_per_block=8, batch_block=256):
    B, D = s0.shape
    T = noise.shape[0]
    dt = 1.0 / T

    TT = min(steps_per_block, T)
    BT = min(batch_block, B)
    assert T % TT == 0, "trajectory_length must be divisible by steps_per_block"
    assert B % BT == 0, "batch must be divisible by batch_block"
    nT = T // TT
    hidden = params["wj1s"].shape[1]

    hp = jax.lax.Precision.HIGHEST

    # --- time MLP fully hoisted out of the kernel (static step schedule) ---
    pe = jnp.arange(1, harmonics_dim + 1, dtype=jnp.float32) * (2.0 * math.pi)
    ts = jnp.arange(T, dtype=jnp.float32) * dt
    ang = ts[:, None] * pe[None, :]
    t_feats = jnp.concatenate([jnp.sin(ang), jnp.cos(ang)], axis=-1)  # (T, 2H)
    th = _gelu(jnp.dot(t_feats, params["wt1"], precision=hp) + params["bt1"])
    temb = jnp.dot(th, params["wt2"], precision=hp) + params["bt2"]
    tproj = jnp.dot(temb, params["wj1t"], precision=hp) + params["bj1"]  # (T, hidden)
    # (nT, hidden, TT): features in sublanes, steps in lanes, per time block
    tproj_blocks = jnp.transpose(tproj.reshape(nT, TT, hidden), (0, 2, 1))

    # per-step scalar tables (functions of the step index only) -> SMEM
    i_f = jnp.arange(T, dtype=jnp.float32)
    back_coef = i_f / (i_f + 1.0)                        # i/(i+1); 0 at i=0
    back_var = t_scale * dt * back_coef                  # pf_std^2*dt*i/(i+1)
    back_var_safe = jnp.where(i_f > 0, back_var, 1.0)
    log_back_var = jnp.log(back_var_safe)                # masked at i=0
    inv_std_back = jax.lax.rsqrt(back_var_safe)

    # --- batch-in-lanes layouts (wrapper-side layout plumbing, XLA ops) ---
    s0_t = s0.T                                          # (D, B)
    noise_tdb = jnp.transpose(noise, (0, 2, 1))          # (T, D, B)

    # transposed weights: kernel computes h = W^T @ x, biases as columns
    ws1T, bs1c = params["ws1"].T, params["bs1"].T
    ws2T, bs2c = params["ws2"].T, params["bs2"].T
    wj1sT = params["wj1s"].T
    wj2T, bj2c = params["wj2"].T, params["bj2"].T
    wj3T, bj3c = params["wj3"].T, params["bj3"].T
    weights = [ws1T, bs1c, ws2T, bs2c, wj1sT, wj2T, bj2c, wj3T, bj3c]

    kernel = _make_gfn_kernel(T, TT, D, log_var_range, t_scale)

    smem = pl.BlockSpec(memory_space=pltpu.MemorySpace.SMEM)
    vmem = pl.BlockSpec(memory_space=pltpu.MemorySpace.VMEM)

    grid = (B // BT, T // TT)   # (parallel batch blocks, sequential time blocks)

    # Size scoped VMEM per chip generation: ~48 MiB on v7x (64 MiB physical),
    # ~96 MiB on v5e/v6e (128 MiB physical).
    vmem_limit = 48 * 1024 * 1024
    try:
        vmem_limit = max(vmem_limit,
                         int(pltpu.get_tpu_info().vmem_capacity_bytes) * 3 // 4)
    except Exception:
        pass

    out_shapes = (
        jax.ShapeDtypeStruct((T, D, B), jnp.float32),   # states[1:], (T, D, B)
        jax.ShapeDtypeStruct((T, B), jnp.float32),      # logpf, time-major
        jax.ShapeDtypeStruct((T, B), jnp.float32),      # logpb, time-major
    )

    states1_tdb, logpf_tb, logpb_tb = pl.pallas_call(
        kernel,
        out_shape=out_shapes,
        grid=grid,
        in_specs=[smem, smem, smem,                                        # tables
                  pl.BlockSpec((D, BT), lambda gb, gt: (0, gb)),           # s0^T
                  pl.BlockSpec((TT, D, BT), lambda gb, gt: (gt, 0, gb)),   # noise
                  pl.BlockSpec((1, hidden, TT), lambda gb, gt: (gt, 0, 0)),
                  ] + [vmem] * len(weights),
        out_specs=(pl.BlockSpec((TT, D, BT), lambda gb, gt: (gt, 0, gb)),
                   pl.BlockSpec((TT, BT), lambda gb, gt: (gt, gb)),
                   pl.BlockSpec((TT, BT), lambda gb, gt: (gt, gb))),
        scratch_shapes=[pltpu.VMEM((D, BT), jnp.float32)],   # running-state carry
        compiler_params=pltpu.CompilerParams(
            dimension_semantics=("parallel", "arbitrary"),
            vmem_limit_bytes=vmem_limit),
    )(back_coef, log_back_var, inv_std_back, s0_t, noise_tdb, tproj_blocks,
      *weights)

    # logf never enters the kernel: rows 0..T-1 hold the scalar flow param.
    flow = params["flow"][0, 0]
    logf = jnp.concatenate([jnp.full((B, T), flow, jnp.float32),
                            jnp.zeros((B, 1), jnp.float32)], axis=1)

    # Batch-major outputs for drop-in parity with the PyTorch module; downstream
    # consumers could use the kernel-native layout directly to save a pass.
    states = jnp.concatenate(
        [s0[:, None, :], jnp.transpose(states1_tdb, (2, 0, 1))], axis=1)
    return states, logpf_tb.T, logpb_tb.T, logf


# ---------------------------------------------------------------------------
# Pure-JAX reference (mirrors get_trajectory_fwd step by step)
# ---------------------------------------------------------------------------
def gfn_forward_ref(params, s0, noise, *, harmonics_dim, t_dim,
                    log_var_range=4.0, t_scale=1.0):
    B, D = s0.shape
    T = noise.shape[0]
    dt = 1.0 / T
    sqrt_dt = math.sqrt(dt)
    hp = jax.lax.Precision.HIGHEST
    dot = lambda a, b: jnp.dot(a, b, precision=hp)
    pe = jnp.arange(1, harmonics_dim + 1, dtype=jnp.float32) * (2.0 * math.pi)
    flow = params["flow"][0, 0]

    s = s0
    states, logpf, logpb, logf = [s0], [], [], []
    for i in range(T):
        ang = (i * dt) * pe
        tf = jnp.concatenate([jnp.sin(ang), jnp.cos(ang)])[None, :]
        temb = dot(_gelu(dot(tf, params["wt1"]) + params["bt1"]),
                   params["wt2"]) + params["bt2"]
        h = _gelu(dot(s, params["ws1"]) + params["bs1"])
        s_emb = dot(h, params["ws2"]) + params["bs2"]
        h1 = _gelu(dot(s_emb, params["wj1s"]) + dot(temb, params["wj1t"])
                   + params["bj1"])
        h2 = _gelu(dot(h1, params["wj2"]) + params["bj2"])
        head = dot(h2, params["wj3"]) + params["bj3"]
        pf_mean = head[:, :D]
        pflogvars = (jnp.tanh(head[:, D:]) * log_var_range
                     + math.log(math.sqrt(t_scale)) * 2.0)
        std = sqrt_dt * jnp.exp(0.5 * pflogvars)
        s_new = s + dt * pf_mean + std * noise[i]
        nf = (s_new - s - dt * pf_mean) / std
        logpf.append(-0.5 * jnp.sum(nf ** 2 + LOGTWOPI + math.log(dt) + pflogvars,
                                    axis=-1))
        if i > 0:
            back_mean = s_new - dt * s_new / ((i + 1) * dt)
            back_var = t_scale * dt * i / (i + 1)
            nb = (s - back_mean) / math.sqrt(back_var)
            logpb.append(-0.5 * jnp.sum(nb ** 2 + LOGTWOPI + math.log(back_var),
                                        axis=-1))
        else:
            logpb.append(jnp.zeros((B,), jnp.float32))
        logf.append(jnp.full((B,), flow))
        s = s_new
        states.append(s)
    logf.append(jnp.zeros((B,), jnp.float32))
    return (jnp.stack(states, axis=1), jnp.stack(logpf, axis=1),
            jnp.stack(logpb, axis=1), jnp.stack(logf, axis=1))


if __name__ == "__main__":
    dim, s_emb_dim, hidden_dim = 4, 16, 32
    harmonics_dim, t_dim = 8, 8
    trajectory_length = 16   # 2 time blocks of 8 steps -> exercises the carry
    batch = 8

    key = jax.random.PRNGKey(0)
    kp, ks, kn = jax.random.split(key, 3)
    params = init_gfn_params(kp, dim, s_emb_dim, hidden_dim, harmonics_dim, t_dim)
    s0 = jax.random.normal(ks, (batch, dim), jnp.float32)
    noise = jax.random.normal(kn, (trajectory_length, batch, dim), jnp.float32)

    out = gfn_forward(params, s0, noise, harmonics_dim=harmonics_dim, t_dim=t_dim)
    out = jax.block_until_ready(out)

    ref = gfn_forward_ref(params, s0, noise,
                          harmonics_dim=harmonics_dim, t_dim=t_dim)
    names = ("states", "logpf", "logpb", "logf")
    for name, a, b in zip(names, out, ref):
        assert a.shape == b.shape, (name, a.shape, b.shape)
        assert jnp.allclose(a, b, rtol=2e-3, atol=2e-3), (
            name, float(jnp.max(jnp.abs(a - b))))

    print("KERNEL_OK")
</pallas_src>

<mosaic_0001>
module attributes {stable_mosaic.version = 11 : i64} {
  func.func @kernel(%arg0: i32, %arg1: i32, %arg2: memref<16xf32, #tpu.memory_space<smem>>, %arg3: memref<16xf32, #tpu.memory_space<smem>>, %arg4: memref<16xf32, #tpu.memory_space<smem>>, %arg5: memref<4x8xf32, #tpu.memory_space<vmem>>, %arg6: memref<8x4x8xf32, #tpu.memory_space<vmem>>, %arg7: memref<1x32x8xf32, #tpu.memory_space<vmem>>, %arg8: memref<32x4xf32, #tpu.memory_space<vmem>>, %arg9: memref<32x1xf32, #tpu.memory_space<vmem>>, %arg10: memref<16x32xf32, #tpu.memory_space<vmem>>, %arg11: memref<16x1xf32, #tpu.memory_space<vmem>>, %arg12: memref<32x16xf32, #tpu.memory_space<vmem>>, %arg13: memref<32x32xf32, #tpu.memory_space<vmem>>, %arg14: memref<32x1xf32, #tpu.memory_space<vmem>>, %arg15: memref<8x32xf32, #tpu.memory_space<vmem>>, %arg16: memref<8x1xf32, #tpu.memory_space<vmem>>, %arg17: memref<8x4x8xf32, #tpu.memory_space<vmem>>, %arg18: memref<8x8xf32, #tpu.memory_space<vmem>>, %arg19: memref<8x8xf32, #tpu.memory_space<vmem>>, %arg20: memref<4x8xf32, #tpu.memory_space<vmem>>) attributes {dimension_semantics = [#tpu.dimension_semantics<parallel>, #tpu.dimension_semantics<arbitrary>], iteration_bounds = array<i64: 1, 2>, scalar_prefetch = 0 : i64, scratch_operands = 1 : i64, tpu.core_type = #tpu.core_type<tc>, window_params = [{transform_indices = @transform_0, window_bounds = array<i64: 16>}, {transform_indices = @transform_1, window_bounds = array<i64: 16>}, {transform_indices = @transform_2, window_bounds = array<i64: 16>}, {transform_indices = @transform_3, window_bounds = array<i64: 4, 8>}, {transform_indices = @transform_4, window_bounds = array<i64: 8, 4, 8>}, {transform_indices = @transform_5, window_bounds = array<i64: 1, 32, 8>}, {pipeline_mode = #tpu.pipeline_mode<synchronous>, transform_indices = @transform_6, window_bounds = array<i64: 32, 4>}, {pipeline_mode = #tpu.pipeline_mode<synchronous>, transform_indices = @transform_7, window_bounds = array<i64: 32, 1>}, {pipeline_mode = #tpu.pipeline_mode<synchronous>, transform_indices = @transform_8, window_bounds = array<i64: 16, 32>}, {pipeline_mode = #tpu.pipeline_mode<synchronous>, transform_indices = @transform_9, window_bounds = array<i64: 16, 1>}, {pipeline_mode = #tpu.pipeline_mode<synchronous>, transform_indices = @transform_10, window_bounds = array<i64: 32, 16>}, {pipeline_mode = #tpu.pipeline_mode<synchronous>, transform_indices = @transform_11, window_bounds = array<i64: 32, 32>}, {pipeline_mode = #tpu.pipeline_mode<synchronous>, transform_indices = @transform_12, window_bounds = array<i64: 32, 1>}, {pipeline_mode = #tpu.pipeline_mode<synchronous>, transform_indices = @transform_13, window_bounds = array<i64: 8, 32>}, {pipeline_mode = #tpu.pipeline_mode<synchronous>, transform_indices = @transform_14, window_bounds = array<i64: 8, 1>}, {transform_indices = @transform_15, window_bounds = array<i64: 8, 4, 8>}, {transform_indices = @transform_16, window_bounds = array<i64: 8, 8>}, {transform_indices = @transform_17, window_bounds = array<i64: 8, 8>}]} {
    %c0_i32 = arith.constant 0 : i32
    %0 = arith.cmpi eq, %arg1, %c0_i32 : i32
    %1 = arith.extui %0 : i1 to i32
    %c0_i32_0 = arith.constant 0 : i32
    %2 = arith.cmpi ne, %1, %c0_i32_0 : i32
    scf.if %2 {
      %c0_723 = arith.constant 0 : index
      %c0_724 = arith.constant 0 : index
      %1811 = vector.load %arg5[%c0_723, %c0_724] : memref<4x8xf32, #tpu.memory_space<vmem>>, vector<4x8xf32>
      %c0_725 = arith.constant 0 : index
      %c0_726 = arith.constant 0 : index
      %1812 = vector.load %arg20[%c0_725, %c0_726] : memref<4x8xf32, #tpu.memory_space<vmem>>, vector<4x8xf32>
      tpu.vector_store %arg20[%c0_725, %c0_726], %1811 {strides = array<i32>} : memref<4x8xf32, #tpu.memory_space<vmem>>, vector<4x8xf32>,
    } else {
    }
    %c0 = arith.constant 0 : index
    %c0_1 = arith.constant 0 : index
    %c0_2 = arith.constant 0 : index
    %3 = vector.load %arg7[%c0, %c0_1, %c0_2] : memref<1x32x8xf32, #tpu.memory_space<vmem>>, vector<1x32x8xf32>
    %4 = vector.shape_cast %3 : vector<1x32x8xf32> to vector<32x8xf32>
    %c0_3 = arith.constant 0 : index
    %c0_4 = arith.constant 0 : index
    %5 = vector.load %arg8[%c0_3, %c0_4] : memref<32x4xf32, #tpu.memory_space<vmem>>, vector<32x4xf32>
    %c0_5 = arith.constant 0 : index
    %c0_6 = arith.constant 0 : index
    %6 = vector.load %arg20[%c0_5, %c0_6] : memref<4x8xf32, #tpu.memory_space<vmem>>, vector<4x8xf32>
    %c8_i32 = arith.constant 8 : i32
    %7 = arith.muli %arg1, %c8_i32 : i32
    %c0_i32_7 = arith.constant 0 : i32
    %8 = arith.addi %7, %c0_i32_7 : i32
    %c0_8 = arith.constant 0 : index
    %c0_9 = arith.constant 0 : index
    %c0_10 = arith.constant 0 : index
    %9 = vector.load %arg6[%c0_8, %c0_9, %c0_10] : memref<8x4x8xf32, #tpu.memory_space<vmem>>, vector<1x4x8xf32>
    %10 = vector.shape_cast %9 : vector<1x4x8xf32> to vector<4x8xf32>
    %c0_11 = arith.constant 0 : index
    %c0_12 = arith.constant 0 : index
    %11 = vector.load %arg9[%c0_11, %c0_12] : memref<32x1xf32, #tpu.memory_space<vmem>>, vector<32x1xf32>
    %12 = vector.extract_strided_slice %5 {offsets = [0, 0], sizes = [32, 1], strides = [1, 1]} : vector<32x4xf32> to vector<32x1xf32>
    %13 = vector.extract_strided_slice %6 {offsets = [0, 0], sizes = [1, 8], strides = [1, 1]} : vector<4x8xf32> to vector<1x8xf32>
    %14 = vector.broadcast %12 : vector<32x1xf32> to vector<32x8xf32>
    %15 = vector.broadcast %13 : vector<1x8xf32> to vector<32x8xf32>
    %16 = arith.mulf %14, %15 : vector<32x8xf32>
    %17 = vector.broadcast %11 : vector<32x1xf32> to vector<32x8xf32>
    %18 = arith.addf %17, %16 : vector<32x8xf32>
    %19 = vector.extract_strided_slice %5 {offsets = [0, 1], sizes = [32, 1], strides = [1, 1]} : vector<32x4xf32> to vector<32x1xf32>
    %20 = vector.extract_strided_slice %6 {offsets = [1, 0], sizes = [1, 8], strides = [1, 1]} : vector<4x8xf32> to vector<1x8xf32>
    %21 = vector.broadcast %19 : vector<32x1xf32> to vector<32x8xf32>
    %22 = vector.broadcast %20 : vector<1x8xf32> to vector<32x8xf32>
    %23 = arith.mulf %21, %22 : vector<32x8xf32>
    %24 = arith.addf %18, %23 : vector<32x8xf32>
    %25 = vector.extract_strided_slice %5 {offsets = [0, 2], sizes = [32, 1], strides = [1, 1]} : vector<32x4xf32> to vector<32x1xf32>
    %26 = vector.extract_strided_slice %6 {offsets = [2, 0], sizes = [1, 8], strides = [1, 1]} : vector<4x8xf32> to vector<1x8xf32>
    %27 = vector.broadcast %25 : vector<32x1xf32> to vector<32x8xf32>
    %28 = vector.broadcast %26 : vector<1x8xf32> to vector<32x8xf32>
    %29 = arith.mulf %27, %28 : vector<32x8xf32>
    %30 = arith.addf %24, %29 : vector<32x8xf32>
    %31 = vector.extract_strided_slice %5 {offsets = [0, 3], sizes = [32, 1], strides = [1, 1]} : vector<32x4xf32> to vector<32x1xf32>
    %32 = vector.extract_strided_slice %6 {offsets = [3, 0], sizes = [1, 8], strides = [1, 1]} : vector<4x8xf32> to vector<1x8xf32>
    %33 = vector.broadcast %31 : vector<32x1xf32> to vector<32x8xf32>
    %34 = vector.broadcast %32 : vector<1x8xf32> to vector<32x8xf32>
    %35 = arith.mulf %33, %34 : vector<32x8xf32>
    %36 = arith.addf %30, %35 : vector<32x8xf32>
    %cst = arith.constant 5.000000e-01 : f32
    %37 = vector.broadcast %cst : f32 to vector<32x8xf32>
    %38 = arith.mulf %37, %36 : vector<32x8xf32>
    %cst_13 = arith.constant 0.707106769 : f32
    %39 = vector.broadcast %cst_13 : f32 to vector<32x8xf32>
    %40 = arith.mulf %36, %39 : vector<32x8xf32>
    %cst_14 = arith.constant 0.000000e+00 : f32
    %41 = vector.broadcast %cst_14 : f32 to vector<32x8xf32>
    %42 = arith.cmpf oge, %40, %41 : vector<32x8xf32>
    %cst_15 = arith.constant 1.000000e+00 : f32
    %cst_16 = arith.constant -1.000000e+00 : f32
    %43 = vector.broadcast %cst_15 : f32 to vector<32x8xf32>
    %44 = vector.broadcast %cst_16 : f32 to vector<32x8xf32>
    %45 = arith.select %42, %43, %44 : vector<32x8xi1>, vector<32x8xf32>
    %46 = math.absf %40 : vector<32x8xf32>
    %cst_17 = arith.constant 0.327591091 : f32
    %47 = vector.broadcast %cst_17 : f32 to vector<32x8xf32>
    %48 = arith.mulf %47, %46 : vector<32x8xf32>
    %cst_18 = arith.constant 1.000000e+00 : f32
    %49 = vector.broadcast %cst_18 : f32 to vector<32x8xf32>
    %50 = arith.addf %49, %48 : vector<32x8xf32>
    %cst_19 = arith.constant 1.000000e+00 : f32
    %51 = vector.broadcast %cst_19 : f32 to vector<32x8xf32>
    %52 = arith.divf %51, %50 : vector<32x8xf32>
    %cst_20 = arith.constant 1.06140542 : f32
    %53 = vector.broadcast %cst_20 : f32 to vector<32x8xf32>
    %54 = arith.mulf %53, %52 : vector<32x8xf32>
    %cst_21 = arith.constant -1.45315206 : f32
    %55 = vector.broadcast %cst_21 : f32 to vector<32x8xf32>
    %56 = arith.addf %54, %55 : vector<32x8xf32>
    %57 = arith.mulf %56, %52 : vector<32x8xf32>
    %cst_22 = arith.constant 1.42141378 : f32
    %58 = vector.broadcast %cst_22 : f32 to vector<32x8xf32>
    %59 = arith.addf %57, %58 : vector<32x8xf32>
    %60 = arith.mulf %59, %52 : vector<32x8xf32>
    %cst_23 = arith.constant -0.284496725 : f32
    %61 = vector.broadcast %cst_23 : f32 to vector<32x8xf32>
    %62 = arith.addf %60, %61 : vector<32x8xf32>
    %63 = arith.mulf %62, %52 : vector<32x8xf32>
    %cst_24 = arith.constant 0.254829586 : f32
    %64 = vector.broadcast %cst_24 : f32 to vector<32x8xf32>
    %65 = arith.addf %63, %64 : vector<32x8xf32>
    %66 = arith.mulf %65, %52 : vector<32x8xf32>
    %cst_25 = arith.constant 0.000000e+00 : f32
    %67 = vector.broadcast %cst_25 : f32 to vector<32x8xf32>
    %68 = arith.subf %67, %46 : vector<32x8xf32>
    %69 = arith.mulf %68, %46 : vector<32x8xf32>
    %70 = math.exp %69 : vector<32x8xf32>
    %71 = arith.mulf %66, %70 : vector<32x8xf32>
    %cst_26 = arith.constant 1.000000e+00 : f32
    %72 = vector.broadcast %cst_26 : f32 to vector<32x8xf32>
    %73 = arith.subf %72, %71 : vector<32x8xf32>
    %74 = arith.mulf %45, %73 : vector<32x8xf32>
    %cst_27 = arith.constant 1.000000e+00 : f32
    %75 = vector.broadcast %cst_27 : f32 to vector<32x8xf32>
    %76 = arith.addf %75, %74 : vector<32x8xf32>
    %77 = arith.mulf %38, %76 : vector<32x8xf32>
    %c0_28 = arith.constant 0 : index
    %c0_29 = arith.constant 0 : index
    %78 = vector.load %arg10[%c0_28, %c0_29] : memref<16x32xf32, #tpu.memory_space<vmem>>, vector<16x32xf32>
    %cst_30 = arith.constant dense<0.000000e+00> : vector<16x8xf32>
    %79 = tpu.matmul %78, %77, %cst_30 {dimension_numbers = #tpu.dot_dimension_numbers<[1], [0], [0], [1], [0, 0, 1, 1], [], []>} : vector<16x32xf32>, vector<32x8xf32>, vector<16x8xf32> -> vector<16x8xf32>
    %c0_31 = arith.constant 0 : index
    %c0_32 = arith.constant 0 : index
    %80 = vector.load %arg11[%c0_31, %c0_32] : memref<16x1xf32, #tpu.memory_space<vmem>>, vector<16x1xf32>
    %81 = vector.broadcast %80 : vector<16x1xf32> to vector<16x8xf32>
    %82 = arith.addf %79, %81 : vector<16x8xf32>
    %c0_33 = arith.constant 0 : index
    %c0_34 = arith.constant 0 : index
    %83 = vector.load %arg12[%c0_33, %c0_34] : memref<32x16xf32, #tpu.memory_space<vmem>>, vector<32x16xf32>
    %cst_35 = arith.constant dense<0.000000e+00> : vector<32x8xf32>
    %84 = tpu.matmul %83, %82, %cst_35 {dimension_numbers = #tpu.dot_dimension_numbers<[1], [0], [0], [1], [0, 0, 1, 1], [], []>} : vector<32x16xf32>, vector<16x8xf32>, vector<32x8xf32> -> vector<32x8xf32>
    %85 = vector.extract_strided_slice %4 {offsets = [0, 0], sizes = [32, 1], strides = [1, 1]} : vector<32x8xf32> to vector<32x1xf32>
    %86 = vector.broadcast %85 : vector<32x1xf32> to vector<32x8xf32>
    %87 = arith.addf %84, %86 : vector<32x8xf32>
    %cst_36 = arith.constant 5.000000e-01 : f32
    %88 = vector.broadcast %cst_36 : f32 to vector<32x8xf32>
    %89 = arith.mulf %88, %87 : vector<32x8xf32>
    %cst_37 = arith.constant 0.707106769 : f32
    %90 = vector.broadcast %cst_37 : f32 to vector<32x8xf32>
    %91 = arith.mulf %87, %90 : vector<32x8xf32>
    %cst_38 = arith.constant 0.000000e+00 : f32
    %92 = vector.broadcast %cst_38 : f32 to vector<32x8xf32>
    %93 = arith.cmpf oge, %91, %92 : vector<32x8xf32>
    %cst_39 = arith.constant 1.000000e+00 : f32
    %cst_40 = arith.constant -1.000000e+00 : f32
    %94 = vector.broadcast %cst_39 : f32 to vector<32x8xf32>
    %95 = vector.broadcast %cst_40 : f32 to vector<32x8xf32>
    %96 = arith.select %93, %94, %95 : vector<32x8xi1>, vector<32x8xf32>
    %97 = math.absf %91 : vector<32x8xf32>
    %cst_41 = arith.constant 0.327591091 : f32
    %98 = vector.broadcast %cst_41 : f32 to vector<32x8xf32>
    %99 = arith.mulf %98, %97 : vector<32x8xf32>
    %cst_42 = arith.constant 1.000000e+00 : f32
    %100 = vector.broadcast %cst_42 : f32 to vector<32x8xf32>
    %101 = arith.addf %100, %99 : vector<32x8xf32>
    %cst_43 = arith.constant 1.000000e+00 : f32
    %102 = vector.broadcast %cst_43 : f32 to vector<32x8xf32>
    %103 = arith.divf %102, %101 : vector<32x8xf32>
    %cst_44 = arith.constant 1.06140542 : f32
    %104 = vector.broadcast %cst_44 : f32 to vector<32x8xf32>
    %105 = arith.mulf %104, %103 : vector<32x8xf32>
    %cst_45 = arith.constant -1.45315206 : f32
    %106 = vector.broadcast %cst_45 : f32 to vector<32x8xf32>
    %107 = arith.addf %105, %106 : vector<32x8xf32>
    %108 = arith.mulf %107, %103 : vector<32x8xf32>
    %cst_46 = arith.constant 1.42141378 : f32
    %109 = vector.broadcast %cst_46 : f32 to vector<32x8xf32>
    %110 = arith.addf %108, %109 : vector<32x8xf32>
    %111 = arith.mulf %110, %103 : vector<32x8xf32>
    %cst_47 = arith.constant -0.284496725 : f32
    %112 = vector.broadcast %cst_47 : f32 to vector<32x8xf32>
    %113 = arith.addf %111, %112 : vector<32x8xf32>
    %114 = arith.mulf %113, %103 : vector<32x8xf32>
    %cst_48 = arith.constant 0.254829586 : f32
    %115 = vector.broadcast %cst_48 : f32 to vector<32x8xf32>
    %116 = arith.addf %114, %115 : vector<32x8xf32>
    %117 = arith.mulf %116, %103 : vector<32x8xf32>
    %cst_49 = arith.constant 0.000000e+00 : f32
    %118 = vector.broadcast %cst_49 : f32 to vector<32x8xf32>
    %119 = arith.subf %118, %97 : vector<32x8xf32>
    %120 = arith.mulf %119, %97 : vector<32x8xf32>
    %121 = math.exp %120 : vector<32x8xf32>
    %122 = arith.mulf %117, %121 : vector<32x8xf32>
    %cst_50 = arith.constant 1.000000e+00 : f32
    %123 = vector.broadcast %cst_50 : f32 to vector<32x8xf32>
    %124 = arith.subf %123, %122 : vector<32x8xf32>
    %125 = arith.mulf %96, %124 : vector<32x8xf32>
    %cst_51 = arith.constant 1.000000e+00 : f32
    %126 = vector.broadcast %cst_51 : f32 to vector<32x8xf32>
    %127 = arith.addf %126, %125 : vector<32x8xf32>
    %128 = arith.mulf %89, %127 : vector<32x8xf32>
    %c0_52 = arith.constant 0 : index
    %c0_53 = arith.constant 0 : index
    %129 = vector.load %arg13[%c0_52, %c0_53] : memref<32x32xf32, #tpu.memory_space<vmem>>, vector<32x32xf32>
    %cst_54 = arith.constant dense<0.000000e+00> : vector<32x8xf32>
    %130 = tpu.matmul %129, %128, %cst_54 {dimension_numbers = #tpu.dot_dimension_numbers<[1], [0], [0], [1], [0, 0, 1, 1], [], []>} : vector<32x32xf32>, vector<32x8xf32>, vector<32x8xf32> -> vector<32x8xf32>
    %c0_55 = arith.constant 0 : index
    %c0_56 = arith.constant 0 : index
    %131 = vector.load %arg14[%c0_55, %c0_56] : memref<32x1xf32, #tpu.memory_space<vmem>>, vector<32x1xf32>
    %132 = vector.broadcast %131 : vector<32x1xf32> to vector<32x8xf32>
    %133 = arith.addf %130, %132 : vector<32x8xf32>
    %cst_57 = arith.constant 5.000000e-01 : f32
    %134 = vector.broadcast %cst_57 : f32 to vector<32x8xf32>
    %135 = arith.mulf %134, %133 : vector<32x8xf32>
    %cst_58 = arith.constant 0.707106769 : f32
    %136 = vector.broadcast %cst_58 : f32 to vector<32x8xf32>
    %137 = arith.mulf %133, %136 : vector<32x8xf32>
    %cst_59 = arith.constant 0.000000e+00 : f32
    %138 = vector.broadcast %cst_59 : f32 to vector<32x8xf32>
    %139 = arith.cmpf oge, %137, %138 : vector<32x8xf32>
    %cst_60 = arith.constant 1.000000e+00 : f32
    %cst_61 = arith.constant -1.000000e+00 : f32
    %140 = vector.broadcast %cst_60 : f32 to vector<32x8xf32>
    %141 = vector.broadcast %cst_61 : f32 to vector<32x8xf32>
    %142 = arith.select %139, %140, %141 : vector<32x8xi1>, vector<32x8xf32>
    %143 = math.absf %137 : vector<32x8xf32>
    %cst_62 = arith.constant 0.327591091 : f32
    %144 = vector.broadcast %cst_62 : f32 to vector<32x8xf32>
    %145 = arith.mulf %144, %143 : vector<32x8xf32>
    %cst_63 = arith.constant 1.000000e+00 : f32
    %146 = vector.broadcast %cst_63 : f32 to vector<32x8xf32>
    %147 = arith.addf %146, %145 : vector<32x8xf32>
    %cst_64 = arith.constant 1.000000e+00 : f32
    %148 = vector.broadcast %cst_64 : f32 to vector<32x8xf32>
    %149 = arith.divf %148, %147 : vector<32x8xf32>
    %cst_65 = arith.constant 1.06140542 : f32
    %150 = vector.broadcast %cst_65 : f32 to vector<32x8xf32>
    %151 = arith.mulf %150, %149 : vector<32x8xf32>
    %cst_66 = arith.constant -1.45315206 : f32
    %152 = vector.broadcast %cst_66 : f32 to vector<32x8xf32>
    %153 = arith.addf %151, %152 : vector<32x8xf32>
    %154 = arith.mulf %153, %149 : vector<32x8xf32>
    %cst_67 = arith.constant 1.42141378 : f32
    %155 = vector.broadcast %cst_67 : f32 to vector<32x8xf32>
    %156 = arith.addf %154, %155 : vector<32x8xf32>
    %157 = arith.mulf %156, %149 : vector<32x8xf32>
    %cst_68 = arith.constant -0.284496725 : f32
    %158 = vector.broadcast %cst_68 : f32 to vector<32x8xf32>
    %159 = arith.addf %157, %158 : vector<32x8xf32>
    %160 = arith.mulf %159, %149 : vector<32x8xf32>
    %cst_69 = arith.constant 0.254829586 : f32
    %161 = vector.broadcast %cst_69 : f32 to vector<32x8xf32>
    %162 = arith.addf %160, %161 : vector<32x8xf32>
    %163 = arith.mulf %162, %149 : vector<32x8xf32>
    %cst_70 = arith.constant 0.000000e+00 : f32
    %164 = vector.broadcast %cst_70 : f32 to vector<32x8xf32>
    %165 = arith.subf %164, %143 : vector<32x8xf32>
    %166 = arith.mulf %165, %143 : vector<32x8xf32>
    %167 = math.exp %166 : vector<32x8xf32>
    %168 = arith.mulf %163, %167 : vector<32x8xf32>
    %cst_71 = arith.constant 1.000000e+00 : f32
    %169 = vector.broadcast %cst_71 : f32 to vector<32x8xf32>
    %170 = arith.subf %169, %168 : vector<32x8xf32>
    %171 = arith.mulf %142, %170 : vector<32x8xf32>
    %cst_72 = arith.constant 1.000000e+00 : f32
    %172 = vector.broadcast %cst_72 : f32 to vector<32x8xf32>
    %173 = arith.addf %172, %171 : vector<32x8xf32>
    %174 = arith.mulf %135, %173 : vector<32x8xf32>
    %c0_73 = arith.constant 0 : index
    %c0_74 = arith.constant 0 : index
    %175 = vector.load %arg15[%c0_73, %c0_74] : memref<8x32xf32, #tpu.memory_space<vmem>>, vector<8x32xf32>
    %cst_75 = arith.constant dense<0.000000e+00> : vector<8x8xf32>
    %176 = tpu.matmul %175, %174, %cst_75 {dimension_numbers = #tpu.dot_dimension_numbers<[1], [0], [0], [1], [0, 0, 1, 1], [], []>} : vector<8x32xf32>, vector<32x8xf32>, vector<8x8xf32> -> vector<8x8xf32>
    %c0_76 = arith.constant 0 : index
    %c0_77 = arith.constant 0 : index
    %177 = vector.load %arg16[%c0_76, %c0_77] : memref<8x1xf32, #tpu.memory_space<vmem>>, vector<8x1xf32>
    %178 = vector.broadcast %177 : vector<8x1xf32> to vector<8x8xf32>
    %179 = arith.addf %176, %178 : vector<8x8xf32>
    %180 = vector.extract_strided_slice %179 {offsets = [0, 0], sizes = [4, 8], strides = [1, 1]} : vector<8x8xf32> to vector<4x8xf32>
    %181 = vector.extract_strided_slice %179 {offsets = [4, 0], sizes = [4, 8], strides = [1, 1]} : vector<8x8xf32> to vector<4x8xf32>
    %182 = math.tanh %181 : vector<4x8xf32>
    %cst_78 = arith.constant 4.000000e+00 : f32
    %183 = vector.broadcast %cst_78 : f32 to vector<4x8xf32>
    %184 = arith.mulf %182, %183 : vector<4x8xf32>
    %cst_79 = arith.constant 0.000000e+00 : f32
    %185 = vector.broadcast %cst_79 : f32 to vector<4x8xf32>
    %186 = arith.addf %184, %185 : vector<4x8xf32>
    %cst_80 = arith.constant 5.000000e-01 : f32
    %187 = vector.broadcast %cst_80 : f32 to vector<4x8xf32>
    %188 = arith.mulf %187, %186 : vector<4x8xf32>
    %189 = math.exp %188 : vector<4x8xf32>
    %cst_81 = arith.constant 2.500000e-01 : f32
    %190 = vector.broadcast %cst_81 : f32 to vector<4x8xf32>
    %191 = arith.mulf %190, %189 : vector<4x8xf32>
    %cst_82 = arith.constant 6.250000e-02 : f32
    %192 = vector.broadcast %cst_82 : f32 to vector<4x8xf32>
    %193 = arith.mulf %192, %180 : vector<4x8xf32>
    %194 = arith.addf %6, %193 : vector<4x8xf32>
    %195 = arith.mulf %191, %10 : vector<4x8xf32>
    %196 = arith.addf %194, %195 : vector<4x8xf32>
    %197 = arith.mulf %10, %10 : vector<4x8xf32>
    %cst_83 = arith.constant -0.934711635 : f32
    %198 = vector.broadcast %cst_83 : f32 to vector<4x8xf32>
    %199 = arith.addf %197, %198 : vector<4x8xf32>
    %200 = arith.addf %199, %186 : vector<4x8xf32>
    %cst_84 = arith.constant dense<0.000000e+00> : vector<8xf32>
    %201 = vector.multi_reduction <add>, %200, %cst_84 [0] : vector<4x8xf32> to vector<8xf32>
    %cst_85 = arith.constant -5.000000e-01 : f32
    %202 = vector.broadcast %cst_85 : f32 to vector<8xf32>
    %203 = arith.mulf %202, %201 : vector<8xf32>
    %204 = arith.index_cast %8 : i32 to index
    %205 = memref.load %arg2[%204] : memref<16xf32, #tpu.memory_space<smem>>
    %206 = arith.index_cast %8 : i32 to index
    %207 = memref.load %arg3[%206] : memref<16xf32, #tpu.memory_space<smem>>
    %208 = arith.index_cast %8 : i32 to index
    %209 = memref.load %arg4[%208] : memref<16xf32, #tpu.memory_space<smem>>
    %210 = vector.broadcast %205 : f32 to vector<4x8xf32>
    %211 = arith.mulf %196, %210 : vector<4x8xf32>
    %212 = arith.subf %6, %211 : vector<4x8xf32>
    %213 = vector.broadcast %209 : f32 to vector<4x8xf32>
    %214 = arith.mulf %212, %213 : vector<4x8xf32>
    %215 = arith.mulf %214, %214 : vector<4x8xf32>
    %cst_86 = arith.constant 1.83787704 : f32
    %216 = vector.broadcast %cst_86 : f32 to vector<4x8xf32>
    %217 = arith.addf %215, %216 : vector<4x8xf32>
    %218 = vector.broadcast %207 : f32 to vector<4x8xf32>
    %219 = arith.addf %217, %218 : vector<4x8xf32>
    %cst_87 = arith.constant dense<0.000000e+00> : vector<8xf32>
    %220 = vector.multi_reduction <add>, %219, %cst_87 [0] : vector<4x8xf32> to vector<8xf32>
    %cst_88 = arith.constant -5.000000e-01 : f32
    %221 = vector.broadcast %cst_88 : f32 to vector<8xf32>
    %222 = arith.mulf %221, %220 : vector<8xf32>
    %c0_i32_89 = arith.constant 0 : i32
    %223 = arith.cmpi sgt, %arg1, %c0_i32_89 : i32
    %cst_90 = arith.constant 0.000000e+00 : f32
    %224 = vector.broadcast %cst_90 : f32 to vector<8xf32>
    %225 = arith.select %223, %222, %224 : vector<8xf32>
    %c0_91 = arith.constant 0 : index
    %c0_92 = arith.constant 0 : index
    %c0_93 = arith.constant 0 : index
    %226 = vector.load %arg17[%c0_91, %c0_92, %c0_93] : memref<8x4x8xf32, #tpu.memory_space<vmem>>, vector<1x4x8xf32>
    %227 = vector.shape_cast %226 : vector<1x4x8xf32> to vector<4x8xf32>
    %228 = vector.shape_cast %196 : vector<4x8xf32> to vector<1x4x8xf32>
    tpu.vector_store %arg17[%c0_91, %c0_92, %c0_93], %228 {strides = array<i32>} : memref<8x4x8xf32, #tpu.memory_space<vmem>>, vector<1x4x8xf32>,
    %c0_94 = arith.constant 0 : index
    %c0_95 = arith.constant 0 : index
    %229 = vector.load %arg18[%c0_94, %c0_95] : memref<8x8xf32, #tpu.memory_space<vmem>>, vector<1x8xf32>
    %230 = vector.shape_cast %229 : vector<1x8xf32> to vector<8xf32>
    %231 = vector.shape_cast %203 : vector<8xf32> to vector<1x8xf32>
    tpu.vector_store %arg18[%c0_94, %c0_95], %231 {strides = array<i32>} : memref<8x8xf32, #tpu.memory_space<vmem>>, vector<1x8xf32>,
    %c0_96 = arith.constant 0 : index
    %c0_97 = arith.constant 0 : index
    %232 = vector.load %arg19[%c0_96, %c0_97] : memref<8x8xf32, #tpu.memory_space<vmem>>, vector<1x8xf32>
    %233 = vector.shape_cast %232 : vector<1x8xf32> to vector<8xf32>
    %234 = vector.shape_cast %225 : vector<8xf32> to vector<1x8xf32>
    tpu.vector_store %arg19[%c0_96, %c0_97], %234 {strides = array<i32>} : memref<8x8xf32, #tpu.memory_space<vmem>>, vector<1x8xf32>,
    %c8_i32_98 = arith.constant 8 : i32
    %235 = arith.muli %arg1, %c8_i32_98 : i32
    %c1_i32 = arith.constant 1 : i32
    %236 = arith.addi %235, %c1_i32 : i32
    %c1 = arith.constant 1 : index
    %c0_99 = arith.constant 0 : index
    %c0_100 = arith.constant 0 : index
    %237 = vector.load %arg6[%c1, %c0_99, %c0_100] : memref<8x4x8xf32, #tpu.memory_space<vmem>>, vector<1x4x8xf32>
    %238 = vector.shape_cast %237 : vector<1x4x8xf32> to vector<4x8xf32>
    %c0_101 = arith.constant 0 : index
    %c0_102 = arith.constant 0 : index
    %239 = vector.load %arg9[%c0_101, %c0_102] : memref<32x1xf32, #tpu.memory_space<vmem>>, vector<32x1xf32>
    %240 = vector.extract_strided_slice %5 {offsets = [0, 0], sizes = [32, 1], strides = [1, 1]} : vector<32x4xf32> to vector<32x1xf32>
    %241 = vector.extract_strided_slice %196 {offsets = [0, 0], sizes = [1, 8], strides = [1, 1]} : vector<4x8xf32> to vector<1x8xf32>
    %242 = vector.broadcast %240 : vector<32x1xf32> to vector<32x8xf32>
    %243 = vector.broadcast %241 : vector<1x8xf32> to vector<32x8xf32>
    %244 = arith.mulf %242, %243 : vector<32x8xf32>
    %245 = vector.broadcast %239 : vector<32x1xf32> to vector<32x8xf32>
    %246 = arith.addf %245, %244 : vector<32x8xf32>
    %247 = vector.extract_strided_slice %5 {offsets = [0, 1], sizes = [32, 1], strides = [1, 1]} : vector<32x4xf32> to vector<32x1xf32>
    %248 = vector.extract_strided_slice %196 {offsets = [1, 0], sizes = [1, 8], strides = [1, 1]} : vector<4x8xf32> to vector<1x8xf32>
    %249 = vector.broadcast %247 : vector<32x1xf32> to vector<32x8xf32>
    %250 = vector.broadcast %248 : vector<1x8xf32> to vector<32x8xf32>
    %251 = arith.mulf %249, %250 : vector<32x8xf32>
    %252 = arith.addf %246, %251 : vector<32x8xf32>
    %253 = vector.extract_strided_slice %5 {offsets = [0, 2], sizes = [32, 1], strides = [1, 1]} : vector<32x4xf32> to vector<32x1xf32>
    %254 = vector.extract_strided_slice %196 {offsets = [2, 0], sizes = [1, 8], strides = [1, 1]} : vector<4x8xf32> to vector<1x8xf32>
    %255 = vector.broadcast %253 : vector<32x1xf32> to vector<32x8xf32>
    %256 = vector.broadcast %254 : vector<1x8xf32> to vector<32x8xf32>
    %257 = arith.mulf %255, %256 : vector<32x8xf32>
    %258 = arith.addf %252, %257 : vector<32x8xf32>
    %259 = vector.extract_strided_slice %5 {offsets = [0, 3], sizes = [32, 1], strides = [1, 1]} : vector<32x4xf32> to vector<32x1xf32>
    %260 = vector.extract_strided_slice %196 {offsets = [3, 0], sizes = [1, 8], strides = [1, 1]} : vector<4x8xf32> to vector<1x8xf32>
    %261 = vector.broadcast %259 : vector<32x1xf32> to vector<32x8xf32>
    %262 = vector.broadcast %260 : vector<1x8xf32> to vector<32x8xf32>
    %263 = arith.mulf %261, %262 : vector<32x8xf32>
    %264 = arith.addf %258, %263 : vector<32x8xf32>
    %cst_103 = arith.constant 5.000000e-01 : f32
    %265 = vector.broadcast %cst_103 : f32 to vector<32x8xf32>
    %266 = arith.mulf %265, %264 : vector<32x8xf32>
    %cst_104 = arith.constant 0.707106769 : f32
    %267 = vector.broadcast %cst_104 : f32 to vector<32x8xf32>
    %268 = arith.mulf %264, %267 : vector<32x8xf32>
    %cst_105 = arith.constant 0.000000e+00 : f32
    %269 = vector.broadcast %cst_105 : f32 to vector<32x8xf32>
    %270 = arith.cmpf oge, %268, %269 : vector<32x8xf32>
    %cst_106 = arith.constant 1.000000e+00 : f32
    %cst_107 = arith.constant -1.000000e+00 : f32
    %271 = vector.broadcast %cst_106 : f32 to vector<32x8xf32>
    %272 = vector.broadcast %cst_107 : f32 to vector<32x8xf32>
    %273 = arith.select %270, %271, %272 : vector<32x8xi1>, vector<32x8xf32>
    %274 = math.absf %268 : vector<32x8xf32>
    %cst_108 = arith.constant 0.327591091 : f32
    %275 = vector.broadcast %cst_108 : f32 to vector<32x8xf32>
    %276 = arith.mulf %275, %274 : vector<32x8xf32>
    %cst_109 = arith.constant 1.000000e+00 : f32
    %277 = vector.broadcast %cst_109 : f32 to vector<32x8xf32>
    %278 = arith.addf %277, %276 : vector<32x8xf32>
    %cst_110 = arith.constant 1.000000e+00 : f32
    %279 = vector.broadcast %cst_110 : f32 to vector<32x8xf32>
    %280 = arith.divf %279, %278 : vector<32x8xf32>
    %cst_111 = arith.constant 1.06140542 : f32
    %281 = vector.broadcast %cst_111 : f32 to vector<32x8xf32>
    %282 = arith.mulf %281, %280 : vector<32x8xf32>
    %cst_112 = arith.constant -1.45315206 : f32
    %283 = vector.broadcast %cst_112 : f32 to vector<32x8xf32>
    %284 = arith.addf %282, %283 : vector<32x8xf32>
    %285 = arith.mulf %284, %280 : vector<32x8xf32>
    %cst_113 = arith.constant 1.42141378 : f32
    %286 = vector.broadcast %cst_113 : f32 to vector<32x8xf32>
    %287 = arith.addf %285, %286 : vector<32x8xf32>
    %288 = arith.mulf %287, %280 : vector<32x8xf32>
    %cst_114 = arith.constant -0.284496725 : f32
    %289 = vector.broadcast %cst_114 : f32 to vector<32x8xf32>
    %290 = arith.addf %288, %289 : vector<32x8xf32>
    %291 = arith.mulf %290, %280 : vector<32x8xf32>
    %cst_115 = arith.constant 0.254829586 : f32
    %292 = vector.broadcast %cst_115 : f32 to vector<32x8xf32>
    %293 = arith.addf %291, %292 : vector<32x8xf32>
    %294 = arith.mulf %293, %280 : vector<32x8xf32>
    %cst_116 = arith.constant 0.000000e+00 : f32
    %295 = vector.broadcast %cst_116 : f32 to vector<32x8xf32>
    %296 = arith.subf %295, %274 : vector<32x8xf32>
    %297 = arith.mulf %296, %274 : vector<32x8xf32>
    %298 = math.exp %297 : vector<32x8xf32>
    %299 = arith.mulf %294, %298 : vector<32x8xf32>
    %cst_117 = arith.constant 1.000000e+00 : f32
    %300 = vector.broadcast %cst_117 : f32 to vector<32x8xf32>
    %301 = arith.subf %300, %299 : vector<32x8xf32>
    %302 = arith.mulf %273, %301 : vector<32x8xf32>
    %cst_118 = arith.constant 1.000000e+00 : f32
    %303 = vector.broadcast %cst_118 : f32 to vector<32x8xf32>
    %304 = arith.addf %303, %302 : vector<32x8xf32>
    %305 = arith.mulf %266, %304 : vector<32x8xf32>
    %c0_119 = arith.constant 0 : index
    %c0_120 = arith.constant 0 : index
    %306 = vector.load %arg10[%c0_119, %c0_120] : memref<16x32xf32, #tpu.memory_space<vmem>>, vector<16x32xf32>
    %cst_121 = arith.constant dense<0.000000e+00> : vector<16x8xf32>
    %307 = tpu.matmul %306, %305, %cst_121 {dimension_numbers = #tpu.dot_dimension_numbers<[1], [0], [0], [1], [0, 0, 1, 1], [], []>} : vector<16x32xf32>, vector<32x8xf32>, vector<16x8xf32> -> vector<16x8xf32>
    %c0_122 = arith.constant 0 : index
    %c0_123 = arith.constant 0 : index
    %308 = vector.load %arg11[%c0_122, %c0_123] : memref<16x1xf32, #tpu.memory_space<vmem>>, vector<16x1xf32>
    %309 = vector.broadcast %308 : vector<16x1xf32> to vector<16x8xf32>
    %310 = arith.addf %307, %309 : vector<16x8xf32>
    %c0_124 = arith.constant 0 : index
    %c0_125 = arith.constant 0 : index
    %311 = vector.load %arg12[%c0_124, %c0_125] : memref<32x16xf32, #tpu.memory_space<vmem>>, vector<32x16xf32>
    %cst_126 = arith.constant dense<0.000000e+00> : vector<32x8xf32>
    %312 = tpu.matmul %311, %310, %cst_126 {dimension_numbers = #tpu.dot_dimension_numbers<[1], [0], [0], [1], [0, 0, 1, 1], [], []>} : vector<32x16xf32>, vector<16x8xf32>, vector<32x8xf32> -> vector<32x8xf32>
    %313 = vector.extract_strided_slice %4 {offsets = [0, 1], sizes = [32, 1], strides = [1, 1]} : vector<32x8xf32> to vector<32x1xf32>
    %314 = vector.broadcast %313 : vector<32x1xf32> to vector<32x8xf32>
    %315 = arith.addf %312, %314 : vector<32x8xf32>
    %cst_127 = arith.constant 5.000000e-01 : f32
    %316 = vector.broadcast %cst_127 : f32 to vector<32x8xf32>
    %317 = arith.mulf %316, %315 : vector<32x8xf32>
    %cst_128 = arith.constant 0.707106769 : f32
    %318 = vector.broadcast %cst_128 : f32 to vector<32x8xf32>
    %319 = arith.mulf %315, %318 : vector<32x8xf32>
    %cst_129 = arith.constant 0.000000e+00 : f32
    %320 = vector.broadcast %cst_129 : f32 to vector<32x8xf32>
    %321 = arith.cmpf oge, %319, %320 : vector<32x8xf32>
    %cst_130 = arith.constant 1.000000e+00 : f32
    %cst_131 = arith.constant -1.000000e+00 : f32
    %322 = vector.broadcast %cst_130 : f32 to vector<32x8xf32>
    %323 = vector.broadcast %cst_131 : f32 to vector<32x8xf32>
    %324 = arith.select %321, %322, %323 : vector<32x8xi1>, vector<32x8xf32>
    %325 = math.absf %319 : vector<32x8xf32>
    %cst_132 = arith.constant 0.327591091 : f32
    %326 = vector.broadcast %cst_132 : f32 to vector<32x8xf32>
    %327 = arith.mulf %326, %325 : vector<32x8xf32>
    %cst_133 = arith.constant 1.000000e+00 : f32
    %328 = vector.broadcast %cst_133 : f32 to vector<32x8xf32>
    %329 = arith.addf %328, %327 : vector<32x8xf32>
    %cst_134 = arith.constant 1.000000e+00 : f32
    %330 = vector.broadcast %cst_134 : f32 to vector<32x8xf32>
    %331 = arith.divf %330, %329 : vector<32x8xf32>
    %cst_135 = arith.constant 1.06140542 : f32
    %332 = vector.broadcast %cst_135 : f32 to vector<32x8xf32>
    %333 = arith.mulf %332, %331 : vector<32x8xf32>
    %cst_136 = arith.constant -1.45315206 : f32
    %334 = vector.broadcast %cst_136 : f32 to vector<32x8xf32>
    %335 = arith.addf %333, %334 : vector<32x8xf32>
    %336 = arith.mulf %335, %331 : vector<32x8xf32>
    %cst_137 = arith.constant 1.42141378 : f32
    %337 = vector.broadcast %cst_137 : f32 to vector<32x8xf32>
    %338 = arith.addf %336, %337 : vector<32x8xf32>
    %339 = arith.mulf %338, %331 : vector<32x8xf32>
    %cst_138 = arith.constant -0.284496725 : f32
    %340 = vector.broadcast %cst_138 : f32 to vector<32x8xf32>
    %341 = arith.addf %339, %340 : vector<32x8xf32>
    %342 = arith.mulf %341, %331 : vector<32x8xf32>
    %cst_139 = arith.constant 0.254829586 : f32
    %343 = vector.broadcast %cst_139 : f32 to vector<32x8xf32>
    %344 = arith.addf %342, %343 : vector<32x8xf32>
    %345 = arith.mulf %344, %331 : vector<32x8xf32>
    %cst_140 = arith.constant 0.000000e+00 : f32
    %346 = vector.broadcast %cst_140 : f32 to vector<32x8xf32>
    %347 = arith.subf %346, %325 : vector<32x8xf32>
    %348 = arith.mulf %347, %325 : vector<32x8xf32>
    %349 = math.exp %348 : vector<32x8xf32>
    %350 = arith.mulf %345, %349 : vector<32x8xf32>
    %cst_141 = arith.constant 1.000000e+00 : f32
    %351 = vector.broadcast %cst_141 : f32 to vector<32x8xf32>
    %352 = arith.subf %351, %350 : vector<32x8xf32>
    %353 = arith.mulf %324, %352 : vector<32x8xf32>
    %cst_142 = arith.constant 1.000000e+00 : f32
    %354 = vector.broadcast %cst_142 : f32 to vector<32x8xf32>
    %355 = arith.addf %354, %353 : vector<32x8xf32>
    %356 = arith.mulf %317, %355 : vector<32x8xf32>
    %c0_143 = arith.constant 0 : index
    %c0_144 = arith.constant 0 : index
    %357 = vector.load %arg13[%c0_143, %c0_144] : memref<32x32xf32, #tpu.memory_space<vmem>>, vector<32x32xf32>
    %cst_145 = arith.constant dense<0.000000e+00> : vector<32x8xf32>
    %358 = tpu.matmul %357, %356, %cst_145 {dimension_numbers = #tpu.dot_dimension_numbers<[1], [0], [0], [1], [0, 0, 1, 1], [], []>} : vector<32x32xf32>, vector<32x8xf32>, vector<32x8xf32> -> vector<32x8xf32>
    %c0_146 = arith.constant 0 : index
    %c0_147 = arith.constant 0 : index
    %359 = vector.load %arg14[%c0_146, %c0_147] : memref<32x1xf32, #tpu.memory_space<vmem>>, vector<32x1xf32>
    %360 = vector.broadcast %359 : vector<32x1xf32> to vector<32x8xf32>
    %361 = arith.addf %358, %360 : vector<32x8xf32>
    %cst_148 = arith.constant 5.000000e-01 : f32
    %362 = vector.broadcast %cst_148 : f32 to vector<32x8xf32>
    %363 = arith.mulf %362, %361 : vector<32x8xf32>
    %cst_149 = arith.constant 0.707106769 : f32
    %364 = vector.broadcast %cst_149 : f32 to vector<32x8xf32>
    %365 = arith.mulf %361, %364 : vector<32x8xf32>
    %cst_150 = arith.constant 0.000000e+00 : f32
    %366 = vector.broadcast %cst_150 : f32 to vector<32x8xf32>
    %367 = arith.cmpf oge, %365, %366 : vector<32x8xf32>
    %cst_151 = arith.constant 1.000000e+00 : f32
    %cst_152 = arith.constant -1.000000e+00 : f32
    %368 = vector.broadcast %cst_151 : f32 to vector<32x8xf32>
    %369 = vector.broadcast %cst_152 : f32 to vector<32x8xf32>
    %370 = arith.select %367, %368, %369 : vector<32x8xi1>, vector<32x8xf32>
    %371 = math.absf %365 : vector<32x8xf32>
    %cst_153 = arith.constant 0.327591091 : f32
    %372 = vector.broadcast %cst_153 : f32 to vector<32x8xf32>
    %373 = arith.mulf %372, %371 : vector<32x8xf32>
    %cst_154 = arith.constant 1.000000e+00 : f32
    %374 = vector.broadcast %cst_154 : f32 to vector<32x8xf32>
    %375 = arith.addf %374, %373 : vector<32x8xf32>
    %cst_155 = arith.constant 1.000000e+00 : f32
    %376 = vector.broadcast %cst_155 : f32 to vector<32x8xf32>
    %377 = arith.divf %376, %375 : vector<32x8xf32>
    %cst_156 = arith.constant 1.06140542 : f32
    %378 = vector.broadcast %cst_156 : f32 to vector<32x8xf32>
    %379 = arith.mulf %378, %377 : vector<32x8xf32>
    %cst_157 = arith.constant -1.45315206 : f32
    %380 = vector.broadcast %cst_157 : f32 to vector<32x8xf32>
    %381 = arith.addf %379, %380 : vector<32x8xf32>
    %382 = arith.mulf %381, %377 : vector<32x8xf32>
    %cst_158 = arith.constant 1.42141378 : f32
    %383 = vector.broadcast %cst_158 : f32 to vector<32x8xf32>
    %384 = arith.addf %382, %383 : vector<32x8xf32>
    %385 = arith.mulf %384, %377 : vector<32x8xf32>
    %cst_159 = arith.constant -0.284496725 : f32
    %386 = vector.broadcast %cst_159 : f32 to vector<32x8xf32>
    %387 = arith.addf %385, %386 : vector<32x8xf32>
    %388 = arith.mulf %387, %377 : vector<32x8xf32>
    %cst_160 = arith.constant 0.254829586 : f32
    %389 = vector.broadcast %cst_160 : f32 to vector<32x8xf32>
    %390 = arith.addf %388, %389 : vector<32x8xf32>
    %391 = arith.mulf %390, %377 : vector<32x8xf32>
    %cst_161 = arith.constant 0.000000e+00 : f32
    %392 = vector.broadcast %cst_161 : f32 to vector<32x8xf32>
    %393 = arith.subf %392, %371 : vector<32x8xf32>
    %394 = arith.mulf %393, %371 : vector<32x8xf32>
    %395 = math.exp %394 : vector<32x8xf32>
    %396 = arith.mulf %391, %395 : vector<32x8xf32>
    %cst_162 = arith.constant 1.000000e+00 : f32
    %397 = vector.broadcast %cst_162 : f32 to vector<32x8xf32>
    %398 = arith.subf %397, %396 : vector<32x8xf32>
    %399 = arith.mulf %370, %398 : vector<32x8xf32>
    %cst_163 = arith.constant 1.000000e+00 : f32
    %400 = vector.broadcast %cst_163 : f32 to vector<32x8xf32>
    %401 = arith.addf %400, %399 : vector<32x8xf32>
    %402 = arith.mulf %363, %401 : vector<32x8xf32>
    %c0_164 = arith.constant 0 : index
    %c0_165 = arith.constant 0 : index
    %403 = vector.load %arg15[%c0_164, %c0_165] : memref<8x32xf32, #tpu.memory_space<vmem>>, vector<8x32xf32>
    %cst_166 = arith.constant dense<0.000000e+00> : vector<8x8xf32>
    %404 = tpu.matmul %403, %402, %cst_166 {dimension_numbers = #tpu.dot_dimension_numbers<[1], [0], [0], [1], [0, 0, 1, 1], [], []>} : vector<8x32xf32>, vector<32x8xf32>, vector<8x8xf32> -> vector<8x8xf32>
    %c0_167 = arith.constant 0 : index
    %c0_168 = arith.constant 0 : index
    %405 = vector.load %arg16[%c0_167, %c0_168] : memref<8x1xf32, #tpu.memory_space<vmem>>, vector<8x1xf32>
    %406 = vector.broadcast %405 : vector<8x1xf32> to vector<8x8xf32>
    %407 = arith.addf %404, %406 : vector<8x8xf32>
    %408 = vector.extract_strided_slice %407 {offsets = [0, 0], sizes = [4, 8], strides = [1, 1]} : vector<8x8xf32> to vector<4x8xf32>
    %409 = vector.extract_strided_slice %407 {offsets = [4, 0], sizes = [4, 8], strides = [1, 1]} : vector<8x8xf32> to vector<4x8xf32>
    %410 = math.tanh %409 : vector<4x8xf32>
    %cst_169 = arith.constant 4.000000e+00 : f32
    %411 = vector.broadcast %cst_169 : f32 to vector<4x8xf32>
    %412 = arith.mulf %410, %411 : vector<4x8xf32>
    %cst_170 = arith.constant 0.000000e+00 : f32
    %413 = vector.broadcast %cst_170 : f32 to vector<4x8xf32>
    %414 = arith.addf %412, %413 : vector<4x8xf32>
    %cst_171 = arith.constant 5.000000e-01 : f32
    %415 = vector.broadcast %cst_171 : f32 to vector<4x8xf32>
    %416 = arith.mulf %415, %414 : vector<4x8xf32>
    %417 = math.exp %416 : vector<4x8xf32>
    %cst_172 = arith.constant 2.500000e-01 : f32
    %418 = vector.broadcast %cst_172 : f32 to vector<4x8xf32>
    %419 = arith.mulf %418, %417 : vector<4x8xf32>
    %cst_173 = arith.constant 6.250000e-02 : f32
    %420 = vector.broadcast %cst_173 : f32 to vector<4x8xf32>
    %421 = arith.mulf %420, %408 : vector<4x8xf32>
    %422 = arith.addf %196, %421 : vector<4x8xf32>
    %423 = arith.mulf %419, %238 : vector<4x8xf32>
    %424 = arith.addf %422, %423 : vector<4x8xf32>
    %425 = arith.mulf %238, %238 : vector<4x8xf32>
    %cst_174 = arith.constant -0.934711635 : f32
    %426 = vector.broadcast %cst_174 : f32 to vector<4x8xf32>
    %427 = arith.addf %425, %426 : vector<4x8xf32>
    %428 = arith.addf %427, %414 : vector<4x8xf32>
    %cst_175 = arith.constant dense<0.000000e+00> : vector<8xf32>
    %429 = vector.multi_reduction <add>, %428, %cst_175 [0] : vector<4x8xf32> to vector<8xf32>
    %cst_176 = arith.constant -5.000000e-01 : f32
    %430 = vector.broadcast %cst_176 : f32 to vector<8xf32>
    %431 = arith.mulf %430, %429 : vector<8xf32>
    %432 = arith.index_cast %236 : i32 to index
    %433 = memref.load %arg2[%432] : memref<16xf32, #tpu.memory_space<smem>>
    %434 = arith.index_cast %236 : i32 to index
    %435 = memref.load %arg3[%434] : memref<16xf32, #tpu.memory_space<smem>>
    %436 = arith.index_cast %236 : i32 to index
    %437 = memref.load %arg4[%436] : memref<16xf32, #tpu.memory_space<smem>>
    %438 = vector.broadcast %433 : f32 to vector<4x8xf32>
    %439 = arith.mulf %424, %438 : vector<4x8xf32>
    %440 = arith.subf %196, %439 : vector<4x8xf32>
    %441 = vector.broadcast %437 : f32 to vector<4x8xf32>
    %442 = arith.mulf %440, %441 : vector<4x8xf32>
    %443 = arith.mulf %442, %442 : vector<4x8xf32>
    %cst_177 = arith.constant 1.83787704 : f32
    %444 = vector.broadcast %cst_177 : f32 to vector<4x8xf32>
    %445 = arith.addf %443, %444 : vector<4x8xf32>
    %446 = vector.broadcast %435 : f32 to vector<4x8xf32>
    %447 = arith.addf %445, %446 : vector<4x8xf32>
    %cst_178 = arith.constant dense<0.000000e+00> : vector<8xf32>
    %448 = vector.multi_reduction <add>, %447, %cst_178 [0] : vector<4x8xf32> to vector<8xf32>
    %cst_179 = arith.constant -5.000000e-01 : f32
    %449 = vector.broadcast %cst_179 : f32 to vector<8xf32>
    %450 = arith.mulf %449, %448 : vector<8xf32>
    %c1_180 = arith.constant 1 : index
    %c0_181 = arith.constant 0 : index
    %c0_182 = arith.constant 0 : index
    %451 = vector.load %arg17[%c1_180, %c0_181, %c0_182] : memref<8x4x8xf32, #tpu.memory_space<vmem>>, vector<1x4x8xf32>
    %452 = vector.shape_cast %451 : vector<1x4x8xf32> to vector<4x8xf32>
    %453 = vector.shape_cast %424 : vector<4x8xf32> to vector<1x4x8xf32>
    tpu.vector_store %arg17[%c1_180, %c0_181, %c0_182], %453 {strides = array<i32>} : memref<8x4x8xf32, #tpu.memory_space<vmem>>, vector<1x4x8xf32>,
    %c1_183 = arith.constant 1 : index
    %c0_184 = arith.constant 0 : index
    %454 = vector.load %arg18[%c1_183, %c0_184] : memref<8x8xf32, #tpu.memory_space<vmem>>, vector<1x8xf32>
    %455 = vector.shape_cast %454 : vector<1x8xf32> to vector<8xf32>
    %456 = vector.shape_cast %431 : vector<8xf32> to vector<1x8xf32>
    tpu.vector_store %arg18[%c1_183, %c0_184], %456 {strides = array<i32>} : memref<8x8xf32, #tpu.memory_space<vmem>>, vector<1x8xf32>,
    %c1_185 = arith.constant 1 : index
    %c0_186 = arith.constant 0 : index
    %457 = vector.load %arg19[%c1_185, %c0_186] : memref<8x8xf32, #tpu.memory_space<vmem>>, vector<1x8xf32>
    %458 = vector.shape_cast %457 : vector<1x8xf32> to vector<8xf32>
    %459 = vector.shape_cast %450 : vector<8xf32> to vector<1x8xf32>
    tpu.vector_store %arg19[%c1_185, %c0_186], %459 {strides = array<i32>} : memref<8x8xf32, #tpu.memory_space<vmem>>, vector<1x8xf32>,
    %c8_i32_187 = arith.constant 8 : i32
    %460 = arith.muli %arg1, %c8_i32_187 : i32
    %c2_i32 = arith.constant 2 : i32
    %461 = arith.addi %460, %c2_i32 : i32
    %c2 = arith.constant 2 : index
    %c0_188 = arith.constant 0 : index
    %c0_189 = arith.constant 0 : index
    %462 = vector.load %arg6[%c2, %c0_188, %c0_189] : memref<8x4x8xf32, #tpu.memory_space<vmem>>, vector<1x4x8xf32>
    %463 = vector.shape_cast %462 : vector<1x4x8xf32> to vector<4x8xf32>
    %c0_190 = arith.constant 0 : index
    %c0_191 = arith.constant 0 : index
    %464 = vector.load %arg9[%c0_190, %c0_191] : memref<32x1xf32, #tpu.memory_space<vmem>>, vector<32x1xf32>
    %465 = vector.extract_strided_slice %5 {offsets = [0, 0], sizes = [32, 1], strides = [1, 1]} : vector<32x4xf32> to vector<32x1xf32>
    %466 = vector.extract_strided_slice %424 {offsets = [0, 0], sizes = [1, 8], strides = [1, 1]} : vector<4x8xf32> to vector<1x8xf32>
    %467 = vector.broadcast %465 : vector<32x1xf32> to vector<32x8xf32>
    %468 = vector.broadcast %466 : vector<1x8xf32> to vector<32x8xf32>
    %469 = arith.mulf %467, %468 : vector<32x8xf32>
    %470 = vector.broadcast %464 : vector<32x1xf32> to vector<32x8xf32>
    %471 = arith.addf %470, %469 : vector<32x8xf32>
    %472 = vector.extract_strided_slice %5 {offsets = [0, 1], sizes = [32, 1], strides = [1, 1]} : vector<32x4xf32> to vector<32x1xf32>
    %473 = vector.extract_strided_slice %424 {offsets = [1, 0], sizes = [1, 8], strides = [1, 1]} : vector<4x8xf32> to vector<1x8xf32>
    %474 = vector.broadcast %472 : vector<32x1xf32> to vector<32x8xf32>
    %475 = vector.broadcast %473 : vector<1x8xf32> to vector<32x8xf32>
    %476 = arith.mulf %474, %475 : vector<32x8xf32>
    %477 = arith.addf %471, %476 : vector<32x8xf32>
    %478 = vector.extract_strided_slice %5 {offsets = [0, 2], sizes = [32, 1], strides = [1, 1]} : vector<32x4xf32> to vector<32x1xf32>
    %479 = vector.extract_strided_slice %424 {offsets = [2, 0], sizes = [1, 8], strides = [1, 1]} : vector<4x8xf32> to vector<1x8xf32>
    %480 = vector.broadcast %478 : vector<32x1xf32> to vector<32x8xf32>
    %481 = vector.broadcast %479 : vector<1x8xf32> to vector<32x8xf32>
    %482 = arith.mulf %480, %481 : vector<32x8xf32>
    %483 = arith.addf %477, %482 : vector<32x8xf32>
    %484 = vector.extract_strided_slice %5 {offsets = [0, 3], sizes = [32, 1], strides = [1, 1]} : vector<32x4xf32> to vector<32x1xf32>
    %485 = vector.extract_strided_slice %424 {offsets = [3, 0], sizes = [1, 8], strides = [1, 1]} : vector<4x8xf32> to vector<1x8xf32>
    %486 = vector.broadcast %484 : vector<32x1xf32> to vector<32x8xf32>
    %487 = vector.broadcast %485 : vector<1x8xf32> to vector<32x8xf32>
    %488 = arith.mulf %486, %487 : vector<32x8xf32>
    %489 = arith.addf %483, %488 : vector<32x8xf32>
    %cst_192 = arith.constant 5.000000e-01 : f32
    %490 = vector.broadcast %cst_192 : f32 to vector<32x8xf32>
    %491 = arith.mulf %490, %489 : vector<32x8xf32>
    %cst_193 = arith.constant 0.707106769 : f32
    %492 = vector.broadcast %cst_193 : f32 to vector<32x8xf32>
    %493 = arith.mulf %489, %492 : vector<32x8xf32>
    %cst_194 = arith.constant 0.000000e+00 : f32
    %494 = vector.broadcast %cst_194 : f32 to vector<32x8xf32>
    %495 = arith.cmpf oge, %493, %494 : vector<32x8xf32>
    %cst_195 = arith.constant 1.000000e+00 : f32
    %cst_196 = arith.constant -1.000000e+00 : f32
    %496 = vector.broadcast %cst_195 : f32 to vector<32x8xf32>
    %497 = vector.broadcast %cst_196 : f32 to vector<32x8xf32>
    %498 = arith.select %495, %496, %497 : vector<32x8xi1>, vector<32x8xf32>
    %499 = math.absf %493 : vector<32x8xf32>
    %cst_197 = arith.constant 0.327591091 : f32
    %500 = vector.broadcast %cst_197 : f32 to vector<32x8xf32>
    %501 = arith.mulf %500, %499 : vector<32x8xf32>
    %cst_198 = arith.constant 1.000000e+00 : f32
    %502 = vector.broadcast %cst_198 : f32 to vector<32x8xf32>
    %503 = arith.addf %502, %501 : vector<32x8xf32>
    %cst_199 = arith.constant 1.000000e+00 : f32
    %504 = vector.broadcast %cst_199 : f32 to vector<32x8xf32>
    %505 = arith.divf %504, %503 : vector<32x8xf32>
    %cst_200 = arith.constant 1.06140542 : f32
    %506 = vector.broadcast %cst_200 : f32 to vector<32x8xf32>
    %507 = arith.mulf %506, %505 : vector<32x8xf32>
    %cst_201 = arith.constant -1.45315206 : f32
    %508 = vector.broadcast %cst_201 : f32 to vector<32x8xf32>
    %509 = arith.addf %507, %508 : vector<32x8xf32>
    %510 = arith.mulf %509, %505 : vector<32x8xf32>
    %cst_202 = arith.constant 1.42141378 : f32
    %511 = vector.broadcast %cst_202 : f32 to vector<32x8xf32>
    %512 = arith.addf %510, %511 : vector<32x8xf32>
    %513 = arith.mulf %512, %505 : vector<32x8xf32>
    %cst_203 = arith.constant -0.284496725 : f32
    %514 = vector.broadcast %cst_203 : f32 to vector<32x8xf32>
    %515 = arith.addf %513, %514 : vector<32x8xf32>
    %516 = arith.mulf %515, %505 : vector<32x8xf32>
    %cst_204 = arith.constant 0.254829586 : f32
    %517 = vector.broadcast %cst_204 : f32 to vector<32x8xf32>
    %518 = arith.addf %516, %517 : vector<32x8xf32>
    %519 = arith.mulf %518, %505 : vector<32x8xf32>
    %cst_205 = arith.constant 0.000000e+00 : f32
    %520 = vector.broadcast %cst_205 : f32 to vector<32x8xf32>
    %521 = arith.subf %520, %499 : vector<32x8xf32>
    %522 = arith.mulf %521, %499 : vector<32x8xf32>
    %523 = math.exp %522 : vector<32x8xf32>
    %524 = arith.mulf %519, %523 : vector<32x8xf32>
    %cst_206 = arith.constant 1.000000e+00 : f32
    %525 = vector.broadcast %cst_206 : f32 to vector<32x8xf32>
    %526 = arith.subf %525, %524 : vector<32x8xf32>
    %527 = arith.mulf %498, %526 : vector<32x8xf32>
    %cst_207 = arith.constant 1.000000e+00 : f32
    %528 = vector.broadcast %cst_207 : f32 to vector<32x8xf32>
    %529 = arith.addf %528, %527 : vector<32x8xf32>
    %530 = arith.mulf %491, %529 : vector<32x8xf32>
    %c0_208 = arith.constant 0 : index
    %c0_209 = arith.constant 0 : index
    %531 = vector.load %arg10[%c0_208, %c0_209] : memref<16x32xf32, #tpu.memory_space<vmem>>, vector<16x32xf32>
    %cst_210 = arith.constant dense<0.000000e+00> : vector<16x8xf32>
    %532 = tpu.matmul %531, %530, %cst_210 {dimension_numbers = #tpu.dot_dimension_numbers<[1], [0], [0], [1], [0, 0, 1, 1], [], []>} : vector<16x32xf32>, vector<32x8xf32>, vector<16x8xf32> -> vector<16x8xf32>
    %c0_211 = arith.constant 0 : index
    %c0_212 = arith.constant 0 : index
    %533 = vector.load %arg11[%c0_211, %c0_212] : memref<16x1xf32, #tpu.memory_space<vmem>>, vector<16x1xf32>
    %534 = vector.broadcast %533 : vector<16x1xf32> to vector<16x8xf32>
    %535 = arith.addf %532, %534 : vector<16x8xf32>
    %c0_213 = arith.constant 0 : index
    %c0_214 = arith.constant 0 : index
    %536 = vector.load %arg12[%c0_213, %c0_214] : memref<32x16xf32, #tpu.memory_space<vmem>>, vector<32x16xf32>
    %cst_215 = arith.constant dense<0.000000e+00> : vector<32x8xf32>
    %537 = tpu.matmul %536, %535, %cst_215 {dimension_numbers = #tpu.dot_dimension_numbers<[1], [0], [0], [1], [0, 0, 1, 1], [], []>} : vector<32x16xf32>, vector<16x8xf32>, vector<32x8xf32> -> vector<32x8xf32>
    %538 = vector.extract_strided_slice %4 {offsets = [0, 2], sizes = [32, 1], strides = [1, 1]} : vector<32x8xf32> to vector<32x1xf32>
    %539 = vector.broadcast %538 : vector<32x1xf32> to vector<32x8xf32>
    %540 = arith.addf %537, %539 : vector<32x8xf32>
    %cst_216 = arith.constant 5.000000e-01 : f32
    %541 = vector.broadcast %cst_216 : f32 to vector<32x8xf32>
    %542 = arith.mulf %541, %540 : vector<32x8xf32>
    %cst_217 = arith.constant 0.707106769 : f32
    %543 = vector.broadcast %cst_217 : f32 to vector<32x8xf32>
    %544 = arith.mulf %540, %543 : vector<32x8xf32>
    %cst_218 = arith.constant 0.000000e+00 : f32
    %545 = vector.broadcast %cst_218 : f32 to vector<32x8xf32>
    %546 = arith.cmpf oge, %544, %545 : vector<32x8xf32>
    %cst_219 = arith.constant 1.000000e+00 : f32
    %cst_220 = arith.constant -1.000000e+00 : f32
    %547 = vector.broadcast %cst_219 : f32 to vector<32x8xf32>
    %548 = vector.broadcast %cst_220 : f32 to vector<32x8xf32>
    %549 = arith.select %546, %547, %548 : vector<32x8xi1>, vector<32x8xf32>
    %550 = math.absf %544 : vector<32x8xf32>
    %cst_221 = arith.constant 0.327591091 : f32
    %551 = vector.broadcast %cst_221 : f32 to vector<32x8xf32>
    %552 = arith.mulf %551, %550 : vector<32x8xf32>
    %cst_222 = arith.constant 1.000000e+00 : f32
    %553 = vector.broadcast %cst_222 : f32 to vector<32x8xf32>
    %554 = arith.addf %553, %552 : vector<32x8xf32>
    %cst_223 = arith.constant 1.000000e+00 : f32
    %555 = vector.broadcast %cst_223 : f32 to vector<32x8xf32>
    %556 = arith.divf %555, %554 : vector<32x8xf32>
    %cst_224 = arith.constant 1.06140542 : f32
    %557 = vector.broadcast %cst_224 : f32 to vector<32x8xf32>
    %558 = arith.mulf %557, %556 : vector<32x8xf32>
    %cst_225 = arith.constant -1.45315206 : f32
    %559 = vector.broadcast %cst_225 : f32 to vector<32x8xf32>
    %560 = arith.addf %558, %559 : vector<32x8xf32>
    %561 = arith.mulf %560, %556 : vector<32x8xf32>
    %cst_226 = arith.constant 1.42141378 : f32
    %562 = vector.broadcast %cst_226 : f32 to vector<32x8xf32>
    %563 = arith.addf %561, %562 : vector<32x8xf32>
    %564 = arith.mulf %563, %556 : vector<32x8xf32>
    %cst_227 = arith.constant -0.284496725 : f32
    %565 = vector.broadcast %cst_227 : f32 to vector<32x8xf32>
    %566 = arith.addf %564, %565 : vector<32x8xf32>
    %567 = arith.mulf %566, %556 : vector<32x8xf32>
    %cst_228 = arith.constant 0.254829586 : f32
    %568 = vector.broadcast %cst_228 : f32 to vector<32x8xf32>
    %569 = arith.addf %567, %568 : vector<32x8xf32>
    %570 = arith.mulf %569, %556 : vector<32x8xf32>
    %cst_229 = arith.constant 0.000000e+00 : f32
    %571 = vector.broadcast %cst_229 : f32 to vector<32x8xf32>
    %572 = arith.subf %571, %550 : vector<32x8xf32>
    %573 = arith.mulf %572, %550 : vector<32x8xf32>
    %574 = math.exp %573 : vector<32x8xf32>
    %575 = arith.mulf %570, %574 : vector<32x8xf32>
    %cst_230 = arith.constant 1.000000e+00 : f32
    %576 = vector.broadcast %cst_230 : f32 to vector<32x8xf32>
    %577 = arith.subf %576, %575 : vector<32x8xf32>
    %578 = arith.mulf %549, %577 : vector<32x8xf32>
    %cst_231 = arith.constant 1.000000e+00 : f32
    %579 = vector.broadcast %cst_231 : f32 to vector<32x8xf32>
    %580 = arith.addf %579, %578 : vector<32x8xf32>
    %581 = arith.mulf %542, %580 : vector<32x8xf32>
    %c0_232 = arith.constant 0 : index
    %c0_233 = arith.constant 0 : index
    %582 = vector.load %arg13[%c0_232, %c0_233] : memref<32x32xf32, #tpu.memory_space<vmem>>, vector<32x32xf32>
    %cst_234 = arith.constant dense<0.000000e+00> : vector<32x8xf32>
    %583 = tpu.matmul %582, %581, %cst_234 {dimension_numbers = #tpu.dot_dimension_numbers<[1], [0], [0], [1], [0, 0, 1, 1], [], []>} : vector<32x32xf32>, vector<32x8xf32>, vector<32x8xf32> -> vector<32x8xf32>
    %c0_235 = arith.constant 0 : index
    %c0_236 = arith.constant 0 : index
    %584 = vector.load %arg14[%c0_235, %c0_236] : memref<32x1xf32, #tpu.memory_space<vmem>>, vector<32x1xf32>
    %585 = vector.broadcast %584 : vector<32x1xf32> to vector<32x8xf32>
    %586 = arith.addf %583, %585 : vector<32x8xf32>
    %cst_237 = arith.constant 5.000000e-01 : f32
    %587 = vector.broadcast %cst_237 : f32 to vector<32x8xf32>
    %588 = arith.mulf %587, %586 : vector<32x8xf32>
    %cst_238 = arith.constant 0.707106769 : f32
    %589 = vector.broadcast %cst_238 : f32 to vector<32x8xf32>
    %590 = arith.mulf %586, %589 : vector<32x8xf32>
    %cst_239 = arith.constant 0.000000e+00 : f32
    %591 = vector.broadcast %cst_239 : f32 to vector<32x8xf32>
    %592 = arith.cmpf oge, %590, %591 : vector<32x8xf32>
    %cst_240 = arith.constant 1.000000e+00 : f32
    %cst_241 = arith.constant -1.000000e+00 : f32
    %593 = vector.broadcast %cst_240 : f32 to vector<32x8xf32>
    %594 = vector.broadcast %cst_241 : f32 to vector<32x8xf32>
    %595 = arith.select %592, %593, %594 : vector<32x8xi1>, vector<32x8xf32>
    %596 = math.absf %590 : vector<32x8xf32>
    %cst_242 = arith.constant 0.327591091 : f32
    %597 = vector.broadcast %cst_242 : f32 to vector<32x8xf32>
    %598 = arith.mulf %597, %596 : vector<32x8xf32>
    %cst_243 = arith.constant 1.000000e+00 : f32
    %599 = vector.broadcast %cst_243 : f32 to vector<32x8xf32>
    %600 = arith.addf %599, %598 : vector<32x8xf32>
    %cst_244 = arith.constant 1.000000e+00 : f32
    %601 = vector.broadcast %cst_244 : f32 to vector<32x8xf32>
    %602 = arith.divf %601, %600 : vector<32x8xf32>
    %cst_245 = arith.constant 1.06140542 : f32
    %603 = vector.broadcast %cst_245 : f32 to vector<32x8xf32>
    %604 = arith.mulf %603, %602 : vector<32x8xf32>
    %cst_246 = arith.constant -1.45315206 : f32
    %605 = vector.broadcast %cst_246 : f32 to vector<32x8xf32>
    %606 = arith.addf %604, %605 : vector<32x8xf32>
    %607 = arith.mulf %606, %602 : vector<32x8xf32>
    %cst_247 = arith.constant 1.42141378 : f32
    %608 = vector.broadcast %cst_247 : f32 to vector<32x8xf32>
    %609 = arith.addf %607, %608 : vector<32x8xf32>
    %610 = arith.mulf %609, %602 : vector<32x8xf32>
    %cst_248 = arith.constant -0.284496725 : f32
    %611 = vector.broadcast %cst_248 : f32 to vector<32x8xf32>
    %612 = arith.addf %610, %611 : vector<32x8xf32>
    %613 = arith.mulf %612, %602 : vector<32x8xf32>
    %cst_249 = arith.constant 0.254829586 : f32
    %614 = vector.broadcast %cst_249 : f32 to vector<32x8xf32>
    %615 = arith.addf %613, %614 : vector<32x8xf32>
    %616 = arith.mulf %615, %602 : vector<32x8xf32>
    %cst_250 = arith.constant 0.000000e+00 : f32
    %617 = vector.broadcast %cst_250 : f32 to vector<32x8xf32>
    %618 = arith.subf %617, %596 : vector<32x8xf32>
    %619 = arith.mulf %618, %596 : vector<32x8xf32>
    %620 = math.exp %619 : vector<32x8xf32>
    %621 = arith.mulf %616, %620 : vector<32x8xf32>
    %cst_251 = arith.constant 1.000000e+00 : f32
    %622 = vector.broadcast %cst_251 : f32 to vector<32x8xf32>
    %623 = arith.subf %622, %621 : vector<32x8xf32>
    %624 = arith.mulf %595, %623 : vector<32x8xf32>
    %cst_252 = arith.constant 1.000000e+00 : f32
    %625 = vector.broadcast %cst_252 : f32 to vector<32x8xf32>
    %626 = arith.addf %625, %624 : vector<32x8xf32>
    %627 = arith.mulf %588, %626 : vector<32x8xf32>
    %c0_253 = arith.constant 0 : index
    %c0_254 = arith.constant 0 : index
    %628 = vector.load %arg15[%c0_253, %c0_254] : memref<8x32xf32, #tpu.memory_space<vmem>>, vector<8x32xf32>
    %cst_255 = arith.constant dense<0.000000e+00> : vector<8x8xf32>
    %629 = tpu.matmul %628, %627, %cst_255 {dimension_numbers = #tpu.dot_dimension_numbers<[1], [0], [0], [1], [0, 0, 1, 1], [], []>} : vector<8x32xf32>, vector<32x8xf32>, vector<8x8xf32> -> vector<8x8xf32>
    %c0_256 = arith.constant 0 : index
    %c0_257 = arith.constant 0 : index
    %630 = vector.load %arg16[%c0_256, %c0_257] : memref<8x1xf32, #tpu.memory_space<vmem>>, vector<8x1xf32>
    %631 = vector.broadcast %630 : vector<8x1xf32> to vector<8x8xf32>
    %632 = arith.addf %629, %631 : vector<8x8xf32>
    %633 = vector.extract_strided_slice %632 {offsets = [0, 0], sizes = [4, 8], strides = [1, 1]} : vector<8x8xf32> to vector<4x8xf32>
    %634 = vector.extract_strided_slice %632 {offsets = [4, 0], sizes = [4, 8], strides = [1, 1]} : vector<8x8xf32> to vector<4x8xf32>
    %635 = math.tanh %634 : vector<4x8xf32>
    %cst_258 = arith.constant 4.000000e+00 : f32
    %636 = vector.broadcast %cst_258 : f32 to vector<4x8xf32>
    %637 = arith.mulf %635, %636 : vector<4x8xf32>
    %cst_259 = arith.constant 0.000000e+00 : f32
    %638 = vector.broadcast %cst_259 : f32 to vector<4x8xf32>
    %639 = arith.addf %637, %638 : vector<4x8xf32>
    %cst_260 = arith.constant 5.000000e-01 : f32
    %640 = vector.broadcast %cst_260 : f32 to vector<4x8xf32>
    %641 = arith.mulf %640, %639 : vector<4x8xf32>
    %642 = math.exp %641 : vector<4x8xf32>
    %cst_261 = arith.constant 2.500000e-01 : f32
    %643 = vector.broadcast %cst_261 : f32 to vector<4x8xf32>
    %644 = arith.mulf %643, %642 : vector<4x8xf32>
    %cst_262 = arith.constant 6.250000e-02 : f32
    %645 = vector.broadcast %cst_262 : f32 to vector<4x8xf32>
    %646 = arith.mulf %645, %633 : vector<4x8xf32>
    %647 = arith.addf %424, %646 : vector<4x8xf32>
    %648 = arith.mulf %644, %463 : vector<4x8xf32>
    %649 = arith.addf %647, %648 : vector<4x8xf32>
    %650 = arith.mulf %463, %463 : vector<4x8xf32>
    %cst_263 = arith.constant -0.934711635 : f32
    %651 = vector.broadcast %cst_263 : f32 to vector<4x8xf32>
    %652 = arith.addf %650, %651 : vector<4x8xf32>
    %653 = arith.addf %652, %639 : vector<4x8xf32>
    %cst_264 = arith.constant dense<0.000000e+00> : vector<8xf32>
    %654 = vector.multi_reduction <add>, %653, %cst_264 [0] : vector<4x8xf32> to vector<8xf32>
    %cst_265 = arith.constant -5.000000e-01 : f32
    %655 = vector.broadcast %cst_265 : f32 to vector<8xf32>
    %656 = arith.mulf %655, %654 : vector<8xf32>
    %657 = arith.index_cast %461 : i32 to index
    %658 = memref.load %arg2[%657] : memref<16xf32, #tpu.memory_space<smem>>
    %659 = arith.index_cast %461 : i32 to index
    %660 = memref.load %arg3[%659] : memref<16xf32, #tpu.memory_space<smem>>
    %661 = arith.index_cast %461 : i32 to index
    %662 = memref.load %arg4[%661] : memref<16xf32, #tpu.memory_space<smem>>
    %663 = vector.broadcast %658 : f32 to vector<4x8xf32>
    %664 = arith.mulf %649, %663 : vector<4x8xf32>
    %665 = arith.subf %424, %664 : vector<4x8xf32>
    %666 = vector.broadcast %662 : f32 to vector<4x8xf32>
    %667 = arith.mulf %665, %666 : vector<4x8xf32>
    %668 = arith.mulf %667, %667 : vector<4x8xf32>
    %cst_266 = arith.constant 1.83787704 : f32
    %669 = vector.broadcast %cst_266 : f32 to vector<4x8xf32>
    %670 = arith.addf %668, %669 : vector<4x8xf32>
    %671 = vector.broadcast %660 : f32 to vector<4x8xf32>
    %672 = arith.addf %670, %671 : vector<4x8xf32>
    %cst_267 = arith.constant dense<0.000000e+00> : vector<8xf32>
    %673 = vector.multi_reduction <add>, %672, %cst_267 [0] : vector<4x8xf32> to vector<8xf32>
    %cst_268 = arith.constant -5.000000e-01 : f32
    %674 = vector.broadcast %cst_268 : f32 to vector<8xf32>
    %675 = arith.mulf %674, %673 : vector<8xf32>
    %c2_269 = arith.constant 2 : index
    %c0_270 = arith.constant 0 : index
    %c0_271 = arith.constant 0 : index
    %676 = vector.load %arg17[%c2_269, %c0_270, %c0_271] : memref<8x4x8xf32, #tpu.memory_space<vmem>>, vector<1x4x8xf32>
    %677 = vector.shape_cast %676 : vector<1x4x8xf32> to vector<4x8xf32>
    %678 = vector.shape_cast %649 : vector<4x8xf32> to vector<1x4x8xf32>
    tpu.vector_store %arg17[%c2_269, %c0_270, %c0_271], %678 {strides = array<i32>} : memref<8x4x8xf32, #tpu.memory_space<vmem>>, vector<1x4x8xf32>,
    %c2_272 = arith.constant 2 : index
    %c0_273 = arith.constant 0 : index
    %679 = vector.load %arg18[%c2_272, %c0_273] : memref<8x8xf32, #tpu.memory_space<vmem>>, vector<1x8xf32>
    %680 = vector.shape_cast %679 : vector<1x8xf32> to vector<8xf32>
    %681 = vector.shape_cast %656 : vector<8xf32> to vector<1x8xf32>
    tpu.vector_store %arg18[%c2_272, %c0_273], %681 {strides = array<i32>} : memref<8x8xf32, #tpu.memory_space<vmem>>, vector<1x8xf32>,
    %c2_274 = arith.constant 2 : index
    %c0_275 = arith.constant 0 : index
    %682 = vector.load %arg19[%c2_274, %c0_275] : memref<8x8xf32, #tpu.memory_space<vmem>>, vector<1x8xf32>
    %683 = vector.shape_cast %682 : vector<1x8xf32> to vector<8xf32>
    %684 = vector.shape_cast %675 : vector<8xf32> to vector<1x8xf32>
    tpu.vector_store %arg19[%c2_274, %c0_275], %684 {strides = array<i32>} : memref<8x8xf32, #tpu.memory_space<vmem>>, vector<1x8xf32>,
    %c8_i32_276 = arith.constant 8 : i32
    %685 = arith.muli %arg1, %c8_i32_276 : i32
    %c3_i32 = arith.constant 3 : i32
    %686 = arith.addi %685, %c3_i32 : i32
    %c3 = arith.constant 3 : index
    %c0_277 = arith.constant 0 : index
    %c0_278 = arith.constant 0 : index
    %687 = vector.load %arg6[%c3, %c0_277, %c0_278] : memref<8x4x8xf32, #tpu.memory_space<vmem>>, vector<1x4x8xf32>
    %688 = vector.shape_cast %687 : vector<1x4x8xf32> to vector<4x8xf32>
    %c0_279 = arith.constant 0 : index
    %c0_280 = arith.constant 0 : index
    %689 = vector.load %arg9[%c0_279, %c0_280] : memref<32x1xf32, #tpu.memory_space<vmem>>, vector<32x1xf32>
    %690 = vector.extract_strided_slice %5 {offsets = [0, 0], sizes = [32, 1], strides = [1, 1]} : vector<32x4xf32> to vector<32x1xf32>
    %691 = vector.extract_strided_slice %649 {offsets = [0, 0], sizes = [1, 8], strides = [1, 1]} : vector<4x8xf32> to vector<1x8xf32>
    %692 = vector.broadcast %690 : vector<32x1xf32> to vector<32x8xf32>
    %693 = vector.broadcast %691 : vector<1x8xf32> to vector<32x8xf32>
    %694 = arith.mulf %692, %693 : vector<32x8xf32>
    %695 = vector.broadcast %689 : vector<32x1xf32> to vector<32x8xf32>
    %696 = arith.addf %695, %694 : vector<32x8xf32>
    %697 = vector.extract_strided_slice %5 {offsets = [0, 1], sizes = [32, 1], strides = [1, 1]} : vector<32x4xf32> to vector<32x1xf32>
    %698 = vector.extract_strided_slice %649 {offsets = [1, 0], sizes = [1, 8], strides = [1, 1]} : vector<4x8xf32> to vector<1x8xf32>
    %699 = vector.broadcast %697 : vector<32x1xf32> to vector<32x8xf32>
    %700 = vector.broadcast %698 : vector<1x8xf32> to vector<32x8xf32>
    %701 = arith.mulf %699, %700 : vector<32x8xf32>
    %702 = arith.addf %696, %701 : vector<32x8xf32>
    %703 = vector.extract_strided_slice %5 {offsets = [0, 2], sizes = [32, 1], strides = [1, 1]} : vector<32x4xf32> to vector<32x1xf32>
    %704 = vector.extract_strided_slice %649 {offsets = [2, 0], sizes = [1, 8], strides = [1, 1]} : vector<4x8xf32> to vector<1x8xf32>
    %705 = vector.broadcast %703 : vector<32x1xf32> to vector<32x8xf32>
    %706 = vector.broadcast %704 : vector<1x8xf32> to vector<32x8xf32>
    %707 = arith.mulf %705, %706 : vector<32x8xf32>
    %708 = arith.addf %702, %707 : vector<32x8xf32>
    %709 = vector.extract_strided_slice %5 {offsets = [0, 3], sizes = [32, 1], strides = [1, 1]} : vector<32x4xf32> to vector<32x1xf32>
    %710 = vector.extract_strided_slice %649 {offsets = [3, 0], sizes = [1, 8], strides = [1, 1]} : vector<4x8xf32> to vector<1x8xf32>
    %711 = vector.broadcast %709 : vector<32x1xf32> to vector<32x8xf32>
    %712 = vector.broadcast %710 : vector<1x8xf32> to vector<32x8xf32>
    %713 = arith.mulf %711, %712 : vector<32x8xf32>
    %714 = arith.addf %708, %713 : vector<32x8xf32>
    %cst_281 = arith.constant 5.000000e-01 : f32
    %715 = vector.broadcast %cst_281 : f32 to vector<32x8xf32>
    %716 = arith.mulf %715, %714 : vector<32x8xf32>
    %cst_282 = arith.constant 0.707106769 : f32
    %717 = vector.broadcast %cst_282 : f32 to vector<32x8xf32>
    %718 = arith.mulf %714, %717 : vector<32x8xf32>
    %cst_283 = arith.constant 0.000000e+00 : f32
    %719 = vector.broadcast %cst_283 : f32 to vector<32x8xf32>
    %720 = arith.cmpf oge, %718, %719 : vector<32x8xf32>
    %cst_284 = arith.constant 1.000000e+00 : f32
    %cst_285 = arith.constant -1.000000e+00 : f32
    %721 = vector.broadcast %cst_284 : f32 to vector<32x8xf32>
    %722 = vector.broadcast %cst_285 : f32 to vector<32x8xf32>
    %723 = arith.select %720, %721, %722 : vector<32x8xi1>, vector<32x8xf32>
    %724 = math.absf %718 : vector<32x8xf32>
    %cst_286 = arith.constant 0.327591091 : f32
    %725 = vector.broadcast %cst_286 : f32 to vector<32x8xf32>
    %726 = arith.mulf %725, %724 : vector<32x8xf32>
    %cst_287 = arith.constant 1.000000e+00 : f32
    %727 = vector.broadcast %cst_287 : f32 to vector<32x8xf32>
    %728 = arith.addf %727, %726 : vector<32x8xf32>
    %cst_288 = arith.constant 1.000000e+00 : f32
    %729 = vector.broadcast %cst_288 : f32 to vector<32x8xf32>
    %730 = arith.divf %729, %728 : vector<32x8xf32>
    %cst_289 = arith.constant 1.06140542 : f32
    %731 = vector.broadcast %cst_289 : f32 to vector<32x8xf32>
    %732 = arith.mulf %731, %730 : vector<32x8xf32>
    %cst_290 = arith.constant -1.45315206 : f32
    %733 = vector.broadcast %cst_290 : f32 to vector<32x8xf32>
    %734 = arith.addf %732, %733 : vector<32x8xf32>
    %735 = arith.mulf %734, %730 : vector<32x8xf32>
    %cst_291 = arith.constant 1.42141378 : f32
    %736 = vector.broadcast %cst_291 : f32 to vector<32x8xf32>
    %737 = arith.addf %735, %736 : vector<32x8xf32>
    %738 = arith.mulf %737, %730 : vector<32x8xf32>
    %cst_292 = arith.constant -0.284496725 : f32
    %739 = vector.broadcast %cst_292 : f32 to vector<32x8xf32>
    %740 = arith.addf %738, %739 : vector<32x8xf32>
    %741 = arith.mulf %740, %730 : vector<32x8xf32>
    %cst_293 = arith.constant 0.254829586 : f32
    %742 = vector.broadcast %cst_293 : f32 to vector<32x8xf32>
    %743 = arith.addf %741, %742 : vector<32x8xf32>
    %744 = arith.mulf %743, %730 : vector<32x8xf32>
    %cst_294 = arith.constant 0.000000e+00 : f32
    %745 = vector.broadcast %cst_294 : f32 to vector<32x8xf32>
    %746 = arith.subf %745, %724 : vector<32x8xf32>
    %747 = arith.mulf %746, %724 : vector<32x8xf32>
    %748 = math.exp %747 : vector<32x8xf32>
    %749 = arith.mulf %744, %748 : vector<32x8xf32>
    %cst_295 = arith.constant 1.000000e+00 : f32
    %750 = vector.broadcast %cst_295 : f32 to vector<32x8xf32>
    %751 = arith.subf %750, %749 : vector<32x8xf32>
    %752 = arith.mulf %723, %751 : vector<32x8xf32>
    %cst_296 = arith.constant 1.000000e+00 : f32
    %753 = vector.broadcast %cst_296 : f32 to vector<32x8xf32>
    %754 = arith.addf %753, %752 : vector<32x8xf32>
    %755 = arith.mulf %716, %754 : vector<32x8xf32>
    %c0_297 = arith.constant 0 : index
    %c0_298 = arith.constant 0 : index
    %756 = vector.load %arg10[%c0_297, %c0_298] : memref<16x32xf32, #tpu.memory_space<vmem>>, vector<16x32xf32>
    %cst_299 = arith.constant dense<0.000000e+00> : vector<16x8xf32>
    %757 = tpu.matmul %756, %755, %cst_299 {dimension_numbers = #tpu.dot_dimension_numbers<[1], [0], [0], [1], [0, 0, 1, 1], [], []>} : vector<16x32xf32>, vector<32x8xf32>, vector<16x8xf32> -> vector<16x8xf32>
    %c0_300 = arith.constant 0 : index
    %c0_301 = arith.constant 0 : index
    %758 = vector.load %arg11[%c0_300, %c0_301] : memref<16x1xf32, #tpu.memory_space<vmem>>, vector<16x1xf32>
    %759 = vector.broadcast %758 : vector<16x1xf32> to vector<16x8xf32>
    %760 = arith.addf %757, %759 : vector<16x8xf32>
    %c0_302 = arith.constant 0 : index
    %c0_303 = arith.constant 0 : index
    %761 = vector.load %arg12[%c0_302, %c0_303] : memref<32x16xf32, #tpu.memory_space<vmem>>, vector<32x16xf32>
    %cst_304 = arith.constant dense<0.000000e+00> : vector<32x8xf32>
    %762 = tpu.matmul %761, %760, %cst_304 {dimension_numbers = #tpu.dot_dimension_numbers<[1], [0], [0], [1], [0, 0, 1, 1], [], []>} : vector<32x16xf32>, vector<16x8xf32>, vector<32x8xf32> -> vector<32x8xf32>
    %763 = vector.extract_strided_slice %4 {offsets = [0, 3], sizes = [32, 1], strides = [1, 1]} : vector<32x8xf32> to vector<32x1xf32>
    %764 = vector.broadcast %763 : vector<32x1xf32> to vector<32x8xf32>
    %765 = arith.addf %762, %764 : vector<32x8xf32>
    %cst_305 = arith.constant 5.000000e-01 : f32
    %766 = vector.broadcast %cst_305 : f32 to vector<32x8xf32>
    %767 = arith.mulf %766, %765 : vector<32x8xf32>
    %cst_306 = arith.constant 0.707106769 : f32
    %768 = vector.broadcast %cst_306 : f32 to vector<32x8xf32>
    %769 = arith.mulf %765, %768 : vector<32x8xf32>
    %cst_307 = arith.constant 0.000000e+00 : f32
    %770 = vector.broadcast %cst_307 : f32 to vector<32x8xf32>
    %771 = arith.cmpf oge, %769, %770 : vector<32x8xf32>
    %cst_308 = arith.constant 1.000000e+00 : f32
    %cst_309 = arith.constant -1.000000e+00 : f32
    %772 = vector.broadcast %cst_308 : f32 to vector<32x8xf32>
    %773 = vector.broadcast %cst_309 : f32 to vector<32x8xf32>
    %774 = arith.select %771, %772, %773 : vector<32x8xi1>, vector<32x8xf32>
    %775 = math.absf %769 : vector<32x8xf32>
    %cst_310 = arith.constant 0.327591091 : f32
    %776 = vector.broadcast %cst_310 : f32 to vector<32x8xf32>
    %777 = arith.mulf %776, %775 : vector<32x8xf32>
    %cst_311 = arith.constant 1.000000e+00 : f32
    %778 = vector.broadcast %cst_311 : f32 to vector<32x8xf32>
    %779 = arith.addf %778, %777 : vector<32x8xf32>
    %cst_312 = arith.constant 1.000000e+00 : f32
    %780 = vector.broadcast %cst_312 : f32 to vector<32x8xf32>
    %781 = arith.divf %780, %779 : vector<32x8xf32>
    %cst_313 = arith.constant 1.06140542 : f32
    %782 = vector.broadcast %cst_313 : f32 to vector<32x8xf32>
    %783 = arith.mulf %782, %781 : vector<32x8xf32>
    %cst_314 = arith.constant -1.45315206 : f32
    %784 = vector.broadcast %cst_314 : f32 to vector<32x8xf32>
    %785 = arith.addf %783, %784 : vector<32x8xf32>
    %786 = arith.mulf %785, %781 : vector<32x8xf32>
    %cst_315 = arith.constant 1.42141378 : f32
    %787 = vector.broadcast %cst_315 : f32 to vector<32x8xf32>
    %788 = arith.addf %786, %787 : vector<32x8xf32>
    %789 = arith.mulf %788, %781 : vector<32x8xf32>
    %cst_316 = arith.constant -0.284496725 : f32
    %790 = vector.broadcast %cst_316 : f32 to vector<32x8xf32>
    %791 = arith.addf %789, %790 : vector<32x8xf32>
    %792 = arith.mulf %791, %781 : vector<32x8xf32>
    %cst_317 = arith.constant 0.254829586 : f32
    %793 = vector.broadcast %cst_317 : f32 to vector<32x8xf32>
    %794 = arith.addf %792, %793 : vector<32x8xf32>
    %795 = arith.mulf %794, %781 : vector<32x8xf32>
    %cst_318 = arith.constant 0.000000e+00 : f32
    %796 = vector.broadcast %cst_318 : f32 to vector<32x8xf32>
    %797 = arith.subf %796, %775 : vector<32x8xf32>
    %798 = arith.mulf %797, %775 : vector<32x8xf32>
    %799 = math.exp %798 : vector<32x8xf32>
    %800 = arith.mulf %795, %799 : vector<32x8xf32>
    %cst_319 = arith.constant 1.000000e+00 : f32
    %801 = vector.broadcast %cst_319 : f32 to vector<32x8xf32>
    %802 = arith.subf %801, %800 : vector<32x8xf32>
    %803 = arith.mulf %774, %802 : vector<32x8xf32>
    %cst_320 = arith.constant 1.000000e+00 : f32
    %804 = vector.broadcast %cst_320 : f32 to vector<32x8xf32>
    %805 = arith.addf %804, %803 : vector<32x8xf32>
    %806 = arith.mulf %767, %805 : vector<32x8xf32>
    %c0_321 = arith.constant 0 : index
    %c0_322 = arith.constant 0 : index
    %807 = vector.load %arg13[%c0_321, %c0_322] : memref<32x32xf32, #tpu.memory_space<vmem>>, vector<32x32xf32>
    %cst_323 = arith.constant dense<0.000000e+00> : vector<32x8xf32>
    %808 = tpu.matmul %807, %806, %cst_323 {dimension_numbers = #tpu.dot_dimension_numbers<[1], [0], [0], [1], [0, 0, 1, 1], [], []>} : vector<32x32xf32>, vector<32x8xf32>, vector<32x8xf32> -> vector<32x8xf32>
    %c0_324 = arith.constant 0 : index
    %c0_325 = arith.constant 0 : index
    %809 = vector.load %arg14[%c0_324, %c0_325] : memref<32x1xf32, #tpu.memory_space<vmem>>, vector<32x1xf32>
    %810 = vector.broadcast %809 : vector<32x1xf32> to vector<32x8xf32>
    %811 = arith.addf %808, %810 : vector<32x8xf32>
    %cst_326 = arith.constant 5.000000e-01 : f32
    %812 = vector.broadcast %cst_326 : f32 to vector<32x8xf32>
    %813 = arith.mulf %812, %811 : vector<32x8xf32>
    %cst_327 = arith.constant 0.707106769 : f32
    %814 = vector.broadcast %cst_327 : f32 to vector<32x8xf32>
    %815 = arith.mulf %811, %814 : vector<32x8xf32>
    %cst_328 = arith.constant 0.000000e+00 : f32
    %816 = vector.broadcast %cst_328 : f32 to vector<32x8xf32>
    %817 = arith.cmpf oge, %815, %816 : vector<32x8xf32>
    %cst_329 = arith.constant 1.000000e+00 : f32
    %cst_330 = arith.constant -1.000000e+00 : f32
    %818 = vector.broadcast %cst_329 : f32 to vector<32x8xf32>
    %819 = vector.broadcast %cst_330 : f32 to vector<32x8xf32>
    %820 = arith.select %817, %818, %819 : vector<32x8xi1>, vector<32x8xf32>
    %821 = math.absf %815 : vector<32x8xf32>
    %cst_331 = arith.constant 0.327591091 : f32
    %822 = vector.broadcast %cst_331 : f32 to vector<32x8xf32>
    %823 = arith.mulf %822, %821 : vector<32x8xf32>
    %cst_332 = arith.constant 1.000000e+00 : f32
    %824 = vector.broadcast %cst_332 : f32 to vector<32x8xf32>
    %825 = arith.addf %824, %823 : vector<32x8xf32>
    %cst_333 = arith.constant 1.000000e+00 : f32
    %826 = vector.broadcast %cst_333 : f32 to vector<32x8xf32>
    %827 = arith.divf %826, %825 : vector<32x8xf32>
    %cst_334 = arith.constant 1.06140542 : f32
    %828 = vector.broadcast %cst_334 : f32 to vector<32x8xf32>
    %829 = arith.mulf %828, %827 : vector<32x8xf32>
    %cst_335 = arith.constant -1.45315206 : f32
    %830 = vector.broadcast %cst_335 : f32 to vector<32x8xf32>
    %831 = arith.addf %829, %830 : vector<32x8xf32>
    %832 = arith.mulf %831, %827 : vector<32x8xf32>
    %cst_336 = arith.constant 1.42141378 : f32
    %833 = vector.broadcast %cst_336 : f32 to vector<32x8xf32>
    %834 = arith.addf %832, %833 : vector<32x8xf32>
    %835 = arith.mulf %834, %827 : vector<32x8xf32>
    %cst_337 = arith.constant -0.284496725 : f32
    %836 = vector.broadcast %cst_337 : f32 to vector<32x8xf32>
    %837 = arith.addf %835, %836 : vector<32x8xf32>
    %838 = arith.mulf %837, %827 : vector<32x8xf32>
    %cst_338 = arith.constant 0.254829586 : f32
    %839 = vector.broadcast %cst_338 : f32 to vector<32x8xf32>
    %840 = arith.addf %838, %839 : vector<32x8xf32>
    %841 = arith.mulf %840, %827 : vector<32x8xf32>
    %cst_339 = arith.constant 0.000000e+00 : f32
    %842 = vector.broadcast %cst_339 : f32 to vector<32x8xf32>
    %843 = arith.subf %842, %821 : vector<32x8xf32>
    %844 = arith.mulf %843, %821 : vector<32x8xf32>
    %845 = math.exp %844 : vector<32x8xf32>
    %846 = arith.mulf %841, %845 : vector<32x8xf32>
    %cst_340 = arith.constant 1.000000e+00 : f32
    %847 = vector.broadcast %cst_340 : f32 to vector<32x8xf32>
    %848 = arith.subf %847, %846 : vector<32x8xf32>
    %849 = arith.mulf %820, %848 : vector<32x8xf32>
    %cst_341 = arith.constant 1.000000e+00 : f32
    %850 = vector.broadcast %cst_341 : f32 to vector<32x8xf32>
    %851 = arith.addf %850, %849 : vector<32x8xf32>
    %852 = arith.mulf %813, %851 : vector<32x8xf32>
    %c0_342 = arith.constant 0 : index
    %c0_343 = arith.constant 0 : index
    %853 = vector.load %arg15[%c0_342, %c0_343] : memref<8x32xf32, #tpu.memory_space<vmem>>, vector<8x32xf32>
    %cst_344 = arith.constant dense<0.000000e+00> : vector<8x8xf32>
    %854 = tpu.matmul %853, %852, %cst_344 {dimension_numbers = #tpu.dot_dimension_numbers<[1], [0], [0], [1], [0, 0, 1, 1], [], []>} : vector<8x32xf32>, vector<32x8xf32>, vector<8x8xf32> -> vector<8x8xf32>
    %c0_345 = arith.constant 0 : index
    %c0_346 = arith.constant 0 : index
    %855 = vector.load %arg16[%c0_345, %c0_346] : memref<8x1xf32, #tpu.memory_space<vmem>>, vector<8x1xf32>
    %856 = vector.broadcast %855 : vector<8x1xf32> to vector<8x8xf32>
    %857 = arith.addf %854, %856 : vector<8x8xf32>
    %858 = vector.extract_strided_slice %857 {offsets = [0, 0], sizes = [4, 8], strides = [1, 1]} : vector<8x8xf32> to vector<4x8xf32>
    %859 = vector.extract_strided_slice %857 {offsets = [4, 0], sizes = [4, 8], strides = [1, 1]} : vector<8x8xf32> to vector<4x8xf32>
    %860 = math.tanh %859 : vector<4x8xf32>
    %cst_347 = arith.constant 4.000000e+00 : f32
    %861 = vector.broadcast %cst_347 : f32 to vector<4x8xf32>
    %862 = arith.mulf %860, %861 : vector<4x8xf32>
    %cst_348 = arith.constant 0.000000e+00 : f32
    %863 = vector.broadcast %cst_348 : f32 to vector<4x8xf32>
    %864 = arith.addf %862, %863 : vector<4x8xf32>
    %cst_349 = arith.constant 5.000000e-01 : f32
    %865 = vector.broadcast %cst_349 : f32 to vector<4x8xf32>
    %866 = arith.mulf %865, %864 : vector<4x8xf32>
    %867 = math.exp %866 : vector<4x8xf32>
    %cst_350 = arith.constant 2.500000e-01 : f32
    %868 = vector.broadcast %cst_350 : f32 to vector<4x8xf32>
    %869 = arith.mulf %868, %867 : vector<4x8xf32>
    %cst_351 = arith.constant 6.250000e-02 : f32
    %870 = vector.broadcast %cst_351 : f32 to vector<4x8xf32>
    %871 = arith.mulf %870, %858 : vector<4x8xf32>
    %872 = arith.addf %649, %871 : vector<4x8xf32>
    %873 = arith.mulf %869, %688 : vector<4x8xf32>
    %874 = arith.addf %872, %873 : vector<4x8xf32>
    %875 = arith.mulf %688, %688 : vector<4x8xf32>
    %cst_352 = arith.constant -0.934711635 : f32
    %876 = vector.broadcast %cst_352 : f32 to vector<4x8xf32>
    %877 = arith.addf %875, %876 : vector<4x8xf32>
    %878 = arith.addf %877, %864 : vector<4x8xf32>
    %cst_353 = arith.constant dense<0.000000e+00> : vector<8xf32>
    %879 = vector.multi_reduction <add>, %878, %cst_353 [0] : vector<4x8xf32> to vector<8xf32>
    %cst_354 = arith.constant -5.000000e-01 : f32
    %880 = vector.broadcast %cst_354 : f32 to vector<8xf32>
    %881 = arith.mulf %880, %879 : vector<8xf32>
    %882 = arith.index_cast %686 : i32 to index
    %883 = memref.load %arg2[%882] : memref<16xf32, #tpu.memory_space<smem>>
    %884 = arith.index_cast %686 : i32 to index
    %885 = memref.load %arg3[%884] : memref<16xf32, #tpu.memory_space<smem>>
    %886 = arith.index_cast %686 : i32 to index
    %887 = memref.load %arg4[%886] : memref<16xf32, #tpu.memory_space<smem>>
    %888 = vector.broadcast %883 : f32 to vector<4x8xf32>
    %889 = arith.mulf %874, %888 : vector<4x8xf32>
    %890 = arith.subf %649, %889 : vector<4x8xf32>
    %891 = vector.broadcast %887 : f32 to vector<4x8xf32>
    %892 = arith.mulf %890, %891 : vector<4x8xf32>
    %893 = arith.mulf %892, %892 : vector<4x8xf32>
    %cst_355 = arith.constant 1.83787704 : f32
    %894 = vector.broadcast %cst_355 : f32 to vector<4x8xf32>
    %895 = arith.addf %893, %894 : vector<4x8xf32>
    %896 = vector.broadcast %885 : f32 to vector<4x8xf32>
    %897 = arith.addf %895, %896 : vector<4x8xf32>
    %cst_356 = arith.constant dense<0.000000e+00> : vector<8xf32>
    %898 = vector.multi_reduction <add>, %897, %cst_356 [0] : vector<4x8xf32> to vector<8xf32>
    %cst_357 = arith.constant -5.000000e-01 : f32
    %899 = vector.broadcast %cst_357 : f32 to vector<8xf32>
    %900 = arith.mulf %899, %898 : vector<8xf32>
    %c3_358 = arith.constant 3 : index
    %c0_359 = arith.constant 0 : index
    %c0_360 = arith.constant 0 : index
    %901 = vector.load %arg17[%c3_358, %c0_359, %c0_360] : memref<8x4x8xf32, #tpu.memory_space<vmem>>, vector<1x4x8xf32>
    %902 = vector.shape_cast %901 : vector<1x4x8xf32> to vector<4x8xf32>
    %903 = vector.shape_cast %874 : vector<4x8xf32> to vector<1x4x8xf32>
    tpu.vector_store %arg17[%c3_358, %c0_359, %c0_360], %903 {strides = array<i32>} : memref<8x4x8xf32, #tpu.memory_space<vmem>>, vector<1x4x8xf32>,
    %c3_361 = arith.constant 3 : index
    %c0_362 = arith.constant 0 : index
    %904 = vector.load %arg18[%c3_361, %c0_362] : memref<8x8xf32, #tpu.memory_space<vmem>>, vector<1x8xf32>
    %905 = vector.shape_cast %904 : vector<1x8xf32> to vector<8xf32>
    %906 = vector.shape_cast %881 : vector<8xf32> to vector<1x8xf32>
    tpu.vector_store %arg18[%c3_361, %c0_362], %906 {strides = array<i32>} : memref<8x8xf32, #tpu.memory_space<vmem>>, vector<1x8xf32>,
    %c3_363 = arith.constant 3 : index
    %c0_364 = arith.constant 0 : index
    %907 = vector.load %arg19[%c3_363, %c0_364] : memref<8x8xf32, #tpu.memory_space<vmem>>, vector<1x8xf32>
    %908 = vector.shape_cast %907 : vector<1x8xf32> to vector<8xf32>
    %909 = vector.shape_cast %900 : vector<8xf32> to vector<1x8xf32>
    tpu.vector_store %arg19[%c3_363, %c0_364], %909 {strides = array<i32>} : memref<8x8xf32, #tpu.memory_space<vmem>>, vector<1x8xf32>,
    %c8_i32_365 = arith.constant 8 : i32
    %910 = arith.muli %arg1, %c8_i32_365 : i32
    %c4_i32 = arith.constant 4 : i32
    %911 = arith.addi %910, %c4_i32 : i32
    %c4 = arith.constant 4 : index
    %c0_366 = arith.constant 0 : index
    %c0_367 = arith.constant 0 : index
    %912 = vector.load %arg6[%c4, %c0_366, %c0_367] : memref<8x4x8xf32, #tpu.memory_space<vmem>>, vector<1x4x8xf32>
    %913 = vector.shape_cast %912 : vector<1x4x8xf32> to vector<4x8xf32>
    %c0_368 = arith.constant 0 : index
    %c0_369 = arith.constant 0 : index
    %914 = vector.load %arg9[%c0_368, %c0_369] : memref<32x1xf32, #tpu.memory_space<vmem>>, vector<32x1xf32>
    %915 = vector.extract_strided_slice %5 {offsets = [0, 0], sizes = [32, 1], strides = [1, 1]} : vector<32x4xf32> to vector<32x1xf32>
    %916 = vector.extract_strided_slice %874 {offsets = [0, 0], sizes = [1, 8], strides = [1, 1]} : vector<4x8xf32> to vector<1x8xf32>
    %917 = vector.broadcast %915 : vector<32x1xf32> to vector<32x8xf32>
    %918 = vector.broadcast %916 : vector<1x8xf32> to vector<32x8xf32>
    %919 = arith.mulf %917, %918 : vector<32x8xf32>
    %920 = vector.broadcast %914 : vector<32x1xf32> to vector<32x8xf32>
    %921 = arith.addf %920, %919 : vector<32x8xf32>
    %922 = vector.extract_strided_slice %5 {offsets = [0, 1], sizes = [32, 1], strides = [1, 1]} : vector<32x4xf32> to vector<32x1xf32>
    %923 = vector.extract_strided_slice %874 {offsets = [1, 0], sizes = [1, 8], strides = [1, 1]} : vector<4x8xf32> to vector<1x8xf32>
    %924 = vector.broadcast %922 : vector<32x1xf32> to vector<32x8xf32>
    %925 = vector.broadcast %923 : vector<1x8xf32> to vector<32x8xf32>
    %926 = arith.mulf %924, %925 : vector<32x8xf32>
    %927 = arith.addf %921, %926 : vector<32x8xf32>
    %928 = vector.extract_strided_slice %5 {offsets = [0, 2], sizes = [32, 1], strides = [1, 1]} : vector<32x4xf32> to vector<32x1xf32>
    %929 = vector.extract_strided_slice %874 {offsets = [2, 0], sizes = [1, 8], strides = [1, 1]} : vector<4x8xf32> to vector<1x8xf32>
    %930 = vector.broadcast %928 : vector<32x1xf32> to vector<32x8xf32>
    %931 = vector.broadcast %929 : vector<1x8xf32> to vector<32x8xf32>
    %932 = arith.mulf %930, %931 : vector<32x8xf32>
    %933 = arith.addf %927, %932 : vector<32x8xf32>
    %934 = vector.extract_strided_slice %5 {offsets = [0, 3], sizes = [32, 1], strides = [1, 1]} : vector<32x4xf32> to vector<32x1xf32>
    %935 = vector.extract_strided_slice %874 {offsets = [3, 0], sizes = [1, 8], strides = [1, 1]} : vector<4x8xf32> to vector<1x8xf32>
    %936 = vector.broadcast %934 : vector<32x1xf32> to vector<32x8xf32>
    %937 = vector.broadcast %935 : vector<1x8xf32> to vector<32x8xf32>
    %938 = arith.mulf %936, %937 : vector<32x8xf32>
    %939 = arith.addf %933, %938 : vector<32x8xf32>
    %cst_370 = arith.constant 5.000000e-01 : f32
    %940 = vector.broadcast %cst_370 : f32 to vector<32x8xf32>
    %941 = arith.mulf %940, %939 : vector<32x8xf32>
    %cst_371 = arith.constant 0.707106769 : f32
    %942 = vector.broadcast %cst_371 : f32 to vector<32x8xf32>
    %943 = arith.mulf %939, %942 : vector<32x8xf32>
    %cst_372 = arith.constant 0.000000e+00 : f32
    %944 = vector.broadcast %cst_372 : f32 to vector<32x8xf32>
    %945 = arith.cmpf oge, %943, %944 : vector<32x8xf32>
    %cst_373 = arith.constant 1.000000e+00 : f32
    %cst_374 = arith.constant -1.000000e+00 : f32
    %946 = vector.broadcast %cst_373 : f32 to vector<32x8xf32>
    %947 = vector.broadcast %cst_374 : f32 to vector<32x8xf32>
    %948 = arith.select %945, %946, %947 : vector<32x8xi1>, vector<32x8xf32>
    %949 = math.absf %943 : vector<32x8xf32>
    %cst_375 = arith.constant 0.327591091 : f32
    %950 = vector.broadcast %cst_375 : f32 to vector<32x8xf32>
    %951 = arith.mulf %950, %949 : vector<32x8xf32>
    %cst_376 = arith.constant 1.000000e+00 : f32
    %952 = vector.broadcast %cst_376 : f32 to vector<32x8xf32>
    %953 = arith.addf %952, %951 : vector<32x8xf32>
    %cst_377 = arith.constant 1.000000e+00 : f32
    %954 = vector.broadcast %cst_377 : f32 to vector<32x8xf32>
    %955 = arith.divf %954, %953 : vector<32x8xf32>
    %cst_378 = arith.constant 1.06140542 : f32
    %956 = vector.broadcast %cst_378 : f32 to vector<32x8xf32>
    %957 = arith.mulf %956, %955 : vector<32x8xf32>
    %cst_379 = arith.constant -1.45315206 : f32
    %958 = vector.broadcast %cst_379 : f32 to vector<32x8xf32>
    %959 = arith.addf %957, %958 : vector<32x8xf32>
    %960 = arith.mulf %959, %955 : vector<32x8xf32>
    %cst_380 = arith.constant 1.42141378 : f32
    %961 = vector.broadcast %cst_380 : f32 to vector<32x8xf32>
    %962 = arith.addf %960, %961 : vector<32x8xf32>
    %963 = arith.mulf %962, %955 : vector<32x8xf32>
    %cst_381 = arith.constant -0.284496725 : f32
    %964 = vector.broadcast %cst_381 : f32 to vector<32x8xf32>
    %965 = arith.addf %963, %964 : vector<32x8xf32>
    %966 = arith.mulf %965, %955 : vector<32x8xf32>
    %cst_382 = arith.constant 0.254829586 : f32
    %967 = vector.broadcast %cst_382 : f32 to vector<32x8xf32>
    %968 = arith.addf %966, %967 : vector<32x8xf32>
    %969 = arith.mulf %968, %955 : vector<32x8xf32>
    %cst_383 = arith.constant 0.000000e+00 : f32
    %970 = vector.broadcast %cst_383 : f32 to vector<32x8xf32>
    %971 = arith.subf %970, %949 : vector<32x8xf32>
    %972 = arith.mulf %971, %949 : vector<32x8xf32>
    %973 = math.exp %972 : vector<32x8xf32>
    %974 = arith.mulf %969, %973 : vector<32x8xf32>
    %cst_384 = arith.constant 1.000000e+00 : f32
    %975 = vector.broadcast %cst_384 : f32 to vector<32x8xf32>
    %976 = arith.subf %975, %974 : vector<32x8xf32>
    %977 = arith.mulf %948, %976 : vector<32x8xf32>
    %cst_385 = arith.constant 1.000000e+00 : f32
    %978 = vector.broadcast %cst_385 : f32 to vector<32x8xf32>
    %979 = arith.addf %978, %977 : vector<32x8xf32>
    %980 = arith.mulf %941, %979 : vector<32x8xf32>
    %c0_386 = arith.constant 0 : index
    %c0_387 = arith.constant 0 : index
    %981 = vector.load %arg10[%c0_386, %c0_387] : memref<16x32xf32, #tpu.memory_space<vmem>>, vector<16x32xf32>
    %cst_388 = arith.constant dense<0.000000e+00> : vector<16x8xf32>
    %982 = tpu.matmul %981, %980, %cst_388 {dimension_numbers = #tpu.dot_dimension_numbers<[1], [0], [0], [1], [0, 0, 1, 1], [], []>} : vector<16x32xf32>, vector<32x8xf32>, vector<16x8xf32> -> vector<16x8xf32>
    %c0_389 = arith.constant 0 : index
    %c0_390 = arith.constant 0 : index
    %983 = vector.load %arg11[%c0_389, %c0_390] : memref<16x1xf32, #tpu.memory_space<vmem>>, vector<16x1xf32>
    %984 = vector.broadcast %983 : vector<16x1xf32> to vector<16x8xf32>
    %985 = arith.addf %982, %984 : vector<16x8xf32>
    %c0_391 = arith.constant 0 : index
    %c0_392 = arith.constant 0 : index
    %986 = vector.load %arg12[%c0_391, %c0_392] : memref<32x16xf32, #tpu.memory_space<vmem>>, vector<32x16xf32>
    %cst_393 = arith.constant dense<0.000000e+00> : vector<32x8xf32>
    %987 = tpu.matmul %986, %985, %cst_393 {dimension_numbers = #tpu.dot_dimension_numbers<[1], [0], [0], [1], [0, 0, 1, 1], [], []>} : vector<32x16xf32>, vector<16x8xf32>, vector<32x8xf32> -> vector<32x8xf32>
    %988 = vector.extract_strided_slice %4 {offsets = [0, 4], sizes = [32, 1], strides = [1, 1]} : vector<32x8xf32> to vector<32x1xf32>
    %989 = vector.broadcast %988 : vector<32x1xf32> to vector<32x8xf32>
    %990 = arith.addf %987, %989 : vector<32x8xf32>
    %cst_394 = arith.constant 5.000000e-01 : f32
    %991 = vector.broadcast %cst_394 : f32 to vector<32x8xf32>
    %992 = arith.mulf %991, %990 : vector<32x8xf32>
    %cst_395 = arith.constant 0.707106769 : f32
    %993 = vector.broadcast %cst_395 : f32 to vector<32x8xf32>
    %994 = arith.mulf %990, %993 : vector<32x8xf32>
    %cst_396 = arith.constant 0.000000e+00 : f32
    %995 = vector.broadcast %cst_396 : f32 to vector<32x8xf32>
    %996 = arith.cmpf oge, %994, %995 : vector<32x8xf32>
    %cst_397 = arith.constant 1.000000e+00 : f32
    %cst_398 = arith.constant -1.000000e+00 : f32
    %997 = vector.broadcast %cst_397 : f32 to vector<32x8xf32>
    %998 = vector.broadcast %cst_398 : f32 to vector<32x8xf32>
    %999 = arith.select %996, %997, %998 : vector<32x8xi1>, vector<32x8xf32>
    %1000 = math.absf %994 : vector<32x8xf32>
    %cst_399 = arith.constant 0.327591091 : f32
    %1001 = vector.broadcast %cst_399 : f32 to vector<32x8xf32>
    %1002 = arith.mulf %1001, %1000 : vector<32x8xf32>
    %cst_400 = arith.constant 1.000000e+00 : f32
    %1003 = vector.broadcast %cst_400 : f32 to vector<32x8xf32>
    %1004 = arith.addf %1003, %1002 : vector<32x8xf32>
    %cst_401 = arith.constant 1.000000e+00 : f32
    %1005 = vector.broadcast %cst_401 : f32 to vector<32x8xf32>
    %1006 = arith.divf %1005, %1004 : vector<32x8xf32>
    %cst_402 = arith.constant 1.06140542 : f32
    %1007 = vector.broadcast %cst_402 : f32 to vector<32x8xf32>
    %1008 = arith.mulf %1007, %1006 : vector<32x8xf32>
    %cst_403 = arith.constant -1.45315206 : f32
    %1009 = vector.broadcast %cst_403 : f32 to vector<32x8xf32>
    %1010 = arith.addf %1008, %1009 : vector<32x8xf32>
    %1011 = arith.mulf %1010, %1006 : vector<32x8xf32>
    %cst_404 = arith.constant 1.42141378 : f32
    %1012 = vector.broadcast %cst_404 : f32 to vector<32x8xf32>
    %1013 = arith.addf %1011, %1012 : vector<32x8xf32>
    %1014 = arith.mulf %1013, %1006 : vector<32x8xf32>
    %cst_405 = arith.constant -0.284496725 : f32
    %1015 = vector.broadcast %cst_405 : f32 to vector<32x8xf32>
    %1016 = arith.addf %1014, %1015 : vector<32x8xf32>
    %1017 = arith.mulf %1016, %1006 : vector<32x8xf32>
    %cst_406 = arith.constant 0.254829586 : f32
    %1018 = vector.broadcast %cst_406 : f32 to vector<32x8xf32>
    %1019 = arith.addf %1017, %1018 : vector<32x8xf32>
    %1020 = arith.mulf %1019, %1006 : vector<32x8xf32>
    %cst_407 = arith.constant 0.000000e+00 : f32
    %1021 = vector.broadcast %cst_407 : f32 to vector<32x8xf32>
    %1022 = arith.subf %1021, %1000 : vector<32x8xf32>
    %1023 = arith.mulf %1022, %1000 : vector<32x8xf32>
    %1024 = math.exp %1023 : vector<32x8xf32>
    %1025 = arith.mulf %1020, %1024 : vector<32x8xf32>
    %cst_408 = arith.constant 1.000000e+00 : f32
    %1026 = vector.broadcast %cst_408 : f32 to vector<32x8xf32>
    %1027 = arith.subf %1026, %1025 : vector<32x8xf32>
    %1028 = arith.mulf %999, %1027 : vector<32x8xf32>
    %cst_409 = arith.constant 1.000000e+00 : f32
    %1029 = vector.broadcast %cst_409 : f32 to vector<32x8xf32>
    %1030 = arith.addf %1029, %1028 : vector<32x8xf32>
    %1031 = arith.mulf %992, %1030 : vector<32x8xf32>
    %c0_410 = arith.constant 0 : index
    %c0_411 = arith.constant 0 : index
    %1032 = vector.load %arg13[%c0_410, %c0_411] : memref<32x32xf32, #tpu.memory_space<vmem>>, vector<32x32xf32>
    %cst_412 = arith.constant dense<0.000000e+00> : vector<32x8xf32>
    %1033 = tpu.matmul %1032, %1031, %cst_412 {dimension_numbers = #tpu.dot_dimension_numbers<[1], [0], [0], [1], [0, 0, 1, 1], [], []>} : vector<32x32xf32>, vector<32x8xf32>, vector<32x8xf32> -> vector<32x8xf32>
    %c0_413 = arith.constant 0 : index
    %c0_414 = arith.constant 0 : index
    %1034 = vector.load %arg14[%c0_413, %c0_414] : memref<32x1xf32, #tpu.memory_space<vmem>>, vector<32x1xf32>
    %1035 = vector.broadcast %1034 : vector<32x1xf32> to vector<32x8xf32>
    %1036 = arith.addf %1033, %1035 : vector<32x8xf32>
    %cst_415 = arith.constant 5.000000e-01 : f32
    %1037 = vector.broadcast %cst_415 : f32 to vector<32x8xf32>
    %1038 = arith.mulf %1037, %1036 : vector<32x8xf32>
    %cst_416 = arith.constant 0.707106769 : f32
    %1039 = vector.broadcast %cst_416 : f32 to vector<32x8xf32>
    %1040 = arith.mulf %1036, %1039 : vector<32x8xf32>
    %cst_417 = arith.constant 0.000000e+00 : f32
    %1041 = vector.broadcast %cst_417 : f32 to vector<32x8xf32>
    %1042 = arith.cmpf oge, %1040, %1041 : vector<32x8xf32>
    %cst_418 = arith.constant 1.000000e+00 : f32
    %cst_419 = arith.constant -1.000000e+00 : f32
    %1043 = vector.broadcast %cst_418 : f32 to vector<32x8xf32>
    %1044 = vector.broadcast %cst_419 : f32 to vector<32x8xf32>
    %1045 = arith.select %1042, %1043, %1044 : vector<32x8xi1>, vector<32x8xf32>
    %1046 = math.absf %1040 : vector<32x8xf32>
    %cst_420 = arith.constant 0.327591091 : f32
    %1047 = vector.broadcast %cst_420 : f32 to vector<32x8xf32>
    %1048 = arith.mulf %1047, %1046 : vector<32x8xf32>
    %cst_421 = arith.constant 1.000000e+00 : f32
    %1049 = vector.broadcast %cst_421 : f32 to vector<32x8xf32>
    %1050 = arith.addf %1049, %1048 : vector<32x8xf32>
    %cst_422 = arith.constant 1.000000e+00 : f32
    %1051 = vector.broadcast %cst_422 : f32 to vector<32x8xf32>
    %1052 = arith.divf %1051, %1050 : vector<32x8xf32>
    %cst_423 = arith.constant 1.06140542 : f32
    %1053 = vector.broadcast %cst_423 : f32 to vector<32x8xf32>
    %1054 = arith.mulf %1053, %1052 : vector<32x8xf32>
    %cst_424 = arith.constant -1.45315206 : f32
    %1055 = vector.broadcast %cst_424 : f32 to vector<32x8xf32>
    %1056 = arith.addf %1054, %1055 : vector<32x8xf32>
    %1057 = arith.mulf %1056, %1052 : vector<32x8xf32>
    %cst_425 = arith.constant 1.42141378 : f32
    %1058 = vector.broadcast %cst_425 : f32 to vector<32x8xf32>
    %1059 = arith.addf %1057, %1058 : vector<32x8xf32>
    %1060 = arith.mulf %1059, %1052 : vector<32x8xf32>
    %cst_426 = arith.constant -0.284496725 : f32
    %1061 = vector.broadcast %cst_426 : f32 to vector<32x8xf32>
    %1062 = arith.addf %1060, %1061 : vector<32x8xf32>
    %1063 = arith.mulf %1062, %1052 : vector<32x8xf32>
    %cst_427 = arith.constant 0.254829586 : f32
    %1064 = vector.broadcast %cst_427 : f32 to vector<32x8xf32>
    %1065 = arith.addf %1063, %1064 : vector<32x8xf32>
    %1066 = arith.mulf %1065, %1052 : vector<32x8xf32>
    %cst_428 = arith.constant 0.000000e+00 : f32
    %1067 = vector.broadcast %cst_428 : f32 to vector<32x8xf32>
    %1068 = arith.subf %1067, %1046 : vector<32x8xf32>
    %1069 = arith.mulf %1068, %1046 : vector<32x8xf32>
    %1070 = math.exp %1069 : vector<32x8xf32>
    %1071 = arith.mulf %1066, %1070 : vector<32x8xf32>
    %cst_429 = arith.constant 1.000000e+00 : f32
    %1072 = vector.broadcast %cst_429 : f32 to vector<32x8xf32>
    %1073 = arith.subf %1072, %1071 : vector<32x8xf32>
    %1074 = arith.mulf %1045, %1073 : vector<32x8xf32>
    %cst_430 = arith.constant 1.000000e+00 : f32
    %1075 = vector.broadcast %cst_430 : f32 to vector<32x8xf32>
    %1076 = arith.addf %1075, %1074 : vector<32x8xf32>
    %1077 = arith.mulf %1038, %1076 : vector<32x8xf32>
    %c0_431 = arith.constant 0 : index
    %c0_432 = arith.constant 0 : index
    %1078 = vector.load %arg15[%c0_431, %c0_432] : memref<8x32xf32, #tpu.memory_space<vmem>>, vector<8x32xf32>
    %cst_433 = arith.constant dense<0.000000e+00> : vector<8x8xf32>
    %1079 = tpu.matmul %1078, %1077, %cst_433 {dimension_numbers = #tpu.dot_dimension_numbers<[1], [0], [0], [1], [0, 0, 1, 1], [], []>} : vector<8x32xf32>, vector<32x8xf32>, vector<8x8xf32> -> vector<8x8xf32>
    %c0_434 = arith.constant 0 : index
    %c0_435 = arith.constant 0 : index
    %1080 = vector.load %arg16[%c0_434, %c0_435] : memref<8x1xf32, #tpu.memory_space<vmem>>, vector<8x1xf32>
    %1081 = vector.broadcast %1080 : vector<8x1xf32> to vector<8x8xf32>
    %1082 = arith.addf %1079, %1081 : vector<8x8xf32>
    %1083 = vector.extract_strided_slice %1082 {offsets = [0, 0], sizes = [4, 8], strides = [1, 1]} : vector<8x8xf32> to vector<4x8xf32>
    %1084 = vector.extract_strided_slice %1082 {offsets = [4, 0], sizes = [4, 8], strides = [1, 1]} : vector<8x8xf32> to vector<4x8xf32>
    %1085 = math.tanh %1084 : vector<4x8xf32>
    %cst_436 = arith.constant 4.000000e+00 : f32
    %1086 = vector.broadcast %cst_436 : f32 to vector<4x8xf32>
    %1087 = arith.mulf %1085, %1086 : vector<4x8xf32>
    %cst_437 = arith.constant 0.000000e+00 : f32
    %1088 = vector.broadcast %cst_437 : f32 to vector<4x8xf32>
    %1089 = arith.addf %1087, %1088 : vector<4x8xf32>
    %cst_438 = arith.constant 5.000000e-01 : f32
    %1090 = vector.broadcast %cst_438 : f32 to vector<4x8xf32>
    %1091 = arith.mulf %1090, %1089 : vector<4x8xf32>
    %1092 = math.exp %1091 : vector<4x8xf32>
    %cst_439 = arith.constant 2.500000e-01 : f32
    %1093 = vector.broadcast %cst_439 : f32 to vector<4x8xf32>
    %1094 = arith.mulf %1093, %1092 : vector<4x8xf32>
    %cst_440 = arith.constant 6.250000e-02 : f32
    %1095 = vector.broadcast %cst_440 : f32 to vector<4x8xf32>
    %1096 = arith.mulf %1095, %1083 : vector<4x8xf32>
    %1097 = arith.addf %874, %1096 : vector<4x8xf32>
    %1098 = arith.mulf %1094, %913 : vector<4x8xf32>
    %1099 = arith.addf %1097, %1098 : vector<4x8xf32>
    %1100 = arith.mulf %913, %913 : vector<4x8xf32>
    %cst_441 = arith.constant -0.934711635 : f32
    %1101 = vector.broadcast %cst_441 : f32 to vector<4x8xf32>
    %1102 = arith.addf %1100, %1101 : vector<4x8xf32>
    %1103 = arith.addf %1102, %1089 : vector<4x8xf32>
    %cst_442 = arith.constant dense<0.000000e+00> : vector<8xf32>
    %1104 = vector.multi_reduction <add>, %1103, %cst_442 [0] : vector<4x8xf32> to vector<8xf32>
    %cst_443 = arith.constant -5.000000e-01 : f32
    %1105 = vector.broadcast %cst_443 : f32 to vector<8xf32>
    %1106 = arith.mulf %1105, %1104 : vector<8xf32>
    %1107 = arith.index_cast %911 : i32 to index
    %1108 = memref.load %arg2[%1107] : memref<16xf32, #tpu.memory_space<smem>>
    %1109 = arith.index_cast %911 : i32 to index
    %1110 = memref.load %arg3[%1109] : memref<16xf32, #tpu.memory_space<smem>>
    %1111 = arith.index_cast %911 : i32 to index
    %1112 = memref.load %arg4[%1111] : memref<16xf32, #tpu.memory_space<smem>>
    %1113 = vector.broadcast %1108 : f32 to vector<4x8xf32>
    %1114 = arith.mulf %1099, %1113 : vector<4x8xf32>
    %1115 = arith.subf %874, %1114 : vector<4x8xf32>
    %1116 = vector.broadcast %1112 : f32 to vector<4x8xf32>
    %1117 = arith.mulf %1115, %1116 : vector<4x8xf32>
    %1118 = arith.mulf %1117, %1117 : vector<4x8xf32>
    %cst_444 = arith.constant 1.83787704 : f32
    %1119 = vector.broadcast %cst_444 : f32 to vector<4x8xf32>
    %1120 = arith.addf %1118, %1119 : vector<4x8xf32>
    %1121 = vector.broadcast %1110 : f32 to vector<4x8xf32>
    %1122 = arith.addf %1120, %1121 : vector<4x8xf32>
    %cst_445 = arith.constant dense<0.000000e+00> : vector<8xf32>
    %1123 = vector.multi_reduction <add>, %1122, %cst_445 [0] : vector<4x8xf32> to vector<8xf32>
    %cst_446 = arith.constant -5.000000e-01 : f32
    %1124 = vector.broadcast %cst_446 : f32 to vector<8xf32>
    %1125 = arith.mulf %1124, %1123 : vector<8xf32>
    %c4_447 = arith.constant 4 : index
    %c0_448 = arith.constant 0 : index
    %c0_449 = arith.constant 0 : index
    %1126 = vector.load %arg17[%c4_447, %c0_448, %c0_449] : memref<8x4x8xf32, #tpu.memory_space<vmem>>, vector<1x4x8xf32>
    %1127 = vector.shape_cast %1126 : vector<1x4x8xf32> to vector<4x8xf32>
    %1128 = vector.shape_cast %1099 : vector<4x8xf32> to vector<1x4x8xf32>
    tpu.vector_store %arg17[%c4_447, %c0_448, %c0_449], %1128 {strides = array<i32>} : memref<8x4x8xf32, #tpu.memory_space<vmem>>, vector<1x4x8xf32>,
    %c4_450 = arith.constant 4 : index
    %c0_451 = arith.constant 0 : index
    %1129 = vector.load %arg18[%c4_450, %c0_451] : memref<8x8xf32, #tpu.memory_space<vmem>>, vector<1x8xf32>
    %1130 = vector.shape_cast %1129 : vector<1x8xf32> to vector<8xf32>
    %1131 = vector.shape_cast %1106 : vector<8xf32> to vector<1x8xf32>
    tpu.vector_store %arg18[%c4_450, %c0_451], %1131 {strides = array<i32>} : memref<8x8xf32, #tpu.memory_space<vmem>>, vector<1x8xf32>,
    %c4_452 = arith.constant 4 : index
    %c0_453 = arith.constant 0 : index
    %1132 = vector.load %arg19[%c4_452, %c0_453] : memref<8x8xf32, #tpu.memory_space<vmem>>, vector<1x8xf32>
    %1133 = vector.shape_cast %1132 : vector<1x8xf32> to vector<8xf32>
    %1134 = vector.shape_cast %1125 : vector<8xf32> to vector<1x8xf32>
    tpu.vector_store %arg19[%c4_452, %c0_453], %1134 {strides = array<i32>} : memref<8x8xf32, #tpu.memory_space<vmem>>, vector<1x8xf32>,
    %c8_i32_454 = arith.constant 8 : i32
    %1135 = arith.muli %arg1, %c8_i32_454 : i32
    %c5_i32 = arith.constant 5 : i32
    %1136 = arith.addi %1135, %c5_i32 : i32
    %c5 = arith.constant 5 : index
    %c0_455 = arith.constant 0 : index
    %c0_456 = arith.constant 0 : index
    %1137 = vector.load %arg6[%c5, %c0_455, %c0_456] : memref<8x4x8xf32, #tpu.memory_space<vmem>>, vector<1x4x8xf32>
    %1138 = vector.shape_cast %1137 : vector<1x4x8xf32> to vector<4x8xf32>
    %c0_457 = arith.constant 0 : index
    %c0_458 = arith.constant 0 : index
    %1139 = vector.load %arg9[%c0_457, %c0_458] : memref<32x1xf32, #tpu.memory_space<vmem>>, vector<32x1xf32>
    %1140 = vector.extract_strided_slice %5 {offsets = [0, 0], sizes = [32, 1], strides = [1, 1]} : vector<32x4xf32> to vector<32x1xf32>
    %1141 = vector.extract_strided_slice %1099 {offsets = [0, 0], sizes = [1, 8], strides = [1, 1]} : vector<4x8xf32> to vector<1x8xf32>
    %1142 = vector.broadcast %1140 : vector<32x1xf32> to vector<32x8xf32>
    %1143 = vector.broadcast %1141 : vector<1x8xf32> to vector<32x8xf32>
    %1144 = arith.mulf %1142, %1143 : vector<32x8xf32>
    %1145 = vector.broadcast %1139 : vector<32x1xf32> to vector<32x8xf32>
    %1146 = arith.addf %1145, %1144 : vector<32x8xf32>
    %1147 = vector.extract_strided_slice %5 {offsets = [0, 1], sizes = [32, 1], strides = [1, 1]} : vector<32x4xf32> to vector<32x1xf32>
    %1148 = vector.extract_strided_slice %1099 {offsets = [1, 0], sizes = [1, 8], strides = [1, 1]} : vector<4x8xf32> to vector<1x8xf32>
    %1149 = vector.broadcast %1147 : vector<32x1xf32> to vector<32x8xf32>
    %1150 = vector.broadcast %1148 : vector<1x8xf32> to vector<32x8xf32>
    %1151 = arith.mulf %1149, %1150 : vector<32x8xf32>
    %1152 = arith.addf %1146, %1151 : vector<32x8xf32>
    %1153 = vector.extract_strided_slice %5 {offsets = [0, 2], sizes = [32, 1], strides = [1, 1]} : vector<32x4xf32> to vector<32x1xf32>
    %1154 = vector.extract_strided_slice %1099 {offsets = [2, 0], sizes = [1, 8], strides = [1, 1]} : vector<4x8xf32> to vector<1x8xf32>
    %1155 = vector.broadcast %1153 : vector<32x1xf32> to vector<32x8xf32>
    %1156 = vector.broadcast %1154 : vector<1x8xf32> to vector<32x8xf32>
    %1157 = arith.mulf %1155, %1156 : vector<32x8xf32>
    %1158 = arith.addf %1152, %1157 : vector<32x8xf32>
    %1159 = vector.extract_strided_slice %5 {offsets = [0, 3], sizes = [32, 1], strides = [1, 1]} : vector<32x4xf32> to vector<32x1xf32>
    %1160 = vector.extract_strided_slice %1099 {offsets = [3, 0], sizes = [1, 8], strides = [1, 1]} : vector<4x8xf32> to vector<1x8xf32>
    %1161 = vector.broadcast %1159 : vector<32x1xf32> to vector<32x8xf32>
    %1162 = vector.broadcast %1160 : vector<1x8xf32> to vector<32x8xf32>
    %1163 = arith.mulf %1161, %1162 : vector<32x8xf32>
    %1164 = arith.addf %1158, %1163 : vector<32x8xf32>
    %cst_459 = arith.constant 5.000000e-01 : f32
    %1165 = vector.broadcast %cst_459 : f32 to vector<32x8xf32>
    %1166 = arith.mulf %1165, %1164 : vector<32x8xf32>
    %cst_460 = arith.constant 0.707106769 : f32
    %1167 = vector.broadcast %cst_460 : f32 to vector<32x8xf32>
    %1168 = arith.mulf %1164, %1167 : vector<32x8xf32>
    %cst_461 = arith.constant 0.000000e+00 : f32
    %1169 = vector.broadcast %cst_461 : f32 to vector<32x8xf32>
    %1170 = arith.cmpf oge, %1168, %1169 : vector<32x8xf32>
    %cst_462 = arith.constant 1.000000e+00 : f32
    %cst_463 = arith.constant -1.000000e+00 : f32
    %1171 = vector.broadcast %cst_462 : f32 to vector<32x8xf32>
    %1172 = vector.broadcast %cst_463 : f32 to vector<32x8xf32>
    %1173 = arith.select %1170, %1171, %1172 : vector<32x8xi1>, vector<32x8xf32>
    %1174 = math.absf %1168 : vector<32x8xf32>
    %cst_464 = arith.constant 0.327591091 : f32
    %1175 = vector.broadcast %cst_464 : f32 to vector<32x8xf32>
    %1176 = arith.mulf %1175, %1174 : vector<32x8xf32>
    %cst_465 = arith.constant 1.000000e+00 : f32
    %1177 = vector.broadcast %cst_465 : f32 to vector<32x8xf32>
    %1178 = arith.addf %1177, %1176 : vector<32x8xf32>
    %cst_466 = arith.constant 1.000000e+00 : f32
    %1179 = vector.broadcast %cst_466 : f32 to vector<32x8xf32>
    %1180 = arith.divf %1179, %1178 : vector<32x8xf32>
    %cst_467 = arith.constant 1.06140542 : f32
    %1181 = vector.broadcast %cst_467 : f32 to vector<32x8xf32>
    %1182 = arith.mulf %1181, %1180 : vector<32x8xf32>
    %cst_468 = arith.constant -1.45315206 : f32
    %1183 = vector.broadcast %cst_468 : f32 to vector<32x8xf32>
    %1184 = arith.addf %1182, %1183 : vector<32x8xf32>
    %1185 = arith.mulf %1184, %1180 : vector<32x8xf32>
    %cst_469 = arith.constant 1.42141378 : f32
    %1186 = vector.broadcast %cst_469 : f32 to vector<32x8xf32>
    %1187 = arith.addf %1185, %1186 : vector<32x8xf32>
    %1188 = arith.mulf %1187, %1180 : vector<32x8xf32>
    %cst_470 = arith.constant -0.284496725 : f32
    %1189 = vector.broadcast %cst_470 : f32 to vector<32x8xf32>
    %1190 = arith.addf %1188, %1189 : vector<32x8xf32>
    %1191 = arith.mulf %1190, %1180 : vector<32x8xf32>
    %cst_471 = arith.constant 0.254829586 : f32
    %1192 = vector.broadcast %cst_471 : f32 to vector<32x8xf32>
    %1193 = arith.addf %1191, %1192 : vector<32x8xf32>
    %1194 = arith.mulf %1193, %1180 : vector<32x8xf32>
    %cst_472 = arith.constant 0.000000e+00 : f32
    %1195 = vector.broadcast %cst_472 : f32 to vector<32x8xf32>
    %1196 = arith.subf %1195, %1174 : vector<32x8xf32>
    %1197 = arith.mulf %1196, %1174 : vector<32x8xf32>
    %1198 = math.exp %1197 : vector<32x8xf32>
    %1199 = arith.mulf %1194, %1198 : vector<32x8xf32>
    %cst_473 = arith.constant 1.000000e+00 : f32
    %1200 = vector.broadcast %cst_473 : f32 to vector<32x8xf32>
    %1201 = arith.subf %1200, %1199 : vector<32x8xf32>
    %1202 = arith.mulf %1173, %1201 : vector<32x8xf32>
    %cst_474 = arith.constant 1.000000e+00 : f32
    %1203 = vector.broadcast %cst_474 : f32 to vector<32x8xf32>
    %1204 = arith.addf %1203, %1202 : vector<32x8xf32>
    %1205 = arith.mulf %1166, %1204 : vector<32x8xf32>
    %c0_475 = arith.constant 0 : index
    %c0_476 = arith.constant 0 : index
    %1206 = vector.load %arg10[%c0_475, %c0_476] : memref<16x32xf32, #tpu.memory_space<vmem>>, vector<16x32xf32>
    %cst_477 = arith.constant dense<0.000000e+00> : vector<16x8xf32>
    %1207 = tpu.matmul %1206, %1205, %cst_477 {dimension_numbers = #tpu.dot_dimension_numbers<[1], [0], [0], [1], [0, 0, 1, 1], [], []>} : vector<16x32xf32>, vector<32x8xf32>, vector<16x8xf32> -> vector<16x8xf32>
    %c0_478 = arith.constant 0 : index
    %c0_479 = arith.constant 0 : index
    %1208 = vector.load %arg11[%c0_478, %c0_479] : memref<16x1xf32, #tpu.memory_space<vmem>>, vector<16x1xf32>
    %1209 = vector.broadcast %1208 : vector<16x1xf32> to vector<16x8xf32>
    %1210 = arith.addf %1207, %1209 : vector<16x8xf32>
    %c0_480 = arith.constant 0 : index
    %c0_481 = arith.constant 0 : index
    %1211 = vector.load %arg12[%c0_480, %c0_481] : memref<32x16xf32, #tpu.memory_space<vmem>>, vector<32x16xf32>
    %cst_482 = arith.constant dense<0.000000e+00> : vector<32x8xf32>
    %1212 = tpu.matmul %1211, %1210, %cst_482 {dimension_numbers = #tpu.dot_dimension_numbers<[1], [0], [0], [1], [0, 0, 1, 1], [], []>} : vector<32x16xf32>, vector<16x8xf32>, vector<32x8xf32> -> vector<32x8xf32>
    %1213 = vector.extract_strided_slice %4 {offsets = [0, 5], sizes = [32, 1], strides = [1, 1]} : vector<32x8xf32> to vector<32x1xf32>
    %1214 = vector.broadcast %1213 : vector<32x1xf32> to vector<32x8xf32>
    %1215 = arith.addf %1212, %1214 : vector<32x8xf32>
    %cst_483 = arith.constant 5.000000e-01 : f32
    %1216 = vector.broadcast %cst_483 : f32 to vector<32x8xf32>
    %1217 = arith.mulf %1216, %1215 : vector<32x8xf32>
    %cst_484 = arith.constant 0.707106769 : f32
    %1218 = vector.broadcast %cst_484 : f32 to vector<32x8xf32>
    %1219 = arith.mulf %1215, %1218 : vector<32x8xf32>
    %cst_485 = arith.constant 0.000000e+00 : f32
    %1220 = vector.broadcast %cst_485 : f32 to vector<32x8xf32>
    %1221 = arith.cmpf oge, %1219, %1220 : vector<32x8xf32>
    %cst_486 = arith.constant 1.000000e+00 : f32
    %cst_487 = arith.constant -1.000000e+00 : f32
    %1222 = vector.broadcast %cst_486 : f32 to vector<32x8xf32>
    %1223 = vector.broadcast %cst_487 : f32 to vector<32x8xf32>
    %1224 = arith.select %1221, %1222, %1223 : vector<32x8xi1>, vector<32x8xf32>
    %1225 = math.absf %1219 : vector<32x8xf32>
    %cst_488 = arith.constant 0.327591091 : f32
    %1226 = vector.broadcast %cst_488 : f32 to vector<32x8xf32>
    %1227 = arith.mulf %1226, %1225 : vector<32x8xf32>
    %cst_489 = arith.constant 1.000000e+00 : f32
    %1228 = vector.broadcast %cst_489 : f32 to vector<32x8xf32>
    %1229 = arith.addf %1228, %1227 : vector<32x8xf32>
    %cst_490 = arith.constant 1.000000e+00 : f32
    %1230 = vector.broadcast %cst_490 : f32 to vector<32x8xf32>
    %1231 = arith.divf %1230, %1229 : vector<32x8xf32>
    %cst_491 = arith.constant 1.06140542 : f32
    %1232 = vector.broadcast %cst_491 : f32 to vector<32x8xf32>
    %1233 = arith.mulf %1232, %1231 : vector<32x8xf32>
    %cst_492 = arith.constant -1.45315206 : f32
    %1234 = vector.broadcast %cst_492 : f32 to vector<32x8xf32>
    %1235 = arith.addf %1233, %1234 : vector<32x8xf32>
    %1236 = arith.mulf %1235, %1231 : vector<32x8xf32>
    %cst_493 = arith.constant 1.42141378 : f32
    %1237 = vector.broadcast %cst_493 : f32 to vector<32x8xf32>
    %1238 = arith.addf %1236, %1237 : vector<32x8xf32>
    %1239 = arith.mulf %1238, %1231 : vector<32x8xf32>
    %cst_494 = arith.constant -0.284496725 : f32
    %1240 = vector.broadcast %cst_494 : f32 to vector<32x8xf32>
    %1241 = arith.addf %1239, %1240 : vector<32x8xf32>
    %1242 = arith.mulf %1241, %1231 : vector<32x8xf32>
    %cst_495 = arith.constant 0.254829586 : f32
    %1243 = vector.broadcast %cst_495 : f32 to vector<32x8xf32>
    %1244 = arith.addf %1242, %1243 : vector<32x8xf32>
    %1245 = arith.mulf %1244, %1231 : vector<32x8xf32>
    %cst_496 = arith.constant 0.000000e+00 : f32
    %1246 = vector.broadcast %cst_496 : f32 to vector<32x8xf32>
    %1247 = arith.subf %1246, %1225 : vector<32x8xf32>
    %1248 = arith.mulf %1247, %1225 : vector<32x8xf32>
    %1249 = math.exp %1248 : vector<32x8xf32>
    %1250 = arith.mulf %1245, %1249 : vector<32x8xf32>
    %cst_497 = arith.constant 1.000000e+00 : f32
    %1251 = vector.broadcast %cst_497 : f32 to vector<32x8xf32>
    %1252 = arith.subf %1251, %1250 : vector<32x8xf32>
    %1253 = arith.mulf %1224, %1252 : vector<32x8xf32>
    %cst_498 = arith.constant 1.000000e+00 : f32
    %1254 = vector.broadcast %cst_498 : f32 to vector<32x8xf32>
    %1255 = arith.addf %1254, %1253 : vector<32x8xf32>
    %1256 = arith.mulf %1217, %1255 : vector<32x8xf32>
    %c0_499 = arith.constant 0 : index
    %c0_500 = arith.constant 0 : index
    %1257 = vector.load %arg13[%c0_499, %c0_500] : memref<32x32xf32, #tpu.memory_space<vmem>>, vector<32x32xf32>
    %cst_501 = arith.constant dense<0.000000e+00> : vector<32x8xf32>
    %1258 = tpu.matmul %1257, %1256, %cst_501 {dimension_numbers = #tpu.dot_dimension_numbers<[1], [0], [0], [1], [0, 0, 1, 1], [], []>} : vector<32x32xf32>, vector<32x8xf32>, vector<32x8xf32> -> vector<32x8xf32>
    %c0_502 = arith.constant 0 : index
    %c0_503 = arith.constant 0 : index
    %1259 = vector.load %arg14[%c0_502, %c0_503] : memref<32x1xf32, #tpu.memory_space<vmem>>, vector<32x1xf32>
    %1260 = vector.broadcast %1259 : vector<32x1xf32> to vector<32x8xf32>
    %1261 = arith.addf %1258, %1260 : vector<32x8xf32>
    %cst_504 = arith.constant 5.000000e-01 : f32
    %1262 = vector.broadcast %cst_504 : f32 to vector<32x8xf32>
    %1263 = arith.mulf %1262, %1261 : vector<32x8xf32>
    %cst_505 = arith.constant 0.707106769 : f32
    %1264 = vector.broadcast %cst_505 : f32 to vector<32x8xf32>
    %1265 = arith.mulf %1261, %1264 : vector<32x8xf32>
    %cst_506 = arith.constant 0.000000e+00 : f32
    %1266 = vector.broadcast %cst_506 : f32 to vector<32x8xf32>
    %1267 = arith.cmpf oge, %1265, %1266 : vector<32x8xf32>
    %cst_507 = arith.constant 1.000000e+00 : f32
    %cst_508 = arith.constant -1.000000e+00 : f32
    %1268 = vector.broadcast %cst_507 : f32 to vector<32x8xf32>
    %1269 = vector.broadcast %cst_508 : f32 to vector<32x8xf32>
    %1270 = arith.select %1267, %1268, %1269 : vector<32x8xi1>, vector<32x8xf32>
    %1271 = math.absf %1265 : vector<32x8xf32>
    %cst_509 = arith.constant 0.327591091 : f32
    %1272 = vector.broadcast %cst_509 : f32 to vector<32x8xf32>
    %1273 = arith.mulf %1272, %1271 : vector<32x8xf32>
    %cst_510 = arith.constant 1.000000e+00 : f32
    %1274 = vector.broadcast %cst_510 : f32 to vector<32x8xf32>
    %1275 = arith.addf %1274, %1273 : vector<32x8xf32>
    %cst_511 = arith.constant 1.000000e+00 : f32
    %1276 = vector.broadcast %cst_511 : f32 to vector<32x8xf32>
    %1277 = arith.divf %1276, %1275 : vector<32x8xf32>
    %cst_512 = arith.constant 1.06140542 : f32
    %1278 = vector.broadcast %cst_512 : f32 to vector<32x8xf32>
    %1279 = arith.mulf %1278, %1277 : vector<32x8xf32>
    %cst_513 = arith.constant -1.45315206 : f32
    %1280 = vector.broadcast %cst_513 : f32 to vector<32x8xf32>
    %1281 = arith.addf %1279, %1280 : vector<32x8xf32>
    %1282 = arith.mulf %1281, %1277 : vector<32x8xf32>
    %cst_514 = arith.constant 1.42141378 : f32
    %1283 = vector.broadcast %cst_514 : f32 to vector<32x8xf32>
    %1284 = arith.addf %1282, %1283 : vector<32x8xf32>
    %1285 = arith.mulf %1284, %1277 : vector<32x8xf32>
    %cst_515 = arith.constant -0.284496725 : f32
    %1286 = vector.broadcast %cst_515 : f32 to vector<32x8xf32>
    %1287 = arith.addf %1285, %1286 : vector<32x8xf32>
    %1288 = arith.mulf %1287, %1277 : vector<32x8xf32>
    %cst_516 = arith.constant 0.254829586 : f32
    %1289 = vector.broadcast %cst_516 : f32 to vector<32x8xf32>
    %1290 = arith.addf %1288, %1289 : vector<32x8xf32>
    %1291 = arith.mulf %1290, %1277 : vector<32x8xf32>
    %cst_517 = arith.constant 0.000000e+00 : f32
    %1292 = vector.broadcast %cst_517 : f32 to vector<32x8xf32>
    %1293 = arith.subf %1292, %1271 : vector<32x8xf32>
    %1294 = arith.mulf %1293, %1271 : vector<32x8xf32>
    %1295 = math.exp %1294 : vector<32x8xf32>
    %1296 = arith.mulf %1291, %1295 : vector<32x8xf32>
    %cst_518 = arith.constant 1.000000e+00 : f32
    %1297 = vector.broadcast %cst_518 : f32 to vector<32x8xf32>
    %1298 = arith.subf %1297, %1296 : vector<32x8xf32>
    %1299 = arith.mulf %1270, %1298 : vector<32x8xf32>
    %cst_519 = arith.constant 1.000000e+00 : f32
    %1300 = vector.broadcast %cst_519 : f32 to vector<32x8xf32>
    %1301 = arith.addf %1300, %1299 : vector<32x8xf32>
    %1302 = arith.mulf %1263, %1301 : vector<32x8xf32>
    %c0_520 = arith.constant 0 : index
    %c0_521 = arith.constant 0 : index
    %1303 = vector.load %arg15[%c0_520, %c0_521] : memref<8x32xf32, #tpu.memory_space<vmem>>, vector<8x32xf32>
    %cst_522 = arith.constant dense<0.000000e+00> : vector<8x8xf32>
    %1304 = tpu.matmul %1303, %1302, %cst_522 {dimension_numbers = #tpu.dot_dimension_numbers<[1], [0], [0], [1], [0, 0, 1, 1], [], []>} : vector<8x32xf32>, vector<32x8xf32>, vector<8x8xf32> -> vector<8x8xf32>
    %c0_523 = arith.constant 0 : index
    %c0_524 = arith.constant 0 : index
    %1305 = vector.load %arg16[%c0_523, %c0_524] : memref<8x1xf32, #tpu.memory_space<vmem>>, vector<8x1xf32>
    %1306 = vector.broadcast %1305 : vector<8x1xf32> to vector<8x8xf32>
    %1307 = arith.addf %1304, %1306 : vector<8x8xf32>
    %1308 = vector.extract_strided_slice %1307 {offsets = [0, 0], sizes = [4, 8], strides = [1, 1]} : vector<8x8xf32> to vector<4x8xf32>
    %1309 = vector.extract_strided_slice %1307 {offsets = [4, 0], sizes = [4, 8], strides = [1, 1]} : vector<8x8xf32> to vector<4x8xf32>
    %1310 = math.tanh %1309 : vector<4x8xf32>
    %cst_525 = arith.constant 4.000000e+00 : f32
    %1311 = vector.broadcast %cst_525 : f32 to vector<4x8xf32>
    %1312 = arith.mulf %1310, %1311 : vector<4x8xf32>
    %cst_526 = arith.constant 0.000000e+00 : f32
    %1313 = vector.broadcast %cst_526 : f32 to vector<4x8xf32>
    %1314 = arith.addf %1312, %1313 : vector<4x8xf32>
    %cst_527 = arith.constant 5.000000e-01 : f32
    %1315 = vector.broadcast %cst_527 : f32 to vector<4x8xf32>
    %1316 = arith.mulf %1315, %1314 : vector<4x8xf32>
    %1317 = math.exp %1316 : vector<4x8xf32>
    %cst_528 = arith.constant 2.500000e-01 : f32
    %1318 = vector.broadcast %cst_528 : f32 to vector<4x8xf32>
    %1319 = arith.mulf %1318, %1317 : vector<4x8xf32>
    %cst_529 = arith.constant 6.250000e-02 : f32
    %1320 = vector.broadcast %cst_529 : f32 to vector<4x8xf32>
    %1321 = arith.mulf %1320, %1308 : vector<4x8xf32>
    %1322 = arith.addf %1099, %1321 : vector<4x8xf32>
    %1323 = arith.mulf %1319, %1138 : vector<4x8xf32>
    %1324 = arith.addf %1322, %1323 : vector<4x8xf32>
    %1325 = arith.mulf %1138, %1138 : vector<4x8xf32>
    %cst_530 = arith.constant -0.934711635 : f32
    %1326 = vector.broadcast %cst_530 : f32 to vector<4x8xf32>
    %1327 = arith.addf %1325, %1326 : vector<4x8xf32>
    %1328 = arith.addf %1327, %1314 : vector<4x8xf32>
    %cst_531 = arith.constant dense<0.000000e+00> : vector<8xf32>
    %1329 = vector.multi_reduction <add>, %1328, %cst_531 [0] : vector<4x8xf32> to vector<8xf32>
    %cst_532 = arith.constant -5.000000e-01 : f32
    %1330 = vector.broadcast %cst_532 : f32 to vector<8xf32>
    %1331 = arith.mulf %1330, %1329 : vector<8xf32>
    %1332 = arith.index_cast %1136 : i32 to index
    %1333 = memref.load %arg2[%1332] : memref<16xf32, #tpu.memory_space<smem>>
    %1334 = arith.index_cast %1136 : i32 to index
    %1335 = memref.load %arg3[%1334] : memref<16xf32, #tpu.memory_space<smem>>
    %1336 = arith.index_cast %1136 : i32 to index
    %1337 = memref.load %arg4[%1336] : memref<16xf32, #tpu.memory_space<smem>>
    %1338 = vector.broadcast %1333 : f32 to vector<4x8xf32>
    %1339 = arith.mulf %1324, %1338 : vector<4x8xf32>
    %1340 = arith.subf %1099, %1339 : vector<4x8xf32>
    %1341 = vector.broadcast %1337 : f32 to vector<4x8xf32>
    %1342 = arith.mulf %1340, %1341 : vector<4x8xf32>
    %1343 = arith.mulf %1342, %1342 : vector<4x8xf32>
    %cst_533 = arith.constant 1.83787704 : f32
    %1344 = vector.broadcast %cst_533 : f32 to vector<4x8xf32>
    %1345 = arith.addf %1343, %1344 : vector<4x8xf32>
    %1346 = vector.broadcast %1335 : f32 to vector<4x8xf32>
    %1347 = arith.addf %1345, %1346 : vector<4x8xf32>
    %cst_534 = arith.constant dense<0.000000e+00> : vector<8xf32>
    %1348 = vector.multi_reduction <add>, %1347, %cst_534 [0] : vector<4x8xf32> to vector<8xf32>
    %cst_535 = arith.constant -5.000000e-01 : f32
    %1349 = vector.broadcast %cst_535 : f32 to vector<8xf32>
    %1350 = arith.mulf %1349, %1348 : vector<8xf32>
    %c5_536 = arith.constant 5 : index
    %c0_537 = arith.constant 0 : index
    %c0_538 = arith.constant 0 : index
    %1351 = vector.load %arg17[%c5_536, %c0_537, %c0_538] : memref<8x4x8xf32, #tpu.memory_space<vmem>>, vector<1x4x8xf32>
    %1352 = vector.shape_cast %1351 : vector<1x4x8xf32> to vector<4x8xf32>
    %1353 = vector.shape_cast %1324 : vector<4x8xf32> to vector<1x4x8xf32>
    tpu.vector_store %arg17[%c5_536, %c0_537, %c0_538], %1353 {strides = array<i32>} : memref<8x4x8xf32, #tpu.memory_space<vmem>>, vector<1x4x8xf32>,
    %c5_539 = arith.constant 5 : index
    %c0_540 = arith.constant 0 : index
    %1354 = vector.load %arg18[%c5_539, %c0_540] : memref<8x8xf32, #tpu.memory_space<vmem>>, vector<1x8xf32>
    %1355 = vector.shape_cast %1354 : vector<1x8xf32> to vector<8xf32>
    %1356 = vector.shape_cast %1331 : vector<8xf32> to vector<1x8xf32>
    tpu.vector_store %arg18[%c5_539, %c0_540], %1356 {strides = array<i32>} : memref<8x8xf32, #tpu.memory_space<vmem>>, vector<1x8xf32>,
    %c5_541 = arith.constant 5 : index
    %c0_542 = arith.constant 0 : index
    %1357 = vector.load %arg19[%c5_541, %c0_542] : memref<8x8xf32, #tpu.memory_space<vmem>>, vector<1x8xf32>
    %1358 = vector.shape_cast %1357 : vector<1x8xf32> to vector<8xf32>
    %1359 = vector.shape_cast %1350 : vector<8xf32> to vector<1x8xf32>
    tpu.vector_store %arg19[%c5_541, %c0_542], %1359 {strides = array<i32>} : memref<8x8xf32, #tpu.memory_space<vmem>>, vector<1x8xf32>,
    %c8_i32_543 = arith.constant 8 : i32
    %1360 = arith.muli %arg1, %c8_i32_543 : i32
    %c6_i32 = arith.constant 6 : i32
    %1361 = arith.addi %1360, %c6_i32 : i32
    %c6 = arith.constant 6 : index
    %c0_544 = arith.constant 0 : index
    %c0_545 = arith.constant 0 : index
    %1362 = vector.load %arg6[%c6, %c0_544, %c0_545] : memref<8x4x8xf32, #tpu.memory_space<vmem>>, vector<1x4x8xf32>
    %1363 = vector.shape_cast %1362 : vector<1x4x8xf32> to vector<4x8xf32>
    %c0_546 = arith.constant 0 : index
    %c0_547 = arith.constant 0 : index
    %1364 = vector.load %arg9[%c0_546, %c0_547] : memref<32x1xf32, #tpu.memory_space<vmem>>, vector<32x1xf32>
    %1365 = vector.extract_strided_slice %5 {offsets = [0, 0], sizes = [32, 1], strides = [1, 1]} : vector<32x4xf32> to vector<32x1xf32>
    %1366 = vector.extract_strided_slice %1324 {offsets = [0, 0], sizes = [1, 8], strides = [1, 1]} : vector<4x8xf32> to vector<1x8xf32>
    %1367 = vector.broadcast %1365 : vector<32x1xf32> to vector<32x8xf32>
    %1368 = vector.broadcast %1366 : vector<1x8xf32> to vector<32x8xf32>
    %1369 = arith.mulf %1367, %1368 : vector<32x8xf32>
    %1370 = vector.broadcast %1364 : vector<32x1xf32> to vector<32x8xf32>
    %1371 = arith.addf %1370, %1369 : vector<32x8xf32>
    %1372 = vector.extract_strided_slice %5 {offsets = [0, 1], sizes = [32, 1], strides = [1, 1]} : vector<32x4xf32> to vector<32x1xf32>
    %1373 = vector.extract_strided_slice %1324 {offsets = [1, 0], sizes = [1, 8], strides = [1, 1]} : vector<4x8xf32> to vector<1x8xf32>
    %1374 = vector.broadcast %1372 : vector<32x1xf32> to vector<32x8xf32>
    %1375 = vector.broadcast %1373 : vector<1x8xf32> to vector<32x8xf32>
    %1376 = arith.mulf %1374, %1375 : vector<32x8xf32>
    %1377 = arith.addf %1371, %1376 : vector<32x8xf32>
    %1378 = vector.extract_strided_slice %5 {offsets = [0, 2], sizes = [32, 1], strides = [1, 1]} : vector<32x4xf32> to vector<32x1xf32>
    %1379 = vector.extract_strided_slice %1324 {offsets = [2, 0], sizes = [1, 8], strides = [1, 1]} : vector<4x8xf32> to vector<1x8xf32>
    %1380 = vector.broadcast %1378 : vector<32x1xf32> to vector<32x8xf32>
    %1381 = vector.broadcast %1379 : vector<1x8xf32> to vector<32x8xf32>
    %1382 = arith.mulf %1380, %1381 : vector<32x8xf32>
    %1383 = arith.addf %1377, %1382 : vector<32x8xf32>
    %1384 = vector.extract_strided_slice %5 {offsets = [0, 3], sizes = [32, 1], strides = [1, 1]} : vector<32x4xf32> to vector<32x1xf32>
    %1385 = vector.extract_strided_slice %1324 {offsets = [3, 0], sizes = [1, 8], strides = [1, 1]} : vector<4x8xf32> to vector<1x8xf32>
    %1386 = vector.broadcast %1384 : vector<32x1xf32> to vector<32x8xf32>
    %1387 = vector.broadcast %1385 : vector<1x8xf32> to vector<32x8xf32>
    %1388 = arith.mulf %1386, %1387 : vector<32x8xf32>
    %1389 = arith.addf %1383, %1388 : vector<32x8xf32>
    %cst_548 = arith.constant 5.000000e-01 : f32
    %1390 = vector.broadcast %cst_548 : f32 to vector<32x8xf32>
    %1391 = arith.mulf %1390, %1389 : vector<32x8xf32>
    %cst_549 = arith.constant 0.707106769 : f32
    %1392 = vector.broadcast %cst_549 : f32 to vector<32x8xf32>
    %1393 = arith.mulf %1389, %1392 : vector<32x8xf32>
    %cst_550 = arith.constant 0.000000e+00 : f32
    %1394 = vector.broadcast %cst_550 : f32 to vector<32x8xf32>
    %1395 = arith.cmpf oge, %1393, %1394 : vector<32x8xf32>
    %cst_551 = arith.constant 1.000000e+00 : f32
    %cst_552 = arith.constant -1.000000e+00 : f32
    %1396 = vector.broadcast %cst_551 : f32 to vector<32x8xf32>
    %1397 = vector.broadcast %cst_552 : f32 to vector<32x8xf32>
    %1398 = arith.select %1395, %1396, %1397 : vector<32x8xi1>, vector<32x8xf32>
    %1399 = math.absf %1393 : vector<32x8xf32>
    %cst_553 = arith.constant 0.327591091 : f32
    %1400 = vector.broadcast %cst_553 : f32 to vector<32x8xf32>
    %1401 = arith.mulf %1400, %1399 : vector<32x8xf32>
    %cst_554 = arith.constant 1.000000e+00 : f32
    %1402 = vector.broadcast %cst_554 : f32 to vector<32x8xf32>
    %1403 = arith.addf %1402, %1401 : vector<32x8xf32>
    %cst_555 = arith.constant 1.000000e+00 : f32
    %1404 = vector.broadcast %cst_555 : f32 to vector<32x8xf32>
    %1405 = arith.divf %1404, %1403 : vector<32x8xf32>
    %cst_556 = arith.constant 1.06140542 : f32
    %1406 = vector.broadcast %cst_556 : f32 to vector<32x8xf32>
    %1407 = arith.mulf %1406, %1405 : vector<32x8xf32>
    %cst_557 = arith.constant -1.45315206 : f32
    %1408 = vector.broadcast %cst_557 : f32 to vector<32x8xf32>
    %1409 = arith.addf %1407, %1408 : vector<32x8xf32>
    %1410 = arith.mulf %1409, %1405 : vector<32x8xf32>
    %cst_558 = arith.constant 1.42141378 : f32
    %1411 = vector.broadcast %cst_558 : f32 to vector<32x8xf32>
    %1412 = arith.addf %1410, %1411 : vector<32x8xf32>
    %1413 = arith.mulf %1412, %1405 : vector<32x8xf32>
    %cst_559 = arith.constant -0.284496725 : f32
    %1414 = vector.broadcast %cst_559 : f32 to vector<32x8xf32>
    %1415 = arith.addf %1413, %1414 : vector<32x8xf32>
    %1416 = arith.mulf %1415, %1405 : vector<32x8xf32>
    %cst_560 = arith.constant 0.254829586 : f32
    %1417 = vector.broadcast %cst_560 : f32 to vector<32x8xf32>
    %1418 = arith.addf %1416, %1417 : vector<32x8xf32>
    %1419 = arith.mulf %1418, %1405 : vector<32x8xf32>
    %cst_561 = arith.constant 0.000000e+00 : f32
    %1420 = vector.broadcast %cst_561 : f32 to vector<32x8xf32>
    %1421 = arith.subf %1420, %1399 : vector<32x8xf32>
    %1422 = arith.mulf %1421, %1399 : vector<32x8xf32>
    %1423 = math.exp %1422 : vector<32x8xf32>
    %1424 = arith.mulf %1419, %1423 : vector<32x8xf32>
    %cst_562 = arith.constant 1.000000e+00 : f32
    %1425 = vector.broadcast %cst_562 : f32 to vector<32x8xf32>
    %1426 = arith.subf %1425, %1424 : vector<32x8xf32>
    %1427 = arith.mulf %1398, %1426 : vector<32x8xf32>
    %cst_563 = arith.constant 1.000000e+00 : f32
    %1428 = vector.broadcast %cst_563 : f32 to vector<32x8xf32>
    %1429 = arith.addf %1428, %1427 : vector<32x8xf32>
    %1430 = arith.mulf %1391, %1429 : vector<32x8xf32>
    %c0_564 = arith.constant 0 : index
    %c0_565 = arith.constant 0 : index
    %1431 = vector.load %arg10[%c0_564, %c0_565] : memref<16x32xf32, #tpu.memory_space<vmem>>, vector<16x32xf32>
    %cst_566 = arith.constant dense<0.000000e+00> : vector<16x8xf32>
    %1432 = tpu.matmul %1431, %1430, %cst_566 {dimension_numbers = #tpu.dot_dimension_numbers<[1], [0], [0], [1], [0, 0, 1, 1], [], []>} : vector<16x32xf32>, vector<32x8xf32>, vector<16x8xf32> -> vector<16x8xf32>
    %c0_567 = arith.constant 0 : index
    %c0_568 = arith.constant 0 : index
    %1433 = vector.load %arg11[%c0_567, %c0_568] : memref<16x1xf32, #tpu.memory_space<vmem>>, vector<16x1xf32>
    %1434 = vector.broadcast %1433 : vector<16x1xf32> to vector<16x8xf32>
    %1435 = arith.addf %1432, %1434 : vector<16x8xf32>
    %c0_569 = arith.constant 0 : index
    %c0_570 = arith.constant 0 : index
    %1436 = vector.load %arg12[%c0_569, %c0_570] : memref<32x16xf32, #tpu.memory_space<vmem>>, vector<32x16xf32>
    %cst_571 = arith.constant dense<0.000000e+00> : vector<32x8xf32>
    %1437 = tpu.matmul %1436, %1435, %cst_571 {dimension_numbers = #tpu.dot_dimension_numbers<[1], [0], [0], [1], [0, 0, 1, 1], [], []>} : vector<32x16xf32>, vector<16x8xf32>, vector<32x8xf32> -> vector<32x8xf32>
    %1438 = vector.extract_strided_slice %4 {offsets = [0, 6], sizes = [32, 1], strides = [1, 1]} : vector<32x8xf32> to vector<32x1xf32>
    %1439 = vector.broadcast %1438 : vector<32x1xf32> to vector<32x8xf32>
    %1440 = arith.addf %1437, %1439 : vector<32x8xf32>
    %cst_572 = arith.constant 5.000000e-01 : f32
    %1441 = vector.broadcast %cst_572 : f32 to vector<32x8xf32>
    %1442 = arith.mulf %1441, %1440 : vector<32x8xf32>
    %cst_573 = arith.constant 0.707106769 : f32
    %1443 = vector.broadcast %cst_573 : f32 to vector<32x8xf32>
    %1444 = arith.mulf %1440, %1443 : vector<32x8xf32>
    %cst_574 = arith.constant 0.000000e+00 : f32
    %1445 = vector.broadcast %cst_574 : f32 to vector<32x8xf32>
    %1446 = arith.cmpf oge, %1444, %1445 : vector<32x8xf32>
    %cst_575 = arith.constant 1.000000e+00 : f32
    %cst_576 = arith.constant -1.000000e+00 : f32
    %1447 = vector.broadcast %cst_575 : f32 to vector<32x8xf32>
    %1448 = vector.broadcast %cst_576 : f32 to vector<32x8xf32>
    %1449 = arith.select %1446, %1447, %1448 : vector<32x8xi1>, vector<32x8xf32>
    %1450 = math.absf %1444 : vector<32x8xf32>
    %cst_577 = arith.constant 0.327591091 : f32
    %1451 = vector.broadcast %cst_577 : f32 to vector<32x8xf32>
    %1452 = arith.mulf %1451, %1450 : vector<32x8xf32>
    %cst_578 = arith.constant 1.000000e+00 : f32
    %1453 = vector.broadcast %cst_578 : f32 to vector<32x8xf32>
    %1454 = arith.addf %1453, %1452 : vector<32x8xf32>
    %cst_579 = arith.constant 1.000000e+00 : f32
    %1455 = vector.broadcast %cst_579 : f32 to vector<32x8xf32>
    %1456 = arith.divf %1455, %1454 : vector<32x8xf32>
    %cst_580 = arith.constant 1.06140542 : f32
    %1457 = vector.broadcast %cst_580 : f32 to vector<32x8xf32>
    %1458 = arith.mulf %1457, %1456 : vector<32x8xf32>
    %cst_581 = arith.constant -1.45315206 : f32
    %1459 = vector.broadcast %cst_581 : f32 to vector<32x8xf32>
    %1460 = arith.addf %1458, %1459 : vector<32x8xf32>
    %1461 = arith.mulf %1460, %1456 : vector<32x8xf32>
    %cst_582 = arith.constant 1.42141378 : f32
    %1462 = vector.broadcast %cst_582 : f32 to vector<32x8xf32>
    %1463 = arith.addf %1461, %1462 : vector<32x8xf32>
    %1464 = arith.mulf %1463, %1456 : vector<32x8xf32>
    %cst_583 = arith.constant -0.284496725 : f32
    %1465 = vector.broadcast %cst_583 : f32 to vector<32x8xf32>
    %1466 = arith.addf %1464, %1465 : vector<32x8xf32>
    %1467 = arith.mulf %1466, %1456 : vector<32x8xf32>
    %cst_584 = arith.constant 0.254829586 : f32
    %1468 = vector.broadcast %cst_584 : f32 to vector<32x8xf32>
    %1469 = arith.addf %1467, %1468 : vector<32x8xf32>
    %1470 = arith.mulf %1469, %1456 : vector<32x8xf32>
    %cst_585 = arith.constant 0.000000e+00 : f32
    %1471 = vector.broadcast %cst_585 : f32 to vector<32x8xf32>
    %1472 = arith.subf %1471, %1450 : vector<32x8xf32>
    %1473 = arith.mulf %1472, %1450 : vector<32x8xf32>
    %1474 = math.exp %1473 : vector<32x8xf32>
    %1475 = arith.mulf %1470, %1474 : vector<32x8xf32>
    %cst_586 = arith.constant 1.000000e+00 : f32
    %1476 = vector.broadcast %cst_586 : f32 to vector<32x8xf32>
    %1477 = arith.subf %1476, %1475 : vector<32x8xf32>
    %1478 = arith.mulf %1449, %1477 : vector<32x8xf32>
    %cst_587 = arith.constant 1.000000e+00 : f32
    %1479 = vector.broadcast %cst_587 : f32 to vector<32x8xf32>
    %1480 = arith.addf %1479, %1478 : vector<32x8xf32>
    %1481 = arith.mulf %1442, %1480 : vector<32x8xf32>
    %c0_588 = arith.constant 0 : index
    %c0_589 = arith.constant 0 : index
    %1482 = vector.load %arg13[%c0_588, %c0_589] : memref<32x32xf32, #tpu.memory_space<vmem>>, vector<32x32xf32>
    %cst_590 = arith.constant dense<0.000000e+00> : vector<32x8xf32>
    %1483 = tpu.matmul %1482, %1481, %cst_590 {dimension_numbers = #tpu.dot_dimension_numbers<[1], [0], [0], [1], [0, 0, 1, 1], [], []>} : vector<32x32xf32>, vector<32x8xf32>, vector<32x8xf32> -> vector<32x8xf32>
    %c0_591 = arith.constant 0 : index
    %c0_592 = arith.constant 0 : index
    %1484 = vector.load %arg14[%c0_591, %c0_592] : memref<32x1xf32, #tpu.memory_space<vmem>>, vector<32x1xf32>
    %1485 = vector.broadcast %1484 : vector<32x1xf32> to vector<32x8xf32>
    %1486 = arith.addf %1483, %1485 : vector<32x8xf32>
    %cst_593 = arith.constant 5.000000e-01 : f32
    %1487 = vector.broadcast %cst_593 : f32 to vector<32x8xf32>
    %1488 = arith.mulf %1487, %1486 : vector<32x8xf32>
    %cst_594 = arith.constant 0.707106769 : f32
    %1489 = vector.broadcast %cst_594 : f32 to vector<32x8xf32>
    %1490 = arith.mulf %1486, %1489 : vector<32x8xf32>
    %cst_595 = arith.constant 0.000000e+00 : f32
    %1491 = vector.broadcast %cst_595 : f32 to vector<32x8xf32>
    %1492 = arith.cmpf oge, %1490, %1491 : vector<32x8xf32>
    %cst_596 = arith.constant 1.000000e+00 : f32
    %cst_597 = arith.constant -1.000000e+00 : f32
    %1493 = vector.broadcast %cst_596 : f32 to vector<32x8xf32>
    %1494 = vector.broadcast %cst_597 : f32 to vector<32x8xf32>
    %1495 = arith.select %1492, %1493, %1494 : vector<32x8xi1>, vector<32x8xf32>
    %1496 = math.absf %1490 : vector<32x8xf32>
    %cst_598 = arith.constant 0.327591091 : f32
    %1497 = vector.broadcast %cst_598 : f32 to vector<32x8xf32>
    %1498 = arith.mulf %1497, %1496 : vector<32x8xf32>
    %cst_599 = arith.constant 1.000000e+00 : f32
    %1499 = vector.broadcast %cst_599 : f32 to vector<32x8xf32>
    %1500 = arith.addf %1499, %1498 : vector<32x8xf32>
    %cst_600 = arith.constant 1.000000e+00 : f32
    %1501 = vector.broadcast %cst_600 : f32 to vector<32x8xf32>
    %1502 = arith.divf %1501, %1500 : vector<32x8xf32>
    %cst_601 = arith.constant 1.06140542 : f32
    %1503 = vector.broadcast %cst_601 : f32 to vector<32x8xf32>
    %1504 = arith.mulf %1503, %1502 : vector<32x8xf32>
    %cst_602 = arith.constant -1.45315206 : f32
    %1505 = vector.broadcast %cst_602 : f32 to vector<32x8xf32>
    %1506 = arith.addf %1504, %1505 : vector<32x8xf32>
    %1507 = arith.mulf %1506, %1502 : vector<32x8xf32>
    %cst_603 = arith.constant 1.42141378 : f32
    %1508 = vector.broadcast %cst_603 : f32 to vector<32x8xf32>
    %1509 = arith.addf %1507, %1508 : vector<32x8xf32>
    %1510 = arith.mulf %1509, %1502 : vector<32x8xf32>
    %cst_604 = arith.constant -0.284496725 : f32
    %1511 = vector.broadcast %cst_604 : f32 to vector<32x8xf32>
    %1512 = arith.addf %1510, %1511 : vector<32x8xf32>
    %1513 = arith.mulf %1512, %1502 : vector<32x8xf32>
    %cst_605 = arith.constant 0.254829586 : f32
    %1514 = vector.broadcast %cst_605 : f32 to vector<32x8xf32>
    %1515 = arith.addf %1513, %1514 : vector<32x8xf32>
    %1516 = arith.mulf %1515, %1502 : vector<32x8xf32>
    %cst_606 = arith.constant 0.000000e+00 : f32
    %1517 = vector.broadcast %cst_606 : f32 to vector<32x8xf32>
    %1518 = arith.subf %1517, %1496 : vector<32x8xf32>
    %1519 = arith.mulf %1518, %1496 : vector<32x8xf32>
    %1520 = math.exp %1519 : vector<32x8xf32>
    %1521 = arith.mulf %1516, %1520 : vector<32x8xf32>
    %cst_607 = arith.constant 1.000000e+00 : f32
    %1522 = vector.broadcast %cst_607 : f32 to vector<32x8xf32>
    %1523 = arith.subf %1522, %1521 : vector<32x8xf32>
    %1524 = arith.mulf %1495, %1523 : vector<32x8xf32>
    %cst_608 = arith.constant 1.000000e+00 : f32
    %1525 = vector.broadcast %cst_608 : f32 to vector<32x8xf32>
    %1526 = arith.addf %1525, %1524 : vector<32x8xf32>
    %1527 = arith.mulf %1488, %1526 : vector<32x8xf32>
    %c0_609 = arith.constant 0 : index
    %c0_610 = arith.constant 0 : index
    %1528 = vector.load %arg15[%c0_609, %c0_610] : memref<8x32xf32, #tpu.memory_space<vmem>>, vector<8x32xf32>
    %cst_611 = arith.constant dense<0.000000e+00> : vector<8x8xf32>
    %1529 = tpu.matmul %1528, %1527, %cst_611 {dimension_numbers = #tpu.dot_dimension_numbers<[1], [0], [0], [1], [0, 0, 1, 1], [], []>} : vector<8x32xf32>, vector<32x8xf32>, vector<8x8xf32> -> vector<8x8xf32>
    %c0_612 = arith.constant 0 : index
    %c0_613 = arith.constant 0 : index
    %1530 = vector.load %arg16[%c0_612, %c0_613] : memref<8x1xf32, #tpu.memory_space<vmem>>, vector<8x1xf32>
    %1531 = vector.broadcast %1530 : vector<8x1xf32> to vector<8x8xf32>
    %1532 = arith.addf %1529, %1531 : vector<8x8xf32>
    %1533 = vector.extract_strided_slice %1532 {offsets = [0, 0], sizes = [4, 8], strides = [1, 1]} : vector<8x8xf32> to vector<4x8xf32>
    %1534 = vector.extract_strided_slice %1532 {offsets = [4, 0], sizes = [4, 8], strides = [1, 1]} : vector<8x8xf32> to vector<4x8xf32>
    %1535 = math.tanh %1534 : vector<4x8xf32>
    %cst_614 = arith.constant 4.000000e+00 : f32
    %1536 = vector.broadcast %cst_614 : f32 to vector<4x8xf32>
    %1537 = arith.mulf %1535, %1536 : vector<4x8xf32>
    %cst_615 = arith.constant 0.000000e+00 : f32
    %1538 = vector.broadcast %cst_615 : f32 to vector<4x8xf32>
    %1539 = arith.addf %1537, %1538 : vector<4x8xf32>
    %cst_616 = arith.constant 5.000000e-01 : f32
    %1540 = vector.broadcast %cst_616 : f32 to vector<4x8xf32>
    %1541 = arith.mulf %1540, %1539 : vector<4x8xf32>
    %1542 = math.exp %1541 : vector<4x8xf32>
    %cst_617 = arith.constant 2.500000e-01 : f32
    %1543 = vector.broadcast %cst_617 : f32 to vector<4x8xf32>
    %1544 = arith.mulf %1543, %1542 : vector<4x8xf32>
    %cst_618 = arith.constant 6.250000e-02 : f32
    %1545 = vector.broadcast %cst_618 : f32 to vector<4x8xf32>
    %1546 = arith.mulf %1545, %1533 : vector<4x8xf32>
    %1547 = arith.addf %1324, %1546 : vector<4x8xf32>
    %1548 = arith.mulf %1544, %1363 : vector<4x8xf32>
    %1549 = arith.addf %1547, %1548 : vector<4x8xf32>
    %1550 = arith.mulf %1363, %1363 : vector<4x8xf32>
    %cst_619 = arith.constant -0.934711635 : f32
    %1551 = vector.broadcast %cst_619 : f32 to vector<4x8xf32>
    %1552 = arith.addf %1550, %1551 : vector<4x8xf32>
    %1553 = arith.addf %1552, %1539 : vector<4x8xf32>
    %cst_620 = arith.constant dense<0.000000e+00> : vector<8xf32>
    %1554 = vector.multi_reduction <add>, %1553, %cst_620 [0] : vector<4x8xf32> to vector<8xf32>
    %cst_621 = arith.constant -5.000000e-01 : f32
    %1555 = vector.broadcast %cst_621 : f32 to vector<8xf32>
    %1556 = arith.mulf %1555, %1554 : vector<8xf32>
    %1557 = arith.index_cast %1361 : i32 to index
    %1558 = memref.load %arg2[%1557] : memref<16xf32, #tpu.memory_space<smem>>
    %1559 = arith.index_cast %1361 : i32 to index
    %1560 = memref.load %arg3[%1559] : memref<16xf32, #tpu.memory_space<smem>>
    %1561 = arith.index_cast %1361 : i32 to index
    %1562 = memref.load %arg4[%1561] : memref<16xf32, #tpu.memory_space<smem>>
    %1563 = vector.broadcast %1558 : f32 to vector<4x8xf32>
    %1564 = arith.mulf %1549, %1563 : vector<4x8xf32>
    %1565 = arith.subf %1324, %1564 : vector<4x8xf32>
    %1566 = vector.broadcast %1562 : f32 to vector<4x8xf32>
    %1567 = arith.mulf %1565, %1566 : vector<4x8xf32>
    %1568 = arith.mulf %1567, %1567 : vector<4x8xf32>
    %cst_622 = arith.constant 1.83787704 : f32
    %1569 = vector.broadcast %cst_622 : f32 to vector<4x8xf32>
    %1570 = arith.addf %1568, %1569 : vector<4x8xf32>
    %1571 = vector.broadcast %1560 : f32 to vector<4x8xf32>
    %1572 = arith.addf %1570, %1571 : vector<4x8xf32>
    %cst_623 = arith.constant dense<0.000000e+00> : vector<8xf32>
    %1573 = vector.multi_reduction <add>, %1572, %cst_623 [0] : vector<4x8xf32> to vector<8xf32>
    %cst_624 = arith.constant -5.000000e-01 : f32
    %1574 = vector.broadcast %cst_624 : f32 to vector<8xf32>
    %1575 = arith.mulf %1574, %1573 : vector<8xf32>
    %c6_625 = arith.constant 6 : index
    %c0_626 = arith.constant 0 : index
    %c0_627 = arith.constant 0 : index
    %1576 = vector.load %arg17[%c6_625, %c0_626, %c0_627] : memref<8x4x8xf32, #tpu.memory_space<vmem>>, vector<1x4x8xf32>
    %1577 = vector.shape_cast %1576 : vector<1x4x8xf32> to vector<4x8xf32>
    %1578 = vector.shape_cast %1549 : vector<4x8xf32> to vector<1x4x8xf32>
    tpu.vector_store %arg17[%c6_625, %c0_626, %c0_627], %1578 {strides = array<i32>} : memref<8x4x8xf32, #tpu.memory_space<vmem>>, vector<1x4x8xf32>,
    %c6_628 = arith.constant 6 : index
    %c0_629 = arith.constant 0 : index
    %1579 = vector.load %arg18[%c6_628, %c0_629] : memref<8x8xf32, #tpu.memory_space<vmem>>, vector<1x8xf32>
    %1580 = vector.shape_cast %1579 : vector<1x8xf32> to vector<8xf32>
    %1581 = vector.shape_cast %1556 : vector<8xf32> to vector<1x8xf32>
    tpu.vector_store %arg18[%c6_628, %c0_629], %1581 {strides = array<i32>} : memref<8x8xf32, #tpu.memory_space<vmem>>, vector<1x8xf32>,
    %c6_630 = arith.constant 6 : index
    %c0_631 = arith.constant 0 : index
    %1582 = vector.load %arg19[%c6_630, %c0_631] : memref<8x8xf32, #tpu.memory_space<vmem>>, vector<1x8xf32>
    %1583 = vector.shape_cast %1582 : vector<1x8xf32> to vector<8xf32>
    %1584 = vector.shape_cast %1575 : vector<8xf32> to vector<1x8xf32>
    tpu.vector_store %arg19[%c6_630, %c0_631], %1584 {strides = array<i32>} : memref<8x8xf32, #tpu.memory_space<vmem>>, vector<1x8xf32>,
    %c8_i32_632 = arith.constant 8 : i32
    %1585 = arith.muli %arg1, %c8_i32_632 : i32
    %c7_i32 = arith.constant 7 : i32
    %1586 = arith.addi %1585, %c7_i32 : i32
    %c7 = arith.constant 7 : index
    %c0_633 = arith.constant 0 : index
    %c0_634 = arith.constant 0 : index
    %1587 = vector.load %arg6[%c7, %c0_633, %c0_634] : memref<8x4x8xf32, #tpu.memory_space<vmem>>, vector<1x4x8xf32>
    %1588 = vector.shape_cast %1587 : vector<1x4x8xf32> to vector<4x8xf32>
    %c0_635 = arith.constant 0 : index
    %c0_636 = arith.constant 0 : index
    %1589 = vector.load %arg9[%c0_635, %c0_636] : memref<32x1xf32, #tpu.memory_space<vmem>>, vector<32x1xf32>
    %1590 = vector.extract_strided_slice %5 {offsets = [0, 0], sizes = [32, 1], strides = [1, 1]} : vector<32x4xf32> to vector<32x1xf32>
    %1591 = vector.extract_strided_slice %1549 {offsets = [0, 0], sizes = [1, 8], strides = [1, 1]} : vector<4x8xf32> to vector<1x8xf32>
    %1592 = vector.broadcast %1590 : vector<32x1xf32> to vector<32x8xf32>
    %1593 = vector.broadcast %1591 : vector<1x8xf32> to vector<32x8xf32>
    %1594 = arith.mulf %1592, %1593 : vector<32x8xf32>
    %1595 = vector.broadcast %1589 : vector<32x1xf32> to vector<32x8xf32>
    %1596 = arith.addf %1595, %1594 : vector<32x8xf32>
    %1597 = vector.extract_strided_slice %5 {offsets = [0, 1], sizes = [32, 1], strides = [1, 1]} : vector<32x4xf32> to vector<32x1xf32>
    %1598 = vector.extract_strided_slice %1549 {offsets = [1, 0], sizes = [1, 8], strides = [1, 1]} : vector<4x8xf32> to vector<1x8xf32>
    %1599 = vector.broadcast %1597 : vector<32x1xf32> to vector<32x8xf32>
    %1600 = vector.broadcast %1598 : vector<1x8xf32> to vector<32x8xf32>
    %1601 = arith.mulf %1599, %1600 : vector<32x8xf32>
    %1602 = arith.addf %1596, %1601 : vector<32x8xf32>
    %1603 = vector.extract_strided_slice %5 {offsets = [0, 2], sizes = [32, 1], strides = [1, 1]} : vector<32x4xf32> to vector<32x1xf32>
    %1604 = vector.extract_strided_slice %1549 {offsets = [2, 0], sizes = [1, 8], strides = [1, 1]} : vector<4x8xf32> to vector<1x8xf32>
    %1605 = vector.broadcast %1603 : vector<32x1xf32> to vector<32x8xf32>
    %1606 = vector.broadcast %1604 : vector<1x8xf32> to vector<32x8xf32>
    %1607 = arith.mulf %1605, %1606 : vector<32x8xf32>
    %1608 = arith.addf %1602, %1607 : vector<32x8xf32>
    %1609 = vector.extract_strided_slice %5 {offsets = [0, 3], sizes = [32, 1], strides = [1, 1]} : vector<32x4xf32> to vector<32x1xf32>
    %1610 = vector.extract_strided_slice %1549 {offsets = [3, 0], sizes = [1, 8], strides = [1, 1]} : vector<4x8xf32> to vector<1x8xf32>
    %1611 = vector.broadcast %1609 : vector<32x1xf32> to vector<32x8xf32>
    %1612 = vector.broadcast %1610 : vector<1x8xf32> to vector<32x8xf32>
    %1613 = arith.mulf %1611, %1612 : vector<32x8xf32>
    %1614 = arith.addf %1608, %1613 : vector<32x8xf32>
    %cst_637 = arith.constant 5.000000e-01 : f32
    %1615 = vector.broadcast %cst_637 : f32 to vector<32x8xf32>
    %1616 = arith.mulf %1615, %1614 : vector<32x8xf32>
    %cst_638 = arith.constant 0.707106769 : f32
    %1617 = vector.broadcast %cst_638 : f32 to vector<32x8xf32>
    %1618 = arith.mulf %1614, %1617 : vector<32x8xf32>
    %cst_639 = arith.constant 0.000000e+00 : f32
    %1619 = vector.broadcast %cst_639 : f32 to vector<32x8xf32>
    %1620 = arith.cmpf oge, %1618, %1619 : vector<32x8xf32>
    %cst_640 = arith.constant 1.000000e+00 : f32
    %cst_641 = arith.constant -1.000000e+00 : f32
    %1621 = vector.broadcast %cst_640 : f32 to vector<32x8xf32>
    %1622 = vector.broadcast %cst_641 : f32 to vector<32x8xf32>
    %1623 = arith.select %1620, %1621, %1622 : vector<32x8xi1>, vector<32x8xf32>
    %1624 = math.absf %1618 : vector<32x8xf32>
    %cst_642 = arith.constant 0.327591091 : f32
    %1625 = vector.broadcast %cst_642 : f32 to vector<32x8xf32>
    %1626 = arith.mulf %1625, %1624 : vector<32x8xf32>
    %cst_643 = arith.constant 1.000000e+00 : f32
    %1627 = vector.broadcast %cst_643 : f32 to vector<32x8xf32>
    %1628 = arith.addf %1627, %1626 : vector<32x8xf32>
    %cst_644 = arith.constant 1.000000e+00 : f32
    %1629 = vector.broadcast %cst_644 : f32 to vector<32x8xf32>
    %1630 = arith.divf %1629, %1628 : vector<32x8xf32>
    %cst_645 = arith.constant 1.06140542 : f32
    %1631 = vector.broadcast %cst_645 : f32 to vector<32x8xf32>
    %1632 = arith.mulf %1631, %1630 : vector<32x8xf32>
    %cst_646 = arith.constant -1.45315206 : f32
    %1633 = vector.broadcast %cst_646 : f32 to vector<32x8xf32>
    %1634 = arith.addf %1632, %1633 : vector<32x8xf32>
    %1635 = arith.mulf %1634, %1630 : vector<32x8xf32>
    %cst_647 = arith.constant 1.42141378 : f32
    %1636 = vector.broadcast %cst_647 : f32 to vector<32x8xf32>
    %1637 = arith.addf %1635, %1636 : vector<32x8xf32>
    %1638 = arith.mulf %1637, %1630 : vector<32x8xf32>
    %cst_648 = arith.constant -0.284496725 : f32
    %1639 = vector.broadcast %cst_648 : f32 to vector<32x8xf32>
    %1640 = arith.addf %1638, %1639 : vector<32x8xf32>
    %1641 = arith.mulf %1640, %1630 : vector<32x8xf32>
    %cst_649 = arith.constant 0.254829586 : f32
    %1642 = vector.broadcast %cst_649 : f32 to vector<32x8xf32>
    %1643 = arith.addf %1641, %1642 : vector<32x8xf32>
    %1644 = arith.mulf %1643, %1630 : vector<32x8xf32>
    %cst_650 = arith.constant 0.000000e+00 : f32
    %1645 = vector.broadcast %cst_650 : f32 to vector<32x8xf32>
    %1646 = arith.subf %1645, %1624 : vector<32x8xf32>
    %1647 = arith.mulf %1646, %1624 : vector<32x8xf32>
    %1648 = math.exp %1647 : vector<32x8xf32>
    %1649 = arith.mulf %1644, %1648 : vector<32x8xf32>
    %cst_651 = arith.constant 1.000000e+00 : f32
    %1650 = vector.broadcast %cst_651 : f32 to vector<32x8xf32>
    %1651 = arith.subf %1650, %1649 : vector<32x8xf32>
    %1652 = arith.mulf %1623, %1651 : vector<32x8xf32>
    %cst_652 = arith.constant 1.000000e+00 : f32
    %1653 = vector.broadcast %cst_652 : f32 to vector<32x8xf32>
    %1654 = arith.addf %1653, %1652 : vector<32x8xf32>
    %1655 = arith.mulf %1616, %1654 : vector<32x8xf32>
    %c0_653 = arith.constant 0 : index
    %c0_654 = arith.constant 0 : index
    %1656 = vector.load %arg10[%c0_653, %c0_654] : memref<16x32xf32, #tpu.memory_space<vmem>>, vector<16x32xf32>
    %cst_655 = arith.constant dense<0.000000e+00> : vector<16x8xf32>
    %1657 = tpu.matmul %1656, %1655, %cst_655 {dimension_numbers = #tpu.dot_dimension_numbers<[1], [0], [0], [1], [0, 0, 1, 1], [], []>} : vector<16x32xf32>, vector<32x8xf32>, vector<16x8xf32> -> vector<16x8xf32>
    %c0_656 = arith.constant 0 : index
    %c0_657 = arith.constant 0 : index
    %1658 = vector.load %arg11[%c0_656, %c0_657] : memref<16x1xf32, #tpu.memory_space<vmem>>, vector<16x1xf32>
    %1659 = vector.broadcast %1658 : vector<16x1xf32> to vector<16x8xf32>
    %1660 = arith.addf %1657, %1659 : vector<16x8xf32>
    %c0_658 = arith.constant 0 : index
    %c0_659 = arith.constant 0 : index
    %1661 = vector.load %arg12[%c0_658, %c0_659] : memref<32x16xf32, #tpu.memory_space<vmem>>, vector<32x16xf32>
    %cst_660 = arith.constant dense<0.000000e+00> : vector<32x8xf32>
    %1662 = tpu.matmul %1661, %1660, %cst_660 {dimension_numbers = #tpu.dot_dimension_numbers<[1], [0], [0], [1], [0, 0, 1, 1], [], []>} : vector<32x16xf32>, vector<16x8xf32>, vector<32x8xf32> -> vector<32x8xf32>
    %1663 = vector.extract_strided_slice %4 {offsets = [0, 7], sizes = [32, 1], strides = [1, 1]} : vector<32x8xf32> to vector<32x1xf32>
    %1664 = vector.broadcast %1663 : vector<32x1xf32> to vector<32x8xf32>
    %1665 = arith.addf %1662, %1664 : vector<32x8xf32>
    %cst_661 = arith.constant 5.000000e-01 : f32
    %1666 = vector.broadcast %cst_661 : f32 to vector<32x8xf32>
    %1667 = arith.mulf %1666, %1665 : vector<32x8xf32>
    %cst_662 = arith.constant 0.707106769 : f32
    %1668 = vector.broadcast %cst_662 : f32 to vector<32x8xf32>
    %1669 = arith.mulf %1665, %1668 : vector<32x8xf32>
    %cst_663 = arith.constant 0.000000e+00 : f32
    %1670 = vector.broadcast %cst_663 : f32 to vector<32x8xf32>
    %1671 = arith.cmpf oge, %1669, %1670 : vector<32x8xf32>
    %cst_664 = arith.constant 1.000000e+00 : f32
    %cst_665 = arith.constant -1.000000e+00 : f32
    %1672 = vector.broadcast %cst_664 : f32 to vector<32x8xf32>
    %1673 = vector.broadcast %cst_665 : f32 to vector<32x8xf32>
    %1674 = arith.select %1671, %1672, %1673 : vector<32x8xi1>, vector<32x8xf32>
    %1675 = math.absf %1669 : vector<32x8xf32>
    %cst_666 = arith.constant 0.327591091 : f32
    %1676 = vector.broadcast %cst_666 : f32 to vector<32x8xf32>
    %1677 = arith.mulf %1676, %1675 : vector<32x8xf32>
    %cst_667 = arith.constant 1.000000e+00 : f32
    %1678 = vector.broadcast %cst_667 : f32 to vector<32x8xf32>
    %1679 = arith.addf %1678, %1677 : vector<32x8xf32>
    %cst_668 = arith.constant 1.000000e+00 : f32
    %1680 = vector.broadcast %cst_668 : f32 to vector<32x8xf32>
    %1681 = arith.divf %1680, %1679 : vector<32x8xf32>
    %cst_669 = arith.constant 1.06140542 : f32
    %1682 = vector.broadcast %cst_669 : f32 to vector<32x8xf32>
    %1683 = arith.mulf %1682, %1681 : vector<32x8xf32>
    %cst_670 = arith.constant -1.45315206 : f32
    %1684 = vector.broadcast %cst_670 : f32 to vector<32x8xf32>
    %1685 = arith.addf %1683, %1684 : vector<32x8xf32>
    %1686 = arith.mulf %1685, %1681 : vector<32x8xf32>
    %cst_671 = arith.constant 1.42141378 : f32
    %1687 = vector.broadcast %cst_671 : f32 to vector<32x8xf32>
    %1688 = arith.addf %1686, %1687 : vector<32x8xf32>
    %1689 = arith.mulf %1688, %1681 : vector<32x8xf32>
    %cst_672 = arith.constant -0.284496725 : f32
    %1690 = vector.broadcast %cst_672 : f32 to vector<32x8xf32>
    %1691 = arith.addf %1689, %1690 : vector<32x8xf32>
    %1692 = arith.mulf %1691, %1681 : vector<32x8xf32>
    %cst_673 = arith.constant 0.254829586 : f32
    %1693 = vector.broadcast %cst_673 : f32 to vector<32x8xf32>
    %1694 = arith.addf %1692, %1693 : vector<32x8xf32>
    %1695 = arith.mulf %1694, %1681 : vector<32x8xf32>
    %cst_674 = arith.constant 0.000000e+00 : f32
    %1696 = vector.broadcast %cst_674 : f32 to vector<32x8xf32>
    %1697 = arith.subf %1696, %1675 : vector<32x8xf32>
    %1698 = arith.mulf %1697, %1675 : vector<32x8xf32>
    %1699 = math.exp %1698 : vector<32x8xf32>
    %1700 = arith.mulf %1695, %1699 : vector<32x8xf32>
    %cst_675 = arith.constant 1.000000e+00 : f32
    %1701 = vector.broadcast %cst_675 : f32 to vector<32x8xf32>
    %1702 = arith.subf %1701, %1700 : vector<32x8xf32>
    %1703 = arith.mulf %1674, %1702 : vector<32x8xf32>
    %cst_676 = arith.constant 1.000000e+00 : f32
    %1704 = vector.broadcast %cst_676 : f32 to vector<32x8xf32>
    %1705 = arith.addf %1704, %1703 : vector<32x8xf32>
    %1706 = arith.mulf %1667, %1705 : vector<32x8xf32>
    %c0_677 = arith.constant 0 : index
    %c0_678 = arith.constant 0 : index
    %1707 = vector.load %arg13[%c0_677, %c0_678] : memref<32x32xf32, #tpu.memory_space<vmem>>, vector<32x32xf32>
    %cst_679 = arith.constant dense<0.000000e+00> : vector<32x8xf32>
    %1708 = tpu.matmul %1707, %1706, %cst_679 {dimension_numbers = #tpu.dot_dimension_numbers<[1], [0], [0], [1], [0, 0, 1, 1], [], []>} : vector<32x32xf32>, vector<32x8xf32>, vector<32x8xf32> -> vector<32x8xf32>
    %c0_680 = arith.constant 0 : index
    %c0_681 = arith.constant 0 : index
    %1709 = vector.load %arg14[%c0_680, %c0_681] : memref<32x1xf32, #tpu.memory_space<vmem>>, vector<32x1xf32>
    %1710 = vector.broadcast %1709 : vector<32x1xf32> to vector<32x8xf32>
    %1711 = arith.addf %1708, %1710 : vector<32x8xf32>
    %cst_682 = arith.constant 5.000000e-01 : f32
    %1712 = vector.broadcast %cst_682 : f32 to vector<32x8xf32>
    %1713 = arith.mulf %1712, %1711 : vector<32x8xf32>
    %cst_683 = arith.constant 0.707106769 : f32
    %1714 = vector.broadcast %cst_683 : f32 to vector<32x8xf32>
    %1715 = arith.mulf %1711, %1714 : vector<32x8xf32>
    %cst_684 = arith.constant 0.000000e+00 : f32
    %1716 = vector.broadcast %cst_684 : f32 to vector<32x8xf32>
    %1717 = arith.cmpf oge, %1715, %1716 : vector<32x8xf32>
    %cst_685 = arith.constant 1.000000e+00 : f32
    %cst_686 = arith.constant -1.000000e+00 : f32
    %1718 = vector.broadcast %cst_685 : f32 to vector<32x8xf32>
    %1719 = vector.broadcast %cst_686 : f32 to vector<32x8xf32>
    %1720 = arith.select %1717, %1718, %1719 : vector<32x8xi1>, vector<32x8xf32>
    %1721 = math.absf %1715 : vector<32x8xf32>
    %cst_687 = arith.constant 0.327591091 : f32
    %1722 = vector.broadcast %cst_687 : f32 to vector<32x8xf32>
    %1723 = arith.mulf %1722, %1721 : vector<32x8xf32>
    %cst_688 = arith.constant 1.000000e+00 : f32
    %1724 = vector.broadcast %cst_688 : f32 to vector<32x8xf32>
    %1725 = arith.addf %1724, %1723 : vector<32x8xf32>
    %cst_689 = arith.constant 1.000000e+00 : f32
    %1726 = vector.broadcast %cst_689 : f32 to vector<32x8xf32>
    %1727 = arith.divf %1726, %1725 : vector<32x8xf32>
    %cst_690 = arith.constant 1.06140542 : f32
    %1728 = vector.broadcast %cst_690 : f32 to vector<32x8xf32>
    %1729 = arith.mulf %1728, %1727 : vector<32x8xf32>
    %cst_691 = arith.constant -1.45315206 : f32
    %1730 = vector.broadcast %cst_691 : f32 to vector<32x8xf32>
    %1731 = arith.addf %1729, %1730 : vector<32x8xf32>
    %1732 = arith.mulf %1731, %1727 : vector<32x8xf32>
    %cst_692 = arith.constant 1.42141378 : f32
    %1733 = vector.broadcast %cst_692 : f32 to vector<32x8xf32>
    %1734 = arith.addf %1732, %1733 : vector<32x8xf32>
    %1735 = arith.mulf %1734, %1727 : vector<32x8xf32>
    %cst_693 = arith.constant -0.284496725 : f32
    %1736 = vector.broadcast %cst_693 : f32 to vector<32x8xf32>
    %1737 = arith.addf %1735, %1736 : vector<32x8xf32>
    %1738 = arith.mulf %1737, %1727 : vector<32x8xf32>
    %cst_694 = arith.constant 0.254829586 : f32
    %1739 = vector.broadcast %cst_694 : f32 to vector<32x8xf32>
    %1740 = arith.addf %1738, %1739 : vector<32x8xf32>
    %1741 = arith.mulf %1740, %1727 : vector<32x8xf32>
    %cst_695 = arith.constant 0.000000e+00 : f32
    %1742 = vector.broadcast %cst_695 : f32 to vector<32x8xf32>
    %1743 = arith.subf %1742, %1721 : vector<32x8xf32>
    %1744 = arith.mulf %1743, %1721 : vector<32x8xf32>
    %1745 = math.exp %1744 : vector<32x8xf32>
    %1746 = arith.mulf %1741, %1745 : vector<32x8xf32>
    %cst_696 = arith.constant 1.000000e+00 : f32
    %1747 = vector.broadcast %cst_696 : f32 to vector<32x8xf32>
    %1748 = arith.subf %1747, %1746 : vector<32x8xf32>
    %1749 = arith.mulf %1720, %1748 : vector<32x8xf32>
    %cst_697 = arith.constant 1.000000e+00 : f32
    %1750 = vector.broadcast %cst_697 : f32 to vector<32x8xf32>
    %1751 = arith.addf %1750, %1749 : vector<32x8xf32>
    %1752 = arith.mulf %1713, %1751 : vector<32x8xf32>
    %c0_698 = arith.constant 0 : index
    %c0_699 = arith.constant 0 : index
    %1753 = vector.load %arg15[%c0_698, %c0_699] : memref<8x32xf32, #tpu.memory_space<vmem>>, vector<8x32xf32>
    %cst_700 = arith.constant dense<0.000000e+00> : vector<8x8xf32>
    %1754 = tpu.matmul %1753, %1752, %cst_700 {dimension_numbers = #tpu.dot_dimension_numbers<[1], [0], [0], [1], [0, 0, 1, 1], [], []>} : vector<8x32xf32>, vector<32x8xf32>, vector<8x8xf32> -> vector<8x8xf32>
    %c0_701 = arith.constant 0 : index
    %c0_702 = arith.constant 0 : index
    %1755 = vector.load %arg16[%c0_701, %c0_702] : memref<8x1xf32, #tpu.memory_space<vmem>>, vector<8x1xf32>
    %1756 = vector.broadcast %1755 : vector<8x1xf32> to vector<8x8xf32>
    %1757 = arith.addf %1754, %1756 : vector<8x8xf32>
    %1758 = vector.extract_strided_slice %1757 {offsets = [0, 0], sizes = [4, 8], strides = [1, 1]} : vector<8x8xf32> to vector<4x8xf32>
    %1759 = vector.extract_strided_slice %1757 {offsets = [4, 0], sizes = [4, 8], strides = [1, 1]} : vector<8x8xf32> to vector<4x8xf32>
    %1760 = math.tanh %1759 : vector<4x8xf32>
    %cst_703 = arith.constant 4.000000e+00 : f32
    %1761 = vector.broadcast %cst_703 : f32 to vector<4x8xf32>
    %1762 = arith.mulf %1760, %1761 : vector<4x8xf32>
    %cst_704 = arith.constant 0.000000e+00 : f32
    %1763 = vector.broadcast %cst_704 : f32 to vector<4x8xf32>
    %1764 = arith.addf %1762, %1763 : vector<4x8xf32>
    %cst_705 = arith.constant 5.000000e-01 : f32
    %1765 = vector.broadcast %cst_705 : f32 to vector<4x8xf32>
    %1766 = arith.mulf %1765, %1764 : vector<4x8xf32>
    %1767 = math.exp %1766 : vector<4x8xf32>
    %cst_706 = arith.constant 2.500000e-01 : f32
    %1768 = vector.broadcast %cst_706 : f32 to vector<4x8xf32>
    %1769 = arith.mulf %1768, %1767 : vector<4x8xf32>
    %cst_707 = arith.constant 6.250000e-02 : f32
    %1770 = vector.broadcast %cst_707 : f32 to vector<4x8xf32>
    %1771 = arith.mulf %1770, %1758 : vector<4x8xf32>
    %1772 = arith.addf %1549, %1771 : vector<4x8xf32>
    %1773 = arith.mulf %1769, %1588 : vector<4x8xf32>
    %1774 = arith.addf %1772, %1773 : vector<4x8xf32>
    %1775 = arith.mulf %1588, %1588 : vector<4x8xf32>
    %cst_708 = arith.constant -0.934711635 : f32
    %1776 = vector.broadcast %cst_708 : f32 to vector<4x8xf32>
    %1777 = arith.addf %1775, %1776 : vector<4x8xf32>
    %1778 = arith.addf %1777, %1764 : vector<4x8xf32>
    %cst_709 = arith.constant dense<0.000000e+00> : vector<8xf32>
    %1779 = vector.multi_reduction <add>, %1778, %cst_709 [0] : vector<4x8xf32> to vector<8xf32>
    %cst_710 = arith.constant -5.000000e-01 : f32
    %1780 = vector.broadcast %cst_710 : f32 to vector<8xf32>
    %1781 = arith.mulf %1780, %1779 : vector<8xf32>
    %1782 = arith.index_cast %1586 : i32 to index
    %1783 = memref.load %arg2[%1782] : memref<16xf32, #tpu.memory_space<smem>>
    %1784 = arith.index_cast %1586 : i32 to index
    %1785 = memref.load %arg3[%1784] : memref<16xf32, #tpu.memory_space<smem>>
    %1786 = arith.index_cast %1586 : i32 to index
    %1787 = memref.load %arg4[%1786] : memref<16xf32, #tpu.memory_space<smem>>
    %1788 = vector.broadcast %1783 : f32 to vector<4x8xf32>
    %1789 = arith.mulf %1774, %1788 : vector<4x8xf32>
    %1790 = arith.subf %1549, %1789 : vector<4x8xf32>
    %1791 = vector.broadcast %1787 : f32 to vector<4x8xf32>
    %1792 = arith.mulf %1790, %1791 : vector<4x8xf32>
    %1793 = arith.mulf %1792, %1792 : vector<4x8xf32>
    %cst_711 = arith.constant 1.83787704 : f32
    %1794 = vector.broadcast %cst_711 : f32 to vector<4x8xf32>
    %1795 = arith.addf %1793, %1794 : vector<4x8xf32>
    %1796 = vector.broadcast %1785 : f32 to vector<4x8xf32>
    %1797 = arith.addf %1795, %1796 : vector<4x8xf32>
    %cst_712 = arith.constant dense<0.000000e+00> : vector<8xf32>
    %1798 = vector.multi_reduction <add>, %1797, %cst_712 [0] : vector<4x8xf32> to vector<8xf32>
    %cst_713 = arith.constant -5.000000e-01 : f32
    %1799 = vector.broadcast %cst_713 : f32 to vector<8xf32>
    %1800 = arith.mulf %1799, %1798 : vector<8xf32>
    %c7_714 = arith.constant 7 : index
    %c0_715 = arith.constant 0 : index
    %c0_716 = arith.constant 0 : index
    %1801 = vector.load %arg17[%c7_714, %c0_715, %c0_716] : memref<8x4x8xf32, #tpu.memory_space<vmem>>, vector<1x4x8xf32>
    %1802 = vector.shape_cast %1801 : vector<1x4x8xf32> to vector<4x8xf32>
    %1803 = vector.shape_cast %1774 : vector<4x8xf32> to vector<1x4x8xf32>
    tpu.vector_store %arg17[%c7_714, %c0_715, %c0_716], %1803 {strides = array<i32>} : memref<8x4x8xf32, #tpu.memory_space<vmem>>, vector<1x4x8xf32>,
    %c7_717 = arith.constant 7 : index
    %c0_718 = arith.constant 0 : index
    %1804 = vector.load %arg18[%c7_717, %c0_718] : memref<8x8xf32, #tpu.memory_space<vmem>>, vector<1x8xf32>
    %1805 = vector.shape_cast %1804 : vector<1x8xf32> to vector<8xf32>
    %1806 = vector.shape_cast %1781 : vector<8xf32> to vector<1x8xf32>
    tpu.vector_store %arg18[%c7_717, %c0_718], %1806 {strides = array<i32>} : memref<8x8xf32, #tpu.memory_space<vmem>>, vector<1x8xf32>,
    %c7_719 = arith.constant 7 : index
    %c0_720 = arith.constant 0 : index
    %1807 = vector.load %arg19[%c7_719, %c0_720] : memref<8x8xf32, #tpu.memory_space<vmem>>, vector<1x8xf32>
    %1808 = vector.shape_cast %1807 : vector<1x8xf32> to vector<8xf32>
    %1809 = vector.shape_cast %1800 : vector<8xf32> to vector<1x8xf32>
    tpu.vector_store %arg19[%c7_719, %c0_720], %1809 {strides = array<i32>} : memref<8x8xf32, #tpu.memory_space<vmem>>, vector<1x8xf32>,
    %c0_721 = arith.constant 0 : index
    %c0_722 = arith.constant 0 : index
    %1810 = vector.load %arg20[%c0_721, %c0_722] : memref<4x8xf32, #tpu.memory_space<vmem>>, vector<4x8xf32>
    tpu.vector_store %arg20[%c0_721, %c0_722], %1774 {strides = array<i32>} : memref<4x8xf32, #tpu.memory_space<vmem>>, vector<4x8xf32>,
    return
  }
  func.func @transform_0(%arg0: i32, %arg1: i32) -> i32 {
    %c0_i32 = arith.constant 0 : i32
    %c0_i32_0 = arith.constant 0 : i32
    return %c0_i32 : i32
  }
  func.func @transform_1(%arg0: i32, %arg1: i32) -> i32 {
    %c0_i32 = arith.constant 0 : i32
    %c0_i32_0 = arith.constant 0 : i32
    return %c0_i32 : i32
  }
  func.func @transform_2(%arg0: i32, %arg1: i32) -> i32 {
    %c0_i32 = arith.constant 0 : i32
    %c0_i32_0 = arith.constant 0 : i32
    return %c0_i32 : i32
  }
  func.func @transform_3(%arg0: i32, %arg1: i32) -> (i32, i32) {
    %c0_i32 = arith.constant 0 : i32
    %c0_i32_0 = arith.constant 0 : i32
    return %c0_i32, %arg0 : i32, i32
  }
  func.func @transform_4(%arg0: i32, %arg1: i32) -> (i32, i32, i32) {
    %c0_i32 = arith.constant 0 : i32
    %c0_i32_0 = arith.constant 0 : i32
    return %arg1, %c0_i32, %arg0 : i32, i32, i32
  }
  func.func @transform_5(%arg0: i32, %arg1: i32) -> (i32, i32, i32) {
    %c0_i32 = arith.constant 0 : i32
    %c0_i32_0 = arith.constant 0 : i32
    %c0_i32_1 = arith.constant 0 : i32
    return %arg1, %c0_i32, %c0_i32_0 : i32, i32, i32
  }
  func.func @transform_6(%arg0: i32, %arg1: i32) -> (i32, i32) {
    %c0_i32 = arith.constant 0 : i32
    %c0_i32_0 = arith.constant 0 : i32
    %c0_i32_1 = arith.constant 0 : i32
    return %c0_i32, %c0_i32_0 : i32, i32
  }
  func.func @transform_7(%arg0: i32, %arg1: i32) -> (i32, i32) {
    %c0_i32 = arith.constant 0 : i32
    %c0_i32_0 = arith.constant 0 : i32
    %c0_i32_1 = arith.constant 0 : i32
    return %c0_i32, %c0_i32_0 : i32, i32
  }
  func.func @transform_8(%arg0: i32, %arg1: i32) -> (i32, i32) {
    %c0_i32 = arith.constant 0 : i32
    %c0_i32_0 = arith.constant 0 : i32
    %c0_i32_1 = arith.constant 0 : i32
    return %c0_i32, %c0_i32_0 : i32, i32
  }
  func.func @transform_9(%arg0: i32, %arg1: i32) -> (i32, i32) {
    %c0_i32 = arith.constant 0 : i32
    %c0_i32_0 = arith.constant 0 : i32
    %c0_i32_1 = arith.constant 0 : i32
    return %c0_i32, %c0_i32_0 : i32, i32
  }
  func.func @transform_10(%arg0: i32, %arg1: i32) -> (i32, i32) {
    %c0_i32 = arith.constant 0 : i32
    %c0_i32_0 = arith.constant 0 : i32
    %c0_i32_1 = arith.constant 0 : i32
    return %c0_i32, %c0_i32_0 : i32, i32
  }
  func.func @transform_11(%arg0: i32, %arg1: i32) -> (i32, i32) {
    %c0_i32 = arith.constant 0 : i32
    %c0_i32_0 = arith.constant 0 : i32
    %c0_i32_1 = arith.constant 0 : i32
    return %c0_i32, %c0_i32_0 : i32, i32
  }
  func.func @transform_12(%arg0: i32, %arg1: i32) -> (i32, i32) {
    %c0_i32 = arith.constant 0 : i32
    %c0_i32_0 = arith.constant 0 : i32
    %c0_i32_1 = arith.constant 0 : i32
    return %c0_i32, %c0_i32_0 : i32, i32
  }
  func.func @transform_13(%arg0: i32, %arg1: i32) -> (i32, i32) {
    %c0_i32 = arith.constant 0 : i32
    %c0_i32_0 = arith.constant 0 : i32
    %c0_i32_1 = arith.constant 0 : i32
    return %c0_i32, %c0_i32_0 : i32, i32
  }
  func.func @transform_14(%arg0: i32, %arg1: i32) -> (i32, i32) {
    %c0_i32 = arith.constant 0 : i32
    %c0_i32_0 = arith.constant 0 : i32
    %c0_i32_1 = arith.constant 0 : i32
    return %c0_i32, %c0_i32_0 : i32, i32
  }
  func.func @transform_15(%arg0: i32, %arg1: i32) -> (i32, i32, i32) {
    %c0_i32 = arith.constant 0 : i32
    %c0_i32_0 = arith.constant 0 : i32
    return %arg1, %c0_i32, %arg0 : i32, i32, i32
  }
  func.func @transform_16(%arg0: i32, %arg1: i32) -> (i32, i32) {
    %c0_i32 = arith.constant 0 : i32
    return %arg1, %arg0 : i32, i32
  }
  func.func @transform_17(%arg0: i32, %arg1: i32) -> (i32, i32) {
    %c0_i32 = arith.constant 0 : i32
    return %arg1, %arg0 : i32, i32
  }
}

</mosaic_0001>

<llo_original>
// kernel: tpu_custom_call.1
$region0: #{tpu_custom_call.1}
  #allocation0 [shape = 'u32[]', space=smem, size = 0x4, offset = 0x4, fixed_abs, tag = 'smem constant byte address 0x4 - core index']
  #allocation1 [shape = 'u32[144,128]{1,0:T(1,128)}', space=vmem, size = 0x12000, scoped, tag = 'internal scratch']
  #allocation2 [shape = 'f32[4,8]{1,0:T(4,128)}', space=vmem, size = 0x800, scoped, tag = 'scratch operand']
  %s0 = inlined_call_operand.vmem [shape: f32[16], index: 0, kind: input, shape index: {}]
  %s1 = inlined_call_operand.vmem [shape: f32[16], index: 1, kind: input, shape index: {}]
  %s2 = inlined_call_operand.vmem [shape: f32[16], index: 2, kind: input, shape index: {}]
  %s3 = inlined_call_operand.vmem [shape: f32[4,8], index: 3, kind: input, shape index: {}]
  %s4 = inlined_call_operand.vmem [shape: f32[16,4,8], index: 4, kind: input, shape index: {}]
  %s5 = inlined_call_operand.vmem [shape: f32[2,32,8], index: 5, kind: input, shape index: {}]
  %s6 = inlined_call_operand.vmem [shape: f32[32,4], index: 6, kind: input, shape index: {}]
  %s7 = inlined_call_operand.vmem [shape: f32[32,1], index: 7, kind: input, shape index: {}]
  %s8 = inlined_call_operand.vmem [shape: f32[16,32], index: 8, kind: input, shape index: {}]
  %s9 = inlined_call_operand.vmem [shape: f32[16,1], index: 9, kind: input, shape index: {}]
  %s10 = inlined_call_operand.vmem [shape: f32[32,16], index: 10, kind: input, shape index: {}]
  %s11 = inlined_call_operand.vmem [shape: f32[32,32], index: 11, kind: input, shape index: {}]
  %s12 = inlined_call_operand.vmem [shape: f32[32,1], index: 12, kind: input, shape index: {}]
  %s13 = inlined_call_operand.vmem [shape: f32[8,32], index: 13, kind: input, shape index: {}]
  %s14 = inlined_call_operand.vmem [shape: f32[8,1], index: 14, kind: input, shape index: {}]
  %s15 = inlined_call_operand.vmem [shape: f32[16,4,8], index: 15, kind: output, shape index: {0}]
  %s16 = inlined_call_operand.vmem [shape: f32[16,8], index: 16, kind: output, shape index: {1}]
  %s17 = inlined_call_operand.vmem [shape: f32[16,8], index: 17, kind: output, shape index: {2}]
  %18 = xla_tuple %s15, %s16, %s17
  %s19 = sld [smem:[#allocation0]]
  $region125: #{tpu_custom_call.1} parent=0
    _
  %s21 = ssub.s32 1, %s19
  %s22 = scalar_select 0, %s21, %s19
  $region1: #{tpu_custom_call.1} parent=0
    #allocation3 [shape = 'u8[512]{0}', space=smem, size = 0x200, scoped, tag = 'input window, operand 0, single buffered']
    #allocation4 [shape = 's32[2]{0}', space=sflag, size = 0x8, scoped, tag = 'scoped memory for tpu_custom_call.1']
    #allocation5 [shape = 'u8[512]{0}', space=smem, size = 0x200, scoped, tag = 'input window, operand 1, single buffered']
    #allocation6 [shape = 's32[1]{0}', space=sflag, size = 0x4, scoped, tag = 'scoped memory for tpu_custom_call.1']
    #allocation7 [shape = 'u8[512]{0}', space=smem, size = 0x200, scoped, tag = 'input window, operand 2, single buffered']
    %23 = vsyncpa [#allocation4], 0
    %24 = vsyncpa [#allocation6], 0
    loop: start=0, step=1, limit=4
    $region2: #{tpu_custom_call.1} parent=1 // loop_pre_header
      _
    $region3: #{tpu_custom_call.1} parent=1 // loop_header
      %s26 = sphi 0, %s30
      %p27 = scmp.ge.s32.totalorder %s26, 4
      %s33 = sphi 0, %s45
      %s34 = sphi 0, %s41
      %s35 = sphi 0, %s33
      %s36 = sphi 0, %s34
      %s37 = sphi 0, %s35
      %s38 = sphi 0, %s36
      %s46 = sphi 0, %s46
      %s48 = sphi 0, %s46
      %s49 = sphi 0, %s48
      %s63 = sphi 0, %s49
      %s67 = sphi 0, %s67
      %s69 = sphi 0, %s67
      %s70 = sphi 0, %s69
      %s84 = sphi 0, %s70
      %s88 = sphi 0, %s88
      %s90 = sphi 0, %s88
      %s91 = sphi 0, %s90
      %s105 = sphi 0, %s91
      %s111 = sphi 0, %s113
      %s114 = sphi 0, %s111
      %s115 = sphi 0, %s114
      %s131 = sphi 0, %s115
      %s139 = sphi 0, %s141
      %s142 = sphi 0, %s139
      %s143 = sphi 0, %s142
      %s159 = sphi 0, %s143
      %s165 = sphi 0, %s167
      %s168 = sphi 0, %s165
      %s169 = sphi 0, %s168
      %s185 = sphi 0, %s169
      %s189 = sphi 0, %s189
      %s191 = sphi 0, %s189
      %s192 = sphi 0, %s191
      %s206 = sphi 0, %s192
      %s210 = sphi 0, %s210
      %s212 = sphi 0, %s210
      %s213 = sphi 0, %s212
      %s227 = sphi 0, %s213
      %s231 = sphi 0, %s231
      %s233 = sphi 0, %s231
      %s234 = sphi 0, %s233
      %s248 = sphi 0, %s234
      %s252 = sphi 0, %s252
      %s254 = sphi 0, %s252
      %s255 = sphi 0, %s254
      %s269 = sphi 0, %s255
      %s273 = sphi 0, %s273
      %s275 = sphi 0, %s273
      %s276 = sphi 0, %s275
      %s290 = sphi 0, %s276
      %s294 = sphi 0, %s294
      %s296 = sphi 0, %s294
      %s297 = sphi 0, %s296
      %s311 = sphi 0, %s297
      %s315 = sphi 0, %s315
      %s317 = sphi 0, %s315
      %s318 = sphi 0, %s317
      %s332 = sphi 0, %s318
      %s336 = sphi 0, %s336
      %s338 = sphi 0, %s336
      %s339 = sphi 0, %s338
      %s353 = sphi 0, %s339
      %s357 = sphi 0, %s357
      %s359 = sphi 0, %s357
      %s360 = sphi 0, %s359
      %s374 = sphi 0, %s360
      %s382 = sphi 0, %s384
      %s385 = sphi 0, %s382
      %s386 = sphi 0, %s385
      %s402 = sphi 0, %s386
      %s410 = sphi 0, %s412
      %s413 = sphi 0, %s410
      %s414 = sphi 0, %s413
      %s430 = sphi 0, %s414
      %s438 = sphi 0, %s440
      %s441 = sphi 0, %s438
      %s442 = sphi 0, %s441
      %s458 = sphi 0, %s442
    $region4: #{tpu_custom_call.1} parent=1 // loop_header_branch
      %29 = sbr.rel (%p27) target = $region8
    $region5: #{tpu_custom_call.1} parent=1 // loop_body
      %s31 = ssub.s32 %s26, 1
      %s32 = ssub.s32 %s26, 2
      %s39 = sadd.s32 1, %s34
      %p40 = scmp.ge.s32.totalorder %s39, 2
      %s41 = scalar_select %p40, 0, %s39
      %s42 = sadd.s32 1, %s33
      %s43 = scalar_select %p40, %s42, %s33
      %p44 = scmp.ge.s32.totalorder %s43, 1
      %s45 = scalar_select %p44, 0, %s43
      %s47 = sadd.s32 %s46, 1
      %p50 = scmp.eq.s32.totalorder %s26, 1
      %p51 = scmp.ne.s32.totalorder %s46, %s48
      %p52 = scmp.eq.s32.totalorder %s26, 0
      %p53 = por %p51, %p52
      %p54 = scmp.ne.s32.totalorder %s46, %s48
      %p55 = scmp.eq.s32.totalorder %s31, 1
      %p56 = por %p54, %p55
      %p57 = scmp.ne.s32.totalorder %s48, %s49
      %p58 = scmp.eq.s32.totalorder %s31, 0
      %p59 = por %p57, %p58
      %p60 = scmp.ne.s32.totalorder %s48, %s49
      %p61 = scmp.eq.s32.totalorder %s32, 1
      %p62 = por %p60, %p61
      %p64 = scmp.ne.s32.totalorder %s49, %s63
      %p65 = scmp.eq.s32.totalorder %s32, 0
      %p66 = por %p64, %p65
      %s68 = sadd.s32 %s67, 1
      %p71 = scmp.eq.s32.totalorder %s26, 1
      %p72 = scmp.ne.s32.totalorder %s67, %s69
      %p73 = scmp.eq.s32.totalorder %s26, 0
      %p74 = por %p72, %p73
      %p75 = scmp.ne.s32.totalorder %s67, %s69
      %p76 = scmp.eq.s32.totalorder %s31, 1
      %p77 = por %p75, %p76
      %p78 = scmp.ne.s32.totalorder %s69, %s70
      %p79 = scmp.eq.s32.totalorder %s31, 0
      %p80 = por %p78, %p79
      %p81 = scmp.ne.s32.totalorder %s69, %s70
      %p82 = scmp.eq.s32.totalorder %s32, 1
      %p83 = por %p81, %p82
      %p85 = scmp.ne.s32.totalorder %s70, %s84
      %p86 = scmp.eq.s32.totalorder %s32, 0
      %p87 = por %p85, %p86
      %s89 = sadd.s32 %s88, 1
      %p92 = scmp.eq.s32.totalorder %s26, 1
      %p93 = scmp.ne.s32.totalorder %s88, %s90
      %p94 = scmp.eq.s32.totalorder %s26, 0
      %p95 = por %p93, %p94
      %p96 = scmp.ne.s32.totalorder %s88, %s90
      %p97 = scmp.eq.s32.totalorder %s31, 1
      %p98 = por %p96, %p97
      %p99 = scmp.ne.s32.totalorder %s90, %s91
      %p100 = scmp.eq.s32.totalorder %s31, 0
      %p101 = por %p99, %p100
      %p102 = scmp.ne.s32.totalorder %s90, %s91
      %p103 = scmp.eq.s32.totalorder %s32, 1
      %p104 = por %p102, %p103
      %p106 = scmp.ne.s32.totalorder %s91, %s105
      %p107 = scmp.eq.s32.totalorder %s32, 0
      %p108 = por %p106, %p107
      %s109 = ssub.s32 %s33, %s45
      %p110 = scmp.eq.s32.totalorder %s109, 0
      %s112 = sadd.s32 %s111, 1
      %s113 = scalar_select %p110, %s111, %s112
      %p116 = pneg %p110
      %p117 = scmp.eq.s32.totalorder %s26, 1
      %p118 = por %p116, %p117
      %p119 = scmp.ne.s32.totalorder %s111, %s114
      %p120 = scmp.eq.s32.totalorder %s26, 0
      %p121 = por %p119, %p120
      %p122 = scmp.ne.s32.totalorder %s111, %s114
      %p123 = scmp.eq.s32.totalorder %s31, 1
      %p124 = por %p122, %p123
      %p125 = scmp.ne.s32.totalorder %s114, %s115
      %p126 = scmp.eq.s32.totalorder %s31, 0
      %p127 = por %p125, %p126
      %p128 = scmp.ne.s32.totalorder %s114, %s115
      %p129 = scmp.eq.s32.totalorder %s32, 1
      %p130 = por %p128, %p129
      %p132 = scmp.ne.s32.totalorder %s115, %s131
      %p133 = scmp.eq.s32.totalorder %s32, 0
      %p134 = por %p132, %p133
      %s135 = ssub.s32 %s34, %s41
      %s136 = ssub.s32 %s33, %s45
      %s137 = sor.u32 %s135, %s136
      %p138 = scmp.eq.s32.totalorder %s137, 0
      %s140 = sadd.s32 %s139, 1
      %s141 = scalar_select %p138, %s139, %s140
      %p144 = pneg %p138
      %p145 = scmp.eq.s32.totalorder %s26, 1
      %p146 = por %p144, %p145
      %p147 = scmp.ne.s32.totalorder %s139, %s142
      %p148 = scmp.eq.s32.totalorder %s26, 0
      %p149 = por %p147, %p148
      %p150 = scmp.ne.s32.totalorder %s139, %s142
      %p151 = scmp.eq.s32.totalorder %s31, 1
      %p152 = por %p150, %p151
      %p153 = scmp.ne.s32.totalorder %s142, %s143
      %p154 = scmp.eq.s32.totalorder %s31, 0
      %p155 = por %p153, %p154
      %p156 = scmp.ne.s32.totalorder %s142, %s143
      %p157 = scmp.eq.s32.totalorder %s32, 1
      %p158 = por %p156, %p157
      %p160 = scmp.ne.s32.totalorder %s143, %s159
      %p161 = scmp.eq.s32.totalorder %s32, 0
      %p162 = por %p160, %p161
      %s163 = ssub.s32 %s34, %s41
      %p164 = scmp.eq.s32.totalorder %s163, 0
      %s166 = sadd.s32 %s165, 1
      %s167 = scalar_select %p164, %s165, %s166
      %p170 = pneg %p164
      %p171 = scmp.eq.s32.totalorder %s26, 1
      %p172 = por %p170, %p171
      %p173 = scmp.ne.s32.totalorder %s165, %s168
      %p174 = scmp.eq.s32.totalorder %s26, 0
      %p175 = por %p173, %p174
      %p176 = scmp.ne.s32.totalorder %s165, %s168
      %p177 = scmp.eq.s32.totalorder %s31, 1
      %p178 = por %p176, %p177
      %p179 = scmp.ne.s32.totalorder %s168, %s169
      %p180 = scmp.eq.s32.totalorder %s31, 0
      %p181 = por %p179, %p180
      %p182 = scmp.ne.s32.totalorder %s168, %s169
      %p183 = scmp.eq.s32.totalorder %s32, 1
      %p184 = por %p182, %p183
      %p186 = scmp.ne.s32.totalorder %s169, %s185
      %p187 = scmp.eq.s32.totalorder %s32, 0
      %p188 = por %p186, %p187
      %s190 = sadd.s32 %s189, 1
      %p193 = scmp.eq.s32.totalorder %s26, 1
      %p194 = scmp.ne.s32.totalorder %s189, %s191
      %p195 = scmp.eq.s32.totalorder %s26, 0
      %p196 = por %p194, %p195
      %p197 = scmp.ne.s32.totalorder %s189, %s191
      %p198 = scmp.eq.s32.totalorder %s31, 1
      %p199 = por %p197, %p198
      %p200 = scmp.ne.s32.totalorder %s191, %s192
      %p201 = scmp.eq.s32.totalorder %s31, 0
      %p202 = por %p200, %p201
      %p203 = scmp.ne.s32.totalorder %s191, %s192
      %p204 = scmp.eq.s32.totalorder %s32, 1
      %p205 = por %p203, %p204
      %p207 = scmp.ne.s32.totalorder %s192, %s206
      %p208 = scmp.eq.s32.totalorder %s32, 0
      %p209 = por %p207, %p208
      %s211 = sadd.s32 %s210, 1
      %p214 = scmp.eq.s32.totalorder %s26, 1
      %p215 = scmp.ne.s32.totalorder %s210, %s212
      %p216 = scmp.eq.s32.totalorder %s26, 0
      %p217 = por %p215, %p216
      %p218 = scmp.ne.s32.totalorder %s210, %s212
      %p219 = scmp.eq.s32.totalorder %s31, 1
      %p220 = por %p218, %p219
      %p221 = scmp.ne.s32.totalorder %s212, %s213
      %p222 = scmp.eq.s32.totalorder %s31, 0
      %p223 = por %p221, %p222
      %p224 = scmp.ne.s32.totalorder %s212, %s213
      %p225 = scmp.eq.s32.totalorder %s32, 1
      %p226 = por %p224, %p225
      %p228 = scmp.ne.s32.totalorder %s213, %s227
      %p229 = scmp.eq.s32.totalorder %s32, 0
      %p230 = por %p228, %p229
      %s232 = sadd.s32 %s231, 1
      %p235 = scmp.eq.s32.totalorder %s26, 1
      %p236 = scmp.ne.s32.totalorder %s231, %s233
      %p237 = scmp.eq.s32.totalorder %s26, 0
      %p238 = por %p236, %p237
      %p239 = scmp.ne.s32.totalorder %s231, %s233
      %p240 = scmp.eq.s32.totalorder %s31, 1
      %p241 = por %p239, %p240
      %p242 = scmp.ne.s32.totalorder %s233, %s234
      %p243 = scmp.eq.s32.totalorder %s31, 0
      %p244 = por %p242, %p243
      %p245 = scmp.ne.s32.totalorder %s233, %s234
      %p246 = scmp.eq.s32.totalorder %s32, 1
      %p247 = por %p245, %p246
      %p249 = scmp.ne.s32.totalorder %s234, %s248
      %p250 = scmp.eq.s32.totalorder %s32, 0
      %p251 = por %p249, %p250
      %s253 = sadd.s32 %s252, 1
      %p256 = scmp.eq.s32.totalorder %s26, 1
      %p257 = scmp.ne.s32.totalorder %s252, %s254
      %p258 = scmp.eq.s32.totalorder %s26, 0
      %p259 = por %p257, %p258
      %p260 = scmp.ne.s32.totalorder %s252, %s254
      %p261 = scmp.eq.s32.totalorder %s31, 1
      %p262 = por %p260, %p261
      %p263 = scmp.ne.s32.totalorder %s254, %s255
      %p264 = scmp.eq.s32.totalorder %s31, 0
      %p265 = por %p263, %p264
      %p266 = scmp.ne.s32.totalorder %s254, %s255
      %p267 = scmp.eq.s32.totalorder %s32, 1
      %p268 = por %p266, %p267
      %p270 = scmp.ne.s32.totalorder %s255, %s269
      %p271 = scmp.eq.s32.totalorder %s32, 0
      %p272 = por %p270, %p271
      %s274 = sadd.s32 %s273, 1
      %p277 = scmp.eq.s32.totalorder %s26, 1
      %p278 = scmp.ne.s32.totalorder %s273, %s275
      %p279 = scmp.eq.s32.totalorder %s26, 0
      %p280 = por %p278, %p279
      %p281 = scmp.ne.s32.totalorder %s273, %s275
      %p282 = scmp.eq.s32.totalorder %s31, 1
      %p283 = por %p281, %p282
      %p284 = scmp.ne.s32.totalorder %s275, %s276
      %p285 = scmp.eq.s32.totalorder %s31, 0
      %p286 = por %p284, %p285
      %p287 = scmp.ne.s32.totalorder %s275, %s276
      %p288 = scmp.eq.s32.totalorder %s32, 1
      %p289 = por %p287, %p288
      %p291 = scmp.ne.s32.totalorder %s276, %s290
      %p292 = scmp.eq.s32.totalorder %s32, 0
      %p293 = por %p291, %p292
      %s295 = sadd.s32 %s294, 1
      %p298 = scmp.eq.s32.totalorder %s26, 1
      %p299 = scmp.ne.s32.totalorder %s294, %s296
      %p300 = scmp.eq.s32.totalorder %s26, 0
      %p301 = por %p299, %p300
      %p302 = scmp.ne.s32.totalorder %s294, %s296
      %p303 = scmp.eq.s32.totalorder %s31, 1
      %p304 = por %p302, %p303
      %p305 = scmp.ne.s32.totalorder %s296, %s297
      %p306 = scmp.eq.s32.totalorder %s31, 0
      %p307 = por %p305, %p306
      %p308 = scmp.ne.s32.totalorder %s296, %s297
      %p309 = scmp.eq.s32.totalorder %s32, 1
      %p310 = por %p308, %p309
      %p312 = scmp.ne.s32.totalorder %s297, %s311
      %p313 = scmp.eq.s32.totalorder %s32, 0
      %p314 = por %p312, %p313
      %s316 = sadd.s32 %s315, 1
      %p319 = scmp.eq.s32.totalorder %s26, 1
      %p320 = scmp.ne.s32.totalorder %s315, %s317
      %p321 = scmp.eq.s32.totalorder %s26, 0
      %p322 = por %p320, %p321
      %p323 = scmp.ne.s32.totalorder %s315, %s317
      %p324 = scmp.eq.s32.totalorder %s31, 1
      %p325 = por %p323, %p324
      %p326 = scmp.ne.s32.totalorder %s317, %s318
      %p327 = scmp.eq.s32.totalorder %s31, 0
      %p328 = por %p326, %p327
      %p329 = scmp.ne.s32.totalorder %s317, %s318
      %p330 = scmp.eq.s32.totalorder %s32, 1
      %p331 = por %p329, %p330
      %p333 = scmp.ne.s32.totalorder %s318, %s332
      %p334 = scmp.eq.s32.totalorder %s32, 0
      %p335 = por %p333, %p334
      %s337 = sadd.s32 %s336, 1
      %p340 = scmp.eq.s32.totalorder %s26, 1
      %p341 = scmp.ne.s32.totalorder %s336, %s338
      %p342 = scmp.eq.s32.totalorder %s26, 0
      %p343 = por %p341, %p342
      %p344 = scmp.ne.s32.totalorder %s336, %s338
      %p345 = scmp.eq.s32.totalorder %s31, 1
      %p346 = por %p344, %p345
      %p347 = scmp.ne.s32.totalorder %s338, %s339
      %p348 = scmp.eq.s32.totalorder %s31, 0
      %p349 = por %p347, %p348
      %p350 = scmp.ne.s32.totalorder %s338, %s339
      %p351 = scmp.eq.s32.totalorder %s32, 1
      %p352 = por %p350, %p351
      %p354 = scmp.ne.s32.totalorder %s339, %s353
      %p355 = scmp.eq.s32.totalorder %s32, 0
      %p356 = por %p354, %p355
      %s358 = sadd.s32 %s357, 1
      %p361 = scmp.eq.s32.totalorder %s26, 1
      %p362 = scmp.ne.s32.totalorder %s357, %s359
      %p363 = scmp.eq.s32.totalorder %s26, 0
      %p364 = por %p362, %p363
      %p365 = scmp.ne.s32.totalorder %s357, %s359
      %p366 = scmp.eq.s32.totalorder %s31, 1
      %p367 = por %p365, %p366
      %p368 = scmp.ne.s32.totalorder %s359, %s360
      %p369 = scmp.eq.s32.totalorder %s31, 0
      %p370 = por %p368, %p369
      %p371 = scmp.ne.s32.totalorder %s359, %s360
      %p372 = scmp.eq.s32.totalorder %s32, 1
      %p373 = por %p371, %p372
      %p375 = scmp.ne.s32.totalorder %s360, %s374
      %p376 = scmp.eq.s32.totalorder %s32, 0
      %p377 = por %p375, %p376
      %s378 = ssub.s32 %s34, %s41
      %s379 = ssub.s32 %s33, %s45
      %s380 = sor.u32 %s378, %s379
      %p381 = scmp.eq.s32.totalorder %s380, 0
      %s383 = sadd.s32 %s382, 1
      %s384 = scalar_select %p381, %s382, %s383
      %p387 = pneg %p381
      %p388 = scmp.eq.s32.totalorder %s26, 1
      %p389 = por %p387, %p388
      %p390 = scmp.ne.s32.totalorder %s382, %s385
      %p391 = scmp.eq.s32.totalorder %s26, 0
      %p392 = por %p390, %p391
      %p393 = scmp.ne.s32.totalorder %s382, %s385
      %p394 = scmp.eq.s32.totalorder %s31, 1
      %p395 = por %p393, %p394
      %p396 = scmp.ne.s32.totalorder %s385, %s386
      %p397 = scmp.eq.s32.totalorder %s31, 0
      %p398 = por %p396, %p397
      %p399 = scmp.ne.s32.totalorder %s385, %s386
      %p400 = scmp.eq.s32.totalorder %s32, 1
      %p401 = por %p399, %p400
      %p403 = scmp.ne.s32.totalorder %s386, %s402
      %p404 = scmp.eq.s32.totalorder %s32, 0
      %p405 = por %p403, %p404
      %s406 = ssub.s32 %s34, %s41
      %s407 = ssub.s32 %s33, %s45
      %s408 = sor.u32 %s406, %s407
      %p409 = scmp.eq.s32.totalorder %s408, 0
      %s411 = sadd.s32 %s410, 1
      %s412 = scalar_select %p409, %s410, %s411
      %p415 = pneg %p409
      %p416 = scmp.eq.s32.totalorder %s26, 1
      %p417 = por %p415, %p416
      %p418 = scmp.ne.s32.totalorder %s410, %s413
      %p419 = scmp.eq.s32.totalorder %s26, 0
      %p420 = por %p418, %p419
      %p421 = scmp.ne.s32.totalorder %s410, %s413
      %p422 = scmp.eq.s32.totalorder %s31, 1
      %p423 = por %p421, %p422
      %p424 = scmp.ne.s32.totalorder %s413, %s414
      %p425 = scmp.eq.s32.totalorder %s31, 0
      %p426 = por %p424, %p425
      %p427 = scmp.ne.s32.totalorder %s413, %s414
      %p428 = scmp.eq.s32.totalorder %s32, 1
      %p429 = por %p427, %p428
      %p431 = scmp.ne.s32.totalorder %s414, %s430
      %p432 = scmp.eq.s32.totalorder %s32, 0
      %p433 = por %p431, %p432
      %s434 = ssub.s32 %s34, %s41
      %s435 = ssub.s32 %s33, %s45
      %s436 = sor.u32 %s434, %s435
      %p437 = scmp.eq.s32.totalorder %s436, 0
      %s439 = sadd.s32 %s438, 1
      %s440 = scalar_select %p437, %s438, %s439
      %p443 = pneg %p437
      %p444 = scmp.eq.s32.totalorder %s26, 1
      %p445 = por %p443, %p444
      %p446 = scmp.ne.s32.totalorder %s438, %s441
      %p447 = scmp.eq.s32.totalorder %s26, 0
      %p448 = por %p446, %p447
      %p449 = scmp.ne.s32.totalorder %s438, %s441
      %p450 = scmp.eq.s32.totalorder %s31, 1
      %p451 = por %p449, %p450
      %p452 = scmp.ne.s32.totalorder %s441, %s442
      %p453 = scmp.eq.s32.totalorder %s31, 0
      %p454 = por %p452, %p453
      %p455 = scmp.ne.s32.totalorder %s441, %s442
      %p456 = scmp.eq.s32.totalorder %s32, 1
      %p457 = por %p455, %p456
      %p459 = scmp.ne.s32.totalorder %s442, %s458
      %p460 = scmp.eq.s32.totalorder %s32, 0
      %p461 = por %p459, %p460
      %p462 = scmp.le.s32.totalorder 1, %s26
      %p463 = scmp.lt.s32.totalorder %s26, 3
      %p464 = pnand %p462, %p463
      %p465 = pneg %p464
      // Predicated region
      $region9: #{tpu_custom_call.1} parent=5 // pred_check
        _
      $region10: #{tpu_custom_call.1} parent=5 // pred_check_branch
        %467 = sbr.rel (%p464) target = $region12
      $region11: #{tpu_custom_call.1} parent=5 // pred_region
        %s468 = ssub.s32 %s26, 1
        // Predicated region
        $region13: #{tpu_custom_call.1} parent=11 // pred_check
          %p469 = pneg %p59
        $region14: #{tpu_custom_call.1} parent=11 // pred_check_branch
          %471 = sbr.rel (%p469) target = $region16
        $region15: #{tpu_custom_call.1} parent=11 // pred_region
          %s473 = ssub.s32 16, 16
          %474 = vsyncadd [#allocation4], %s473
          %s476 = sshll.u32 %s0, 4
          %s477 = int_to_ptr.vmem [resolvable:$true] %s476
          %479 = dma.vmem_to_smem %s477, 16, [#allocation3], [#allocation4]
        $region16: #{tpu_custom_call.1} parent=11 // pred_fallthru
          _
        // Predicated region
        $region17: #{tpu_custom_call.1} parent=11 // pred_check
          %p480 = pneg %p80
        $region18: #{tpu_custom_call.1} parent=11 // pred_check_branch
          %482 = sbr.rel (%p480) target = $region20
        $region19: #{tpu_custom_call.1} parent=11 // pred_region
          %s484 = ssub.s32 16, 16
          %485 = vsyncadd [#allocation6], %s484
          %s487 = sshll.u32 %s1, 4
          %s488 = int_to_ptr.vmem [resolvable:$true] %s487
          %490 = dma.vmem_to_smem %s488, 16, [#allocation5], [#allocation6]
        $region20: #{tpu_custom_call.1} parent=11 // pred_fallthru
          _
        // Predicated region
        $region21: #{tpu_custom_call.1} parent=11 // pred_check
          %p491 = pneg %p101
        $region22: #{tpu_custom_call.1} parent=11 // pred_check_branch
          %493 = sbr.rel (%p491) target = $region24
        $region23: #{tpu_custom_call.1} parent=11 // pred_region
          %s495 = ssub.s32 16, 16
          %496 = vsyncadd [#allocation6], %s495
          %s498 = sshll.u32 %s2, 4
          %s499 = int_to_ptr.vmem [resolvable:$true] %s498
          %501 = dma.vmem_to_smem %s499, 16, [#allocation7], [#allocation6]
        $region24: #{tpu_custom_call.1} parent=11 // pred_fallthru
          _
        // Predicated region
        $region25: #{tpu_custom_call.1} parent=11 // pred_check
          %p502 = pneg %p127
        $region26: #{tpu_custom_call.1} parent=11 // pred_check_branch
          %504 = sbr.rel (%p502) target = $region28
        $region27: #{tpu_custom_call.1} parent=11 // pred_region
          %p505 = scmp.lt.s32.totalorder %s35, 0
          %s506 = scalar_select %p505, %s35, 0
          %s507 = smul.addr %s506, 4
          %s508 = scalar_lea.vmem %s3, %s507
        $region28: #{tpu_custom_call.1} parent=11 // pred_fallthru
          _
        // Predicated region
        $region29: #{tpu_custom_call.1} parent=11 // pred_check
          %p509 = pneg %p202
        $region30: #{tpu_custom_call.1} parent=11 // pred_check_branch
          %511 = sbr.rel (%p509) target = $region32
        $region31: #{tpu_custom_call.1} parent=11 // pred_region
          _
        $region32: #{tpu_custom_call.1} parent=11 // pred_fallthru
          _
        // Predicated region
        $region33: #{tpu_custom_call.1} parent=11 // pred_check
          %p512 = pneg %p223
        $region34: #{tpu_custom_call.1} parent=11 // pred_check_branch
          %514 = sbr.rel (%p512) target = $region36
        $region35: #{tpu_custom_call.1} parent=11 // pred_region
          _
        $region36: #{tpu_custom_call.1} parent=11 // pred_fallthru
          _
        // Predicated region
        $region37: #{tpu_custom_call.1} parent=11 // pred_check
          %p515 = pneg %p244
        $region38: #{tpu_custom_call.1} parent=11 // pred_check_branch
          %517 = sbr.rel (%p515) target = $region40
        $region39: #{tpu_custom_call.1} parent=11 // pred_region
          _
        $region40: #{tpu_custom_call.1} parent=11 // pred_fallthru
          _
        // Predicated region
        $region41: #{tpu_custom_call.1} parent=11 // pred_check
          %p518 = pneg %p265
        $region42: #{tpu_custom_call.1} parent=11 // pred_check_branch
          %520 = sbr.rel (%p518) target = $region44
        $region43: #{tpu_custom_call.1} parent=11 // pred_region
          _
        $region44: #{tpu_custom_call.1} parent=11 // pred_fallthru
          _
        // Predicated region
        $region45: #{tpu_custom_call.1} parent=11 // pred_check
          %p521 = pneg %p286
        $region46: #{tpu_custom_call.1} parent=11 // pred_check_branch
          %523 = sbr.rel (%p521) target = $region48
        $region47: #{tpu_custom_call.1} parent=11 // pred_region
          _
        $region48: #{tpu_custom_call.1} parent=11 // pred_fallthru
          _
        // Predicated region
        $region49: #{tpu_custom_call.1} parent=11 // pred_check
          %p524 = pneg %p307
        $region50: #{tpu_custom_call.1} parent=11 // pred_check_branch
          %526 = sbr.rel (%p524) target = $region52
        $region51: #{tpu_custom_call.1} parent=11 // pred_region
          _
        $region52: #{tpu_custom_call.1} parent=11 // pred_fallthru
          _
        // Predicated region
        $region53: #{tpu_custom_call.1} parent=11 // pred_check
          %p527 = pneg %p328
        $region54: #{tpu_custom_call.1} parent=11 // pred_check_branch
          %529 = sbr.rel (%p527) target = $region56
        $region55: #{tpu_custom_call.1} parent=11 // pred_region
          _
        $region56: #{tpu_custom_call.1} parent=11 // pred_fallthru
          _
        // Predicated region
        $region57: #{tpu_custom_call.1} parent=11 // pred_check
          %p530 = pneg %p349
        $region58: #{tpu_custom_call.1} parent=11 // pred_check_branch
          %532 = sbr.rel (%p530) target = $region60
        $region59: #{tpu_custom_call.1} parent=11 // pred_region
          _
        $region60: #{tpu_custom_call.1} parent=11 // pred_fallthru
          _
        // Predicated region
        $region61: #{tpu_custom_call.1} parent=11 // pred_check
          %p533 = pneg %p370
        $region62: #{tpu_custom_call.1} parent=11 // pred_check_branch
          %535 = sbr.rel (%p533) target = $region64
        $region63: #{tpu_custom_call.1} parent=11 // pred_region
          _
        $region64: #{tpu_custom_call.1} parent=11 // pred_fallthru
          _
      $region12: #{tpu_custom_call.1} parent=5 // pred_fallthru
        _
      %p536 = scmp.lt.s32.totalorder %s26, 2
      // Predicated region
      $region65: #{tpu_custom_call.1} parent=5 // pred_check
        %p537 = pneg %p536
      $region66: #{tpu_custom_call.1} parent=5 // pred_check_branch
        %539 = sbr.rel (%p537) target = $region68
      $region67: #{tpu_custom_call.1} parent=5 // pred_region
        // Predicated region
        $region69: #{tpu_custom_call.1} parent=67 // pred_check
          %p540 = pneg %p149
        $region70: #{tpu_custom_call.1} parent=67 // pred_check_branch
          %542 = sbr.rel (%p540) target = $region72
        $region71: #{tpu_custom_call.1} parent=67 // pred_region
          %s543 = smul.u32 8, %s34
          %p544 = scmp.lt.s32.totalorder %s543, 15
          %s545 = scalar_select %p544, %s543, 15
          %p546 = scmp.lt.s32.totalorder %s33, 0
          %s547 = scalar_select %p546, %s33, 0
          %s548 = sadd.s32 %s547, %s545
          %s549 = smul.addr %s548, 4
          %s550 = scalar_lea.vmem %s4, %s549
          %s551 = smul.u32 8, %s34
        $region72: #{tpu_custom_call.1} parent=67 // pred_fallthru
          _
        // Predicated region
        $region73: #{tpu_custom_call.1} parent=67 // pred_check
          %p552 = pneg %p175
        $region74: #{tpu_custom_call.1} parent=67 // pred_check_branch
          %554 = sbr.rel (%p552) target = $region76
        $region75: #{tpu_custom_call.1} parent=67 // pred_region
          %p555 = scmp.lt.s32.totalorder %s34, 1
          %s556 = scalar_select %p555, %s34, 1
          %s557 = smul.addr %s556, 4
          %s558 = smul.addr %s557, 8
          %s559 = scalar_lea.vmem %s5, %s558
        $region76: #{tpu_custom_call.1} parent=67 // pred_fallthru
          _
      $region68: #{tpu_custom_call.1} parent=5 // pred_fallthru
        _
      %p560 = scmp.le.s32.totalorder 1, %s26
      %p561 = scmp.lt.s32.totalorder %s26, 3
      %p562 = pnand %p560, %p561
      %p563 = pneg %p562
      // Predicated region
      $region77: #{tpu_custom_call.1} parent=5 // pred_check
        _
      $region78: #{tpu_custom_call.1} parent=5 // pred_check_branch
        %565 = sbr.rel (%p562) target = $region80
      $region79: #{tpu_custom_call.1} parent=5 // pred_region
        %s566 = ssub.s32 %s26, 1
        // Predicated region
        $region81: #{tpu_custom_call.1} parent=79 // pred_check
          %p567 = pneg %p59
        $region82: #{tpu_custom_call.1} parent=79 // pred_check_branch
          %569 = sbr.rel (%p567) target = $region84
        $region83: #{tpu_custom_call.1} parent=79 // pred_region
          %570 = dma.done [#allocation4], 16
        $region84: #{tpu_custom_call.1} parent=79 // pred_fallthru
          _
        // Predicated region
        $region85: #{tpu_custom_call.1} parent=79 // pred_check
          %p571 = pneg %p80
        $region86: #{tpu_custom_call.1} parent=79 // pred_check_branch
          %573 = sbr.rel (%p571) target = $region88
        $region87: #{tpu_custom_call.1} parent=79 // pred_region
          %574 = dma.done [#allocation6], 16
        $region88: #{tpu_custom_call.1} parent=79 // pred_fallthru
          _
        // Predicated region
        $region89: #{tpu_custom_call.1} parent=79 // pred_check
          %p575 = pneg %p101
        $region90: #{tpu_custom_call.1} parent=79 // pred_check_branch
          %577 = sbr.rel (%p575) target = $region92
        $region91: #{tpu_custom_call.1} parent=79 // pred_region
          %578 = dma.done [#allocation6], 16
        $region92: #{tpu_custom_call.1} parent=79 // pred_fallthru
          _
        %579 = sfence
        %p580 = pneg %p59
        %p581 = pneg %p56
        %p582 = pneg %p80
        %p583 = pneg %p77
        %p584 = pneg %p101
        %p585 = pneg %p98
        %p586 = scmp.lt.s32.totalorder %s35, 0
        %s587 = scalar_select %p586, %s35, 0
        %s588 = smul.addr %s587, 4
        %s589 = scalar_lea.vmem %s3, %s588
        %p590 = pneg %p127
        %p591 = pneg %p124
        %s592 = smul.u32 8, %s36
        %p593 = scmp.lt.s32.totalorder %s592, 15
        %s594 = scalar_select %p593, %s592, 15
        %p595 = scmp.lt.s32.totalorder %s35, 0
        %s596 = scalar_select %p595, %s35, 0
        %s597 = sadd.s32 %s596, %s594
        %s598 = smul.addr %s597, 4
        %s599 = scalar_lea.vmem %s4, %s598
        %p600 = pneg %p155
        %p601 = pneg %p152
        %p602 = scmp.lt.s32.totalorder %s36, 1
        %s603 = scalar_select %p602, %s36, 1
        %s604 = smul.addr %s603, 4
        %s605 = smul.addr %s604, 8
        %s606 = scalar_lea.vmem %s5, %s605
        %p607 = pneg %p181
        %p608 = pneg %p178
        %p609 = pneg %p202
        %p610 = pneg %p199
        %p611 = pneg %p223
        %p612 = pneg %p220
        %p613 = pneg %p244
        %p614 = pneg %p241
        %p615 = pneg %p265
        %p616 = pneg %p262
        %p617 = pneg %p286
        %p618 = pneg %p283
        %p619 = pneg %p307
        %p620 = pneg %p304
        %p621 = pneg %p328
        %p622 = pneg %p325
        %p623 = pneg %p349
        %p624 = pneg %p346
        %p625 = pneg %p370
        %p626 = pneg %p367
        %p627 = pneg %p398
        %p628 = pneg %p395
        %s629 = smul.u32 8, %s36
        %p630 = scmp.lt.s32.totalorder %s629, 15
        %s631 = scalar_select %p630, %s629, 15
        %p632 = scmp.lt.s32.totalorder %s35, 0
        %s633 = scalar_select %p632, %s35, 0
        %s634 = sadd.s32 %s633, %s631
        %s635 = smul.addr %s634, 4
        %s636 = scalar_lea.vmem %s15, %s635
        %p637 = pneg %p426
        %p638 = pneg %p423
        %p639 = scmp.lt.s32.totalorder %s36, 1
        %s640 = scalar_select %p639, %s36, 1
        %p641 = scmp.lt.s32.totalorder %s35, 0
        %s642 = scalar_select %p641, %s35, 0
        %s643 = sadd.s32 %s642, %s640
        %s644 = smul.addr %s643, 8
        %s645 = scalar_lea.vmem %s16, %s644
        %p646 = pneg %p454
        %p647 = pneg %p451
        %p648 = scmp.lt.s32.totalorder %s36, 1
        %s649 = scalar_select %p648, %s36, 1
        %p650 = scmp.lt.s32.totalorder %s35, 0
        %s651 = scalar_select %p650, %s35, 0
        %s652 = sadd.s32 %s651, %s649
        %s653 = smul.addr %s652, 8
        %s654 = scalar_lea.vmem %s17, %s653
        %p655 = scmp.lt.s32.totalorder %s35, 0
        %s656 = scalar_select %p655, %s35, 0
        %s657 = smul.addr %s656, 4
        %s658 = scalar_lea.vmem %s3, %s657
        %s659 = smul.u32 8, %s36
        %p660 = scmp.lt.s32.totalorder %s659, 15
        %s661 = scalar_select %p660, %s659, 15
        %p662 = scmp.lt.s32.totalorder %s35, 0
        %s663 = scalar_select %p662, %s35, 0
        %s664 = sadd.s32 %s663, %s661
        %s665 = smul.addr %s664, 4
        %s666 = scalar_lea.vmem %s4, %s665
        %s667 = smul.u32 8, %s36
        %p668 = scmp.lt.s32.totalorder %s36, 1
        %s669 = scalar_select %p668, %s36, 1
        %s670 = smul.addr %s669, 4
        %s671 = smul.addr %s670, 8
        %s672 = scalar_lea.vmem %s5, %s671
        %s673 = smul.u32 8, %s36
        %p674 = scmp.lt.s32.totalorder %s673, 15
        %s675 = scalar_select %p674, %s673, 15
        %p676 = scmp.lt.s32.totalorder %s35, 0
        %s677 = scalar_select %p676, %s35, 0
        %s678 = sadd.s32 %s677, %s675
        %s679 = smul.addr %s678, 4
        %s680 = scalar_lea.vmem %s15, %s679
        %s681 = smul.u32 8, %s36
        %p682 = scmp.lt.s32.totalorder %s36, 1
        %s683 = scalar_select %p682, %s36, 1
        %p684 = scmp.lt.s32.totalorder %s35, 0
        %s685 = scalar_select %p684, %s35, 0
        %s686 = sadd.s32 %s685, %s683
        %s687 = smul.addr %s686, 8
        %s688 = scalar_lea.vmem %s16, %s687
        %p689 = scmp.lt.s32.totalorder %s36, 1
        %s690 = scalar_select %p689, %s36, 1
        %p691 = scmp.lt.s32.totalorder %s35, 0
        %s692 = scalar_select %p691, %s35, 0
        %s693 = sadd.s32 %s692, %s690
        %s694 = smul.addr %s693, 8
        %s695 = scalar_lea.vmem %s17, %s694
        %p696 = scmp.eq.s32.totalorder %s36, 0
        // Predicated region
        $region93: #{tpu_custom_call.1} parent=79 // pred_check
          %p697 = pneg %p696
        $region94: #{tpu_custom_call.1} parent=79 // pred_check_branch
          %699 = sbr.rel (%p697) target = $region96
        $region95: #{tpu_custom_call.1} parent=79 // pred_region
          %v700 = vld [vmem:[%s658] sm:$0xf]
          %vm701 = vcmask 60416
          %702 = vst.msk [vmem:[#allocation2] sm:$0xf] %vm701, %v700
        $region96: #{tpu_custom_call.1} parent=79 // pred_fallthru
          _
        %v703 = vld [vmem:[%s672] sm:$0xff]
        %v704 = vld [vmem:[%s672 + $0x8] sm:$0xff]
        %v705 = vld [vmem:[%s672 + $0x10] sm:$0xff]
        %v706 = vld [vmem:[%s672 + $0x18] sm:$0xff]
        %v707 = vld [vmem:[%s6] sm:$0xff]
        %v708 = vld [vmem:[%s6 + $0x8] sm:$0xff]
        %v709 = vld [vmem:[%s6 + $0x10] sm:$0xff]
        %v710 = vld [vmem:[%s6 + $0x18] sm:$0xff]
        %v711 = vld [vmem:[#allocation2] sm:$0xf]
        %s712 = smul.u32 %s36, 8
        %v713 = vld [vmem:[%s666] sm:$0xf]
        %v714 = vld [vmem:[%s7] sm:$0xff]
        %v715 = vld [vmem:[%s7 + $0x8] sm:$0xff]
        %v716 = vld [vmem:[%s7 + $0x10] sm:$0xff]
        %v717 = vld [vmem:[%s7 + $0x18] sm:$0xff]
        %719 = vset.pattern.permute.xlu0 0
        %720 = vperm.xlu0 %719, %v707
        %v721 = vpop.permute.xlu0 %720
        %724 = vset.pattern.permute.xlu0 0
        %725 = vperm.xlu0 %724, %v708
        %v726 = vpop.permute.xlu0 %725
        %729 = vset.pattern.permute.xlu0 0
        %730 = vperm.xlu0 %729, %v709
        %v731 = vpop.permute.xlu0 %730
        %734 = vset.pattern.permute.xlu0 0
        %735 = vperm.xlu0 %734, %v710
        %v736 = vpop.permute.xlu0 %735
        %v738 = vlaneseq
        %v739 = vshrl.u32 %v738, 7
        %v740 = vsub.s32 0, %v739
        %v741 = vrot.slane %v711, %v740
        %v742 = vmul.f32 %v721, %v741
        %v743 = vmul.f32 %v726, %v741
        %v744 = vmul.f32 %v731, %v741
        %v745 = vmul.f32 %v736, %v741
        %747 = vset.pattern.permute.xlu0 0
        %748 = vperm.xlu0 %747, %v714
        %v749 = vpop.permute.xlu0 %748
        %752 = vset.pattern.permute.xlu0 0
        %753 = vperm.xlu0 %752, %v715
        %v754 = vpop.permute.xlu0 %753
        %757 = vset.pattern.permute.xlu0 0
        %758 = vperm.xlu0 %757, %v716
        %v759 = vpop.permute.xlu0 %758
        %762 = vset.pattern.permute.xlu0 0
        %763 = vperm.xlu0 %762, %v717
        %v764 = vpop.permute.xlu0 %763
        %v766 = vadd.f32 %v749, %v742
        %v767 = vadd.f32 %v754, %v743
        %v768 = vadd.f32 %v759, %v744
        %v769 = vadd.f32 %v764, %v745
        %770 = vset.pattern.permute.xlu0 1
        %771 = vperm.xlu0 %770, %v707
        %v772 = vpop.permute.xlu0 %771
        %774 = vset.pattern.permute.xlu0 1
        %775 = vperm.xlu0 %774, %v708
        %v776 = vpop.permute.xlu0 %775
        %778 = vset.pattern.permute.xlu0 1
        %779 = vperm.xlu0 %778, %v709
        %v780 = vpop.permute.xlu0 %779
        %782 = vset.pattern.permute.xlu0 1
        %783 = vperm.xlu0 %782, %v710
        %v784 = vpop.permute.xlu0 %783
        %v786 = vlaneseq
        %v787 = vshrl.u32 %v786, 7
        %v788 = vsub.s32 1, %v787
        %v789 = vrot.slane %v711, %v788
        %v790 = vmul.f32 %v772, %v789
        %v791 = vmul.f32 %v776, %v789
        %v792 = vmul.f32 %v780, %v789
        %v793 = vmul.f32 %v784, %v789
        %v794 = vadd.f32 %v766, %v790
        %v795 = vadd.f32 %v767, %v791
        %v796 = vadd.f32 %v768, %v792
        %v797 = vadd.f32 %v769, %v793
        %798 = vset.pattern.permute.xlu0 2
        %799 = vperm.xlu0 %798, %v707
        %v800 = vpop.permute.xlu0 %799
        %802 = vset.pattern.permute.xlu0 2
        %803 = vperm.xlu0 %802, %v708
        %v804 = vpop.permute.xlu0 %803
        %806 = vset.pattern.permute.xlu0 2
        %807 = vperm.xlu0 %806, %v709
        %v808 = vpop.permute.xlu0 %807
        %810 = vset.pattern.permute.xlu0 2
        %811 = vperm.xlu0 %810, %v710
        %v812 = vpop.permute.xlu0 %811
        %v814 = vlaneseq
        %v815 = vshrl.u32 %v814, 7
        %v816 = vsub.s32 2, %v815
        %v817 = vrot.slane %v711, %v816
        %v818 = vmul.f32 %v800, %v817
        %v819 = vmul.f32 %v804, %v817
        %v820 = vmul.f32 %v808, %v817
        %v821 = vmul.f32 %v812, %v817
        %v822 = vadd.f32 %v794, %v818
        %v823 = vadd.f32 %v795, %v819
        %v824 = vadd.f32 %v796, %v820
        %v825 = vadd.f32 %v797, %v821
        %826 = vset.pattern.permute.xlu0 3
        %827 = vperm.xlu0 %826, %v707
        %v828 = vpop.permute.xlu0 %827
        %830 = vset.pattern.permute.xlu0 3
        %831 = vperm.xlu0 %830, %v708
        %v832 = vpop.permute.xlu0 %831
        %834 = vset.pattern.permute.xlu0 3
        %835 = vperm.xlu0 %834, %v709
        %v836 = vpop.permute.xlu0 %835
        %838 = vset.pattern.permute.xlu0 3
        %839 = vperm.xlu0 %838, %v710
        %v840 = vpop.permute.xlu0 %839
        %v842 = vlaneseq
        %v843 = vshrl.u32 %v842, 7
        %v844 = vsub.s32 3, %v843
        %v845 = vrot.slane %v711, %v844
        %v846 = vmul.f32 %v828, %v845
        %v847 = vmul.f32 %v832, %v845
        %v848 = vmul.f32 %v836, %v845
        %v849 = vmul.f32 %v840, %v845
        %v850 = vadd.f32 %v822, %v846
        %v851 = vadd.f32 %v823, %v847
        %v852 = vadd.f32 %v824, %v848
        %v853 = vadd.f32 %v825, %v849
        %v854 = vmul.f32 %v850, 0.5
        %v855 = vmul.f32 %v851, 0.5
        %v856 = vmul.f32 %v852, 0.5
        %v857 = vmul.f32 %v853, 0.5
        %v858 = vmul.f32 %v850, 0.70710677
        %v859 = vmul.f32 %v851, 0.70710677
        %v860 = vmul.f32 %v852, 0.70710677
        %v861 = vmul.f32 %v853, 0.70710677
        %vm862 = vcmp.ge.f32.partialorder %v858, 0.0
        %vm863 = vcmp.ge.f32.partialorder %v859, 0.0
        %vm864 = vcmp.ge.f32.partialorder %v860, 0.0
        %vm865 = vcmp.ge.f32.partialorder %v861, 0.0
        %v866 = vsel %vm862, 1.0, -1.0
        %v867 = vsel %vm863, 1.0, -1.0
        %v868 = vsel %vm864, 1.0, -1.0
        %v869 = vsel %vm865, 1.0, -1.0
        %v870 = vand.u32 2147483647, %v858
        %v871 = vand.u32 2147483647, %v859
        %v872 = vand.u32 2147483647, %v860
        %v873 = vand.u32 2147483647, %v861
        %v874 = vmul.f32 %v870, 0.3275911
        %v875 = vmul.f32 %v871, 0.3275911
        %v876 = vmul.f32 %v872, 0.3275911
        %v877 = vmul.f32 %v873, 0.3275911
        %v878 = vadd.f32 %v874, 1.0
        %v879 = vadd.f32 %v875, 1.0
        %v880 = vadd.f32 %v876, 1.0
        %v881 = vadd.f32 %v877, 1.0
        %v882 = vrcp.pop %v878
        %v883 = vmul.f32 1.0, %v882
        %v884 = vrcp.pop %v879
        %v885 = vmul.f32 1.0, %v884
        %v886 = vrcp.pop %v880
        %v887 = vmul.f32 1.0, %v886
        %v888 = vrcp.pop %v881
        %v889 = vmul.f32 1.0, %v888
        %v890 = vmul.f32 %v883, 1.0614054
        %v891 = vmul.f32 %v885, 1.0614054
        %v892 = vmul.f32 %v887, 1.0614054
        %v893 = vmul.f32 %v889, 1.0614054
        %v894 = vadd.f32 %v890, -1.4531521
        %v895 = vadd.f32 %v891, -1.4531521
        %v896 = vadd.f32 %v892, -1.4531521
        %v897 = vadd.f32 %v893, -1.4531521
        %v898 = vmul.f32 %v894, %v883
        %v899 = vmul.f32 %v895, %v885
        %v900 = vmul.f32 %v896, %v887
        %v901 = vmul.f32 %v897, %v889
        %v902 = vadd.f32 %v898, 1.4214138
        %v903 = vadd.f32 %v899, 1.4214138
        %v904 = vadd.f32 %v900, 1.4214138
        %v905 = vadd.f32 %v901, 1.4214138
        %v906 = vmul.f32 %v902, %v883
        %v907 = vmul.f32 %v903, %v885
        %v908 = vmul.f32 %v904, %v887
        %v909 = vmul.f32 %v905, %v889
        %v910 = vadd.f32 %v906, -0.28449672
        %v911 = vadd.f32 %v907, -0.28449672
        %v912 = vadd.f32 %v908, -0.28449672
        %v913 = vadd.f32 %v909, -0.28449672
        %v914 = vmul.f32 %v910, %v883
        %v915 = vmul.f32 %v911, %v885
        %v916 = vmul.f32 %v912, %v887
        %v917 = vmul.f32 %v913, %v889
        %v918 = vadd.f32 %v914, 0.2548296
        %v919 = vadd.f32 %v915, 0.2548296
        %v920 = vadd.f32 %v916, 0.2548296
        %v921 = vadd.f32 %v917, 0.2548296
        %v922 = vmul.f32 %v918, %v883
        %v923 = vmul.f32 %v919, %v885
        %v924 = vmul.f32 %v920, %v887
        %v925 = vmul.f32 %v921, %v889
        %v926 = vsub.f32 0.0, %v870
        %v927 = vsub.f32 0.0, %v871
        %v928 = vsub.f32 0.0, %v872
        %v929 = vsub.f32 0.0, %v873
        %v930 = vmul.f32 %v926, %v870
        %v931 = vmul.f32 %v927, %v871
        %v932 = vmul.f32 %v928, %v872
        %v933 = vmul.f32 %v929, %v873
        %v934 = vmul.f32 %v930, 1.442695
        %v935 = vpow.pop %v934
        %v936 = vmul.f32 %v931, 1.442695
        %v937 = vpow.pop %v936
        %v938 = vmul.f32 %v932, 1.442695
        %v939 = vpow.pop %v938
        %v940 = vmul.f32 %v933, 1.442695
        %v941 = vpow.pop %v940
        %v942 = vmul.f32 %v922, %v935
        %v943 = vmul.f32 %v923, %v937
        %v944 = vmul.f32 %v924, %v939
        %v945 = vmul.f32 %v925, %v941
        %v946 = vsub.f32 1.0, %v942
        %v947 = vsub.f32 1.0, %v943
        %v948 = vsub.f32 1.0, %v944
        %v949 = vsub.f32 1.0, %v945
        %v950 = vmul.f32 %v866, %v946
        %v951 = vmul.f32 %v867, %v947
        %v952 = vmul.f32 %v868, %v948
        %v953 = vmul.f32 %v869, %v949
        %v954 = vadd.f32 %v950, 1.0
        %v955 = vadd.f32 %v951, 1.0
        %v956 = vadd.f32 %v952, 1.0
        %v957 = vadd.f32 %v953, 1.0
        %v958 = vmul.f32 %v854, %v954
        %v959 = vmul.f32 %v855, %v955
        %v960 = vmul.f32 %v856, %v956
        %v961 = vmul.f32 %v857, %v957
        %v962 = vld [vmem:[%s8] sm:$0xff]
        %v963 = vld [vmem:[%s8 + $0x8] sm:$0xff]
        %v964 = vld [vmem:[%s9] sm:$0xff]
        %v965 = vld [vmem:[%s9 + $0x8] sm:$0xff]
        %967 = vset.pattern.permute.xlu0 0
        %968 = vperm.xlu0 %967, %v964
        %v969 = vpop.permute.xlu0 %968
        %972 = vset.pattern.permute.xlu0 0
        %973 = vperm.xlu0 %972, %v965
        %v974 = vpop.permute.xlu0 %973
        %vm976 = vcmask 261120
        %v978 = vsel %vm976, %v962, 0
        %v981 = vsel %vm976, %v963, 0
        %983 = vmatprep.subr.mxu0 0.0
        %984 = vmatpush1.msra.mxu0 %v958
        %985 = vmatprep.subr.mxu0 0.0
        %986 = vmatpush1.msra.mxu0 %v959
        %987 = vmatprep.subr.mxu0 0.0
        %988 = vmatpush1.msra.mxu0 %v960
        %989 = vmatprep.subr.mxu0 0.0
        %990 = vmatpush1.msra.mxu0 %v961
        %991 = vmatprep.subr.mxu0 0.0
        %992 = vmatpush1.msra.mxu0 0.0
        %993 = vmatprep.subr.mxu0 0.0
        %994 = vmatpush1.msra.mxu0 0.0
        %995 = vmatprep.subr.mxu0 0.0
        %996 = vmatpush1.msra.mxu0 0.0
        %997 = vmatprep.subr.mxu0 0.0
        %998 = vmatpush1.msra.mxu0 0.0
        %999 = vmatprep.subr.mxu0 0.0
        %1000 = vmatpush1.msra.mxu0 0.0
        %1001 = vmatprep.subr.mxu0 0.0
        %1002 = vmatpush1.msra.mxu0 0.0
        %1003 = vmatprep.subr.mxu0 0.0
        %1004 = vmatpush1.msra.mxu0 0.0
        %1005 = vmatprep.subr.mxu0 0.0
        %1006 = vmatpush1.msra.mxu0 0.0
        %1007 = vmatprep.subr.mxu0 0.0
        %1008 = vmatpush1.msra.mxu0 0.0
        %1009 = vmatprep.subr.mxu0 0.0
        %1010 = vmatpush1.msra.mxu0 0.0
        %1011 = vmatprep.subr.mxu0 0.0
        %1012 = vmatpush1.msra.mxu0 0.0
        %1013 = vmatprep.subr.mxu0 0.0
        %1014 = vmatpush1.msra.mxu0 0.0
        %1015 = vmatprep.subr.mxu0 0.0
        %1016 = vmatpush1.msra.mxu0 0.0
        %1017 = vmatprep.subr.mxu0 0.0
        %1018 = vmatpush1.msra.mxu0 0.0
        %1019 = vmatprep.subr.mxu0 0.0
        %1020 = vmatpush1.msra.mxu0 0.0
        %1021 = vmatprep.subr.mxu0 0.0
        %1022 = vmatpush1.msra.mxu0 0.0
        %1023 = vmatprep.subr.mxu0 0.0
        %1024 = vmatpush1.msra.mxu0 0.0
        %1025 = vmatprep.subr.mxu0 0.0
        %1026 = vmatpush1.msra.mxu0 0.0
        %1027 = vmatprep.subr.mxu0 0.0
        %1028 = vmatpush1.msra.mxu0 0.0
        %1029 = vmatprep.subr.mxu0 0.0
        %1030 = vmatpush1.msra.mxu0 0.0
        %1031 = vmatprep.subr.mxu0 0.0
        %1032 = vmatpush1.msra.mxu0 0.0
        %1033 = vmatprep.subr.mxu0 0.0
        %1034 = vmatpush1.msra.mxu0 0.0
        %1035 = vmatprep.subr.mxu0 0.0
        %1036 = vmatpush1.msra.mxu0 0.0
        %1037 = vmatprep.subr.mxu0 0.0
        %1038 = vmatpush1.msra.mxu0 0.0
        %1039 = vmatprep.subr.mxu0 0.0
        %1040 = vmatpush1.msra.mxu0 0.0
        %1041 = vmatprep.subr.mxu0 0.0
        %1042 = vmatpush1.msra.mxu0 0.0
        %1043 = vmatprep.subr.mxu0 0.0
        %1044 = vmatpush1.msra.mxu0 0.0
        %1045 = vmatprep.subr.mxu0 0.0
        %1046 = vmatpush1.msra.mxu0 0.0
        %1047 = vmatprep.mubr.f32.mxu0 0.0
        %1048 = vmatmul.mubr.f32.gmra.mrb[0].mxu0 %v978
        %v1049 = vpop.f32.mrb[0].mxu0
        %v1050 = vadd.f32 %v969, %v1049
        %v1051 = vpop.f32.mrb[0].mxu0
        %1052 = vmatprep.mubr.f32.mxu0 0.0
        %1053 = vmatmul.mubr.f32.gmra.mrb[0].mxu0 %v981
        %v1054 = vpop.f32.mrb[0].mxu0
        %v1055 = vadd.f32 %v974, %v1054
        %v1056 = vpop.f32.mrb[0].mxu0
        %1057 = vdwg.mxu0
        %v1058 = vld [vmem:[%s10] sm:$0xff]
        %v1059 = vld [vmem:[%s10 + $0x8] sm:$0xff]
        %v1060 = vld [vmem:[%s10 + $0x10] sm:$0xff]
        %v1061 = vld [vmem:[%s10 + $0x18] sm:$0xff]
        %1063 = vset.pattern.permute.xlu0 0
        %1064 = vperm.xlu0 %1063, %v703
        %v1065 = vpop.permute.xlu0 %1064
        %1068 = vset.pattern.permute.xlu0 0
        %1069 = vperm.xlu0 %1068, %v704
        %v1070 = vpop.permute.xlu0 %1069
        %1073 = vset.pattern.permute.xlu0 0
        %1074 = vperm.xlu0 %1073, %v705
        %v1075 = vpop.permute.xlu0 %1074
        %1078 = vset.pattern.permute.xlu0 0
        %1079 = vperm.xlu0 %1078, %v706
        %v1080 = vpop.permute.xlu0 %1079
        %vm1082 = vcmask 130048
        %v1084 = vsel %vm1082, %v1058, 0
        %v1087 = vsel %vm1082, %v1059, 0
        %v1090 = vsel %vm1082, %v1060, 0
        %v1093 = vsel %vm1082, %v1061, 0
        %1095 = vmatprep.subr.mxu0 0.0
        %1096 = vmatpush1.msra.mxu0 %v1050
        %1097 = vmatprep.subr.mxu0 0.0
        %1098 = vmatpush1.msra.mxu0 %v1055
        %1099 = vmatprep.subr.mxu0 0.0
        %1100 = vmatpush1.msra.mxu0 0.0
        %1101 = vmatprep.subr.mxu0 0.0
        %1102 = vmatpush1.msra.mxu0 0.0
        %1103 = vmatprep.subr.mxu0 0.0
        %1104 = vmatpush1.msra.mxu0 0.0
        %1105 = vmatprep.subr.mxu0 0.0
        %1106 = vmatpush1.msra.mxu0 0.0
        %1107 = vmatprep.subr.mxu0 0.0
        %1108 = vmatpush1.msra.mxu0 0.0
        %1109 = vmatprep.subr.mxu0 0.0
        %1110 = vmatpush1.msra.mxu0 0.0
        %1111 = vmatprep.subr.mxu0 0.0
        %1112 = vmatpush1.msra.mxu0 0.0
        %1113 = vmatprep.subr.mxu0 0.0
        %1114 = vmatpush1.msra.mxu0 0.0
        %1115 = vmatprep.subr.mxu0 0.0
        %1116 = vmatpush1.msra.mxu0 0.0
        %1117 = vmatprep.subr.mxu0 0.0
        %1118 = vmatpush1.msra.mxu0 0.0
        %1119 = vmatprep.subr.mxu0 0.0
        %1120 = vmatpush1.msra.mxu0 0.0
        %1121 = vmatprep.subr.mxu0 0.0
        %1122 = vmatpush1.msra.mxu0 0.0
        %1123 = vmatprep.subr.mxu0 0.0
        %1124 = vmatpush1.msra.mxu0 0.0
        %1125 = vmatprep.subr.mxu0 0.0
        %1126 = vmatpush1.msra.mxu0 0.0
        %1127 = vmatprep.subr.mxu0 0.0
        %1128 = vmatpush1.msra.mxu0 0.0
        %1129 = vmatprep.subr.mxu0 0.0
        %1130 = vmatpush1.msra.mxu0 0.0
        %1131 = vmatprep.subr.mxu0 0.0
        %1132 = vmatpush1.msra.mxu0 0.0
        %1133 = vmatprep.subr.mxu0 0.0
        %1134 = vmatpush1.msra.mxu0 0.0
        %1135 = vmatprep.subr.mxu0 0.0
        %1136 = vmatpush1.msra.mxu0 0.0
        %1137 = vmatprep.subr.mxu0 0.0
        %1138 = vmatpush1.msra.mxu0 0.0
        %1139 = vmatprep.subr.mxu0 0.0
        %1140 = vmatpush1.msra.mxu0 0.0
        %1141 = vmatprep.subr.mxu0 0.0
        %1142 = vmatpush1.msra.mxu0 0.0
        %1143 = vmatprep.subr.mxu0 0.0
        %1144 = vmatpush1.msra.mxu0 0.0
        %1145 = vmatprep.subr.mxu0 0.0
        %1146 = vmatpush1.msra.mxu0 0.0
        %1147 = vmatprep.subr.mxu0 0.0
        %1148 = vmatpush1.msra.mxu0 0.0
        %1149 = vmatprep.subr.mxu0 0.0
        %1150 = vmatpush1.msra.mxu0 0.0
        %1151 = vmatprep.subr.mxu0 0.0
        %1152 = vmatpush1.msra.mxu0 0.0
        %1153 = vmatprep.subr.mxu0 0.0
        %1154 = vmatpush1.msra.mxu0 0.0
        %1155 = vmatprep.subr.mxu0 0.0
        %1156 = vmatpush1.msra.mxu0 0.0
        %1157 = vmatprep.subr.mxu0 0.0
        %1158 = vmatpush1.msra.mxu0 0.0
        %1159 = vmatprep.mubr.f32.mxu0 0.0
        %1160 = vmatmul.mubr.f32.gmra.mrb[0].mxu0 %v1084
        %v1161 = vpop.f32.mrb[0].mxu0
        %v1162 = vadd.f32 %v1065, %v1161
        %v1163 = vpop.f32.mrb[0].mxu0
        %1164 = vmatprep.mubr.f32.mxu0 0.0
        %1165 = vmatmul.mubr.f32.gmra.mrb[0].mxu0 %v1087
        %v1166 = vpop.f32.mrb[0].mxu0
        %v1167 = vadd.f32 %v1070, %v1166
        %v1168 = vpop.f32.mrb[0].mxu0
        %1169 = vmatprep.mubr.f32.mxu0 0.0
        %1170 = vmatmul.mubr.f32.gmra.mrb[0].mxu0 %v1090
        %v1171 = vpop.f32.mrb[0].mxu0
        %v1172 = vadd.f32 %v1075, %v1171
        %v1173 = vpop.f32.mrb[0].mxu0
        %1174 = vmatprep.mubr.f32.mxu0 0.0
        %1175 = vmatmul.mubr.f32.gmra.mrb[0].mxu0 %v1093
        %v1176 = vpop.f32.mrb[0].mxu0
        %v1177 = vadd.f32 %v1080, %v1176
        %v1178 = vpop.f32.mrb[0].mxu0
        %1179 = vdwg.mxu0
        %v1180 = vmul.f32 %v1162, 0.5
        %v1181 = vmul.f32 %v1167, 0.5
        %v1182 = vmul.f32 %v1172, 0.5
        %v1183 = vmul.f32 %v1177, 0.5
        %v1184 = vmul.f32 %v1162, 0.70710677
        %v1185 = vmul.f32 %v1167, 0.70710677
        %v1186 = vmul.f32 %v1172, 0.70710677
        %v1187 = vmul.f32 %v1177, 0.70710677
        %vm1188 = vcmp.ge.f32.partialorder %v1184, 0.0
        %vm1189 = vcmp.ge.f32.partialorder %v1185, 0.0
        %vm1190 = vcmp.ge.f32.partialorder %v1186, 0.0
        %vm1191 = vcmp.ge.f32.partialorder %v1187, 0.0
        %v1192 = vsel %vm1188, 1.0, -1.0
        %v1193 = vsel %vm1189, 1.0, -1.0
        %v1194 = vsel %vm1190, 1.0, -1.0
        %v1195 = vsel %vm1191, 1.0, -1.0
        %v1196 = vand.u32 2147483647, %v1184
        %v1197 = vand.u32 2147483647, %v1185
        %v1198 = vand.u32 2147483647, %v1186
        %v1199 = vand.u32 2147483647, %v1187
        %v1200 = vmul.f32 %v1196, 0.3275911
        %v1201 = vmul.f32 %v1197, 0.3275911
        %v1202 = vmul.f32 %v1198, 0.3275911
        %v1203 = vmul.f32 %v1199, 0.3275911
        %v1204 = vadd.f32 %v1200, 1.0
        %v1205 = vadd.f32 %v1201, 1.0
        %v1206 = vadd.f32 %v1202, 1.0
        %v1207 = vadd.f32 %v1203, 1.0
        %v1208 = vrcp.pop %v1204
        %v1209 = vmul.f32 1.0, %v1208
        %v1210 = vrcp.pop %v1205
        %v1211 = vmul.f32 1.0, %v1210
        %v1212 = vrcp.pop %v1206
        %v1213 = vmul.f32 1.0, %v1212
        %v1214 = vrcp.pop %v1207
        %v1215 = vmul.f32 1.0, %v1214
        %v1216 = vmul.f32 %v1209, 1.0614054
        %v1217 = vmul.f32 %v1211, 1.0614054
        %v1218 = vmul.f32 %v1213, 1.0614054
        %v1219 = vmul.f32 %v1215, 1.0614054
        %v1220 = vadd.f32 %v1216, -1.4531521
        %v1221 = vadd.f32 %v1217, -1.4531521
        %v1222 = vadd.f32 %v1218, -1.4531521
        %v1223 = vadd.f32 %v1219, -1.4531521
        %v1224 = vmul.f32 %v1220, %v1209
        %v1225 = vmul.f32 %v1221, %v1211
        %v1226 = vmul.f32 %v1222, %v1213
        %v1227 = vmul.f32 %v1223, %v1215
        %v1228 = vadd.f32 %v1224, 1.4214138
        %v1229 = vadd.f32 %v1225, 1.4214138
        %v1230 = vadd.f32 %v1226, 1.4214138
        %v1231 = vadd.f32 %v1227, 1.4214138
        %v1232 = vmul.f32 %v1228, %v1209
        %v1233 = vmul.f32 %v1229, %v1211
        %v1234 = vmul.f32 %v1230, %v1213
        %v1235 = vmul.f32 %v1231, %v1215
        %v1236 = vadd.f32 %v1232, -0.28449672
        %v1237 = vadd.f32 %v1233, -0.28449672
        %v1238 = vadd.f32 %v1234, -0.28449672
        %v1239 = vadd.f32 %v1235, -0.28449672
        %v1240 = vmul.f32 %v1236, %v1209
        %v1241 = vmul.f32 %v1237, %v1211
        %v1242 = vmul.f32 %v1238, %v1213
        %v1243 = vmul.f32 %v1239, %v1215
        %v1244 = vadd.f32 %v1240, 0.2548296
        %v1245 = vadd.f32 %v1241, 0.2548296
        %v1246 = vadd.f32 %v1242, 0.2548296
        %v1247 = vadd.f32 %v1243, 0.2548296
        %v1248 = vmul.f32 %v1244, %v1209
        %v1249 = vmul.f32 %v1245, %v1211
        %v1250 = vmul.f32 %v1246, %v1213
        %v1251 = vmul.f32 %v1247, %v1215
        %v1252 = vsub.f32 0.0, %v1196
        %v1253 = vsub.f32 0.0, %v1197
        %v1254 = vsub.f32 0.0, %v1198
        %v1255 = vsub.f32 0.0, %v1199
        %v1256 = vmul.f32 %v1252, %v1196
        %v1257 = vmul.f32 %v1253, %v1197
        %v1258 = vmul.f32 %v1254, %v1198
        %v1259 = vmul.f32 %v1255, %v1199
        %v1260 = vmul.f32 %v1256, 1.442695
        %v1261 = vpow.pop %v1260
        %v1262 = vmul.f32 %v1257, 1.442695
        %v1263 = vpow.pop %v1262
        %v1264 = vmul.f32 %v1258, 1.442695
        %v1265 = vpow.pop %v1264
        %v1266 = vmul.f32 %v1259, 1.442695
        %v1267 = vpow.pop %v1266
        %v1268 = vmul.f32 %v1248, %v1261
        %v1269 = vmul.f32 %v1249, %v1263
        %v1270 = vmul.f32 %v1250, %v1265
        %v1271 = vmul.f32 %v1251, %v1267
        %v1272 = vsub.f32 1.0, %v1268
        %v1273 = vsub.f32 1.0, %v1269
        %v1274 = vsub.f32 1.0, %v1270
        %v1275 = vsub.f32 1.0, %v1271
        %v1276 = vmul.f32 %v1192, %v1272
        %v1277 = vmul.f32 %v1193, %v1273
        %v1278 = vmul.f32 %v1194, %v1274
        %v1279 = vmul.f32 %v1195, %v1275
        %v1280 = vadd.f32 %v1276, 1.0
        %v1281 = vadd.f32 %v1277, 1.0
        %v1282 = vadd.f32 %v1278, 1.0
        %v1283 = vadd.f32 %v1279, 1.0
        %v1284 = vmul.f32 %v1180, %v1280
        %v1285 = vmul.f32 %v1181, %v1281
        %v1286 = vmul.f32 %v1182, %v1282
        %v1287 = vmul.f32 %v1183, %v1283
        %v1288 = vld [vmem:[%s11] sm:$0xff]
        %v1289 = vld [vmem:[%s11 + $0x8] sm:$0xff]
        %v1290 = vld [vmem:[%s11 + $0x10] sm:$0xff]
        %v1291 = vld [vmem:[%s11 + $0x18] sm:$0xff]
        %v1292 = vld [vmem:[%s12] sm:$0xff]
        %v1293 = vld [vmem:[%s12 + $0x8] sm:$0xff]
        %v1294 = vld [vmem:[%s12 + $0x10] sm:$0xff]
        %v1295 = vld [vmem:[%s12 + $0x18] sm:$0xff]
        %1297 = vset.pattern.permute.xlu0 0
        %1298 = vperm.xlu0 %1297, %v1292
        %v1299 = vpop.permute.xlu0 %1298
        %1302 = vset.pattern.permute.xlu0 0
        %1303 = vperm.xlu0 %1302, %v1293
        %v1304 = vpop.permute.xlu0 %1303
        %1307 = vset.pattern.permute.xlu0 0
        %1308 = vperm.xlu0 %1307, %v1294
        %v1309 = vpop.permute.xlu0 %1308
        %1312 = vset.pattern.permute.xlu0 0
        %1313 = vperm.xlu0 %1312, %v1295
        %v1314 = vpop.permute.xlu0 %1313
        %v1317 = vsel %vm976, %v1288, 0
        %v1320 = vsel %vm976, %v1289, 0
        %v1323 = vsel %vm976, %v1290, 0
        %v1326 = vsel %vm976, %v1291, 0
        %1328 = vmatprep.subr.mxu0 0.0
        %1329 = vmatpush1.msra.mxu0 %v1284
        %1330 = vmatprep.subr.mxu0 0.0
        %1331 = vmatpush1.msra.mxu0 %v1285
        %1332 = vmatprep.subr.mxu0 0.0
        %1333 = vmatpush1.msra.mxu0 %v1286
        %1334 = vmatprep.subr.mxu0 0.0
        %1335 = vmatpush1.msra.mxu0 %v1287
        %1336 = vmatprep.subr.mxu0 0.0
        %1337 = vmatpush1.msra.mxu0 0.0
        %1338 = vmatprep.subr.mxu0 0.0
        %1339 = vmatpush1.msra.mxu0 0.0
        %1340 = vmatprep.subr.mxu0 0.0
        %1341 = vmatpush1.msra.mxu0 0.0
        %1342 = vmatprep.subr.mxu0 0.0
        %1343 = vmatpush1.msra.mxu0 0.0
        %1344 = vmatprep.subr.mxu0 0.0
        %1345 = vmatpush1.msra.mxu0 0.0
        %1346 = vmatprep.subr.mxu0 0.0
        %1347 = vmatpush1.msra.mxu0 0.0
        %1348 = vmatprep.subr.mxu0 0.0
        %1349 = vmatpush1.msra.mxu0 0.0
        %1350 = vmatprep.subr.mxu0 0.0
        %1351 = vmatpush1.msra.mxu0 0.0
        %1352 = vmatprep.subr.mxu0 0.0
        %1353 = vmatpush1.msra.mxu0 0.0
        %1354 = vmatprep.subr.mxu0 0.0
        %1355 = vmatpush1.msra.mxu0 0.0
        %1356 = vmatprep.subr.mxu0 0.0
        %1357 = vmatpush1.msra.mxu0 0.0
        %1358 = vmatprep.subr.mxu0 0.0
        %1359 = vmatpush1.msra.mxu0 0.0
        %1360 = vmatprep.subr.mxu0 0.0
        %1361 = vmatpush1.msra.mxu0 0.0
        %1362 = vmatprep.subr.mxu0 0.0
        %1363 = vmatpush1.msra.mxu0 0.0
        %1364 = vmatprep.subr.mxu0 0.0
        %1365 = vmatpush1.msra.mxu0 0.0
        %1366 = vmatprep.subr.mxu0 0.0
        %1367 = vmatpush1.msra.mxu0 0.0
        %1368 = vmatprep.subr.mxu0 0.0
        %1369 = vmatpush1.msra.mxu0 0.0
        %1370 = vmatprep.subr.mxu0 0.0
        %1371 = vmatpush1.msra.mxu0 0.0
        %1372 = vmatprep.subr.mxu0 0.0
        %1373 = vmatpush1.msra.mxu0 0.0
        %1374 = vmatprep.subr.mxu0 0.0
        %1375 = vmatpush1.msra.mxu0 0.0
        %1376 = vmatprep.subr.mxu0 0.0
        %1377 = vmatpush1.msra.mxu0 0.0
        %1378 = vmatprep.subr.mxu0 0.0
        %1379 = vmatpush1.msra.mxu0 0.0
        %1380 = vmatprep.subr.mxu0 0.0
        %1381 = vmatpush1.msra.mxu0 0.0
        %1382 = vmatprep.subr.mxu0 0.0
        %1383 = vmatpush1.msra.mxu0 0.0
        %1384 = vmatprep.subr.mxu0 0.0
        %1385 = vmatpush1.msra.mxu0 0.0
        %1386 = vmatprep.subr.mxu0 0.0
        %1387 = vmatpush1.msra.mxu0 0.0
        %1388 = vmatprep.subr.mxu0 0.0
        %1389 = vmatpush1.msra.mxu0 0.0
        %1390 = vmatprep.subr.mxu0 0.0
        %1391 = vmatpush1.msra.mxu0 0.0
        %1392 = vmatprep.mubr.f32.mxu0 0.0
        %1393 = vmatmul.mubr.f32.gmra.mrb[0].mxu0 %v1317
        %v1394 = vpop.f32.mrb[0].mxu0
        %v1395 = vadd.f32 %v1299, %v1394
        %v1396 = vpop.f32.mrb[0].mxu0
        %1397 = vmatprep.mubr.f32.mxu0 0.0
        %1398 = vmatmul.mubr.f32.gmra.mrb[0].mxu0 %v1320
        %v1399 = vpop.f32.mrb[0].mxu0
        %v1400 = vadd.f32 %v1304, %v1399
        %v1401 = vpop.f32.mrb[0].mxu0
        %1402 = vmatprep.mubr.f32.mxu0 0.0
        %1403 = vmatmul.mubr.f32.gmra.mrb[0].mxu0 %v1323
        %v1404 = vpop.f32.mrb[0].mxu0
        %v1405 = vadd.f32 %v1309, %v1404
        %v1406 = vpop.f32.mrb[0].mxu0
        %1407 = vmatprep.mubr.f32.mxu0 0.0
        %1408 = vmatmul.mubr.f32.gmra.mrb[0].mxu0 %v1326
        %v1409 = vpop.f32.mrb[0].mxu0
        %v1410 = vadd.f32 %v1314, %v1409
        %v1411 = vpop.f32.mrb[0].mxu0
        %1412 = vdwg.mxu0
        %v1413 = vmul.f32 %v1395, 0.5
        %v1414 = vmul.f32 %v1400, 0.5
        %v1415 = vmul.f32 %v1405, 0.5
        %v1416 = vmul.f32 %v1410, 0.5
        %v1417 = vmul.f32 %v1395, 0.70710677
        %v1418 = vmul.f32 %v1400, 0.70710677
        %v1419 = vmul.f32 %v1405, 0.70710677
        %v1420 = vmul.f32 %v1410, 0.70710677
        %vm1421 = vcmp.ge.f32.partialorder %v1417, 0.0
        %vm1422 = vcmp.ge.f32.partialorder %v1418, 0.0
        %vm1423 = vcmp.ge.f32.partialorder %v1419, 0.0
        %vm1424 = vcmp.ge.f32.partialorder %v1420, 0.0
        %v1425 = vsel %vm1421, 1.0, -1.0
        %v1426 = vsel %vm1422, 1.0, -1.0
        %v1427 = vsel %vm1423, 1.0, -1.0
        %v1428 = vsel %vm1424, 1.0, -1.0
        %v1429 = vand.u32 2147483647, %v1417
        %v1430 = vand.u32 2147483647, %v1418
        %v1431 = vand.u32 2147483647, %v1419
        %v1432 = vand.u32 2147483647, %v1420
        %v1433 = vmul.f32 %v1429, 0.3275911
        %v1434 = vmul.f32 %v1430, 0.3275911
        %v1435 = vmul.f32 %v1431, 0.3275911
        %v1436 = vmul.f32 %v1432, 0.3275911
        %v1437 = vadd.f32 %v1433, 1.0
        %v1438 = vadd.f32 %v1434, 1.0
        %v1439 = vadd.f32 %v1435, 1.0
        %v1440 = vadd.f32 %v1436, 1.0
        %v1441 = vrcp.pop %v1437
        %v1442 = vmul.f32 1.0, %v1441
        %v1443 = vrcp.pop %v1438
        %v1444 = vmul.f32 1.0, %v1443
        %v1445 = vrcp.pop %v1439
        %v1446 = vmul.f32 1.0, %v1445
        %v1447 = vrcp.pop %v1440
        %v1448 = vmul.f32 1.0, %v1447
        %v1449 = vmul.f32 %v1442, 1.0614054
        %v1450 = vmul.f32 %v1444, 1.0614054
        %v1451 = vmul.f32 %v1446, 1.0614054
        %v1452 = vmul.f32 %v1448, 1.0614054
        %v1453 = vadd.f32 %v1449, -1.4531521
        %v1454 = vadd.f32 %v1450, -1.4531521
        %v1455 = vadd.f32 %v1451, -1.4531521
        %v1456 = vadd.f32 %v1452, -1.4531521
        %v1457 = vmul.f32 %v1453, %v1442
        %v1458 = vmul.f32 %v1454, %v1444
        %v1459 = vmul.f32 %v1455, %v1446
        %v1460 = vmul.f32 %v1456, %v1448
        %v1461 = vadd.f32 %v1457, 1.4214138
        %v1462 = vadd.f32 %v1458, 1.4214138
        %v1463 = vadd.f32 %v1459, 1.4214138
        %v1464 = vadd.f32 %v1460, 1.4214138
        %v1465 = vmul.f32 %v1461, %v1442
        %v1466 = vmul.f32 %v1462, %v1444
        %v1467 = vmul.f32 %v1463, %v1446
        %v1468 = vmul.f32 %v1464, %v1448
        %v1469 = vadd.f32 %v1465, -0.28449672
        %v1470 = vadd.f32 %v1466, -0.28449672
        %v1471 = vadd.f32 %v1467, -0.28449672
        %v1472 = vadd.f32 %v1468, -0.28449672
        %v1473 = vmul.f32 %v1469, %v1442
        %v1474 = vmul.f32 %v1470, %v1444
        %v1475 = vmul.f32 %v1471, %v1446
        %v1476 = vmul.f32 %v1472, %v1448
        %v1477 = vadd.f32 %v1473, 0.2548296
        %v1478 = vadd.f32 %v1474, 0.2548296
        %v1479 = vadd.f32 %v1475, 0.2548296
        %v1480 = vadd.f32 %v1476, 0.2548296
        %v1481 = vmul.f32 %v1477, %v1442
        %v1482 = vmul.f32 %v1478, %v1444
        %v1483 = vmul.f32 %v1479, %v1446
        %v1484 = vmul.f32 %v1480, %v1448
        %v1485 = vsub.f32 0.0, %v1429
        %v1486 = vsub.f32 0.0, %v1430
        %v1487 = vsub.f32 0.0, %v1431
        %v1488 = vsub.f32 0.0, %v1432
        %v1489 = vmul.f32 %v1485, %v1429
        %v1490 = vmul.f32 %v1486, %v1430
        %v1491 = vmul.f32 %v1487, %v1431
        %v1492 = vmul.f32 %v1488, %v1432
        %v1493 = vmul.f32 %v1489, 1.442695
        %v1494 = vpow.pop %v1493
        %v1495 = vmul.f32 %v1490, 1.442695
        %v1496 = vpow.pop %v1495
        %v1497 = vmul.f32 %v1491, 1.442695
        %v1498 = vpow.pop %v1497
        %v1499 = vmul.f32 %v1492, 1.442695
        %v1500 = vpow.pop %v1499
        %v1501 = vmul.f32 %v1481, %v1494
        %v1502 = vmul.f32 %v1482, %v1496
        %v1503 = vmul.f32 %v1483, %v1498
        %v1504 = vmul.f32 %v1484, %v1500
        %v1505 = vsub.f32 1.0, %v1501
        %v1506 = vsub.f32 1.0, %v1502
        %v1507 = vsub.f32 1.0, %v1503
        %v1508 = vsub.f32 1.0, %v1504
        %v1509 = vmul.f32 %v1425, %v1505
        %v1510 = vmul.f32 %v1426, %v1506
        %v1511 = vmul.f32 %v1427, %v1507
        %v1512 = vmul.f32 %v1428, %v1508
        %v1513 = vadd.f32 %v1509, 1.0
        %v1514 = vadd.f32 %v1510, 1.0
        %v1515 = vadd.f32 %v1511, 1.0
        %v1516 = vadd.f32 %v1512, 1.0
        %v1517 = vmul.f32 %v1413, %v1513
        %v1518 = vmul.f32 %v1414, %v1514
        %v1519 = vmul.f32 %v1415, %v1515
        %v1520 = vmul.f32 %v1416, %v1516
        %v1521 = vld [vmem:[%s13] sm:$0xff]
        %v1522 = vld [vmem:[%s14] sm:$0xff]
        %1524 = vset.pattern.permute.xlu0 0
        %1525 = vperm.xlu0 %1524, %v1522
        %v1526 = vpop.permute.xlu0 %1525
        %v1529 = vsel %vm976, %v1521, 0
        %1531 = vmatprep.subr.mxu0 0.0
        %1532 = vmatpush1.msra.mxu0 %v1517
        %1533 = vmatprep.subr.mxu0 0.0
        %1534 = vmatpush1.msra.mxu0 %v1518
        %1535 = vmatprep.subr.mxu0 0.0
        %1536 = vmatpush1.msra.mxu0 %v1519
        %1537 = vmatprep.subr.mxu0 0.0
        %1538 = vmatpush1.msra.mxu0 %v1520
        %1539 = vmatprep.subr.mxu0 0.0
        %1540 = vmatpush1.msra.mxu0 0.0
        %1541 = vmatprep.subr.mxu0 0.0
        %1542 = vmatpush1.msra.mxu0 0.0
        %1543 = vmatprep.subr.mxu0 0.0
        %1544 = vmatpush1.msra.mxu0 0.0
        %1545 = vmatprep.subr.mxu0 0.0
        %1546 = vmatpush1.msra.mxu0 0.0
        %1547 = vmatprep.subr.mxu0 0.0
        %1548 = vmatpush1.msra.mxu0 0.0
        %1549 = vmatprep.subr.mxu0 0.0
        %1550 = vmatpush1.msra.mxu0 0.0
        %1551 = vmatprep.subr.mxu0 0.0
        %1552 = vmatpush1.msra.mxu0 0.0
        %1553 = vmatprep.subr.mxu0 0.0
        %1554 = vmatpush1.msra.mxu0 0.0
        %1555 = vmatprep.subr.mxu0 0.0
        %1556 = vmatpush1.msra.mxu0 0.0
        %1557 = vmatprep.subr.mxu0 0.0
        %1558 = vmatpush1.msra.mxu0 0.0
        %1559 = vmatprep.subr.mxu0 0.0
        %1560 = vmatpush1.msra.mxu0 0.0
        %1561 = vmatprep.subr.mxu0 0.0
        %1562 = vmatpush1.msra.mxu0 0.0
        %1563 = vmatprep.subr.mxu0 0.0
        %1564 = vmatpush1.msra.mxu0 0.0
        %1565 = vmatprep.subr.mxu0 0.0
        %1566 = vmatpush1.msra.mxu0 0.0
        %1567 = vmatprep.subr.mxu0 0.0
        %1568 = vmatpush1.msra.mxu0 0.0
        %1569 = vmatprep.subr.mxu0 0.0
        %1570 = vmatpush1.msra.mxu0 0.0
        %1571 = vmatprep.subr.mxu0 0.0
        %1572 = vmatpush1.msra.mxu0 0.0
        %1573 = vmatprep.subr.mxu0 0.0
        %1574 = vmatpush1.msra.mxu0 0.0
        %1575 = vmatprep.subr.mxu0 0.0
        %1576 = vmatpush1.msra.mxu0 0.0
        %1577 = vmatprep.subr.mxu0 0.0
        %1578 = vmatpush1.msra.mxu0 0.0
        %1579 = vmatprep.subr.mxu0 0.0
        %1580 = vmatpush1.msra.mxu0 0.0
        %1581 = vmatprep.subr.mxu0 0.0
        %1582 = vmatpush1.msra.mxu0 0.0
        %1583 = vmatprep.subr.mxu0 0.0
        %1584 = vmatpush1.msra.mxu0 0.0
        %1585 = vmatprep.subr.mxu0 0.0
        %1586 = vmatpush1.msra.mxu0 0.0
        %1587 = vmatprep.subr.mxu0 0.0
        %1588 = vmatpush1.msra.mxu0 0.0
        %1589 = vmatprep.subr.mxu0 0.0
        %1590 = vmatpush1.msra.mxu0 0.0
        %1591 = vmatprep.subr.mxu0 0.0
        %1592 = vmatpush1.msra.mxu0 0.0
        %1593 = vmatprep.subr.mxu0 0.0
        %1594 = vmatpush1.msra.mxu0 0.0
        %1595 = vmatprep.mubr.f32.mxu0 0.0
        %1596 = vmatmul.mubr.f32.gmra.mrb[0].mxu0 %v1529
        %v1597 = vpop.f32.mrb[0].mxu0
        %v1598 = vadd.f32 %v1526, %v1597
        %v1599 = vpop.f32.mrb[0].mxu0
        %1600 = vdwg.mxu0
        %v1601 = vtanh.pop %v1598
        %v1602 = vmul.f32 %v1601, 4.0
        %v1603 = vadd.f32 %v1602, 0.0
        %v1604 = vmul.f32 %v1603, 0.5
        %v1605 = vmul.f32 %v1604, 1.442695
        %v1606 = vpow.pop %v1605
        %v1607 = vmul.f32 %v1606, 0.25
        %v1608 = vmul.f32 %v1598, 0.0625
        %v1609 = vadd.f32 %v711, %v1608
        %v1611 = vrot.slane %v713, 4
        %v1613 = vmul.f32 %v1607, %v1611
        %v1615 = vrot.slane %v1613, 4
        %v1617 = vadd.f32 %v1609, %v1615
        %v1618 = vmul.f32 %v713, %v713
        %v1619 = vadd.f32 %v1618, -0.93471164
        %v1621 = vrot.slane %v1603, 4
        %v1623 = vadd.f32 %v1619, %v1621
        %vm1624 = vcmask 60416
        %v1625 = vsel %vm1624, %v1623, 0.0
        %v1626 = vrot.slane %v1625, 4
        %v1627 = vadd.f32 %v1625, %v1626
        %v1628 = vrot.slane %v1627, 2
        %v1629 = vadd.f32 %v1627, %v1628
        %v1630 = vrot.slane %v1629, 1
        %v1631 = vadd.f32 %v1629, %v1630
        %v1632 = vmul.f32 %v1631, -0.5
        %s1633 = sld [smem:[#allocation3 + %s712]]
        %s1634 = sld [smem:[#allocation5 + %s712]]
        %s1635 = sld [smem:[#allocation7 + %s712]]
        %v1636 = vstv %s1633
        %v1637 = vmul.f32 %v1617, %v1636
        %v1638 = vsub.f32 %v711, %v1637
        %v1639 = vstv %s1635
        %v1640 = vmul.f32 %v1638, %v1639
        %v1641 = vmul.f32 %v1640, %v1640
        %v1642 = vadd.f32 %v1641, 1.837877
        %v1643 = vstv %s1634
        %v1644 = vadd.f32 %v1642, %v1643
        %v1645 = vsel %vm1624, %v1644, 0.0
        %v1646 = vrot.slane %v1645, 4
        %v1647 = vadd.f32 %v1645, %v1646
        %v1648 = vrot.slane %v1647, 2
        %v1649 = vadd.f32 %v1647, %v1648
        %v1650 = vrot.slane %v1649, 1
        %v1651 = vadd.f32 %v1649, %v1650
        %v1652 = vmul.f32 %v1651, -0.5
        %p1653 = scmp.gt.s32.totalorder %s36, 0
        %s1654 = scalar_select %p1653, 1, 0
        %v1655 = vstv %s1654
        %vm1656 = vcmp.eq.s32.totalorder %v1655, 1
        %v1657 = vsel %vm1656, %v1652, 0.0
        %1658 = vst.msk [vmem:[%s680] sm:$0xf] %vm1624, %v1617
        %vm1659 = vcmask 57344
        %1660 = vst.msk [vmem:[%s688] sm:$0x1] %vm1659, %v1632
        %1661 = vst.msk [vmem:[%s695] sm:$0x1] %vm1659, %v1657
        %s1662 = sadd.s32 %s712, 1
        %s1663 = scalar_lea.vmem %s666, 4
        %v1664 = vld [vmem:[%s1663] sm:$0xf]
        %v1665 = vld [vmem:[%s7] sm:$0xff]
        %v1666 = vld [vmem:[%s7 + $0x8] sm:$0xff]
        %v1667 = vld [vmem:[%s7 + $0x10] sm:$0xff]
        %v1668 = vld [vmem:[%s7 + $0x18] sm:$0xff]
        %v1669 = vlaneseq
        %v1670 = vshrl.u32 %v1669, 7
        %v1671 = vsub.s32 0, %v1670
        %v1672 = vrot.slane %v1617, %v1671
        %v1673 = vmul.f32 %v721, %v1672
        %v1674 = vmul.f32 %v726, %v1672
        %v1675 = vmul.f32 %v731, %v1672
        %v1676 = vmul.f32 %v736, %v1672
        %1678 = vset.pattern.permute.xlu0 0
        %1679 = vperm.xlu0 %1678, %v1665
        %v1680 = vpop.permute.xlu0 %1679
        %1683 = vset.pattern.permute.xlu0 0
        %1684 = vperm.xlu0 %1683, %v1666
        %v1685 = vpop.permute.xlu0 %1684
        %1688 = vset.pattern.permute.xlu0 0
        %1689 = vperm.xlu0 %1688, %v1667
        %v1690 = vpop.permute.xlu0 %1689
        %1693 = vset.pattern.permute.xlu0 0
        %1694 = vperm.xlu0 %1693, %v1668
        %v1695 = vpop.permute.xlu0 %1694
        %v1697 = vadd.f32 %v1680, %v1673
        %v1698 = vadd.f32 %v1685, %v1674
        %v1699 = vadd.f32 %v1690, %v1675
        %v1700 = vadd.f32 %v1695, %v1676
        %v1701 = vlaneseq
        %v1702 = vshrl.u32 %v1701, 7
        %v1703 = vsub.s32 1, %v1702
        %v1704 = vrot.slane %v1617, %v1703
        %v1705 = vmul.f32 %v772, %v1704
        %v1706 = vmul.f32 %v776, %v1704
        %v1707 = vmul.f32 %v780, %v1704
        %v1708 = vmul.f32 %v784, %v1704
        %v1709 = vadd.f32 %v1697, %v1705
        %v1710 = vadd.f32 %v1698, %v1706
        %v1711 = vadd.f32 %v1699, %v1707
        %v1712 = vadd.f32 %v1700, %v1708
        %v1713 = vlaneseq
        %v1714 = vshrl.u32 %v1713, 7
        %v1715 = vsub.s32 2, %v1714
        %v1716 = vrot.slane %v1617, %v1715
        %v1717 = vmul.f32 %v800, %v1716
        %v1718 = vmul.f32 %v804, %v1716
        %v1719 = vmul.f32 %v808, %v1716
        %v1720 = vmul.f32 %v812, %v1716
        %v1721 = vadd.f32 %v1709, %v1717
        %v1722 = vadd.f32 %v1710, %v1718
        %v1723 = vadd.f32 %v1711, %v1719
        %v1724 = vadd.f32 %v1712, %v1720
        %v1725 = vlaneseq
        %v1726 = vshrl.u32 %v1725, 7
        %v1727 = vsub.s32 3, %v1726
        %v1728 = vrot.slane %v1617, %v1727
        %v1729 = vmul.f32 %v828, %v1728
        %v1730 = vmul.f32 %v832, %v1728
        %v1731 = vmul.f32 %v836, %v1728
        %v1732 = vmul.f32 %v840, %v1728
        %v1733 = vadd.f32 %v1721, %v1729
        %v1734 = vadd.f32 %v1722, %v1730
        %v1735 = vadd.f32 %v1723, %v1731
        %v1736 = vadd.f32 %v1724, %v1732
        %v1737 = vmul.f32 %v1733, 0.5
        %v1738 = vmul.f32 %v1734, 0.5
        %v1739 = vmul.f32 %v1735, 0.5
        %v1740 = vmul.f32 %v1736, 0.5
        %v1741 = vmul.f32 %v1733, 0.70710677
        %v1742 = vmul.f32 %v1734, 0.70710677
        %v1743 = vmul.f32 %v1735, 0.70710677
        %v1744 = vmul.f32 %v1736, 0.70710677
        %vm1745 = vcmp.ge.f32.partialorder %v1741, 0.0
        %vm1746 = vcmp.ge.f32.partialorder %v1742, 0.0
        %vm1747 = vcmp.ge.f32.partialorder %v1743, 0.0
        %vm1748 = vcmp.ge.f32.partialorder %v1744, 0.0
        %v1749 = vsel %vm1745, 1.0, -1.0
        %v1750 = vsel %vm1746, 1.0, -1.0
        %v1751 = vsel %vm1747, 1.0, -1.0
        %v1752 = vsel %vm1748, 1.0, -1.0
        %v1753 = vand.u32 2147483647, %v1741
        %v1754 = vand.u32 2147483647, %v1742
        %v1755 = vand.u32 2147483647, %v1743
        %v1756 = vand.u32 2147483647, %v1744
        %v1757 = vmul.f32 %v1753, 0.3275911
        %v1758 = vmul.f32 %v1754, 0.3275911
        %v1759 = vmul.f32 %v1755, 0.3275911
        %v1760 = vmul.f32 %v1756, 0.3275911
        %v1761 = vadd.f32 %v1757, 1.0
        %v1762 = vadd.f32 %v1758, 1.0
        %v1763 = vadd.f32 %v1759, 1.0
        %v1764 = vadd.f32 %v1760, 1.0
        %v1765 = vrcp.pop %v1761
        %v1766 = vmul.f32 1.0, %v1765
        %v1767 = vrcp.pop %v1762
        %v1768 = vmul.f32 1.0, %v1767
        %v1769 = vrcp.pop %v1763
        %v1770 = vmul.f32 1.0, %v1769
        %v1771 = vrcp.pop %v1764
        %v1772 = vmul.f32 1.0, %v1771
        %v1773 = vmul.f32 %v1766, 1.0614054
        %v1774 = vmul.f32 %v1768, 1.0614054
        %v1775 = vmul.f32 %v1770, 1.0614054
        %v1776 = vmul.f32 %v1772, 1.0614054
        %v1777 = vadd.f32 %v1773, -1.4531521
        %v1778 = vadd.f32 %v1774, -1.4531521
        %v1779 = vadd.f32 %v1775, -1.4531521
        %v1780 = vadd.f32 %v1776, -1.4531521
        %v1781 = vmul.f32 %v1777, %v1766
        %v1782 = vmul.f32 %v1778, %v1768
        %v1783 = vmul.f32 %v1779, %v1770
        %v1784 = vmul.f32 %v1780, %v1772
        %v1785 = vadd.f32 %v1781, 1.4214138
        %v1786 = vadd.f32 %v1782, 1.4214138
        %v1787 = vadd.f32 %v1783, 1.4214138
        %v1788 = vadd.f32 %v1784, 1.4214138
        %v1789 = vmul.f32 %v1785, %v1766
        %v1790 = vmul.f32 %v1786, %v1768
        %v1791 = vmul.f32 %v1787, %v1770
        %v1792 = vmul.f32 %v1788, %v1772
        %v1793 = vadd.f32 %v1789, -0.28449672
        %v1794 = vadd.f32 %v1790, -0.28449672
        %v1795 = vadd.f32 %v1791, -0.28449672
        %v1796 = vadd.f32 %v1792, -0.28449672
        %v1797 = vmul.f32 %v1793, %v1766
        %v1798 = vmul.f32 %v1794, %v1768
        %v1799 = vmul.f32 %v1795, %v1770
        %v1800 = vmul.f32 %v1796, %v1772
        %v1801 = vadd.f32 %v1797, 0.2548296
        %v1802 = vadd.f32 %v1798, 0.2548296
        %v1803 = vadd.f32 %v1799, 0.2548296
        %v1804 = vadd.f32 %v1800, 0.2548296
        %v1805 = vmul.f32 %v1801, %v1766
        %v1806 = vmul.f32 %v1802, %v1768
        %v1807 = vmul.f32 %v1803, %v1770
        %v1808 = vmul.f32 %v1804, %v1772
        %v1809 = vsub.f32 0.0, %v1753
        %v1810 = vsub.f32 0.0, %v1754
        %v1811 = vsub.f32 0.0, %v1755
        %v1812 = vsub.f32 0.0, %v1756
        %v1813 = vmul.f32 %v1809, %v1753
        %v1814 = vmul.f32 %v1810, %v1754
        %v1815 = vmul.f32 %v1811, %v1755
        %v1816 = vmul.f32 %v1812, %v1756
        %v1817 = vmul.f32 %v1813, 1.442695
        %v1818 = vpow.pop %v1817
        %v1819 = vmul.f32 %v1814, 1.442695
        %v1820 = vpow.pop %v1819
        %v1821 = vmul.f32 %v1815, 1.442695
        %v1822 = vpow.pop %v1821
        %v1823 = vmul.f32 %v1816, 1.442695
        %v1824 = vpow.pop %v1823
        %v1825 = vmul.f32 %v1805, %v1818
        %v1826 = vmul.f32 %v1806, %v1820
        %v1827 = vmul.f32 %v1807, %v1822
        %v1828 = vmul.f32 %v1808, %v1824
        %v1829 = vsub.f32 1.0, %v1825
        %v1830 = vsub.f32 1.0, %v1826
        %v1831 = vsub.f32 1.0, %v1827
        %v1832 = vsub.f32 1.0, %v1828
        %v1833 = vmul.f32 %v1749, %v1829
        %v1834 = vmul.f32 %v1750, %v1830
        %v1835 = vmul.f32 %v1751, %v1831
        %v1836 = vmul.f32 %v1752, %v1832
        %v1837 = vadd.f32 %v1833, 1.0
        %v1838 = vadd.f32 %v1834, 1.0
        %v1839 = vadd.f32 %v1835, 1.0
        %v1840 = vadd.f32 %v1836, 1.0
        %v1841 = vmul.f32 %v1737, %v1837
        %v1842 = vmul.f32 %v1738, %v1838
        %v1843 = vmul.f32 %v1739, %v1839
        %v1844 = vmul.f32 %v1740, %v1840
        %v1845 = vld [vmem:[%s8] sm:$0xff]
        %v1846 = vld [vmem:[%s8 + $0x8] sm:$0xff]
        %v1847 = vld [vmem:[%s9] sm:$0xff]
        %v1848 = vld [vmem:[%s9 + $0x8] sm:$0xff]
        %1850 = vset.pattern.permute.xlu0 0
        %1851 = vperm.xlu0 %1850, %v1847
        %v1852 = vpop.permute.xlu0 %1851
        %1855 = vset.pattern.permute.xlu0 0
        %1856 = vperm.xlu0 %1855, %v1848
        %v1857 = vpop.permute.xlu0 %1856
        %v1860 = vsel %vm976, %v1845, 0
        %v1863 = vsel %vm976, %v1846, 0
        %1865 = vmatprep.subr.mxu0 0.0
        %1866 = vmatpush1.msra.mxu0 %v1841
        %1867 = vmatprep.subr.mxu0 0.0
        %1868 = vmatpush1.msra.mxu0 %v1842
        %1869 = vmatprep.subr.mxu0 0.0
        %1870 = vmatpush1.msra.mxu0 %v1843
        %1871 = vmatprep.subr.mxu0 0.0
        %1872 = vmatpush1.msra.mxu0 %v1844
        %1873 = vmatprep.subr.mxu0 0.0
        %1874 = vmatpush1.msra.mxu0 0.0
        %1875 = vmatprep.subr.mxu0 0.0
        %1876 = vmatpush1.msra.mxu0 0.0
        %1877 = vmatprep.subr.mxu0 0.0
        %1878 = vmatpush1.msra.mxu0 0.0
        %1879 = vmatprep.subr.mxu0 0.0
        %1880 = vmatpush1.msra.mxu0 0.0
        %1881 = vmatprep.subr.mxu0 0.0
        %1882 = vmatpush1.msra.mxu0 0.0
        %1883 = vmatprep.subr.mxu0 0.0
        %1884 = vmatpush1.msra.mxu0 0.0
        %1885 = vmatprep.subr.mxu0 0.0
        %1886 = vmatpush1.msra.mxu0 0.0
        %1887 = vmatprep.subr.mxu0 0.0
        %1888 = vmatpush1.msra.mxu0 0.0
        %1889 = vmatprep.subr.mxu0 0.0
        %1890 = vmatpush1.msra.mxu0 0.0
        %1891 = vmatprep.subr.mxu0 0.0
        %1892 = vmatpush1.msra.mxu0 0.0
        %1893 = vmatprep.subr.mxu0 0.0
        %1894 = vmatpush1.msra.mxu0 0.0
        %1895 = vmatprep.subr.mxu0 0.0
        %1896 = vmatpush1.msra.mxu0 0.0
        %1897 = vmatprep.subr.mxu0 0.0
        %1898 = vmatpush1.msra.mxu0 0.0
        %1899 = vmatprep.subr.mxu0 0.0
        %1900 = vmatpush1.msra.mxu0 0.0
        %1901 = vmatprep.subr.mxu0 0.0
        %1902 = vmatpush1.msra.mxu0 0.0
        %1903 = vmatprep.subr.mxu0 0.0
        %1904 = vmatpush1.msra.mxu0 0.0
        %1905 = vmatprep.subr.mxu0 0.0
        %1906 = vmatpush1.msra.mxu0 0.0
        %1907 = vmatprep.subr.mxu0 0.0
        %1908 = vmatpush1.msra.mxu0 0.0
        %1909 = vmatprep.subr.mxu0 0.0
        %1910 = vmatpush1.msra.mxu0 0.0
        %1911 = vmatprep.subr.mxu0 0.0
        %1912 = vmatpush1.msra.mxu0 0.0
        %1913 = vmatprep.subr.mxu0 0.0
        %1914 = vmatpush1.msra.mxu0 0.0
        %1915 = vmatprep.subr.mxu0 0.0
        %1916 = vmatpush1.msra.mxu0 0.0
        %1917 = vmatprep.subr.mxu0 0.0
        %1918 = vmatpush1.msra.mxu0 0.0
        %1919 = vmatprep.subr.mxu0 0.0
        %1920 = vmatpush1.msra.mxu0 0.0
        %1921 = vmatprep.subr.mxu0 0.0
        %1922 = vmatpush1.msra.mxu0 0.0
        %1923 = vmatprep.subr.mxu0 0.0
        %1924 = vmatpush1.msra.mxu0 0.0
        %1925 = vmatprep.subr.mxu0 0.0
        %1926 = vmatpush1.msra.mxu0 0.0
        %1927 = vmatprep.subr.mxu0 0.0
        %1928 = vmatpush1.msra.mxu0 0.0
        %1929 = vmatprep.mubr.f32.mxu0 0.0
        %1930 = vmatmul.mubr.f32.gmra.mrb[0].mxu0 %v1860
        %v1931 = vpop.f32.mrb[0].mxu0
        %v1932 = vadd.f32 %v1852, %v1931
        %v1933 = vpop.f32.mrb[0].mxu0
        %1934 = vmatprep.mubr.f32.mxu0 0.0
        %1935 = vmatmul.mubr.f32.gmra.mrb[0].mxu0 %v1863
        %v1936 = vpop.f32.mrb[0].mxu0
        %v1937 = vadd.f32 %v1857, %v1936
        %v1938 = vpop.f32.mrb[0].mxu0
        %1939 = vdwg.mxu0
        %v1940 = vld [vmem:[%s10] sm:$0xff]
        %v1941 = vld [vmem:[%s10 + $0x8] sm:$0xff]
        %v1942 = vld [vmem:[%s10 + $0x10] sm:$0xff]
        %v1943 = vld [vmem:[%s10 + $0x18] sm:$0xff]
        %1944 = vset.pattern.permute.xlu0 1
        %1945 = vperm.xlu0 %1944, %v703
        %v1946 = vpop.permute.xlu0 %1945
        %1948 = vset.pattern.permute.xlu0 1
        %1949 = vperm.xlu0 %1948, %v704
        %v1950 = vpop.permute.xlu0 %1949
        %1952 = vset.pattern.permute.xlu0 1
        %1953 = vperm.xlu0 %1952, %v705
        %v1954 = vpop.permute.xlu0 %1953
        %1956 = vset.pattern.permute.xlu0 1
        %1957 = vperm.xlu0 %1956, %v706
        %v1958 = vpop.permute.xlu0 %1957
        %v1961 = vsel %vm1082, %v1940, 0
        %v1964 = vsel %vm1082, %v1941, 0
        %v1967 = vsel %vm1082, %v1942, 0
        %v1970 = vsel %vm1082, %v1943, 0
        %1972 = vmatprep.subr.mxu0 0.0
        %1973 = vmatpush1.msra.mxu0 %v1932
        %1974 = vmatprep.subr.mxu0 0.0
        %1975 = vmatpush1.msra.mxu0 %v1937
        %1976 = vmatprep.subr.mxu0 0.0
        %1977 = vmatpush1.msra.mxu0 0.0
        %1978 = vmatprep.subr.mxu0 0.0
        %1979 = vmatpush1.msra.mxu0 0.0
        %1980 = vmatprep.subr.mxu0 0.0
        %1981 = vmatpush1.msra.mxu0 0.0
        %1982 = vmatprep.subr.mxu0 0.0
        %1983 = vmatpush1.msra.mxu0 0.0
        %1984 = vmatprep.subr.mxu0 0.0
        %1985 = vmatpush1.msra.mxu0 0.0
        %1986 = vmatprep.subr.mxu0 0.0
        %1987 = vmatpush1.msra.mxu0 0.0
        %1988 = vmatprep.subr.mxu0 0.0
        %1989 = vmatpush1.msra.mxu0 0.0
        %1990 = vmatprep.subr.mxu0 0.0
        %1991 = vmatpush1.msra.mxu0 0.0
        %1992 = vmatprep.subr.mxu0 0.0
        %1993 = vmatpush1.msra.mxu0 0.0
        %1994 = vmatprep.subr.mxu0 0.0
        %1995 = vmatpush1.msra.mxu0 0.0
        %1996 = vmatprep.subr.mxu0 0.0
        %1997 = vmatpush1.msra.mxu0 0.0
        %1998 = vmatprep.subr.mxu0 0.0
        %1999 = vmatpush1.msra.mxu0 0.0
        %2000 = vmatprep.subr.mxu0 0.0
        %2001 = vmatpush1.msra.mxu0 0.0
        %2002 = vmatprep.subr.mxu0 0.0
        %2003 = vmatpush1.msra.mxu0 0.0
        %2004 = vmatprep.subr.mxu0 0.0
        %2005 = vmatpush1.msra.mxu0 0.0
        %2006 = vmatprep.subr.mxu0 0.0
        %2007 = vmatpush1.msra.mxu0 0.0
        %2008 = vmatprep.subr.mxu0 0.0
        %2009 = vmatpush1.msra.mxu0 0.0
        %2010 = vmatprep.subr.mxu0 0.0
        %2011 = vmatpush1.msra.mxu0 0.0
        %2012 = vmatprep.subr.mxu0 0.0
        %2013 = vmatpush1.msra.mxu0 0.0
        %2014 = vmatprep.subr.mxu0 0.0
        %2015 = vmatpush1.msra.mxu0 0.0
        %2016 = vmatprep.subr.mxu0 0.0
        %2017 = vmatpush1.msra.mxu0 0.0
        %2018 = vmatprep.subr.mxu0 0.0
        %2019 = vmatpush1.msra.mxu0 0.0
        %2020 = vmatprep.subr.mxu0 0.0
        %2021 = vmatpush1.msra.mxu0 0.0
        %2022 = vmatprep.subr.mxu0 0.0
        %2023 = vmatpush1.msra.mxu0 0.0
        %2024 = vmatprep.subr.mxu0 0.0
        %2025 = vmatpush1.msra.mxu0 0.0
        %2026 = vmatprep.subr.mxu0 0.0
        %2027 = vmatpush1.msra.mxu0 0.0
        %2028 = vmatprep.subr.mxu0 0.0
        %2029 = vmatpush1.msra.mxu0 0.0
        %2030 = vmatprep.subr.mxu0 0.0
        %2031 = vmatpush1.msra.mxu0 0.0
        %2032 = vmatprep.subr.mxu0 0.0
        %2033 = vmatpush1.msra.mxu0 0.0
        %2034 = vmatprep.subr.mxu0 0.0
        %2035 = vmatpush1.msra.mxu0 0.0
        %2036 = vmatprep.mubr.f32.mxu0 0.0
        %2037 = vmatmul.mubr.f32.gmra.mrb[0].mxu0 %v1961
        %v2038 = vpop.f32.mrb[0].mxu0
        %v2039 = vadd.f32 %v1946, %v2038
        %v2040 = vpop.f32.mrb[0].mxu0
        %2041 = vmatprep.mubr.f32.mxu0 0.0
        %2042 = vmatmul.mubr.f32.gmra.mrb[0].mxu0 %v1964
        %v2043 = vpop.f32.mrb[0].mxu0
        %v2044 = vadd.f32 %v1950, %v2043
        %v2045 = vpop.f32.mrb[0].mxu0
        %2046 = vmatprep.mubr.f32.mxu0 0.0
        %2047 = vmatmul.mubr.f32.gmra.mrb[0].mxu0 %v1967
        %v2048 = vpop.f32.mrb[0].mxu0
        %v2049 = vadd.f32 %v1954, %v2048
        %v2050 = vpop.f32.mrb[0].mxu0
        %2051 = vmatprep.mubr.f32.mxu0 0.0
        %2052 = vmatmul.mubr.f32.gmra.mrb[0].mxu0 %v1970
        %v2053 = vpop.f32.mrb[0].mxu0
        %v2054 = vadd.f32 %v1958, %v2053
        %v2055 = vpop.f32.mrb[0].mxu0
        %2056 = vdwg.mxu0
        %v2057 = vmul.f32 %v2039, 0.5
        %v2058 = vmul.f32 %v2044, 0.5
        %v2059 = vmul.f32 %v2049, 0.5
        %v2060 = vmul.f32 %v2054, 0.5
        %v2061 = vmul.f32 %v2039, 0.70710677
        %v2062 = vmul.f32 %v2044, 0.70710677
        %v2063 = vmul.f32 %v2049, 0.70710677
        %v2064 = vmul.f32 %v2054, 0.70710677
        %vm2065 = vcmp.ge.f32.partialorder %v2061, 0.0
        %vm2066 = vcmp.ge.f32.partialorder %v2062, 0.0
        %vm2067 = vcmp.ge.f32.partialorder %v2063, 0.0
        %vm2068 = vcmp.ge.f32.partialorder %v2064, 0.0
        %v2069 = vsel %vm2065, 1.0, -1.0
        %v2070 = vsel %vm2066, 1.0, -1.0
        %v2071 = vsel %vm2067, 1.0, -1.0
        %v2072 = vsel %vm2068, 1.0, -1.0
        %v2073 = vand.u32 2147483647, %v2061
        %v2074 = vand.u32 2147483647, %v2062
        %v2075 = vand.u32 2147483647, %v2063
        %v2076 = vand.u32 2147483647, %v2064
        %v2077 = vmul.f32 %v2073, 0.3275911
        %v2078 = vmul.f32 %v2074, 0.3275911
        %v2079 = vmul.f32 %v2075, 0.3275911
        %v2080 = vmul.f32 %v2076, 0.3275911
        %v2081 = vadd.f32 %v2077, 1.0
        %v2082 = vadd.f32 %v2078, 1.0
        %v2083 = vadd.f32 %v2079, 1.0
        %v2084 = vadd.f32 %v2080, 1.0
        %v2085 = vrcp.pop %v2081
        %v2086 = vmul.f32 1.0, %v2085
        %v2087 = vrcp.pop %v2082
        %v2088 = vmul.f32 1.0, %v2087
        %v2089 = vrcp.pop %v2083
        %v2090 = vmul.f32 1.0, %v2089
        %v2091 = vrcp.pop %v2084
        %v2092 = vmul.f32 1.0, %v2091
        %v2093 = vmul.f32 %v2086, 1.0614054
        %v2094 = vmul.f32 %v2088, 1.0614054
        %v2095 = vmul.f32 %v2090, 1.0614054
        %v2096 = vmul.f32 %v2092, 1.0614054
        %v2097 = vadd.f32 %v2093, -1.4531521
        %v2098 = vadd.f32 %v2094, -1.4531521
        %v2099 = vadd.f32 %v2095, -1.4531521
        %v2100 = vadd.f32 %v2096, -1.4531521
        %v2101 = vmul.f32 %v2097, %v2086
        %v2102 = vmul.f32 %v2098, %v2088
        %v2103 = vmul.f32 %v2099, %v2090
        %v2104 = vmul.f32 %v2100, %v2092
        %v2105 = vadd.f32 %v2101, 1.4214138
        %v2106 = vadd.f32 %v2102, 1.4214138
        %v2107 = vadd.f32 %v2103, 1.4214138
        %v2108 = vadd.f32 %v2104, 1.4214138
        %v2109 = vmul.f32 %v2105, %v2086
        %v2110 = vmul.f32 %v2106, %v2088
        %v2111 = vmul.f32 %v2107, %v2090
        %v2112 = vmul.f32 %v2108, %v2092
        %v2113 = vadd.f32 %v2109, -0.28449672
        %v2114 = vadd.f32 %v2110, -0.28449672
        %v2115 = vadd.f32 %v2111, -0.28449672
        %v2116 = vadd.f32 %v2112, -0.28449672
        %v2117 = vmul.f32 %v2113, %v2086
        %v2118 = vmul.f32 %v2114, %v2088
        %v2119 = vmul.f32 %v2115, %v2090
        %v2120 = vmul.f32 %v2116, %v2092
        %v2121 = vadd.f32 %v2117, 0.2548296
        %v2122 = vadd.f32 %v2118, 0.2548296
        %v2123 = vadd.f32 %v2119, 0.2548296
        %v2124 = vadd.f32 %v2120, 0.2548296
        %v2125 = vmul.f32 %v2121, %v2086
        %v2126 = vmul.f32 %v2122, %v2088
        %v2127 = vmul.f32 %v2123, %v2090
        %v2128 = vmul.f32 %v2124, %v2092
        %v2129 = vsub.f32 0.0, %v2073
        %v2130 = vsub.f32 0.0, %v2074
        %v2131 = vsub.f32 0.0, %v2075
        %v2132 = vsub.f32 0.0, %v2076
        %v2133 = vmul.f32 %v2129, %v2073
        %v2134 = vmul.f32 %v2130, %v2074
        %v2135 = vmul.f32 %v2131, %v2075
        %v2136 = vmul.f32 %v2132, %v2076
        %v2137 = vmul.f32 %v2133, 1.442695
        %v2138 = vpow.pop %v2137
        %v2139 = vmul.f32 %v2134, 1.442695
        %v2140 = vpow.pop %v2139
        %v2141 = vmul.f32 %v2135, 1.442695
        %v2142 = vpow.pop %v2141
        %v2143 = vmul.f32 %v2136, 1.442695
        %v2144 = vpow.pop %v2143
        %v2145 = vmul.f32 %v2125, %v2138
        %v2146 = vmul.f32 %v2126, %v2140
        %v2147 = vmul.f32 %v2127, %v2142
        %v2148 = vmul.f32 %v2128, %v2144
        %v2149 = vsub.f32 1.0, %v2145
        %v2150 = vsub.f32 1.0, %v2146
        %v2151 = vsub.f32 1.0, %v2147
        %v2152 = vsub.f32 1.0, %v2148
        %v2153 = vmul.f32 %v2069, %v2149
        %v2154 = vmul.f32 %v2070, %v2150
        %v2155 = vmul.f32 %v2071, %v2151
        %v2156 = vmul.f32 %v2072, %v2152
        %v2157 = vadd.f32 %v2153, 1.0
        %v2158 = vadd.f32 %v2154, 1.0
        %v2159 = vadd.f32 %v2155, 1.0
        %v2160 = vadd.f32 %v2156, 1.0
        %v2161 = vmul.f32 %v2057, %v2157
        %v2162 = vmul.f32 %v2058, %v2158
        %v2163 = vmul.f32 %v2059, %v2159
        %v2164 = vmul.f32 %v2060, %v2160
        %v2165 = vld [vmem:[%s11] sm:$0xff]
        %v2166 = vld [vmem:[%s11 + $0x8] sm:$0xff]
        %v2167 = vld [vmem:[%s11 + $0x10] sm:$0xff]
        %v2168 = vld [vmem:[%s11 + $0x18] sm:$0xff]
        %v2169 = vld [vmem:[%s12] sm:$0xff]
        %v2170 = vld [vmem:[%s12 + $0x8] sm:$0xff]
        %v2171 = vld [vmem:[%s12 + $0x10] sm:$0xff]
        %v2172 = vld [vmem:[%s12 + $0x18] sm:$0xff]
        %2174 = vset.pattern.permute.xlu0 0
        %2175 = vperm.xlu0 %2174, %v2169
        %v2176 = vpop.permute.xlu0 %2175
        %2179 = vset.pattern.permute.xlu0 0
        %2180 = vperm.xlu0 %2179, %v2170
        %v2181 = vpop.permute.xlu0 %2180
        %2184 = vset.pattern.permute.xlu0 0
        %2185 = vperm.xlu0 %2184, %v2171
        %v2186 = vpop.permute.xlu0 %2185
        %2189 = vset.pattern.permute.xlu0 0
        %2190 = vperm.xlu0 %2189, %v2172
        %v2191 = vpop.permute.xlu0 %2190
        %v2194 = vsel %vm976, %v2165, 0
        %v2197 = vsel %vm976, %v2166, 0
        %v2200 = vsel %vm976, %v2167, 0
        %v2203 = vsel %vm976, %v2168, 0
        %2205 = vmatprep.subr.mxu0 0.0
        %2206 = vmatpush1.msra.mxu0 %v2161
        %2207 = vmatprep.subr.mxu0 0.0
        %2208 = vmatpush1.msra.mxu0 %v2162
        %2209 = vmatprep.subr.mxu0 0.0
        %2210 = vmatpush1.msra.mxu0 %v2163
        %2211 = vmatprep.subr.mxu0 0.0
        %2212 = vmatpush1.msra.mxu0 %v2164
        %2213 = vmatprep.subr.mxu0 0.0
        %2214 = vmatpush1.msra.mxu0 0.0
        %2215 = vmatprep.subr.mxu0 0.0
        %2216 = vmatpush1.msra.mxu0 0.0
        %2217 = vmatprep.subr.mxu0 0.0
        %2218 = vmatpush1.msra.mxu0 0.0
        %2219 = vmatprep.subr.mxu0 0.0
        %2220 = vmatpush1.msra.mxu0 0.0
        %2221 = vmatprep.subr.mxu0 0.0
        %2222 = vmatpush1.msra.mxu0 0.0
        %2223 = vmatprep.subr.mxu0 0.0
        %2224 = vmatpush1.msra.mxu0 0.0
        %2225 = vmatprep.subr.mxu0 0.0
        %2226 = vmatpush1.msra.mxu0 0.0
        %2227 = vmatprep.subr.mxu0 0.0
        %2228 = vmatpush1.msra.mxu0 0.0
        %2229 = vmatprep.subr.mxu0 0.0
        %2230 = vmatpush1.msra.mxu0 0.0
        %2231 = vmatprep.subr.mxu0 0.0
        %2232 = vmatpush1.msra.mxu0 0.0
        %2233 = vmatprep.subr.mxu0 0.0
        %2234 = vmatpush1.msra.mxu0 0.0
        %2235 = vmatprep.subr.mxu0 0.0
        %2236 = vmatpush1.msra.mxu0 0.0
        %2237 = vmatprep.subr.mxu0 0.0
        %2238 = vmatpush1.msra.mxu0 0.0
        %2239 = vmatprep.subr.mxu0 0.0
        %2240 = vmatpush1.msra.mxu0 0.0
        %2241 = vmatprep.subr.mxu0 0.0
        %2242 = vmatpush1.msra.mxu0 0.0
        %2243 = vmatprep.subr.mxu0 0.0
        %2244 = vmatpush1.msra.mxu0 0.0
        %2245 = vmatprep.subr.mxu0 0.0
        %2246 = vmatpush1.msra.mxu0 0.0
        %2247 = vmatprep.subr.mxu0 0.0
        %2248 = vmatpush1.msra.mxu0 0.0
        %2249 = vmatprep.subr.mxu0 0.0
        %2250 = vmatpush1.msra.mxu0 0.0
        %2251 = vmatprep.subr.mxu0 0.0
        %2252 = vmatpush1.msra.mxu0 0.0
        %2253 = vmatprep.subr.mxu0 0.0
        %2254 = vmatpush1.msra.mxu0 0.0
        %2255 = vmatprep.subr.mxu0 0.0
        %2256 = vmatpush1.msra.mxu0 0.0
        %2257 = vmatprep.subr.mxu0 0.0
        %2258 = vmatpush1.msra.mxu0 0.0
        %2259 = vmatprep.subr.mxu0 0.0
        %2260 = vmatpush1.msra.mxu0 0.0
        %2261 = vmatprep.subr.mxu0 0.0
        %2262 = vmatpush1.msra.mxu0 0.0
        %2263 = vmatprep.subr.mxu0 0.0
        %2264 = vmatpush1.msra.mxu0 0.0
        %2265 = vmatprep.subr.mxu0 0.0
        %2266 = vmatpush1.msra.mxu0 0.0
        %2267 = vmatprep.subr.mxu0 0.0
        %2268 = vmatpush1.msra.mxu0 0.0
        %2269 = vmatprep.mubr.f32.mxu0 0.0
        %2270 = vmatmul.mubr.f32.gmra.mrb[0].mxu0 %v2194
        %v2271 = vpop.f32.mrb[0].mxu0
        %v2272 = vadd.f32 %v2176, %v2271
        %v2273 = vpop.f32.mrb[0].mxu0
        %2274 = vmatprep.mubr.f32.mxu0 0.0
        %2275 = vmatmul.mubr.f32.gmra.mrb[0].mxu0 %v2197
        %v2276 = vpop.f32.mrb[0].mxu0
        %v2277 = vadd.f32 %v2181, %v2276
        %v2278 = vpop.f32.mrb[0].mxu0
        %2279 = vmatprep.mubr.f32.mxu0 0.0
        %2280 = vmatmul.mubr.f32.gmra.mrb[0].mxu0 %v2200
        %v2281 = vpop.f32.mrb[0].mxu0
        %v2282 = vadd.f32 %v2186, %v2281
        %v2283 = vpop.f32.mrb[0].mxu0
        %2284 = vmatprep.mubr.f32.mxu0 0.0
        %2285 = vmatmul.mubr.f32.gmra.mrb[0].mxu0 %v2203
        %v2286 = vpop.f32.mrb[0].mxu0
        %v2287 = vadd.f32 %v2191, %v2286
        %v2288 = vpop.f32.mrb[0].mxu0
        %2289 = vdwg.mxu0
        %v2290 = vmul.f32 %v2272, 0.5
        %v2291 = vmul.f32 %v2277, 0.5
        %v2292 = vmul.f32 %v2282, 0.5
        %v2293 = vmul.f32 %v2287, 0.5
        %v2294 = vmul.f32 %v2272, 0.70710677
        %v2295 = vmul.f32 %v2277, 0.70710677
        %v2296 = vmul.f32 %v2282, 0.70710677
        %v2297 = vmul.f32 %v2287, 0.70710677
        %vm2298 = vcmp.ge.f32.partialorder %v2294, 0.0
        %vm2299 = vcmp.ge.f32.partialorder %v2295, 0.0
        %vm2300 = vcmp.ge.f32.partialorder %v2296, 0.0
        %vm2301 = vcmp.ge.f32.partialorder %v2297, 0.0
        %v2302 = vsel %vm2298, 1.0, -1.0
        %v2303 = vsel %vm2299, 1.0, -1.0
        %v2304 = vsel %vm2300, 1.0, -1.0
        %v2305 = vsel %vm2301, 1.0, -1.0
        %v2306 = vand.u32 2147483647, %v2294
        %v2307 = vand.u32 2147483647, %v2295
        %v2308 = vand.u32 2147483647, %v2296
        %v2309 = vand.u32 2147483647, %v2297
        %v2310 = vmul.f32 %v2306, 0.3275911
        %v2311 = vmul.f32 %v2307, 0.3275911
        %v2312 = vmul.f32 %v2308, 0.3275911
        %v2313 = vmul.f32 %v2309, 0.3275911
        %v2314 = vadd.f32 %v2310, 1.0
        %v2315 = vadd.f32 %v2311, 1.0
        %v2316 = vadd.f32 %v2312, 1.0
        %v2317 = vadd.f32 %v2313, 1.0
        %v2318 = vrcp.pop %v2314
        %v2319 = vmul.f32 1.0, %v2318
        %v2320 = vrcp.pop %v2315
        %v2321 = vmul.f32 1.0, %v2320
        %v2322 = vrcp.pop %v2316
        %v2323 = vmul.f32 1.0, %v2322
        %v2324 = vrcp.pop %v2317
        %v2325 = vmul.f32 1.0, %v2324
        %v2326 = vmul.f32 %v2319, 1.0614054
        %v2327 = vmul.f32 %v2321, 1.0614054
        %v2328 = vmul.f32 %v2323, 1.0614054
        %v2329 = vmul.f32 %v2325, 1.0614054
        %v2330 = vadd.f32 %v2326, -1.4531521
        %v2331 = vadd.f32 %v2327, -1.4531521
        %v2332 = vadd.f32 %v2328, -1.4531521
        %v2333 = vadd.f32 %v2329, -1.4531521
        %v2334 = vmul.f32 %v2330, %v2319
        %v2335 = vmul.f32 %v2331, %v2321
        %v2336 = vmul.f32 %v2332, %v2323
        %v2337 = vmul.f32 %v2333, %v2325
        %v2338 = vadd.f32 %v2334, 1.4214138
        %v2339 = vadd.f32 %v2335, 1.4214138
        %v2340 = vadd.f32 %v2336, 1.4214138
        %v2341 = vadd.f32 %v2337, 1.4214138
        %v2342 = vmul.f32 %v2338, %v2319
        %v2343 = vmul.f32 %v2339, %v2321
        %v2344 = vmul.f32 %v2340, %v2323
        %v2345 = vmul.f32 %v2341, %v2325
        %v2346 = vadd.f32 %v2342, -0.28449672
        %v2347 = vadd.f32 %v2343, -0.28449672
        %v2348 = vadd.f32 %v2344, -0.28449672
        %v2349 = vadd.f32 %v2345, -0.28449672
        %v2350 = vmul.f32 %v2346, %v2319
        %v2351 = vmul.f32 %v2347, %v2321
        %v2352 = vmul.f32 %v2348, %v2323
        %v2353 = vmul.f32 %v2349, %v2325
        %v2354 = vadd.f32 %v2350, 0.2548296
        %v2355 = vadd.f32 %v2351, 0.2548296
        %v2356 = vadd.f32 %v2352, 0.2548296
        %v2357 = vadd.f32 %v2353, 0.2548296
        %v2358 = vmul.f32 %v2354, %v2319
        %v2359 = vmul.f32 %v2355, %v2321
        %v2360 = vmul.f32 %v2356, %v2323
        %v2361 = vmul.f32 %v2357, %v2325
        %v2362 = vsub.f32 0.0, %v2306
        %v2363 = vsub.f32 0.0, %v2307
        %v2364 = vsub.f32 0.0, %v2308
        %v2365 = vsub.f32 0.0, %v2309
        %v2366 = vmul.f32 %v2362, %v2306
        %v2367 = vmul.f32 %v2363, %v2307
        %v2368 = vmul.f32 %v2364, %v2308
        %v2369 = vmul.f32 %v2365, %v2309
        %v2370 = vmul.f32 %v2366, 1.442695
        %v2371 = vpow.pop %v2370
        %v2372 = vmul.f32 %v2367, 1.442695
        %v2373 = vpow.pop %v2372
        %v2374 = vmul.f32 %v2368, 1.442695
        %v2375 = vpow.pop %v2374
        %v2376 = vmul.f32 %v2369, 1.442695
        %v2377 = vpow.pop %v2376
        %v2378 = vmul.f32 %v2358, %v2371
        %v2379 = vmul.f32 %v2359, %v2373
        %v2380 = vmul.f32 %v2360, %v2375
        %v2381 = vmul.f32 %v2361, %v2377
        %v2382 = vsub.f32 1.0, %v2378
        %v2383 = vsub.f32 1.0, %v2379
        %v2384 = vsub.f32 1.0, %v2380
        %v2385 = vsub.f32 1.0, %v2381
        %v2386 = vmul.f32 %v2302, %v2382
        %v2387 = vmul.f32 %v2303, %v2383
        %v2388 = vmul.f32 %v2304, %v2384
        %v2389 = vmul.f32 %v2305, %v2385
        %v2390 = vadd.f32 %v2386, 1.0
        %v2391 = vadd.f32 %v2387, 1.0
        %v2392 = vadd.f32 %v2388, 1.0
        %v2393 = vadd.f32 %v2389, 1.0
        %v2394 = vmul.f32 %v2290, %v2390
        %v2395 = vmul.f32 %v2291, %v2391
        %v2396 = vmul.f32 %v2292, %v2392
        %v2397 = vmul.f32 %v2293, %v2393
        %v2398 = vld [vmem:[%s13] sm:$0xff]
        %v2399 = vld [vmem:[%s14] sm:$0xff]
        %2401 = vset.pattern.permute.xlu0 0
        %2402 = vperm.xlu0 %2401, %v2399
        %v2403 = vpop.permute.xlu0 %2402
        %v2406 = vsel %vm976, %v2398, 0
        %2408 = vmatprep.subr.mxu0 0.0
        %2409 = vmatpush1.msra.mxu0 %v2394
        %2410 = vmatprep.subr.mxu0 0.0
        %2411 = vmatpush1.msra.mxu0 %v2395
        %2412 = vmatprep.subr.mxu0 0.0
        %2413 = vmatpush1.msra.mxu0 %v2396
        %2414 = vmatprep.subr.mxu0 0.0
        %2415 = vmatpush1.msra.mxu0 %v2397
        %2416 = vmatprep.subr.mxu0 0.0
        %2417 = vmatpush1.msra.mxu0 0.0
        %2418 = vmatprep.subr.mxu0 0.0
        %2419 = vmatpush1.msra.mxu0 0.0
        %2420 = vmatprep.subr.mxu0 0.0
        %2421 = vmatpush1.msra.mxu0 0.0
        %2422 = vmatprep.subr.mxu0 0.0
        %2423 = vmatpush1.msra.mxu0 0.0
        %2424 = vmatprep.subr.mxu0 0.0
        %2425 = vmatpush1.msra.mxu0 0.0
        %2426 = vmatprep.subr.mxu0 0.0
        %2427 = vmatpush1.msra.mxu0 0.0
        %2428 = vmatprep.subr.mxu0 0.0
        %2429 = vmatpush1.msra.mxu0 0.0
        %2430 = vmatprep.subr.mxu0 0.0
        %2431 = vmatpush1.msra.mxu0 0.0
        %2432 = vmatprep.subr.mxu0 0.0
        %2433 = vmatpush1.msra.mxu0 0.0
        %2434 = vmatprep.subr.mxu0 0.0
        %2435 = vmatpush1.msra.mxu0 0.0
        %2436 = vmatprep.subr.mxu0 0.0
        %2437 = vmatpush1.msra.mxu0 0.0
        %2438 = vmatprep.subr.mxu0 0.0
        %2439 = vmatpush1.msra.mxu0 0.0
        %2440 = vmatprep.subr.mxu0 0.0
        %2441 = vmatpush1.msra.mxu0 0.0
        %2442 = vmatprep.subr.mxu0 0.0
        %2443 = vmatpush1.msra.mxu0 0.0
        %2444 = vmatprep.subr.mxu0 0.0
        %2445 = vmatpush1.msra.mxu0 0.0
        %2446 = vmatprep.subr.mxu0 0.0
        %2447 = vmatpush1.msra.mxu0 0.0
        %2448 = vmatprep.subr.mxu0 0.0
        %2449 = vmatpush1.msra.mxu0 0.0
        %2450 = vmatprep.subr.mxu0 0.0
        %2451 = vmatpush1.msra.mxu0 0.0
        %2452 = vmatprep.subr.mxu0 0.0
        %2453 = vmatpush1.msra.mxu0 0.0
        %2454 = vmatprep.subr.mxu0 0.0
        %2455 = vmatpush1.msra.mxu0 0.0
        %2456 = vmatprep.subr.mxu0 0.0
        %2457 = vmatpush1.msra.mxu0 0.0
        %2458 = vmatprep.subr.mxu0 0.0
        %2459 = vmatpush1.msra.mxu0 0.0
        %2460 = vmatprep.subr.mxu0 0.0
        %2461 = vmatpush1.msra.mxu0 0.0
        %2462 = vmatprep.subr.mxu0 0.0
        %2463 = vmatpush1.msra.mxu0 0.0
        %2464 = vmatprep.subr.mxu0 0.0
        %2465 = vmatpush1.msra.mxu0 0.0
        %2466 = vmatprep.subr.mxu0 0.0
        %2467 = vmatpush1.msra.mxu0 0.0
        %2468 = vmatprep.subr.mxu0 0.0
        %2469 = vmatpush1.msra.mxu0 0.0
        %2470 = vmatprep.subr.mxu0 0.0
        %2471 = vmatpush1.msra.mxu0 0.0
        %2472 = vmatprep.mubr.f32.mxu0 0.0
        %2473 = vmatmul.mubr.f32.gmra.mrb[0].mxu0 %v2406
        %v2474 = vpop.f32.mrb[0].mxu0
        %v2475 = vadd.f32 %v2403, %v2474
        %v2476 = vpop.f32.mrb[0].mxu0
        %2477 = vdwg.mxu0
        %v2478 = vtanh.pop %v2475
        %v2479 = vmul.f32 %v2478, 4.0
        %v2480 = vadd.f32 %v2479, 0.0
        %v2481 = vmul.f32 %v2480, 0.5
        %v2482 = vmul.f32 %v2481, 1.442695
        %v2483 = vpow.pop %v2482
        %v2484 = vmul.f32 %v2483, 0.25
        %v2485 = vmul.f32 %v2475, 0.0625
        %v2486 = vadd.f32 %v1617, %v2485
        %v2488 = vrot.slane %v1664, 4
        %v2490 = vmul.f32 %v2484, %v2488
        %v2492 = vrot.slane %v2490, 4
        %v2494 = vadd.f32 %v2486, %v2492
        %v2495 = vmul.f32 %v1664, %v1664
        %v2496 = vadd.f32 %v2495, -0.93471164
        %v2498 = vrot.slane %v2480, 4
        %v2500 = vadd.f32 %v2496, %v2498
        %v2501 = vsel %vm1624, %v2500, 0.0
        %v2502 = vrot.slane %v2501, 4
        %v2503 = vadd.f32 %v2501, %v2502
        %v2504 = vrot.slane %v2503, 2
        %v2505 = vadd.f32 %v2503, %v2504
        %v2506 = vrot.slane %v2505, 1
        %v2507 = vadd.f32 %v2505, %v2506
        %v2508 = vmul.f32 %v2507, -0.5
        %s2509 = sld [smem:[#allocation3 + %s1662]]
        %s2510 = sld [smem:[#allocation5 + %s1662]]
        %s2511 = sld [smem:[#allocation7 + %s1662]]
        %v2512 = vstv %s2509
        %v2513 = vmul.f32 %v2494, %v2512
        %v2514 = vsub.f32 %v1617, %v2513
        %v2515 = vstv %s2511
        %v2516 = vmul.f32 %v2514, %v2515
        %v2517 = vmul.f32 %v2516, %v2516
        %v2518 = vadd.f32 %v2517, 1.837877
        %v2519 = vstv %s2510
        %v2520 = vadd.f32 %v2518, %v2519
        %v2521 = vsel %vm1624, %v2520, 0.0
        %v2522 = vrot.slane %v2521, 4
        %v2523 = vadd.f32 %v2521, %v2522
        %v2524 = vrot.slane %v2523, 2
        %v2525 = vadd.f32 %v2523, %v2524
        %v2526 = vrot.slane %v2525, 1
        %v2527 = vadd.f32 %v2525, %v2526
        %v2528 = vmul.f32 %v2527, -0.5
        %s2529 = scalar_lea.vmem %s680, 4
        %2530 = vst.msk [vmem:[%s2529] sm:$0xf] %vm1624, %v2494
        %2531 = vst.msk [vmem:[%s688 + $0x1] sm:$0x1] %vm1659, %v2508
        %2532 = vst.msk [vmem:[%s695 + $0x1] sm:$0x1] %vm1659, %v2528
        %s2533 = sadd.s32 %s712, 2
        %s2534 = scalar_lea.vmem %s666, 8
        %v2535 = vld [vmem:[%s2534] sm:$0xf]
        %v2536 = vld [vmem:[%s7] sm:$0xff]
        %v2537 = vld [vmem:[%s7 + $0x8] sm:$0xff]
        %v2538 = vld [vmem:[%s7 + $0x10] sm:$0xff]
        %v2539 = vld [vmem:[%s7 + $0x18] sm:$0xff]
        %v2540 = vlaneseq
        %v2541 = vshrl.u32 %v2540, 7
        %v2542 = vsub.s32 0, %v2541
        %v2543 = vrot.slane %v2494, %v2542
        %v2544 = vmul.f32 %v721, %v2543
        %v2545 = vmul.f32 %v726, %v2543
        %v2546 = vmul.f32 %v731, %v2543
        %v2547 = vmul.f32 %v736, %v2543
        %2549 = vset.pattern.permute.xlu0 0
        %2550 = vperm.xlu0 %2549, %v2536
        %v2551 = vpop.permute.xlu0 %2550
        %2554 = vset.pattern.permute.xlu0 0
        %2555 = vperm.xlu0 %2554, %v2537
        %v2556 = vpop.permute.xlu0 %2555
        %2559 = vset.pattern.permute.xlu0 0
        %2560 = vperm.xlu0 %2559, %v2538
        %v2561 = vpop.permute.xlu0 %2560
        %2564 = vset.pattern.permute.xlu0 0
        %2565 = vperm.xlu0 %2564, %v2539
        %v2566 = vpop.permute.xlu0 %2565
        %v2568 = vadd.f32 %v2551, %v2544
        %v2569 = vadd.f32 %v2556, %v2545
        %v2570 = vadd.f32 %v2561, %v2546
        %v2571 = vadd.f32 %v2566, %v2547
        %v2572 = vlaneseq
        %v2573 = vshrl.u32 %v2572, 7
        %v2574 = vsub.s32 1, %v2573
        %v2575 = vrot.slane %v2494, %v2574
        %v2576 = vmul.f32 %v772, %v2575
        %v2577 = vmul.f32 %v776, %v2575
        %v2578 = vmul.f32 %v780, %v2575
        %v2579 = vmul.f32 %v784, %v2575
        %v2580 = vadd.f32 %v2568, %v2576
        %v2581 = vadd.f32 %v2569, %v2577
        %v2582 = vadd.f32 %v2570, %v2578
        %v2583 = vadd.f32 %v2571, %v2579
        %v2584 = vlaneseq
        %v2585 = vshrl.u32 %v2584, 7
        %v2586 = vsub.s32 2, %v2585
        %v2587 = vrot.slane %v2494, %v2586
        %v2588 = vmul.f32 %v800, %v2587
        %v2589 = vmul.f32 %v804, %v2587
        %v2590 = vmul.f32 %v808, %v2587
        %v2591 = vmul.f32 %v812, %v2587
        %v2592 = vadd.f32 %v2580, %v2588
        %v2593 = vadd.f32 %v2581, %v2589
        %v2594 = vadd.f32 %v2582, %v2590
        %v2595 = vadd.f32 %v2583, %v2591
        %v2596 = vlaneseq
        %v2597 = vshrl.u32 %v2596, 7
        %v2598 = vsub.s32 3, %v2597
        %v2599 = vrot.slane %v2494, %v2598
        %v2600 = vmul.f32 %v828, %v2599
        %v2601 = vmul.f32 %v832, %v2599
        %v2602 = vmul.f32 %v836, %v2599
        %v2603 = vmul.f32 %v840, %v2599
        %v2604 = vadd.f32 %v2592, %v2600
        %v2605 = vadd.f32 %v2593, %v2601
        %v2606 = vadd.f32 %v2594, %v2602
        %v2607 = vadd.f32 %v2595, %v2603
        %v2608 = vmul.f32 %v2604, 0.5
        %v2609 = vmul.f32 %v2605, 0.5
        %v2610 = vmul.f32 %v2606, 0.5
        %v2611 = vmul.f32 %v2607, 0.5
        %v2612 = vmul.f32 %v2604, 0.70710677
        %v2613 = vmul.f32 %v2605, 0.70710677
        %v2614 = vmul.f32 %v2606, 0.70710677
        %v2615 = vmul.f32 %v2607, 0.70710677
        %vm2616 = vcmp.ge.f32.partialorder %v2612, 0.0
        %vm2617 = vcmp.ge.f32.partialorder %v2613, 0.0
        %vm2618 = vcmp.ge.f32.partialorder %v2614, 0.0
        %vm2619 = vcmp.ge.f32.partialorder %v2615, 0.0
        %v2620 = vsel %vm2616, 1.0, -1.0
        %v2621 = vsel %vm2617, 1.0, -1.0
        %v2622 = vsel %vm2618, 1.0, -1.0
        %v2623 = vsel %vm2619, 1.0, -1.0
        %v2624 = vand.u32 2147483647, %v2612
        %v2625 = vand.u32 2147483647, %v2613
        %v2626 = vand.u32 2147483647, %v2614
        %v2627 = vand.u32 2147483647, %v2615
        %v2628 = vmul.f32 %v2624, 0.3275911
        %v2629 = vmul.f32 %v2625, 0.3275911
        %v2630 = vmul.f32 %v2626, 0.3275911
        %v2631 = vmul.f32 %v2627, 0.3275911
        %v2632 = vadd.f32 %v2628, 1.0
        %v2633 = vadd.f32 %v2629, 1.0
        %v2634 = vadd.f32 %v2630, 1.0
        %v2635 = vadd.f32 %v2631, 1.0
        %v2636 = vrcp.pop %v2632
        %v2637 = vmul.f32 1.0, %v2636
        %v2638 = vrcp.pop %v2633
        %v2639 = vmul.f32 1.0, %v2638
        %v2640 = vrcp.pop %v2634
        %v2641 = vmul.f32 1.0, %v2640
        %v2642 = vrcp.pop %v2635
        %v2643 = vmul.f32 1.0, %v2642
        %v2644 = vmul.f32 %v2637, 1.0614054
        %v2645 = vmul.f32 %v2639, 1.0614054
        %v2646 = vmul.f32 %v2641, 1.0614054
        %v2647 = vmul.f32 %v2643, 1.0614054
        %v2648 = vadd.f32 %v2644, -1.4531521
        %v2649 = vadd.f32 %v2645, -1.4531521
        %v2650 = vadd.f32 %v2646, -1.4531521
        %v2651 = vadd.f32 %v2647, -1.4531521
        %v2652 = vmul.f32 %v2648, %v2637
        %v2653 = vmul.f32 %v2649, %v2639
        %v2654 = vmul.f32 %v2650, %v2641
        %v2655 = vmul.f32 %v2651, %v2643
        %v2656 = vadd.f32 %v2652, 1.4214138
        %v2657 = vadd.f32 %v2653, 1.4214138
        %v2658 = vadd.f32 %v2654, 1.4214138
        %v2659 = vadd.f32 %v2655, 1.4214138
        %v2660 = vmul.f32 %v2656, %v2637
        %v2661 = vmul.f32 %v2657, %v2639
        %v2662 = vmul.f32 %v2658, %v2641
        %v2663 = vmul.f32 %v2659, %v2643
        %v2664 = vadd.f32 %v2660, -0.28449672
        %v2665 = vadd.f32 %v2661, -0.28449672
        %v2666 = vadd.f32 %v2662, -0.28449672
        %v2667 = vadd.f32 %v2663, -0.28449672
        %v2668 = vmul.f32 %v2664, %v2637
        %v2669 = vmul.f32 %v2665, %v2639
        %v2670 = vmul.f32 %v2666, %v2641
        %v2671 = vmul.f32 %v2667, %v2643
        %v2672 = vadd.f32 %v2668, 0.2548296
        %v2673 = vadd.f32 %v2669, 0.2548296
        %v2674 = vadd.f32 %v2670, 0.2548296
        %v2675 = vadd.f32 %v2671, 0.2548296
        %v2676 = vmul.f32 %v2672, %v2637
        %v2677 = vmul.f32 %v2673, %v2639
        %v2678 = vmul.f32 %v2674, %v2641
        %v2679 = vmul.f32 %v2675, %v2643
        %v2680 = vsub.f32 0.0, %v2624
        %v2681 = vsub.f32 0.0, %v2625
        %v2682 = vsub.f32 0.0, %v2626
        %v2683 = vsub.f32 0.0, %v2627
        %v2684 = vmul.f32 %v2680, %v2624
        %v2685 = vmul.f32 %v2681, %v2625
        %v2686 = vmul.f32 %v2682, %v2626
        %v2687 = vmul.f32 %v2683, %v2627
        %v2688 = vmul.f32 %v2684, 1.442695
        %v2689 = vpow.pop %v2688
        %v2690 = vmul.f32 %v2685, 1.442695
        %v2691 = vpow.pop %v2690
        %v2692 = vmul.f32 %v2686, 1.442695
        %v2693 = vpow.pop %v2692
        %v2694 = vmul.f32 %v2687, 1.442695
        %v2695 = vpow.pop %v2694
        %v2696 = vmul.f32 %v2676, %v2689
        %v2697 = vmul.f32 %v2677, %v2691
        %v2698 = vmul.f32 %v2678, %v2693
        %v2699 = vmul.f32 %v2679, %v2695
        %v2700 = vsub.f32 1.0, %v2696
        %v2701 = vsub.f32 1.0, %v2697
        %v2702 = vsub.f32 1.0, %v2698
        %v2703 = vsub.f32 1.0, %v2699
        %v2704 = vmul.f32 %v2620, %v2700
        %v2705 = vmul.f32 %v2621, %v2701
        %v2706 = vmul.f32 %v2622, %v2702
        %v2707 = vmul.f32 %v2623, %v2703
        %v2708 = vadd.f32 %v2704, 1.0
        %v2709 = vadd.f32 %v2705, 1.0
        %v2710 = vadd.f32 %v2706, 1.0
        %v2711 = vadd.f32 %v2707, 1.0
        %v2712 = vmul.f32 %v2608, %v2708
        %v2713 = vmul.f32 %v2609, %v2709
        %v2714 = vmul.f32 %v2610, %v2710
        %v2715 = vmul.f32 %v2611, %v2711
        %v2716 = vld [vmem:[%s8] sm:$0xff]
        %v2717 = vld [vmem:[%s8 + $0x8] sm:$0xff]
        %v2718 = vld [vmem:[%s9] sm:$0xff]
        %v2719 = vld [vmem:[%s9 + $0x8] sm:$0xff]
        %2721 = vset.pattern.permute.xlu0 0
        %2722 = vperm.xlu0 %2721, %v2718
        %v2723 = vpop.permute.xlu0 %2722
        %2726 = vset.pattern.permute.xlu0 0
        %2727 = vperm.xlu0 %2726, %v2719
        %v2728 = vpop.permute.xlu0 %2727
        %v2731 = vsel %vm976, %v2716, 0
        %v2734 = vsel %vm976, %v2717, 0
        %2736 = vmatprep.subr.mxu0 0.0
        %2737 = vmatpush1.msra.mxu0 %v2712
        %2738 = vmatprep.subr.mxu0 0.0
        %2739 = vmatpush1.msra.mxu0 %v2713
        %2740 = vmatprep.subr.mxu0 0.0
        %2741 = vmatpush1.msra.mxu0 %v2714
        %2742 = vmatprep.subr.mxu0 0.0
        %2743 = vmatpush1.msra.mxu0 %v2715
        %2744 = vmatprep.subr.mxu0 0.0
        %2745 = vmatpush1.msra.mxu0 0.0
        %2746 = vmatprep.subr.mxu0 0.0
        %2747 = vmatpush1.msra.mxu0 0.0
        %2748 = vmatprep.subr.mxu0 0.0
        %2749 = vmatpush1.msra.mxu0 0.0
        %2750 = vmatprep.subr.mxu0 0.0
        %2751 = vmatpush1.msra.mxu0 0.0
        %2752 = vmatprep.subr.mxu0 0.0
        %2753 = vmatpush1.msra.mxu0 0.0
        %2754 = vmatprep.subr.mxu0 0.0
        %2755 = vmatpush1.msra.mxu0 0.0
        %2756 = vmatprep.subr.mxu0 0.0
        %2757 = vmatpush1.msra.mxu0 0.0
        %2758 = vmatprep.subr.mxu0 0.0
        %2759 = vmatpush1.msra.mxu0 0.0
        %2760 = vmatprep.subr.mxu0 0.0
        %2761 = vmatpush1.msra.mxu0 0.0
        %2762 = vmatprep.subr.mxu0 0.0
        %2763 = vmatpush1.msra.mxu0 0.0
        %2764 = vmatprep.subr.mxu0 0.0
        %2765 = vmatpush1.msra.mxu0 0.0
        %2766 = vmatprep.subr.mxu0 0.0
        %2767 = vmatpush1.msra.mxu0 0.0
        %2768 = vmatprep.subr.mxu0 0.0
        %2769 = vmatpush1.msra.mxu0 0.0
        %2770 = vmatprep.subr.mxu0 0.0
        %2771 = vmatpush1.msra.mxu0 0.0
        %2772 = vmatprep.subr.mxu0 0.0
        %2773 = vmatpush1.msra.mxu0 0.0
        %2774 = vmatprep.subr.mxu0 0.0
        %2775 = vmatpush1.msra.mxu0 0.0
        %2776 = vmatprep.subr.mxu0 0.0
        %2777 = vmatpush1.msra.mxu0 0.0
        %2778 = vmatprep.subr.mxu0 0.0
        %2779 = vmatpush1.msra.mxu0 0.0
        %2780 = vmatprep.subr.mxu0 0.0
        %2781 = vmatpush1.msra.mxu0 0.0
        %2782 = vmatprep.subr.mxu0 0.0
        %2783 = vmatpush1.msra.mxu0 0.0
        %2784 = vmatprep.subr.mxu0 0.0
        %2785 = vmatpush1.msra.mxu0 0.0
        %2786 = vmatprep.subr.mxu0 0.0
        %2787 = vmatpush1.msra.mxu0 0.0
        %2788 = vmatprep.subr.mxu0 0.0
        %2789 = vmatpush1.msra.mxu0 0.0
        %2790 = vmatprep.subr.mxu0 0.0
        %2791 = vmatpush1.msra.mxu0 0.0
        %2792 = vmatprep.subr.mxu0 0.0
        %2793 = vmatpush1.msra.mxu0 0.0
        %2794 = vmatprep.subr.mxu0 0.0
        %2795 = vmatpush1.msra.mxu0 0.0
        %2796 = vmatprep.subr.mxu0 0.0
        %2797 = vmatpush1.msra.mxu0 0.0
        %2798 = vmatprep.subr.mxu0 0.0
        %2799 = vmatpush1.msra.mxu0 0.0
        %2800 = vmatprep.mubr.f32.mxu0 0.0
        %2801 = vmatmul.mubr.f32.gmra.mrb[0].mxu0 %v2731
        %v2802 = vpop.f32.mrb[0].mxu0
        %v2803 = vadd.f32 %v2723, %v2802
        %v2804 = vpop.f32.mrb[0].mxu0
        %2805 = vmatprep.mubr.f32.mxu0 0.0
        %2806 = vmatmul.mubr.f32.gmra.mrb[0].mxu0 %v2734
        %v2807 = vpop.f32.mrb[0].mxu0
        %v2808 = vadd.f32 %v2728, %v2807
        %v2809 = vpop.f32.mrb[0].mxu0
        %2810 = vdwg.mxu0
        %v2811 = vld [vmem:[%s10] sm:$0xff]
        %v2812 = vld [vmem:[%s10 + $0x8] sm:$0xff]
        %v2813 = vld [vmem:[%s10 + $0x10] sm:$0xff]
        %v2814 = vld [vmem:[%s10 + $0x18] sm:$0xff]
        %2815 = vset.pattern.permute.xlu0 2
        %2816 = vperm.xlu0 %2815, %v703
        %v2817 = vpop.permute.xlu0 %2816
        %2819 = vset.pattern.permute.xlu0 2
        %2820 = vperm.xlu0 %2819, %v704
        %v2821 = vpop.permute.xlu0 %2820
        %2823 = vset.pattern.permute.xlu0 2
        %2824 = vperm.xlu0 %2823, %v705
        %v2825 = vpop.permute.xlu0 %2824
        %2827 = vset.pattern.permute.xlu0 2
        %2828 = vperm.xlu0 %2827, %v706
        %v2829 = vpop.permute.xlu0 %2828
        %v2832 = vsel %vm1082, %v2811, 0
        %v2835 = vsel %vm1082, %v2812, 0
        %v2838 = vsel %vm1082, %v2813, 0
        %v2841 = vsel %vm1082, %v2814, 0
        %2843 = vmatprep.subr.mxu0 0.0
        %2844 = vmatpush1.msra.mxu0 %v2803
        %2845 = vmatprep.subr.mxu0 0.0
        %2846 = vmatpush1.msra.mxu0 %v2808
        %2847 = vmatprep.subr.mxu0 0.0
        %2848 = vmatpush1.msra.mxu0 0.0
        %2849 = vmatprep.subr.mxu0 0.0
        %2850 = vmatpush1.msra.mxu0 0.0
        %2851 = vmatprep.subr.mxu0 0.0
        %2852 = vmatpush1.msra.mxu0 0.0
        %2853 = vmatprep.subr.mxu0 0.0
        %2854 = vmatpush1.msra.mxu0 0.0
        %2855 = vmatprep.subr.mxu0 0.0
        %2856 = vmatpush1.msra.mxu0 0.0
        %2857 = vmatprep.subr.mxu0 0.0
        %2858 = vmatpush1.msra.mxu0 0.0
        %2859 = vmatprep.subr.mxu0 0.0
        %2860 = vmatpush1.msra.mxu0 0.0
        %2861 = vmatprep.subr.mxu0 0.0
        %2862 = vmatpush1.msra.mxu0 0.0
        %2863 = vmatprep.subr.mxu0 0.0
        %2864 = vmatpush1.msra.mxu0 0.0
        %2865 = vmatprep.subr.mxu0 0.0
        %2866 = vmatpush1.msra.mxu0 0.0
        %2867 = vmatprep.subr.mxu0 0.0
        %2868 = vmatpush1.msra.mxu0 0.0
        %2869 = vmatprep.subr.mxu0 0.0
        %2870 = vmatpush1.msra.mxu0 0.0
        %2871 = vmatprep.subr.mxu0 0.0
        %2872 = vmatpush1.msra.mxu0 0.0
        %2873 = vmatprep.subr.mxu0 0.0
        %2874 = vmatpush1.msra.mxu0 0.0
        %2875 = vmatprep.subr.mxu0 0.0
        %2876 = vmatpush1.msra.mxu0 0.0
        %2877 = vmatprep.subr.mxu0 0.0
        %2878 = vmatpush1.msra.mxu0 0.0
        %2879 = vmatprep.subr.mxu0 0.0
        %2880 = vmatpush1.msra.mxu0 0.0
        %2881 = vmatprep.subr.mxu0 0.0
        %2882 = vmatpush1.msra.mxu0 0.0
        %2883 = vmatprep.subr.mxu0 0.0
        %2884 = vmatpush1.msra.mxu0 0.0
        %2885 = vmatprep.subr.mxu0 0.0
        %2886 = vmatpush1.msra.mxu0 0.0
        %2887 = vmatprep.subr.mxu0 0.0
        %2888 = vmatpush1.msra.mxu0 0.0
        %2889 = vmatprep.subr.mxu0 0.0
        %2890 = vmatpush1.msra.mxu0 0.0
        %2891 = vmatprep.subr.mxu0 0.0
        %2892 = vmatpush1.msra.mxu0 0.0
        %2893 = vmatprep.subr.mxu0 0.0
        %2894 = vmatpush1.msra.mxu0 0.0
        %2895 = vmatprep.subr.mxu0 0.0
        %2896 = vmatpush1.msra.mxu0 0.0
        %2897 = vmatprep.subr.mxu0 0.0
        %2898 = vmatpush1.msra.mxu0 0.0
        %2899 = vmatprep.subr.mxu0 0.0
        %2900 = vmatpush1.msra.mxu0 0.0
        %2901 = vmatprep.subr.mxu0 0.0
        %2902 = vmatpush1.msra.mxu0 0.0
        %2903 = vmatprep.subr.mxu0 0.0
        %2904 = vmatpush1.msra.mxu0 0.0
        %2905 = vmatprep.subr.mxu0 0.0
        %2906 = vmatpush1.msra.mxu0 0.0
        %2907 = vmatprep.mubr.f32.mxu0 0.0
        %2908 = vmatmul.mubr.f32.gmra.mrb[0].mxu0 %v2832
        %v2909 = vpop.f32.mrb[0].mxu0
        %v2910 = vadd.f32 %v2817, %v2909
        %v2911 = vpop.f32.mrb[0].mxu0
        %2912 = vmatprep.mubr.f32.mxu0 0.0
        %2913 = vmatmul.mubr.f32.gmra.mrb[0].mxu0 %v2835
        %v2914 = vpop.f32.mrb[0].mxu0
        %v2915 = vadd.f32 %v2821, %v2914
        %v2916 = vpop.f32.mrb[0].mxu0
        %2917 = vmatprep.mubr.f32.mxu0 0.0
        %2918 = vmatmul.mubr.f32.gmra.mrb[0].mxu0 %v2838
        %v2919 = vpop.f32.mrb[0].mxu0
        %v2920 = vadd.f32 %v2825, %v2919
        %v2921 = vpop.f32.mrb[0].mxu0
        %2922 = vmatprep.mubr.f32.mxu0 0.0
        %2923 = vmatmul.mubr.f32.gmra.mrb[0].mxu0 %v2841
        %v2924 = vpop.f32.mrb[0].mxu0
        %v2925 = vadd.f32 %v2829, %v2924
        %v2926 = vpop.f32.mrb[0].mxu0
        %2927 = vdwg.mxu0
        %v2928 = vmul.f32 %v2910, 0.5
        %v2929 = vmul.f32 %v2915, 0.5
        %v2930 = vmul.f32 %v2920, 0.5
        %v2931 = vmul.f32 %v2925, 0.5
        %v2932 = vmul.f32 %v2910, 0.70710677
        %v2933 = vmul.f32 %v2915, 0.70710677
        %v2934 = vmul.f32 %v2920, 0.70710677
        %v2935 = vmul.f32 %v2925, 0.70710677
        %vm2936 = vcmp.ge.f32.partialorder %v2932, 0.0
        %vm2937 = vcmp.ge.f32.partialorder %v2933, 0.0
        %vm2938 = vcmp.ge.f32.partialorder %v2934, 0.0
        %vm2939 = vcmp.ge.f32.partialorder %v2935, 0.0
        %v2940 = vsel %vm2936, 1.0, -1.0
        %v2941 = vsel %vm2937, 1.0, -1.0
        %v2942 = vsel %vm2938, 1.0, -1.0
        %v2943 = vsel %vm2939, 1.0, -1.0
        %v2944 = vand.u32 2147483647, %v2932
        %v2945 = vand.u32 2147483647, %v2933
        %v2946 = vand.u32 2147483647, %v2934
        %v2947 = vand.u32 2147483647, %v2935
        %v2948 = vmul.f32 %v2944, 0.3275911
        %v2949 = vmul.f32 %v2945, 0.3275911
        %v2950 = vmul.f32 %v2946, 0.3275911
        %v2951 = vmul.f32 %v2947, 0.3275911
        %v2952 = vadd.f32 %v2948, 1.0
        %v2953 = vadd.f32 %v2949, 1.0
        %v2954 = vadd.f32 %v2950, 1.0
        %v2955 = vadd.f32 %v2951, 1.0
        %v2956 = vrcp.pop %v2952
        %v2957 = vmul.f32 1.0, %v2956
        %v2958 = vrcp.pop %v2953
        %v2959 = vmul.f32 1.0, %v2958
        %v2960 = vrcp.pop %v2954
        %v2961 = vmul.f32 1.0, %v2960
        %v2962 = vrcp.pop %v2955
        %v2963 = vmul.f32 1.0, %v2962
        %v2964 = vmul.f32 %v2957, 1.0614054
        %v2965 = vmul.f32 %v2959, 1.0614054
        %v2966 = vmul.f32 %v2961, 1.0614054
        %v2967 = vmul.f32 %v2963, 1.0614054
        %v2968 = vadd.f32 %v2964, -1.4531521
        %v2969 = vadd.f32 %v2965, -1.4531521
        %v2970 = vadd.f32 %v2966, -1.4531521
        %v2971 = vadd.f32 %v2967, -1.4531521
        %v2972 = vmul.f32 %v2968, %v2957
        %v2973 = vmul.f32 %v2969, %v2959
        %v2974 = vmul.f32 %v2970, %v2961
        %v2975 = vmul.f32 %v2971, %v2963
        %v2976 = vadd.f32 %v2972, 1.4214138
        %v2977 = vadd.f32 %v2973, 1.4214138
        %v2978 = vadd.f32 %v2974, 1.4214138
        %v2979 = vadd.f32 %v2975, 1.4214138
        %v2980 = vmul.f32 %v2976, %v2957
        %v2981 = vmul.f32 %v2977, %v2959
        %v2982 = vmul.f32 %v2978, %v2961
        %v2983 = vmul.f32 %v2979, %v2963
        %v2984 = vadd.f32 %v2980, -0.28449672
        %v2985 = vadd.f32 %v2981, -0.28449672
        %v2986 = vadd.f32 %v2982, -0.28449672
        %v2987 = vadd.f32 %v2983, -0.28449672
        %v2988 = vmul.f32 %v2984, %v2957
        %v2989 = vmul.f32 %v2985, %v2959
        %v2990 = vmul.f32 %v2986, %v2961
        %v2991 = vmul.f32 %v2987, %v2963
        %v2992 = vadd.f32 %v2988, 0.2548296
        %v2993 = vadd.f32 %v2989, 0.2548296
        %v2994 = vadd.f32 %v2990, 0.2548296
        %v2995 = vadd.f32 %v2991, 0.2548296
        %v2996 = vmul.f32 %v2992, %v2957
        %v2997 = vmul.f32 %v2993, %v2959
        %v2998 = vmul.f32 %v2994, %v2961
        %v2999 = vmul.f32 %v2995, %v2963
        %v3000 = vsub.f32 0.0, %v2944
        %v3001 = vsub.f32 0.0, %v2945
        %v3002 = vsub.f32 0.0, %v2946
        %v3003 = vsub.f32 0.0, %v2947
        %v3004 = vmul.f32 %v3000, %v2944
        %v3005 = vmul.f32 %v3001, %v2945
        %v3006 = vmul.f32 %v3002, %v2946
        %v3007 = vmul.f32 %v3003, %v2947
        %v3008 = vmul.f32 %v3004, 1.442695
        %v3009 = vpow.pop %v3008
        %v3010 = vmul.f32 %v3005, 1.442695
        %v3011 = vpow.pop %v3010
        %v3012 = vmul.f32 %v3006, 1.442695
        %v3013 = vpow.pop %v3012
        %v3014 = vmul.f32 %v3007, 1.442695
        %v3015 = vpow.pop %v3014
        %v3016 = vmul.f32 %v2996, %v3009
        %v3017 = vmul.f32 %v2997, %v3011
        %v3018 = vmul.f32 %v2998, %v3013
        %v3019 = vmul.f32 %v2999, %v3015
        %v3020 = vsub.f32 1.0, %v3016
        %v3021 = vsub.f32 1.0, %v3017
        %v3022 = vsub.f32 1.0, %v3018
        %v3023 = vsub.f32 1.0, %v3019
        %v3024 = vmul.f32 %v2940, %v3020
        %v3025 = vmul.f32 %v2941, %v3021
        %v3026 = vmul.f32 %v2942, %v3022
        %v3027 = vmul.f32 %v2943, %v3023
        %v3028 = vadd.f32 %v3024, 1.0
        %v3029 = vadd.f32 %v3025, 1.0
        %v3030 = vadd.f32 %v3026, 1.0
        %v3031 = vadd.f32 %v3027, 1.0
        %v3032 = vmul.f32 %v2928, %v3028
        %v3033 = vmul.f32 %v2929, %v3029
        %v3034 = vmul.f32 %v2930, %v3030
        %v3035 = vmul.f32 %v2931, %v3031
        %v3036 = vld [vmem:[%s11] sm:$0xff]
        %v3037 = vld [vmem:[%s11 + $0x8] sm:$0xff]
        %v3038 = vld [vmem:[%s11 + $0x10] sm:$0xff]
        %v3039 = vld [vmem:[%s11 + $0x18] sm:$0xff]
        %v3040 = vld [vmem:[%s12] sm:$0xff]
        %v3041 = vld [vmem:[%s12 + $0x8] sm:$0xff]
        %v3042 = vld [vmem:[%s12 + $0x10] sm:$0xff]
        %v3043 = vld [vmem:[%s12 + $0x18] sm:$0xff]
        %3045 = vset.pattern.permute.xlu0 0
        %3046 = vperm.xlu0 %3045, %v3040
        %v3047 = vpop.permute.xlu0 %3046
        %3050 = vset.pattern.permute.xlu0 0
        %3051 = vperm.xlu0 %3050, %v3041
        %v3052 = vpop.permute.xlu0 %3051
        %3055 = vset.pattern.permute.xlu0 0
        %3056 = vperm.xlu0 %3055, %v3042
        %v3057 = vpop.permute.xlu0 %3056
        %3060 = vset.pattern.permute.xlu0 0
        %3061 = vperm.xlu0 %3060, %v3043
        %v3062 = vpop.permute.xlu0 %3061
        %v3065 = vsel %vm976, %v3036, 0
        %v3068 = vsel %vm976, %v3037, 0
        %v3071 = vsel %vm976, %v3038, 0
        %v3074 = vsel %vm976, %v3039, 0
        %3076 = vmatprep.subr.mxu0 0.0
        %3077 = vmatpush1.msra.mxu0 %v3032
        %3078 = vmatprep.subr.mxu0 0.0
        %3079 = vmatpush1.msra.mxu0 %v3033
        %3080 = vmatprep.subr.mxu0 0.0
        %3081 = vmatpush1.msra.mxu0 %v3034
        %3082 = vmatprep.subr.mxu0 0.0
        %3083 = vmatpush1.msra.mxu0 %v3035
        %3084 = vmatprep.subr.mxu0 0.0
        %3085 = vmatpush1.msra.mxu0 0.0
        %3086 = vmatprep.subr.mxu0 0.0
        %3087 = vmatpush1.msra.mxu0 0.0
        %3088 = vmatprep.subr.mxu0 0.0
        %3089 = vmatpush1.msra.mxu0 0.0
        %3090 = vmatprep.subr.mxu0 0.0
        %3091 = vmatpush1.msra.mxu0 0.0
        %3092 = vmatprep.subr.mxu0 0.0
        %3093 = vmatpush1.msra.mxu0 0.0
        %3094 = vmatprep.subr.mxu0 0.0
        %3095 = vmatpush1.msra.mxu0 0.0
        %3096 = vmatprep.subr.mxu0 0.0
        %3097 = vmatpush1.msra.mxu0 0.0
        %3098 = vmatprep.subr.mxu0 0.0
        %3099 = vmatpush1.msra.mxu0 0.0
        %3100 = vmatprep.subr.mxu0 0.0
        %3101 = vmatpush1.msra.mxu0 0.0
        %3102 = vmatprep.subr.mxu0 0.0
        %3103 = vmatpush1.msra.mxu0 0.0
        %3104 = vmatprep.subr.mxu0 0.0
        %3105 = vmatpush1.msra.mxu0 0.0
        %3106 = vmatprep.subr.mxu0 0.0
        %3107 = vmatpush1.msra.mxu0 0.0
        %3108 = vmatprep.subr.mxu0 0.0
        %3109 = vmatpush1.msra.mxu0 0.0
        %3110 = vmatprep.subr.mxu0 0.0
        %3111 = vmatpush1.msra.mxu0 0.0
        %3112 = vmatprep.subr.mxu0 0.0
        %3113 = vmatpush1.msra.mxu0 0.0
        %3114 = vmatprep.subr.mxu0 0.0
        %3115 = vmatpush1.msra.mxu0 0.0
        %3116 = vmatprep.subr.mxu0 0.0
        %3117 = vmatpush1.msra.mxu0 0.0
        %3118 = vmatprep.subr.mxu0 0.0
        %3119 = vmatpush1.msra.mxu0 0.0
        %3120 = vmatprep.subr.mxu0 0.0
        %3121 = vmatpush1.msra.mxu0 0.0
        %3122 = vmatprep.subr.mxu0 0.0
        %3123 = vmatpush1.msra.mxu0 0.0
        %3124 = vmatprep.subr.mxu0 0.0
        %3125 = vmatpush1.msra.mxu0 0.0
        %3126 = vmatprep.subr.mxu0 0.0
        %3127 = vmatpush1.msra.mxu0 0.0
        %3128 = vmatprep.subr.mxu0 0.0
        %3129 = vmatpush1.msra.mxu0 0.0
        %3130 = vmatprep.subr.mxu0 0.0
        %3131 = vmatpush1.msra.mxu0 0.0
        %3132 = vmatprep.subr.mxu0 0.0
        %3133 = vmatpush1.msra.mxu0 0.0
        %3134 = vmatprep.subr.mxu0 0.0
        %3135 = vmatpush1.msra.mxu0 0.0
        %3136 = vmatprep.subr.mxu0 0.0
        %3137 = vmatpush1.msra.mxu0 0.0
        %3138 = vmatprep.subr.mxu0 0.0
        %3139 = vmatpush1.msra.mxu0 0.0
        %3140 = vmatprep.mubr.f32.mxu0 0.0
        %3141 = vmatmul.mubr.f32.gmra.mrb[0].mxu0 %v3065
        %v3142 = vpop.f32.mrb[0].mxu0
        %v3143 = vadd.f32 %v3047, %v3142
        %v3144 = vpop.f32.mrb[0].mxu0
        %3145 = vmatprep.mubr.f32.mxu0 0.0
        %3146 = vmatmul.mubr.f32.gmra.mrb[0].mxu0 %v3068
        %v3147 = vpop.f32.mrb[0].mxu0
        %v3148 = vadd.f32 %v3052, %v3147
        %v3149 = vpop.f32.mrb[0].mxu0
        %3150 = vmatprep.mubr.f32.mxu0 0.0
        %3151 = vmatmul.mubr.f32.gmra.mrb[0].mxu0 %v3071
        %v3152 = vpop.f32.mrb[0].mxu0
        %v3153 = vadd.f32 %v3057, %v3152
        %v3154 = vpop.f32.mrb[0].mxu0
        %3155 = vmatprep.mubr.f32.mxu0 0.0
        %3156 = vmatmul.mubr.f32.gmra.mrb[0].mxu0 %v3074
        %v3157 = vpop.f32.mrb[0].mxu0
        %v3158 = vadd.f32 %v3062, %v3157
        %v3159 = vpop.f32.mrb[0].mxu0
        %3160 = vdwg.mxu0
        %v3161 = vmul.f32 %v3143, 0.5
        %v3162 = vmul.f32 %v3148, 0.5
        %v3163 = vmul.f32 %v3153, 0.5
        %v3164 = vmul.f32 %v3158, 0.5
        %v3165 = vmul.f32 %v3143, 0.70710677
        %v3166 = vmul.f32 %v3148, 0.70710677
        %v3167 = vmul.f32 %v3153, 0.70710677
        %v3168 = vmul.f32 %v3158, 0.70710677
        %vm3169 = vcmp.ge.f32.partialorder %v3165, 0.0
        %vm3170 = vcmp.ge.f32.partialorder %v3166, 0.0
        %vm3171 = vcmp.ge.f32.partialorder %v3167, 0.0
        %vm3172 = vcmp.ge.f32.partialorder %v3168, 0.0
        %v3173 = vsel %vm3169, 1.0, -1.0
        %v3174 = vsel %vm3170, 1.0, -1.0
        %v3175 = vsel %vm3171, 1.0, -1.0
        %v3176 = vsel %vm3172, 1.0, -1.0
        %v3177 = vand.u32 2147483647, %v3165
        %v3178 = vand.u32 2147483647, %v3166
        %v3179 = vand.u32 2147483647, %v3167
        %v3180 = vand.u32 2147483647, %v3168
        %v3181 = vmul.f32 %v3177, 0.3275911
        %v3182 = vmul.f32 %v3178, 0.3275911
        %v3183 = vmul.f32 %v3179, 0.3275911
        %v3184 = vmul.f32 %v3180, 0.3275911
        %v3185 = vadd.f32 %v3181, 1.0
        %v3186 = vadd.f32 %v3182, 1.0
        %v3187 = vadd.f32 %v3183, 1.0
        %v3188 = vadd.f32 %v3184, 1.0
        %v3189 = vrcp.pop %v3185
        %v3190 = vmul.f32 1.0, %v3189
        %v3191 = vrcp.pop %v3186
        %v3192 = vmul.f32 1.0, %v3191
        %v3193 = vrcp.pop %v3187
        %v3194 = vmul.f32 1.0, %v3193
        %v3195 = vrcp.pop %v3188
        %v3196 = vmul.f32 1.0, %v3195
        %v3197 = vmul.f32 %v3190, 1.0614054
        %v3198 = vmul.f32 %v3192, 1.0614054
        %v3199 = vmul.f32 %v3194, 1.0614054
        %v3200 = vmul.f32 %v3196, 1.0614054
        %v3201 = vadd.f32 %v3197, -1.4531521
        %v3202 = vadd.f32 %v3198, -1.4531521
        %v3203 = vadd.f32 %v3199, -1.4531521
        %v3204 = vadd.f32 %v3200, -1.4531521
        %v3205 = vmul.f32 %v3201, %v3190
        %v3206 = vmul.f32 %v3202, %v3192
        %v3207 = vmul.f32 %v3203, %v3194
        %v3208 = vmul.f32 %v3204, %v3196
        %v3209 = vadd.f32 %v3205, 1.4214138
        %v3210 = vadd.f32 %v3206, 1.4214138
        %v3211 = vadd.f32 %v3207, 1.4214138
        %v3212 = vadd.f32 %v3208, 1.4214138
        %v3213 = vmul.f32 %v3209, %v3190
        %v3214 = vmul.f32 %v3210, %v3192
        %v3215 = vmul.f32 %v3211, %v3194
        %v3216 = vmul.f32 %v3212, %v3196
        %v3217 = vadd.f32 %v3213, -0.28449672
        %v3218 = vadd.f32 %v3214, -0.28449672
        %v3219 = vadd.f32 %v3215, -0.28449672
        %v3220 = vadd.f32 %v3216, -0.28449672
        %v3221 = vmul.f32 %v3217, %v3190
        %v3222 = vmul.f32 %v3218, %v3192
        %v3223 = vmul.f32 %v3219, %v3194
        %v3224 = vmul.f32 %v3220, %v3196
        %v3225 = vadd.f32 %v3221, 0.2548296
        %v3226 = vadd.f32 %v3222, 0.2548296
        %v3227 = vadd.f32 %v3223, 0.2548296
        %v3228 = vadd.f32 %v3224, 0.2548296
        %v3229 = vmul.f32 %v3225, %v3190
        %v3230 = vmul.f32 %v3226, %v3192
        %v3231 = vmul.f32 %v3227, %v3194
        %v3232 = vmul.f32 %v3228, %v3196
        %v3233 = vsub.f32 0.0, %v3177
        %v3234 = vsub.f32 0.0, %v3178
        %v3235 = vsub.f32 0.0, %v3179
        %v3236 = vsub.f32 0.0, %v3180
        %v3237 = vmul.f32 %v3233, %v3177
        %v3238 = vmul.f32 %v3234, %v3178
        %v3239 = vmul.f32 %v3235, %v3179
        %v3240 = vmul.f32 %v3236, %v3180
        %v3241 = vmul.f32 %v3237, 1.442695
        %v3242 = vpow.pop %v3241
        %v3243 = vmul.f32 %v3238, 1.442695
        %v3244 = vpow.pop %v3243
        %v3245 = vmul.f32 %v3239, 1.442695
        %v3246 = vpow.pop %v3245
        %v3247 = vmul.f32 %v3240, 1.442695
        %v3248 = vpow.pop %v3247
        %v3249 = vmul.f32 %v3229, %v3242
        %v3250 = vmul.f32 %v3230, %v3244
        %v3251 = vmul.f32 %v3231, %v3246
        %v3252 = vmul.f32 %v3232, %v3248
        %v3253 = vsub.f32 1.0, %v3249
        %v3254 = vsub.f32 1.0, %v3250
        %v3255 = vsub.f32 1.0, %v3251
        %v3256 = vsub.f32 1.0, %v3252
        %v3257 = vmul.f32 %v3173, %v3253
        %v3258 = vmul.f32 %v3174, %v3254
        %v3259 = vmul.f32 %v3175, %v3255
        %v3260 = vmul.f32 %v3176, %v3256
        %v3261 = vadd.f32 %v3257, 1.0
        %v3262 = vadd.f32 %v3258, 1.0
        %v3263 = vadd.f32 %v3259, 1.0
        %v3264 = vadd.f32 %v3260, 1.0
        %v3265 = vmul.f32 %v3161, %v3261
        %v3266 = vmul.f32 %v3162, %v3262
        %v3267 = vmul.f32 %v3163, %v3263
        %v3268 = vmul.f32 %v3164, %v3264
        %v3269 = vld [vmem:[%s13] sm:$0xff]
        %v3270 = vld [vmem:[%s14] sm:$0xff]
        %3272 = vset.pattern.permute.xlu0 0
        %3273 = vperm.xlu0 %3272, %v3270
        %v3274 = vpop.permute.xlu0 %3273
        %v3277 = vsel %vm976, %v3269, 0
        %3279 = vmatprep.subr.mxu0 0.0
        %3280 = vmatpush1.msra.mxu0 %v3265
        %3281 = vmatprep.subr.mxu0 0.0
        %3282 = vmatpush1.msra.mxu0 %v3266
        %3283 = vmatprep.subr.mxu0 0.0
        %3284 = vmatpush1.msra.mxu0 %v3267
        %3285 = vmatprep.subr.mxu0 0.0
        %3286 = vmatpush1.msra.mxu0 %v3268
        %3287 = vmatprep.subr.mxu0 0.0
        %3288 = vmatpush1.msra.mxu0 0.0
        %3289 = vmatprep.subr.mxu0 0.0
        %3290 = vmatpush1.msra.mxu0 0.0
        %3291 = vmatprep.subr.mxu0 0.0
        %3292 = vmatpush1.msra.mxu0 0.0
        %3293 = vmatprep.subr.mxu0 0.0
        %3294 = vmatpush1.msra.mxu0 0.0
        %3295 = vmatprep.subr.mxu0 0.0
        %3296 = vmatpush1.msra.mxu0 0.0
        %3297 = vmatprep.subr.mxu0 0.0
        %3298 = vmatpush1.msra.mxu0 0.0
        %3299 = vmatprep.subr.mxu0 0.0
        %3300 = vmatpush1.msra.mxu0 0.0
        %3301 = vmatprep.subr.mxu0 0.0
        %3302 = vmatpush1.msra.mxu0 0.0
        %3303 = vmatprep.subr.mxu0 0.0
        %3304 = vmatpush1.msra.mxu0 0.0
        %3305 = vmatprep.subr.mxu0 0.0
        %3306 = vmatpush1.msra.mxu0 0.0
        %3307 = vmatprep.subr.mxu0 0.0
        %3308 = vmatpush1.msra.mxu0 0.0
        %3309 = vmatprep.subr.mxu0 0.0
        %3310 = vmatpush1.msra.mxu0 0.0
        %3311 = vmatprep.subr.mxu0 0.0
        %3312 = vmatpush1.msra.mxu0 0.0
        %3313 = vmatprep.subr.mxu0 0.0
        %3314 = vmatpush1.msra.mxu0 0.0
        %3315 = vmatprep.subr.mxu0 0.0
        %3316 = vmatpush1.msra.mxu0 0.0
        %3317 = vmatprep.subr.mxu0 0.0
        %3318 = vmatpush1.msra.mxu0 0.0
        %3319 = vmatprep.subr.mxu0 0.0
        %3320 = vmatpush1.msra.mxu0 0.0
        %3321 = vmatprep.subr.mxu0 0.0
        %3322 = vmatpush1.msra.mxu0 0.0
        %3323 = vmatprep.subr.mxu0 0.0
        %3324 = vmatpush1.msra.mxu0 0.0
        %3325 = vmatprep.subr.mxu0 0.0
        %3326 = vmatpush1.msra.mxu0 0.0
        %3327 = vmatprep.subr.mxu0 0.0
        %3328 = vmatpush1.msra.mxu0 0.0
        %3329 = vmatprep.subr.mxu0 0.0
        %3330 = vmatpush1.msra.mxu0 0.0
        %3331 = vmatprep.subr.mxu0 0.0
        %3332 = vmatpush1.msra.mxu0 0.0
        %3333 = vmatprep.subr.mxu0 0.0
        %3334 = vmatpush1.msra.mxu0 0.0
        %3335 = vmatprep.subr.mxu0 0.0
        %3336 = vmatpush1.msra.mxu0 0.0
        %3337 = vmatprep.subr.mxu0 0.0
        %3338 = vmatpush1.msra.mxu0 0.0
        %3339 = vmatprep.subr.mxu0 0.0
        %3340 = vmatpush1.msra.mxu0 0.0
        %3341 = vmatprep.subr.mxu0 0.0
        %3342 = vmatpush1.msra.mxu0 0.0
        %3343 = vmatprep.mubr.f32.mxu0 0.0
        %3344 = vmatmul.mubr.f32.gmra.mrb[0].mxu0 %v3277
        %v3345 = vpop.f32.mrb[0].mxu0
        %v3346 = vadd.f32 %v3274, %v3345
        %v3347 = vpop.f32.mrb[0].mxu0
        %3348 = vdwg.mxu0
        %v3349 = vtanh.pop %v3346
        %v3350 = vmul.f32 %v3349, 4.0
        %v3351 = vadd.f32 %v3350, 0.0
        %v3352 = vmul.f32 %v3351, 0.5
        %v3353 = vmul.f32 %v3352, 1.442695
        %v3354 = vpow.pop %v3353
        %v3355 = vmul.f32 %v3354, 0.25
        %v3356 = vmul.f32 %v3346, 0.0625
        %v3357 = vadd.f32 %v2494, %v3356
        %v3359 = vrot.slane %v2535, 4
        %v3361 = vmul.f32 %v3355, %v3359
        %v3363 = vrot.slane %v3361, 4
        %v3365 = vadd.f32 %v3357, %v3363
        %v3366 = vmul.f32 %v2535, %v2535
        %v3367 = vadd.f32 %v3366, -0.93471164
        %v3369 = vrot.slane %v3351, 4
        %v3371 = vadd.f32 %v3367, %v3369
        %v3372 = vsel %vm1624, %v3371, 0.0
        %v3373 = vrot.slane %v3372, 4
        %v3374 = vadd.f32 %v3372, %v3373
        %v3375 = vrot.slane %v3374, 2
        %v3376 = vadd.f32 %v3374, %v3375
        %v3377 = vrot.slane %v3376, 1
        %v3378 = vadd.f32 %v3376, %v3377
        %v3379 = vmul.f32 %v3378, -0.5
        %s3380 = sld [smem:[#allocation3 + %s2533]]
        %s3381 = sld [smem:[#allocation5 + %s2533]]
        %s3382 = sld [smem:[#allocation7 + %s2533]]
        %v3383 = vstv %s3380
        %v3384 = vmul.f32 %v3365, %v3383
        %v3385 = vsub.f32 %v2494, %v3384
        %v3386 = vstv %s3382
        %v3387 = vmul.f32 %v3385, %v3386
        %v3388 = vmul.f32 %v3387, %v3387
        %v3389 = vadd.f32 %v3388, 1.837877
        %v3390 = vstv %s3381
        %v3391 = vadd.f32 %v3389, %v3390
        %v3392 = vsel %vm1624, %v3391, 0.0
        %v3393 = vrot.slane %v3392, 4
        %v3394 = vadd.f32 %v3392, %v3393
        %v3395 = vrot.slane %v3394, 2
        %v3396 = vadd.f32 %v3394, %v3395
        %v3397 = vrot.slane %v3396, 1
        %v3398 = vadd.f32 %v3396, %v3397
        %v3399 = vmul.f32 %v3398, -0.5
        %s3400 = scalar_lea.vmem %s680, 8
        %3401 = vst.msk [vmem:[%s3400] sm:$0xf] %vm1624, %v3365
        %3402 = vst.msk [vmem:[%s688 + $0x2] sm:$0x1] %vm1659, %v3379
        %3403 = vst.msk [vmem:[%s695 + $0x2] sm:$0x1] %vm1659, %v3399
        %s3404 = sadd.s32 %s712, 3
        %s3405 = scalar_lea.vmem %s666, 12
        %v3406 = vld [vmem:[%s3405] sm:$0xf]
        %v3407 = vld [vmem:[%s7] sm:$0xff]
        %v3408 = vld [vmem:[%s7 + $0x8] sm:$0xff]
        %v3409 = vld [vmem:[%s7 + $0x10] sm:$0xff]
        %v3410 = vld [vmem:[%s7 + $0x18] sm:$0xff]
        %v3411 = vlaneseq
        %v3412 = vshrl.u32 %v3411, 7
        %v3413 = vsub.s32 0, %v3412
        %v3414 = vrot.slane %v3365, %v3413
        %v3415 = vmul.f32 %v721, %v3414
        %v3416 = vmul.f32 %v726, %v3414
        %v3417 = vmul.f32 %v731, %v3414
        %v3418 = vmul.f32 %v736, %v3414
        %3420 = vset.pattern.permute.xlu0 0
        %3421 = vperm.xlu0 %3420, %v3407
        %v3422 = vpop.permute.xlu0 %3421
        %3425 = vset.pattern.permute.xlu0 0
        %3426 = vperm.xlu0 %3425, %v3408
        %v3427 = vpop.permute.xlu0 %3426
        %3430 = vset.pattern.permute.xlu0 0
        %3431 = vperm.xlu0 %3430, %v3409
        %v3432 = vpop.permute.xlu0 %3431
        %3435 = vset.pattern.permute.xlu0 0
        %3436 = vperm.xlu0 %3435, %v3410
        %v3437 = vpop.permute.xlu0 %3436
        %v3439 = vadd.f32 %v3422, %v3415
        %v3440 = vadd.f32 %v3427, %v3416
        %v3441 = vadd.f32 %v3432, %v3417
        %v3442 = vadd.f32 %v3437, %v3418
        %v3443 = vlaneseq
        %v3444 = vshrl.u32 %v3443, 7
        %v3445 = vsub.s32 1, %v3444
        %v3446 = vrot.slane %v3365, %v3445
        %v3447 = vmul.f32 %v772, %v3446
        %v3448 = vmul.f32 %v776, %v3446
        %v3449 = vmul.f32 %v780, %v3446
        %v3450 = vmul.f32 %v784, %v3446
        %v3451 = vadd.f32 %v3439, %v3447
        %v3452 = vadd.f32 %v3440, %v3448
        %v3453 = vadd.f32 %v3441, %v3449
        %v3454 = vadd.f32 %v3442, %v3450
        %v3455 = vlaneseq
        %v3456 = vshrl.u32 %v3455, 7
        %v3457 = vsub.s32 2, %v3456
        %v3458 = vrot.slane %v3365, %v3457
        %v3459 = vmul.f32 %v800, %v3458
        %v3460 = vmul.f32 %v804, %v3458
        %v3461 = vmul.f32 %v808, %v3458
        %v3462 = vmul.f32 %v812, %v3458
        %v3463 = vadd.f32 %v3451, %v3459
        %v3464 = vadd.f32 %v3452, %v3460
        %v3465 = vadd.f32 %v3453, %v3461
        %v3466 = vadd.f32 %v3454, %v3462
        %v3467 = vlaneseq
        %v3468 = vshrl.u32 %v3467, 7
        %v3469 = vsub.s32 3, %v3468
        %v3470 = vrot.slane %v3365, %v3469
        %v3471 = vmul.f32 %v828, %v3470
        %v3472 = vmul.f32 %v832, %v3470
        %v3473 = vmul.f32 %v836, %v3470
        %v3474 = vmul.f32 %v840, %v3470
        %v3475 = vadd.f32 %v3463, %v3471
        %v3476 = vadd.f32 %v3464, %v3472
        %v3477 = vadd.f32 %v3465, %v3473
        %v3478 = vadd.f32 %v3466, %v3474
        %v3479 = vmul.f32 %v3475, 0.5
        %v3480 = vmul.f32 %v3476, 0.5
        %v3481 = vmul.f32 %v3477, 0.5
        %v3482 = vmul.f32 %v3478, 0.5
        %v3483 = vmul.f32 %v3475, 0.70710677
        %v3484 = vmul.f32 %v3476, 0.70710677
        %v3485 = vmul.f32 %v3477, 0.70710677
        %v3486 = vmul.f32 %v3478, 0.70710677
        %vm3487 = vcmp.ge.f32.partialorder %v3483, 0.0
        %vm3488 = vcmp.ge.f32.partialorder %v3484, 0.0
        %vm3489 = vcmp.ge.f32.partialorder %v3485, 0.0
        %vm3490 = vcmp.ge.f32.partialorder %v3486, 0.0
        %v3491 = vsel %vm3487, 1.0, -1.0
        %v3492 = vsel %vm3488, 1.0, -1.0
        %v3493 = vsel %vm3489, 1.0, -1.0
        %v3494 = vsel %vm3490, 1.0, -1.0
        %v3495 = vand.u32 2147483647, %v3483
        %v3496 = vand.u32 2147483647, %v3484
        %v3497 = vand.u32 2147483647, %v3485
        %v3498 = vand.u32 2147483647, %v3486
        %v3499 = vmul.f32 %v3495, 0.3275911
        %v3500 = vmul.f32 %v3496, 0.3275911
        %v3501 = vmul.f32 %v3497, 0.3275911
        %v3502 = vmul.f32 %v3498, 0.3275911
        %v3503 = vadd.f32 %v3499, 1.0
        %v3504 = vadd.f32 %v3500, 1.0
        %v3505 = vadd.f32 %v3501, 1.0
        %v3506 = vadd.f32 %v3502, 1.0
        %v3507 = vrcp.pop %v3503
        %v3508 = vmul.f32 1.0, %v3507
        %v3509 = vrcp.pop %v3504
        %v3510 = vmul.f32 1.0, %v3509
        %v3511 = vrcp.pop %v3505
        %v3512 = vmul.f32 1.0, %v3511
        %v3513 = vrcp.pop %v3506
        %v3514 = vmul.f32 1.0, %v3513
        %v3515 = vmul.f32 %v3508, 1.0614054
        %v3516 = vmul.f32 %v3510, 1.0614054
        %v3517 = vmul.f32 %v3512, 1.0614054
        %v3518 = vmul.f32 %v3514, 1.0614054
        %v3519 = vadd.f32 %v3515, -1.4531521
        %v3520 = vadd.f32 %v3516, -1.4531521
        %v3521 = vadd.f32 %v3517, -1.4531521
        %v3522 = vadd.f32 %v3518, -1.4531521
        %v3523 = vmul.f32 %v3519, %v3508
        %v3524 = vmul.f32 %v3520, %v3510
        %v3525 = vmul.f32 %v3521, %v3512
        %v3526 = vmul.f32 %v3522, %v3514
        %v3527 = vadd.f32 %v3523, 1.4214138
        %v3528 = vadd.f32 %v3524, 1.4214138
        %v3529 = vadd.f32 %v3525, 1.4214138
        %v3530 = vadd.f32 %v3526, 1.4214138
        %v3531 = vmul.f32 %v3527, %v3508
        %v3532 = vmul.f32 %v3528, %v3510
        %v3533 = vmul.f32 %v3529, %v3512
        %v3534 = vmul.f32 %v3530, %v3514
        %v3535 = vadd.f32 %v3531, -0.28449672
        %v3536 = vadd.f32 %v3532, -0.28449672
        %v3537 = vadd.f32 %v3533, -0.28449672
        %v3538 = vadd.f32 %v3534, -0.28449672
        %v3539 = vmul.f32 %v3535, %v3508
        %v3540 = vmul.f32 %v3536, %v3510
        %v3541 = vmul.f32 %v3537, %v3512
        %v3542 = vmul.f32 %v3538, %v3514
        %v3543 = vadd.f32 %v3539, 0.2548296
        %v3544 = vadd.f32 %v3540, 0.2548296
        %v3545 = vadd.f32 %v3541, 0.2548296
        %v3546 = vadd.f32 %v3542, 0.2548296
        %v3547 = vmul.f32 %v3543, %v3508
        %v3548 = vmul.f32 %v3544, %v3510
        %v3549 = vmul.f32 %v3545, %v3512
        %v3550 = vmul.f32 %v3546, %v3514
        %v3551 = vsub.f32 0.0, %v3495
        %v3552 = vsub.f32 0.0, %v3496
        %v3553 = vsub.f32 0.0, %v3497
        %v3554 = vsub.f32 0.0, %v3498
        %v3555 = vmul.f32 %v3551, %v3495
        %v3556 = vmul.f32 %v3552, %v3496
        %v3557 = vmul.f32 %v3553, %v3497
        %v3558 = vmul.f32 %v3554, %v3498
        %v3559 = vmul.f32 %v3555, 1.442695
        %v3560 = vpow.pop %v3559
        %v3561 = vmul.f32 %v3556, 1.442695
        %v3562 = vpow.pop %v3561
        %v3563 = vmul.f32 %v3557, 1.442695
        %v3564 = vpow.pop %v3563
        %v3565 = vmul.f32 %v3558, 1.442695
        %v3566 = vpow.pop %v3565
        %v3567 = vmul.f32 %v3547, %v3560
        %v3568 = vmul.f32 %v3548, %v3562
        %v3569 = vmul.f32 %v3549, %v3564
        %v3570 = vmul.f32 %v3550, %v3566
        %v3571 = vsub.f32 1.0, %v3567
        %v3572 = vsub.f32 1.0, %v3568
        %v3573 = vsub.f32 1.0, %v3569
        %v3574 = vsub.f32 1.0, %v3570
        %v3575 = vmul.f32 %v3491, %v3571
        %v3576 = vmul.f32 %v3492, %v3572
        %v3577 = vmul.f32 %v3493, %v3573
        %v3578 = vmul.f32 %v3494, %v3574
        %v3579 = vadd.f32 %v3575, 1.0
        %v3580 = vadd.f32 %v3576, 1.0
        %v3581 = vadd.f32 %v3577, 1.0
        %v3582 = vadd.f32 %v3578, 1.0
        %v3583 = vmul.f32 %v3479, %v3579
        %v3584 = vmul.f32 %v3480, %v3580
        %v3585 = vmul.f32 %v3481, %v3581
        %v3586 = vmul.f32 %v3482, %v3582
        %v3587 = vld [vmem:[%s8] sm:$0xff]
        %v3588 = vld [vmem:[%s8 + $0x8] sm:$0xff]
        %v3589 = vld [vmem:[%s9] sm:$0xff]
        %v3590 = vld [vmem:[%s9 + $0x8] sm:$0xff]
        %3592 = vset.pattern.permute.xlu0 0
        %3593 = vperm.xlu0 %3592, %v3589
        %v3594 = vpop.permute.xlu0 %3593
        %3597 = vset.pattern.permute.xlu0 0
        %3598 = vperm.xlu0 %3597, %v3590
        %v3599 = vpop.permute.xlu0 %3598
        %v3602 = vsel %vm976, %v3587, 0
        %v3605 = vsel %vm976, %v3588, 0
        %3607 = vmatprep.subr.mxu0 0.0
        %3608 = vmatpush1.msra.mxu0 %v3583
        %3609 = vmatprep.subr.mxu0 0.0
        %3610 = vmatpush1.msra.mxu0 %v3584
        %3611 = vmatprep.subr.mxu0 0.0
        %3612 = vmatpush1.msra.mxu0 %v3585
        %3613 = vmatprep.subr.mxu0 0.0
        %3614 = vmatpush1.msra.mxu0 %v3586
        %3615 = vmatprep.subr.mxu0 0.0
        %3616 = vmatpush1.msra.mxu0 0.0
        %3617 = vmatprep.subr.mxu0 0.0
        %3618 = vmatpush1.msra.mxu0 0.0
        %3619 = vmatprep.subr.mxu0 0.0
        %3620 = vmatpush1.msra.mxu0 0.0
        %3621 = vmatprep.subr.mxu0 0.0
        %3622 = vmatpush1.msra.mxu0 0.0
        %3623 = vmatprep.subr.mxu0 0.0
        %3624 = vmatpush1.msra.mxu0 0.0
        %3625 = vmatprep.subr.mxu0 0.0
        %3626 = vmatpush1.msra.mxu0 0.0
        %3627 = vmatprep.subr.mxu0 0.0
        %3628 = vmatpush1.msra.mxu0 0.0
        %3629 = vmatprep.subr.mxu0 0.0
        %3630 = vmatpush1.msra.mxu0 0.0
        %3631 = vmatprep.subr.mxu0 0.0
        %3632 = vmatpush1.msra.mxu0 0.0
        %3633 = vmatprep.subr.mxu0 0.0
        %3634 = vmatpush1.msra.mxu0 0.0
        %3635 = vmatprep.subr.mxu0 0.0
        %3636 = vmatpush1.msra.mxu0 0.0
        %3637 = vmatprep.subr.mxu0 0.0
        %3638 = vmatpush1.msra.mxu0 0.0
        %3639 = vmatprep.subr.mxu0 0.0
        %3640 = vmatpush1.msra.mxu0 0.0
        %3641 = vmatprep.subr.mxu0 0.0
        %3642 = vmatpush1.msra.mxu0 0.0
        %3643 = vmatprep.subr.mxu0 0.0
        %3644 = vmatpush1.msra.mxu0 0.0
        %3645 = vmatprep.subr.mxu0 0.0
        %3646 = vmatpush1.msra.mxu0 0.0
        %3647 = vmatprep.subr.mxu0 0.0
        %3648 = vmatpush1.msra.mxu0 0.0
        %3649 = vmatprep.subr.mxu0 0.0
        %3650 = vmatpush1.msra.mxu0 0.0
        %3651 = vmatprep.subr.mxu0 0.0
        %3652 = vmatpush1.msra.mxu0 0.0
        %3653 = vmatprep.subr.mxu0 0.0
        %3654 = vmatpush1.msra.mxu0 0.0
        %3655 = vmatprep.subr.mxu0 0.0
        %3656 = vmatpush1.msra.mxu0 0.0
        %3657 = vmatprep.subr.mxu0 0.0
        %3658 = vmatpush1.msra.mxu0 0.0
        %3659 = vmatprep.subr.mxu0 0.0
        %3660 = vmatpush1.msra.mxu0 0.0
        %3661 = vmatprep.subr.mxu0 0.0
        %3662 = vmatpush1.msra.mxu0 0.0
        %3663 = vmatprep.subr.mxu0 0.0
        %3664 = vmatpush1.msra.mxu0 0.0
        %3665 = vmatprep.subr.mxu0 0.0
        %3666 = vmatpush1.msra.mxu0 0.0
        %3667 = vmatprep.subr.mxu0 0.0
        %3668 = vmatpush1.msra.mxu0 0.0
        %3669 = vmatprep.subr.mxu0 0.0
        %3670 = vmatpush1.msra.mxu0 0.0
        %3671 = vmatprep.mubr.f32.mxu0 0.0
        %3672 = vmatmul.mubr.f32.gmra.mrb[0].mxu0 %v3602
        %v3673 = vpop.f32.mrb[0].mxu0
        %v3674 = vadd.f32 %v3594, %v3673
        %v3675 = vpop.f32.mrb[0].mxu0
        %3676 = vmatprep.mubr.f32.mxu0 0.0
        %3677 = vmatmul.mubr.f32.gmra.mrb[0].mxu0 %v3605
        %v3678 = vpop.f32.mrb[0].mxu0
        %v3679 = vadd.f32 %v3599, %v3678
        %v3680 = vpop.f32.mrb[0].mxu0
        %3681 = vdwg.mxu0
        %v3682 = vld [vmem:[%s10] sm:$0xff]
        %v3683 = vld [vmem:[%s10 + $0x8] sm:$0xff]
        %v3684 = vld [vmem:[%s10 + $0x10] sm:$0xff]
        %v3685 = vld [vmem:[%s10 + $0x18] sm:$0xff]
        %3686 = vset.pattern.permute.xlu0 3
        %3687 = vperm.xlu0 %3686, %v703
        %v3688 = vpop.permute.xlu0 %3687
        %3690 = vset.pattern.permute.xlu0 3
        %3691 = vperm.xlu0 %3690, %v704
        %v3692 = vpop.permute.xlu0 %3691
        %3694 = vset.pattern.permute.xlu0 3
        %3695 = vperm.xlu0 %3694, %v705
        %v3696 = vpop.permute.xlu0 %3695
        %3698 = vset.pattern.permute.xlu0 3
        %3699 = vperm.xlu0 %3698, %v706
        %v3700 = vpop.permute.xlu0 %3699
        %v3703 = vsel %vm1082, %v3682, 0
        %v3706 = vsel %vm1082, %v3683, 0
        %v3709 = vsel %vm1082, %v3684, 0
        %v3712 = vsel %vm1082, %v3685, 0
        %3714 = vmatprep.subr.mxu0 0.0
        %3715 = vmatpush1.msra.mxu0 %v3674
        %3716 = vmatprep.subr.mxu0 0.0
        %3717 = vmatpush1.msra.mxu0 %v3679
        %3718 = vmatprep.subr.mxu0 0.0
        %3719 = vmatpush1.msra.mxu0 0.0
        %3720 = vmatprep.subr.mxu0 0.0
        %3721 = vmatpush1.msra.mxu0 0.0
        %3722 = vmatprep.subr.mxu0 0.0
        %3723 = vmatpush1.msra.mxu0 0.0
        %3724 = vmatprep.subr.mxu0 0.0
        %3725 = vmatpush1.msra.mxu0 0.0
        %3726 = vmatprep.subr.mxu0 0.0
        %3727 = vmatpush1.msra.mxu0 0.0
        %3728 = vmatprep.subr.mxu0 0.0
        %3729 = vmatpush1.msra.mxu0 0.0
        %3730 = vmatprep.subr.mxu0 0.0
        %3731 = vmatpush1.msra.mxu0 0.0
        %3732 = vmatprep.subr.mxu0 0.0
        %3733 = vmatpush1.msra.mxu0 0.0
        %3734 = vmatprep.subr.mxu0 0.0
        %3735 = vmatpush1.msra.mxu0 0.0
        %3736 = vmatprep.subr.mxu0 0.0
        %3737 = vmatpush1.msra.mxu0 0.0
        %3738 = vmatprep.subr.mxu0 0.0
        %3739 = vmatpush1.msra.mxu0 0.0
        %3740 = vmatprep.subr.mxu0 0.0
        %3741 = vmatpush1.msra.mxu0 0.0
        %3742 = vmatprep.subr.mxu0 0.0
        %3743 = vmatpush1.msra.mxu0 0.0
        %3744 = vmatprep.subr.mxu0 0.0
        %3745 = vmatpush1.msra.mxu0 0.0
        %3746 = vmatprep.subr.mxu0 0.0
        %3747 = vmatpush1.msra.mxu0 0.0
        %3748 = vmatprep.subr.mxu0 0.0
        %3749 = vmatpush1.msra.mxu0 0.0
        %3750 = vmatprep.subr.mxu0 0.0
        %3751 = vmatpush1.msra.mxu0 0.0
        %3752 = vmatprep.subr.mxu0 0.0
        %3753 = vmatpush1.msra.mxu0 0.0
        %3754 = vmatprep.subr.mxu0 0.0
        %3755 = vmatpush1.msra.mxu0 0.0
        %3756 = vmatprep.subr.mxu0 0.0
        %3757 = vmatpush1.msra.mxu0 0.0
        %3758 = vmatprep.subr.mxu0 0.0
        %3759 = vmatpush1.msra.mxu0 0.0
        %3760 = vmatprep.subr.mxu0 0.0
        %3761 = vmatpush1.msra.mxu0 0.0
        %3762 = vmatprep.subr.mxu0 0.0
        %3763 = vmatpush1.msra.mxu0 0.0
        %3764 = vmatprep.subr.mxu0 0.0
        %3765 = vmatpush1.msra.mxu0 0.0
        %3766 = vmatprep.subr.mxu0 0.0
        %3767 = vmatpush1.msra.mxu0 0.0
        %3768 = vmatprep.subr.mxu0 0.0
        %3769 = vmatpush1.msra.mxu0 0.0
        %3770 = vmatprep.subr.mxu0 0.0
        %3771 = vmatpush1.msra.mxu0 0.0
        %3772 = vmatprep.subr.mxu0 0.0
        %3773 = vmatpush1.msra.mxu0 0.0
        %3774 = vmatprep.subr.mxu0 0.0
        %3775 = vmatpush1.msra.mxu0 0.0
        %3776 = vmatprep.subr.mxu0 0.0
        %3777 = vmatpush1.msra.mxu0 0.0
        %3778 = vmatprep.mubr.f32.mxu0 0.0
        %3779 = vmatmul.mubr.f32.gmra.mrb[0].mxu0 %v3703
        %v3780 = vpop.f32.mrb[0].mxu0
        %v3781 = vadd.f32 %v3688, %v3780
        %v3782 = vpop.f32.mrb[0].mxu0
        %3783 = vmatprep.mubr.f32.mxu0 0.0
        %3784 = vmatmul.mubr.f32.gmra.mrb[0].mxu0 %v3706
        %v3785 = vpop.f32.mrb[0].mxu0
        %v3786 = vadd.f32 %v3692, %v3785
        %v3787 = vpop.f32.mrb[0].mxu0
        %3788 = vmatprep.mubr.f32.mxu0 0.0
        %3789 = vmatmul.mubr.f32.gmra.mrb[0].mxu0 %v3709
        %v3790 = vpop.f32.mrb[0].mxu0
        %v3791 = vadd.f32 %v3696, %v3790
        %v3792 = vpop.f32.mrb[0].mxu0
        %3793 = vmatprep.mubr.f32.mxu0 0.0
        %3794 = vmatmul.mubr.f32.gmra.mrb[0].mxu0 %v3712
        %v3795 = vpop.f32.mrb[0].mxu0
        %v3796 = vadd.f32 %v3700, %v3795
        %v3797 = vpop.f32.mrb[0].mxu0
        %3798 = vdwg.mxu0
        %v3799 = vmul.f32 %v3781, 0.5
        %v3800 = vmul.f32 %v3786, 0.5
        %v3801 = vmul.f32 %v3791, 0.5
        %v3802 = vmul.f32 %v3796, 0.5
        %v3803 = vmul.f32 %v3781, 0.70710677
        %v3804 = vmul.f32 %v3786, 0.70710677
        %v3805 = vmul.f32 %v3791, 0.70710677
        %v3806 = vmul.f32 %v3796, 0.70710677
        %vm3807 = vcmp.ge.f32.partialorder %v3803, 0.0
        %vm3808 = vcmp.ge.f32.partialorder %v3804, 0.0
        %vm3809 = vcmp.ge.f32.partialorder %v3805, 0.0
        %vm3810 = vcmp.ge.f32.partialorder %v3806, 0.0
        %v3811 = vsel %vm3807, 1.0, -1.0
        %v3812 = vsel %vm3808, 1.0, -1.0
        %v3813 = vsel %vm3809, 1.0, -1.0
        %v3814 = vsel %vm3810, 1.0, -1.0
        %v3815 = vand.u32 2147483647, %v3803
        %v3816 = vand.u32 2147483647, %v3804
        %v3817 = vand.u32 2147483647, %v3805
        %v3818 = vand.u32 2147483647, %v3806
        %v3819 = vmul.f32 %v3815, 0.3275911
        %v3820 = vmul.f32 %v3816, 0.3275911
        %v3821 = vmul.f32 %v3817, 0.3275911
        %v3822 = vmul.f32 %v3818, 0.3275911
        %v3823 = vadd.f32 %v3819, 1.0
        %v3824 = vadd.f32 %v3820, 1.0
        %v3825 = vadd.f32 %v3821, 1.0
        %v3826 = vadd.f32 %v3822, 1.0
        %v3827 = vrcp.pop %v3823
        %v3828 = vmul.f32 1.0, %v3827
        %v3829 = vrcp.pop %v3824
        %v3830 = vmul.f32 1.0, %v3829
        %v3831 = vrcp.pop %v3825
        %v3832 = vmul.f32 1.0, %v3831
        %v3833 = vrcp.pop %v3826
        %v3834 = vmul.f32 1.0, %v3833
        %v3835 = vmul.f32 %v3828, 1.0614054
        %v3836 = vmul.f32 %v3830, 1.0614054
        %v3837 = vmul.f32 %v3832, 1.0614054
        %v3838 = vmul.f32 %v3834, 1.0614054
        %v3839 = vadd.f32 %v3835, -1.4531521
        %v3840 = vadd.f32 %v3836, -1.4531521
        %v3841 = vadd.f32 %v3837, -1.4531521
        %v3842 = vadd.f32 %v3838, -1.4531521
        %v3843 = vmul.f32 %v3839, %v3828
        %v3844 = vmul.f32 %v3840, %v3830
        %v3845 = vmul.f32 %v3841, %v3832
        %v3846 = vmul.f32 %v3842, %v3834
        %v3847 = vadd.f32 %v3843, 1.4214138
        %v3848 = vadd.f32 %v3844, 1.4214138
        %v3849 = vadd.f32 %v3845, 1.4214138
        %v3850 = vadd.f32 %v3846, 1.4214138
        %v3851 = vmul.f32 %v3847, %v3828
        %v3852 = vmul.f32 %v3848, %v3830
        %v3853 = vmul.f32 %v3849, %v3832
        %v3854 = vmul.f32 %v3850, %v3834
        %v3855 = vadd.f32 %v3851, -0.28449672
        %v3856 = vadd.f32 %v3852, -0.28449672
        %v3857 = vadd.f32 %v3853, -0.28449672
        %v3858 = vadd.f32 %v3854, -0.28449672
        %v3859 = vmul.f32 %v3855, %v3828
        %v3860 = vmul.f32 %v3856, %v3830
        %v3861 = vmul.f32 %v3857, %v3832
        %v3862 = vmul.f32 %v3858, %v3834
        %v3863 = vadd.f32 %v3859, 0.2548296
        %v3864 = vadd.f32 %v3860, 0.2548296
        %v3865 = vadd.f32 %v3861, 0.2548296
        %v3866 = vadd.f32 %v3862, 0.2548296
        %v3867 = vmul.f32 %v3863, %v3828
        %v3868 = vmul.f32 %v3864, %v3830
        %v3869 = vmul.f32 %v3865, %v3832
        %v3870 = vmul.f32 %v3866, %v3834
        %v3871 = vsub.f32 0.0, %v3815
        %v3872 = vsub.f32 0.0, %v3816
        %v3873 = vsub.f32 0.0, %v3817
        %v3874 = vsub.f32 0.0, %v3818
        %v3875 = vmul.f32 %v3871, %v3815
        %v3876 = vmul.f32 %v3872, %v3816
        %v3877 = vmul.f32 %v3873, %v3817
        %v3878 = vmul.f32 %v3874, %v3818
        %v3879 = vmul.f32 %v3875, 1.442695
        %v3880 = vpow.pop %v3879
        %v3881 = vmul.f32 %v3876, 1.442695
        %v3882 = vpow.pop %v3881
        %v3883 = vmul.f32 %v3877, 1.442695
        %v3884 = vpow.pop %v3883
        %v3885 = vmul.f32 %v3878, 1.442695
        %v3886 = vpow.pop %v3885
        %v3887 = vmul.f32 %v3867, %v3880
        %v3888 = vmul.f32 %v3868, %v3882
        %v3889 = vmul.f32 %v3869, %v3884
        %v3890 = vmul.f32 %v3870, %v3886
        %v3891 = vsub.f32 1.0, %v3887
        %v3892 = vsub.f32 1.0, %v3888
        %v3893 = vsub.f32 1.0, %v3889
        %v3894 = vsub.f32 1.0, %v3890
        %v3895 = vmul.f32 %v3811, %v3891
        %v3896 = vmul.f32 %v3812, %v3892
        %v3897 = vmul.f32 %v3813, %v3893
        %v3898 = vmul.f32 %v3814, %v3894
        %v3899 = vadd.f32 %v3895, 1.0
        %v3900 = vadd.f32 %v3896, 1.0
        %v3901 = vadd.f32 %v3897, 1.0
        %v3902 = vadd.f32 %v3898, 1.0
        %v3903 = vmul.f32 %v3799, %v3899
        %v3904 = vmul.f32 %v3800, %v3900
        %v3905 = vmul.f32 %v3801, %v3901
        %v3906 = vmul.f32 %v3802, %v3902
        %v3907 = vld [vmem:[%s11] sm:$0xff]
        %v3908 = vld [vmem:[%s11 + $0x8] sm:$0xff]
        %v3909 = vld [vmem:[%s11 + $0x10] sm:$0xff]
        %v3910 = vld [vmem:[%s11 + $0x18] sm:$0xff]
        %v3911 = vld [vmem:[%s12] sm:$0xff]
        %v3912 = vld [vmem:[%s12 + $0x8] sm:$0xff]
        %v3913 = vld [vmem:[%s12 + $0x10] sm:$0xff]
        %v3914 = vld [vmem:[%s12 + $0x18] sm:$0xff]
        %3916 = vset.pattern.permute.xlu0 0
        %3917 = vperm.xlu0 %3916, %v3911
        %v3918 = vpop.permute.xlu0 %3917
        %3921 = vset.pattern.permute.xlu0 0
        %3922 = vperm.xlu0 %3921, %v3912
        %v3923 = vpop.permute.xlu0 %3922
        %3926 = vset.pattern.permute.xlu0 0
        %3927 = vperm.xlu0 %3926, %v3913
        %v3928 = vpop.permute.xlu0 %3927
        %3931 = vset.pattern.permute.xlu0 0
        %3932 = vperm.xlu0 %3931, %v3914
        %v3933 = vpop.permute.xlu0 %3932
        %v3936 = vsel %vm976, %v3907, 0
        %v3939 = vsel %vm976, %v3908, 0
        %v3942 = vsel %vm976, %v3909, 0
        %v3945 = vsel %vm976, %v3910, 0
        %3947 = vmatprep.subr.mxu0 0.0
        %3948 = vmatpush1.msra.mxu0 %v3903
        %3949 = vmatprep.subr.mxu0 0.0
        %3950 = vmatpush1.msra.mxu0 %v3904
        %3951 = vmatprep.subr.mxu0 0.0
        %3952 = vmatpush1.msra.mxu0 %v3905
        %3953 = vmatprep.subr.mxu0 0.0
        %3954 = vmatpush1.msra.mxu0 %v3906
        %3955 = vmatprep.subr.mxu0 0.0
        %3956 = vmatpush1.msra.mxu0 0.0
        %3957 = vmatprep.subr.mxu0 0.0
        %3958 = vmatpush1.msra.mxu0 0.0
        %3959 = vmatprep.subr.mxu0 0.0
        %3960 = vmatpush1.msra.mxu0 0.0
        %3961 = vmatprep.subr.mxu0 0.0
        %3962 = vmatpush1.msra.mxu0 0.0
        %3963 = vmatprep.subr.mxu0 0.0
        %3964 = vmatpush1.msra.mxu0 0.0
        %3965 = vmatprep.subr.mxu0 0.0
        %3966 = vmatpush1.msra.mxu0 0.0
        %3967 = vmatprep.subr.mxu0 0.0
        %3968 = vmatpush1.msra.mxu0 0.0
        %3969 = vmatprep.subr.mxu0 0.0
        %3970 = vmatpush1.msra.mxu0 0.0
        %3971 = vmatprep.subr.mxu0 0.0
        %3972 = vmatpush1.msra.mxu0 0.0
        %3973 = vmatprep.subr.mxu0 0.0
        %3974 = vmatpush1.msra.mxu0 0.0
        %3975 = vmatprep.subr.mxu0 0.0
        %3976 = vmatpush1.msra.mxu0 0.0
        %3977 = vmatprep.subr.mxu0 0.0
        %3978 = vmatpush1.msra.mxu0 0.0
        %3979 = vmatprep.subr.mxu0 0.0
        %3980 = vmatpush1.msra.mxu0 0.0
        %3981 = vmatprep.subr.mxu0 0.0
        %3982 = vmatpush1.msra.mxu0 0.0
        %3983 = vmatprep.subr.mxu0 0.0
        %3984 = vmatpush1.msra.mxu0 0.0
        %3985 = vmatprep.subr.mxu0 0.0
        %3986 = vmatpush1.msra.mxu0 0.0
        %3987 = vmatprep.subr.mxu0 0.0
        %3988 = vmatpush1.msra.mxu0 0.0
        %3989 = vmatprep.subr.mxu0 0.0
        %3990 = vmatpush1.msra.mxu0 0.0
        %3991 = vmatprep.subr.mxu0 0.0
        %3992 = vmatpush1.msra.mxu0 0.0
        %3993 = vmatprep.subr.mxu0 0.0
        %3994 = vmatpush1.msra.mxu0 0.0
        %3995 = vmatprep.subr.mxu0 0.0
        %3996 = vmatpush1.msra.mxu0 0.0
        %3997 = vmatprep.subr.mxu0 0.0
        %3998 = vmatpush1.msra.mxu0 0.0
        %3999 = vmatprep.subr.mxu0 0.0
        %4000 = vmatpush1.msra.mxu0 0.0
        %4001 = vmatprep.subr.mxu0 0.0
        %4002 = vmatpush1.msra.mxu0 0.0
        %4003 = vmatprep.subr.mxu0 0.0
        %4004 = vmatpush1.msra.mxu0 0.0
        %4005 = vmatprep.subr.mxu0 0.0
        %4006 = vmatpush1.msra.mxu0 0.0
        %4007 = vmatprep.subr.mxu0 0.0
        %4008 = vmatpush1.msra.mxu0 0.0
        %4009 = vmatprep.subr.mxu0 0.0
        %4010 = vmatpush1.msra.mxu0 0.0
        %4011 = vmatprep.mubr.f32.mxu0 0.0
        %4012 = vmatmul.mubr.f32.gmra.mrb[0].mxu0 %v3936
        %v4013 = vpop.f32.mrb[0].mxu0
        %v4014 = vadd.f32 %v3918, %v4013
        %v4015 = vpop.f32.mrb[0].mxu0
        %4016 = vmatprep.mubr.f32.mxu0 0.0
        %4017 = vmatmul.mubr.f32.gmra.mrb[0].mxu0 %v3939
        %v4018 = vpop.f32.mrb[0].mxu0
        %v4019 = vadd.f32 %v3923, %v4018
        %v4020 = vpop.f32.mrb[0].mxu0
        %4021 = vmatprep.mubr.f32.mxu0 0.0
        %4022 = vmatmul.mubr.f32.gmra.mrb[0].mxu0 %v3942
        %v4023 = vpop.f32.mrb[0].mxu0
        %v4024 = vadd.f32 %v3928, %v4023
        %v4025 = vpop.f32.mrb[0].mxu0
        %4026 = vmatprep.mubr.f32.mxu0 0.0
        %4027 = vmatmul.mubr.f32.gmra.mrb[0].mxu0 %v3945
        %v4028 = vpop.f32.mrb[0].mxu0
        %v4029 = vadd.f32 %v3933, %v4028
        %v4030 = vpop.f32.mrb[0].mxu0
        %4031 = vdwg.mxu0
        %v4032 = vmul.f32 %v4014, 0.5
        %v4033 = vmul.f32 %v4019, 0.5
        %v4034 = vmul.f32 %v4024, 0.5
        %v4035 = vmul.f32 %v4029, 0.5
        %v4036 = vmul.f32 %v4014, 0.70710677
        %v4037 = vmul.f32 %v4019, 0.70710677
        %v4038 = vmul.f32 %v4024, 0.70710677
        %v4039 = vmul.f32 %v4029, 0.70710677
        %vm4040 = vcmp.ge.f32.partialorder %v4036, 0.0
        %vm4041 = vcmp.ge.f32.partialorder %v4037, 0.0
        %vm4042 = vcmp.ge.f32.partialorder %v4038, 0.0
        %vm4043 = vcmp.ge.f32.partialorder %v4039, 0.0
        %v4044 = vsel %vm4040, 1.0, -1.0
        %v4045 = vsel %vm4041, 1.0, -1.0
        %v4046 = vsel %vm4042, 1.0, -1.0
        %v4047 = vsel %vm4043, 1.0, -1.0
        %v4048 = vand.u32 2147483647, %v4036
        %v4049 = vand.u32 2147483647, %v4037
        %v4050 = vand.u32 2147483647, %v4038
        %v4051 = vand.u32 2147483647, %v4039
        %v4052 = vmul.f32 %v4048, 0.3275911
        %v4053 = vmul.f32 %v4049, 0.3275911
        %v4054 = vmul.f32 %v4050, 0.3275911
        %v4055 = vmul.f32 %v4051, 0.3275911
        %v4056 = vadd.f32 %v4052, 1.0
        %v4057 = vadd.f32 %v4053, 1.0
        %v4058 = vadd.f32 %v4054, 1.0
        %v4059 = vadd.f32 %v4055, 1.0
        %v4060 = vrcp.pop %v4056
        %v4061 = vmul.f32 1.0, %v4060
        %v4062 = vrcp.pop %v4057
        %v4063 = vmul.f32 1.0, %v4062
        %v4064 = vrcp.pop %v4058
        %v4065 = vmul.f32 1.0, %v4064
        %v4066 = vrcp.pop %v4059
        %v4067 = vmul.f32 1.0, %v4066
        %v4068 = vmul.f32 %v4061, 1.0614054
        %v4069 = vmul.f32 %v4063, 1.0614054
        %v4070 = vmul.f32 %v4065, 1.0614054
        %v4071 = vmul.f32 %v4067, 1.0614054
        %v4072 = vadd.f32 %v4068, -1.4531521
        %v4073 = vadd.f32 %v4069, -1.4531521
        %v4074 = vadd.f32 %v4070, -1.4531521
        %v4075 = vadd.f32 %v4071, -1.4531521
        %v4076 = vmul.f32 %v4072, %v4061
        %v4077 = vmul.f32 %v4073, %v4063
        %v4078 = vmul.f32 %v4074, %v4065
        %v4079 = vmul.f32 %v4075, %v4067
        %v4080 = vadd.f32 %v4076, 1.4214138
        %v4081 = vadd.f32 %v4077, 1.4214138
        %v4082 = vadd.f32 %v4078, 1.4214138
        %v4083 = vadd.f32 %v4079, 1.4214138
        %v4084 = vmul.f32 %v4080, %v4061
        %v4085 = vmul.f32 %v4081, %v4063
        %v4086 = vmul.f32 %v4082, %v4065
        %v4087 = vmul.f32 %v4083, %v4067
        %v4088 = vadd.f32 %v4084, -0.28449672
        %v4089 = vadd.f32 %v4085, -0.28449672
        %v4090 = vadd.f32 %v4086, -0.28449672
        %v4091 = vadd.f32 %v4087, -0.28449672
        %v4092 = vmul.f32 %v4088, %v4061
        %v4093 = vmul.f32 %v4089, %v4063
        %v4094 = vmul.f32 %v4090, %v4065
        %v4095 = vmul.f32 %v4091, %v4067
        %v4096 = vadd.f32 %v4092, 0.2548296
        %v4097 = vadd.f32 %v4093, 0.2548296
        %v4098 = vadd.f32 %v4094, 0.2548296
        %v4099 = vadd.f32 %v4095, 0.2548296
        %v4100 = vmul.f32 %v4096, %v4061
        %v4101 = vmul.f32 %v4097, %v4063
        %v4102 = vmul.f32 %v4098, %v4065
        %v4103 = vmul.f32 %v4099, %v4067
        %v4104 = vsub.f32 0.0, %v4048
        %v4105 = vsub.f32 0.0, %v4049
        %v4106 = vsub.f32 0.0, %v4050
        %v4107 = vsub.f32 0.0, %v4051
        %v4108 = vmul.f32 %v4104, %v4048
        %v4109 = vmul.f32 %v4105, %v4049
        %v4110 = vmul.f32 %v4106, %v4050
        %v4111 = vmul.f32 %v4107, %v4051
        %v4112 = vmul.f32 %v4108, 1.442695
        %v4113 = vpow.pop %v4112
        %v4114 = vmul.f32 %v4109, 1.442695
        %v4115 = vpow.pop %v4114
        %v4116 = vmul.f32 %v4110, 1.442695
        %v4117 = vpow.pop %v4116
        %v4118 = vmul.f32 %v4111, 1.442695
        %v4119 = vpow.pop %v4118
        %v4120 = vmul.f32 %v4100, %v4113
        %v4121 = vmul.f32 %v4101, %v4115
        %v4122 = vmul.f32 %v4102, %v4117
        %v4123 = vmul.f32 %v4103, %v4119
        %v4124 = vsub.f32 1.0, %v4120
        %v4125 = vsub.f32 1.0, %v4121
        %v4126 = vsub.f32 1.0, %v4122
        %v4127 = vsub.f32 1.0, %v4123
        %v4128 = vmul.f32 %v4044, %v4124
        %v4129 = vmul.f32 %v4045, %v4125
        %v4130 = vmul.f32 %v4046, %v4126
        %v4131 = vmul.f32 %v4047, %v4127
        %v4132 = vadd.f32 %v4128, 1.0
        %v4133 = vadd.f32 %v4129, 1.0
        %v4134 = vadd.f32 %v4130, 1.0
        %v4135 = vadd.f32 %v4131, 1.0
        %v4136 = vmul.f32 %v4032, %v4132
        %v4137 = vmul.f32 %v4033, %v4133
        %v4138 = vmul.f32 %v4034, %v4134
        %v4139 = vmul.f32 %v4035, %v4135
        %v4140 = vld [vmem:[%s13] sm:$0xff]
        %v4141 = vld [vmem:[%s14] sm:$0xff]
        %4143 = vset.pattern.permute.xlu0 0
        %4144 = vperm.xlu0 %4143, %v4141
        %v4145 = vpop.permute.xlu0 %4144
        %v4148 = vsel %vm976, %v4140, 0
        %4150 = vmatprep.subr.mxu0 0.0
        %4151 = vmatpush1.msra.mxu0 %v4136
        %4152 = vmatprep.subr.mxu0 0.0
        %4153 = vmatpush1.msra.mxu0 %v4137
        %4154 = vmatprep.subr.mxu0 0.0
        %4155 = vmatpush1.msra.mxu0 %v4138
        %4156 = vmatprep.subr.mxu0 0.0
        %4157 = vmatpush1.msra.mxu0 %v4139
        %4158 = vmatprep.subr.mxu0 0.0
        %4159 = vmatpush1.msra.mxu0 0.0
        %4160 = vmatprep.subr.mxu0 0.0
        %4161 = vmatpush1.msra.mxu0 0.0
        %4162 = vmatprep.subr.mxu0 0.0
        %4163 = vmatpush1.msra.mxu0 0.0
        %4164 = vmatprep.subr.mxu0 0.0
        %4165 = vmatpush1.msra.mxu0 0.0
        %4166 = vmatprep.subr.mxu0 0.0
        %4167 = vmatpush1.msra.mxu0 0.0
        %4168 = vmatprep.subr.mxu0 0.0
        %4169 = vmatpush1.msra.mxu0 0.0
        %4170 = vmatprep.subr.mxu0 0.0
        %4171 = vmatpush1.msra.mxu0 0.0
        %4172 = vmatprep.subr.mxu0 0.0
        %4173 = vmatpush1.msra.mxu0 0.0
        %4174 = vmatprep.subr.mxu0 0.0
        %4175 = vmatpush1.msra.mxu0 0.0
        %4176 = vmatprep.subr.mxu0 0.0
        %4177 = vmatpush1.msra.mxu0 0.0
        %4178 = vmatprep.subr.mxu0 0.0
        %4179 = vmatpush1.msra.mxu0 0.0
        %4180 = vmatprep.subr.mxu0 0.0
        %4181 = vmatpush1.msra.mxu0 0.0
        %4182 = vmatprep.subr.mxu0 0.0
        %4183 = vmatpush1.msra.mxu0 0.0
        %4184 = vmatprep.subr.mxu0 0.0
        %4185 = vmatpush1.msra.mxu0 0.0
        %4186 = vmatprep.subr.mxu0 0.0
        %4187 = vmatpush1.msra.mxu0 0.0
        %4188 = vmatprep.subr.mxu0 0.0
        %4189 = vmatpush1.msra.mxu0 0.0
        %4190 = vmatprep.subr.mxu0 0.0
        %4191 = vmatpush1.msra.mxu0 0.0
        %4192 = vmatprep.subr.mxu0 0.0
        %4193 = vmatpush1.msra.mxu0 0.0
        %4194 = vmatprep.subr.mxu0 0.0
        %4195 = vmatpush1.msra.mxu0 0.0
        %4196 = vmatprep.subr.mxu0 0.0
        %4197 = vmatpush1.msra.mxu0 0.0
        %4198 = vmatprep.subr.mxu0 0.0
        %4199 = vmatpush1.msra.mxu0 0.0
        %4200 = vmatprep.subr.mxu0 0.0
        %4201 = vmatpush1.msra.mxu0 0.0
        %4202 = vmatprep.subr.mxu0 0.0
        %4203 = vmatpush1.msra.mxu0 0.0
        %4204 = vmatprep.subr.mxu0 0.0
        %4205 = vmatpush1.msra.mxu0 0.0
        %4206 = vmatprep.subr.mxu0 0.0
        %4207 = vmatpush1.msra.mxu0 0.0
        %4208 = vmatprep.subr.mxu0 0.0
        %4209 = vmatpush1.msra.mxu0 0.0
        %4210 = vmatprep.subr.mxu0 0.0
        %4211 = vmatpush1.msra.mxu0 0.0
        %4212 = vmatprep.subr.mxu0 0.0
        %4213 = vmatpush1.msra.mxu0 0.0
        %4214 = vmatprep.mubr.f32.mxu0 0.0
        %4215 = vmatmul.mubr.f32.gmra.mrb[0].mxu0 %v4148
        %v4216 = vpop.f32.mrb[0].mxu0
        %v4217 = vadd.f32 %v4145, %v4216
        %v4218 = vpop.f32.mrb[0].mxu0
        %4219 = vdwg.mxu0
        %v4220 = vtanh.pop %v4217
        %v4221 = vmul.f32 %v4220, 4.0
        %v4222 = vadd.f32 %v4221, 0.0
        %v4223 = vmul.f32 %v4222, 0.5
        %v4224 = vmul.f32 %v4223, 1.442695
        %v4225 = vpow.pop %v4224
        %v4226 = vmul.f32 %v4225, 0.25
        %v4227 = vmul.f32 %v4217, 0.0625
        %v4228 = vadd.f32 %v3365, %v4227
        %v4230 = vrot.slane %v3406, 4
        %v4232 = vmul.f32 %v4226, %v4230
        %v4234 = vrot.slane %v4232, 4
        %v4236 = vadd.f32 %v4228, %v4234
        %v4237 = vmul.f32 %v3406, %v3406
        %v4238 = vadd.f32 %v4237, -0.93471164
        %v4240 = vrot.slane %v4222, 4
        %v4242 = vadd.f32 %v4238, %v4240
        %v4243 = vsel %vm1624, %v4242, 0.0
        %v4244 = vrot.slane %v4243, 4
        %v4245 = vadd.f32 %v4243, %v4244
        %v4246 = vrot.slane %v4245, 2
        %v4247 = vadd.f32 %v4245, %v4246
        %v4248 = vrot.slane %v4247, 1
        %v4249 = vadd.f32 %v4247, %v4248
        %v4250 = vmul.f32 %v4249, -0.5
        %s4251 = sld [smem:[#allocation3 + %s3404]]
        %s4252 = sld [smem:[#allocation5 + %s3404]]
        %s4253 = sld [smem:[#allocation7 + %s3404]]
        %v4254 = vstv %s4251
        %v4255 = vmul.f32 %v4236, %v4254
        %v4256 = vsub.f32 %v3365, %v4255
        %v4257 = vstv %s4253
        %v4258 = vmul.f32 %v4256, %v4257
        %v4259 = vmul.f32 %v4258, %v4258
        %v4260 = vadd.f32 %v4259, 1.837877
        %v4261 = vstv %s4252
        %v4262 = vadd.f32 %v4260, %v4261
        %v4263 = vsel %vm1624, %v4262, 0.0
        %v4264 = vrot.slane %v4263, 4
        %v4265 = vadd.f32 %v4263, %v4264
        %v4266 = vrot.slane %v4265, 2
        %v4267 = vadd.f32 %v4265, %v4266
        %v4268 = vrot.slane %v4267, 1
        %v4269 = vadd.f32 %v4267, %v4268
        %v4270 = vmul.f32 %v4269, -0.5
        %s4271 = scalar_lea.vmem %s680, 12
        %4272 = vst.msk [vmem:[%s4271] sm:$0xf] %vm1624, %v4236
        %4273 = vst.msk [vmem:[%s688 + $0x3] sm:$0x1] %vm1659, %v4250
        %4274 = vst.msk [vmem:[%s695 + $0x3] sm:$0x1] %vm1659, %v4270
        %s4275 = sadd.s32 %s712, 4
        %s4276 = scalar_lea.vmem %s666, 16
        %v4277 = vld [vmem:[%s4276] sm:$0xf]
        %v4278 = vld [vmem:[%s7] sm:$0xff]
        %v4279 = vld [vmem:[%s7 + $0x8] sm:$0xff]
        %v4280 = vld [vmem:[%s7 + $0x10] sm:$0xff]
        %v4281 = vld [vmem:[%s7 + $0x18] sm:$0xff]
        %v4282 = vlaneseq
        %v4283 = vshrl.u32 %v4282, 7
        %v4284 = vsub.s32 0, %v4283
        %v4285 = vrot.slane %v4236, %v4284
        %v4286 = vmul.f32 %v721, %v4285
        %v4287 = vmul.f32 %v726, %v4285
        %v4288 = vmul.f32 %v731, %v4285
        %v4289 = vmul.f32 %v736, %v4285
        %4291 = vset.pattern.permute.xlu0 0
        %4292 = vperm.xlu0 %4291, %v4278
        %v4293 = vpop.permute.xlu0 %4292
        %4296 = vset.pattern.permute.xlu0 0
        %4297 = vperm.xlu0 %4296, %v4279
        %v4298 = vpop.permute.xlu0 %4297
        %4301 = vset.pattern.permute.xlu0 0
        %4302 = vperm.xlu0 %4301, %v4280
        %v4303 = vpop.permute.xlu0 %4302
        %4306 = vset.pattern.permute.xlu0 0
        %4307 = vperm.xlu0 %4306, %v4281
        %v4308 = vpop.permute.xlu0 %4307
        %v4310 = vadd.f32 %v4293, %v4286
        %v4311 = vadd.f32 %v4298, %v4287
        %v4312 = vadd.f32 %v4303, %v4288
        %v4313 = vadd.f32 %v4308, %v4289
        %v4314 = vlaneseq
        %v4315 = vshrl.u32 %v4314, 7
        %v4316 = vsub.s32 1, %v4315
        %v4317 = vrot.slane %v4236, %v4316
        %v4318 = vmul.f32 %v772, %v4317
        %v4319 = vmul.f32 %v776, %v4317
        %v4320 = vmul.f32 %v780, %v4317
        %v4321 = vmul.f32 %v784, %v4317
        %v4322 = vadd.f32 %v4310, %v4318
        %v4323 = vadd.f32 %v4311, %v4319
        %v4324 = vadd.f32 %v4312, %v4320
        %v4325 = vadd.f32 %v4313, %v4321
        %v4326 = vlaneseq
        %v4327 = vshrl.u32 %v4326, 7
        %v4328 = vsub.s32 2, %v4327
        %v4329 = vrot.slane %v4236, %v4328
        %v4330 = vmul.f32 %v800, %v4329
        %v4331 = vmul.f32 %v804, %v4329
        %v4332 = vmul.f32 %v808, %v4329
        %v4333 = vmul.f32 %v812, %v4329
        %v4334 = vadd.f32 %v4322, %v4330
        %v4335 = vadd.f32 %v4323, %v4331
        %v4336 = vadd.f32 %v4324, %v4332
        %v4337 = vadd.f32 %v4325, %v4333
        %v4338 = vlaneseq
        %v4339 = vshrl.u32 %v4338, 7
        %v4340 = vsub.s32 3, %v4339
        %v4341 = vrot.slane %v4236, %v4340
        %v4342 = vmul.f32 %v828, %v4341
        %v4343 = vmul.f32 %v832, %v4341
        %v4344 = vmul.f32 %v836, %v4341
        %v4345 = vmul.f32 %v840, %v4341
        %v4346 = vadd.f32 %v4334, %v4342
        %v4347 = vadd.f32 %v4335, %v4343
        %v4348 = vadd.f32 %v4336, %v4344
        %v4349 = vadd.f32 %v4337, %v4345
        %v4350 = vmul.f32 %v4346, 0.5
        %v4351 = vmul.f32 %v4347, 0.5
        %v4352 = vmul.f32 %v4348, 0.5
        %v4353 = vmul.f32 %v4349, 0.5
        %v4354 = vmul.f32 %v4346, 0.70710677
        %v4355 = vmul.f32 %v4347, 0.70710677
        %v4356 = vmul.f32 %v4348, 0.70710677
        %v4357 = vmul.f32 %v4349, 0.70710677
        %vm4358 = vcmp.ge.f32.partialorder %v4354, 0.0
        %vm4359 = vcmp.ge.f32.partialorder %v4355, 0.0
        %vm4360 = vcmp.ge.f32.partialorder %v4356, 0.0
        %vm4361 = vcmp.ge.f32.partialorder %v4357, 0.0
        %v4362 = vsel %vm4358, 1.0, -1.0
        %v4363 = vsel %vm4359, 1.0, -1.0
        %v4364 = vsel %vm4360, 1.0, -1.0
        %v4365 = vsel %vm4361, 1.0, -1.0
        %v4366 = vand.u32 2147483647, %v4354
        %v4367 = vand.u32 2147483647, %v4355
        %v4368 = vand.u32 2147483647, %v4356
        %v4369 = vand.u32 2147483647, %v4357
        %v4370 = vmul.f32 %v4366, 0.3275911
        %v4371 = vmul.f32 %v4367, 0.3275911
        %v4372 = vmul.f32 %v4368, 0.3275911
        %v4373 = vmul.f32 %v4369, 0.3275911
        %v4374 = vadd.f32 %v4370, 1.0
        %v4375 = vadd.f32 %v4371, 1.0
        %v4376 = vadd.f32 %v4372, 1.0
        %v4377 = vadd.f32 %v4373, 1.0
        %v4378 = vrcp.pop %v4374
        %v4379 = vmul.f32 1.0, %v4378
        %v4380 = vrcp.pop %v4375
        %v4381 = vmul.f32 1.0, %v4380
        %v4382 = vrcp.pop %v4376
        %v4383 = vmul.f32 1.0, %v4382
        %v4384 = vrcp.pop %v4377
        %v4385 = vmul.f32 1.0, %v4384
        %v4386 = vmul.f32 %v4379, 1.0614054
        %v4387 = vmul.f32 %v4381, 1.0614054
        %v4388 = vmul.f32 %v4383, 1.0614054
        %v4389 = vmul.f32 %v4385, 1.0614054
        %v4390 = vadd.f32 %v4386, -1.4531521
        %v4391 = vadd.f32 %v4387, -1.4531521
        %v4392 = vadd.f32 %v4388, -1.4531521
        %v4393 = vadd.f32 %v4389, -1.4531521
        %v4394 = vmul.f32 %v4390, %v4379
        %v4395 = vmul.f32 %v4391, %v4381
        %v4396 = vmul.f32 %v4392, %v4383
        %v4397 = vmul.f32 %v4393, %v4385
        %v4398 = vadd.f32 %v4394, 1.4214138
        %v4399 = vadd.f32 %v4395, 1.4214138
        %v4400 = vadd.f32 %v4396, 1.4214138
        %v4401 = vadd.f32 %v4397, 1.4214138
        %v4402 = vmul.f32 %v4398, %v4379
        %v4403 = vmul.f32 %v4399, %v4381
        %v4404 = vmul.f32 %v4400, %v4383
        %v4405 = vmul.f32 %v4401, %v4385
        %v4406 = vadd.f32 %v4402, -0.28449672
        %v4407 = vadd.f32 %v4403, -0.28449672
        %v4408 = vadd.f32 %v4404, -0.28449672
        %v4409 = vadd.f32 %v4405, -0.28449672
        %v4410 = vmul.f32 %v4406, %v4379
        %v4411 = vmul.f32 %v4407, %v4381
        %v4412 = vmul.f32 %v4408, %v4383
        %v4413 = vmul.f32 %v4409, %v4385
        %v4414 = vadd.f32 %v4410, 0.2548296
        %v4415 = vadd.f32 %v4411, 0.2548296
        %v4416 = vadd.f32 %v4412, 0.2548296
        %v4417 = vadd.f32 %v4413, 0.2548296
        %v4418 = vmul.f32 %v4414, %v4379
        %v4419 = vmul.f32 %v4415, %v4381
        %v4420 = vmul.f32 %v4416, %v4383
        %v4421 = vmul.f32 %v4417, %v4385
        %v4422 = vsub.f32 0.0, %v4366
        %v4423 = vsub.f32 0.0, %v4367
        %v4424 = vsub.f32 0.0, %v4368
        %v4425 = vsub.f32 0.0, %v4369
        %v4426 = vmul.f32 %v4422, %v4366
        %v4427 = vmul.f32 %v4423, %v4367
        %v4428 = vmul.f32 %v4424, %v4368
        %v4429 = vmul.f32 %v4425, %v4369
        %v4430 = vmul.f32 %v4426, 1.442695
        %v4431 = vpow.pop %v4430
        %v4432 = vmul.f32 %v4427, 1.442695
        %v4433 = vpow.pop %v4432
        %v4434 = vmul.f32 %v4428, 1.442695
        %v4435 = vpow.pop %v4434
        %v4436 = vmul.f32 %v4429, 1.442695
        %v4437 = vpow.pop %v4436
        %v4438 = vmul.f32 %v4418, %v4431
        %v4439 = vmul.f32 %v4419, %v4433
        %v4440 = vmul.f32 %v4420, %v4435
        %v4441 = vmul.f32 %v4421, %v4437
        %v4442 = vsub.f32 1.0, %v4438
        %v4443 = vsub.f32 1.0, %v4439
        %v4444 = vsub.f32 1.0, %v4440
        %v4445 = vsub.f32 1.0, %v4441
        %v4446 = vmul.f32 %v4362, %v4442
        %v4447 = vmul.f32 %v4363, %v4443
        %v4448 = vmul.f32 %v4364, %v4444
        %v4449 = vmul.f32 %v4365, %v4445
        %v4450 = vadd.f32 %v4446, 1.0
        %v4451 = vadd.f32 %v4447, 1.0
        %v4452 = vadd.f32 %v4448, 1.0
        %v4453 = vadd.f32 %v4449, 1.0
        %v4454 = vmul.f32 %v4350, %v4450
        %v4455 = vmul.f32 %v4351, %v4451
        %v4456 = vmul.f32 %v4352, %v4452
        %v4457 = vmul.f32 %v4353, %v4453
        %v4458 = vld [vmem:[%s8] sm:$0xff]
        %v4459 = vld [vmem:[%s8 + $0x8] sm:$0xff]
        %v4460 = vld [vmem:[%s9] sm:$0xff]
        %v4461 = vld [vmem:[%s9 + $0x8] sm:$0xff]
        %4463 = vset.pattern.permute.xlu0 0
        %4464 = vperm.xlu0 %4463, %v4460
        %v4465 = vpop.permute.xlu0 %4464
        %4468 = vset.pattern.permute.xlu0 0
        %4469 = vperm.xlu0 %4468, %v4461
        %v4470 = vpop.permute.xlu0 %4469
        %v4473 = vsel %vm976, %v4458, 0
        %v4476 = vsel %vm976, %v4459, 0
        %4478 = vmatprep.subr.mxu0 0.0
        %4479 = vmatpush1.msra.mxu0 %v4454
        %4480 = vmatprep.subr.mxu0 0.0
        %4481 = vmatpush1.msra.mxu0 %v4455
        %4482 = vmatprep.subr.mxu0 0.0
        %4483 = vmatpush1.msra.mxu0 %v4456
        %4484 = vmatprep.subr.mxu0 0.0
        %4485 = vmatpush1.msra.mxu0 %v4457
        %4486 = vmatprep.subr.mxu0 0.0
        %4487 = vmatpush1.msra.mxu0 0.0
        %4488 = vmatprep.subr.mxu0 0.0
        %4489 = vmatpush1.msra.mxu0 0.0
        %4490 = vmatprep.subr.mxu0 0.0
        %4491 = vmatpush1.msra.mxu0 0.0
        %4492 = vmatprep.subr.mxu0 0.0
        %4493 = vmatpush1.msra.mxu0 0.0
        %4494 = vmatprep.subr.mxu0 0.0
        %4495 = vmatpush1.msra.mxu0 0.0
        %4496 = vmatprep.subr.mxu0 0.0
        %4497 = vmatpush1.msra.mxu0 0.0
        %4498 = vmatprep.subr.mxu0 0.0
        %4499 = vmatpush1.msra.mxu0 0.0
        %4500 = vmatprep.subr.mxu0 0.0
        %4501 = vmatpush1.msra.mxu0 0.0
        %4502 = vmatprep.subr.mxu0 0.0
        %4503 = vmatpush1.msra.mxu0 0.0
        %4504 = vmatprep.subr.mxu0 0.0
        %4505 = vmatpush1.msra.mxu0 0.0
        %4506 = vmatprep.subr.mxu0 0.0
        %4507 = vmatpush1.msra.mxu0 0.0
        %4508 = vmatprep.subr.mxu0 0.0
        %4509 = vmatpush1.msra.mxu0 0.0
        %4510 = vmatprep.subr.mxu0 0.0
        %4511 = vmatpush1.msra.mxu0 0.0
        %4512 = vmatprep.subr.mxu0 0.0
        %4513 = vmatpush1.msra.mxu0 0.0
        %4514 = vmatprep.subr.mxu0 0.0
        %4515 = vmatpush1.msra.mxu0 0.0
        %4516 = vmatprep.subr.mxu0 0.0
        %4517 = vmatpush1.msra.mxu0 0.0
        %4518 = vmatprep.subr.mxu0 0.0
        %4519 = vmatpush1.msra.mxu0 0.0
        %4520 = vmatprep.subr.mxu0 0.0
        %4521 = vmatpush1.msra.mxu0 0.0
        %4522 = vmatprep.subr.mxu0 0.0
        %4523 = vmatpush1.msra.mxu0 0.0
        %4524 = vmatprep.subr.mxu0 0.0
        %4525 = vmatpush1.msra.mxu0 0.0
        %4526 = vmatprep.subr.mxu0 0.0
        %4527 = vmatpush1.msra.mxu0 0.0
        %4528 = vmatprep.subr.mxu0 0.0
        %4529 = vmatpush1.msra.mxu0 0.0
        %4530 = vmatprep.subr.mxu0 0.0
        %4531 = vmatpush1.msra.mxu0 0.0
        %4532 = vmatprep.subr.mxu0 0.0
        %4533 = vmatpush1.msra.mxu0 0.0
        %4534 = vmatprep.subr.mxu0 0.0
        %4535 = vmatpush1.msra.mxu0 0.0
        %4536 = vmatprep.subr.mxu0 0.0
        %4537 = vmatpush1.msra.mxu0 0.0
        %4538 = vmatprep.subr.mxu0 0.0
        %4539 = vmatpush1.msra.mxu0 0.0
        %4540 = vmatprep.subr.mxu0 0.0
        %4541 = vmatpush1.msra.mxu0 0.0
        %4542 = vmatprep.mubr.f32.mxu0 0.0
        %4543 = vmatmul.mubr.f32.gmra.mrb[0].mxu0 %v4473
        %v4544 = vpop.f32.mrb[0].mxu0
        %v4545 = vadd.f32 %v4465, %v4544
        %v4546 = vpop.f32.mrb[0].mxu0
        %4547 = vmatprep.mubr.f32.mxu0 0.0
        %4548 = vmatmul.mubr.f32.gmra.mrb[0].mxu0 %v4476
        %v4549 = vpop.f32.mrb[0].mxu0
        %v4550 = vadd.f32 %v4470, %v4549
        %v4551 = vpop.f32.mrb[0].mxu0
        %4552 = vdwg.mxu0
        %v4553 = vld [vmem:[%s10] sm:$0xff]
        %v4554 = vld [vmem:[%s10 + $0x8] sm:$0xff]
        %v4555 = vld [vmem:[%s10 + $0x10] sm:$0xff]
        %v4556 = vld [vmem:[%s10 + $0x18] sm:$0xff]
        %4557 = vset.pattern.permute.xlu0 4
        %4558 = vperm.xlu0 %4557, %v703
        %v4559 = vpop.permute.xlu0 %4558
        %4561 = vset.pattern.permute.xlu0 4
        %4562 = vperm.xlu0 %4561, %v704
        %v4563 = vpop.permute.xlu0 %4562
        %4565 = vset.pattern.permute.xlu0 4
        %4566 = vperm.xlu0 %4565, %v705
        %v4567 = vpop.permute.xlu0 %4566
        %4569 = vset.pattern.permute.xlu0 4
        %4570 = vperm.xlu0 %4569, %v706
        %v4571 = vpop.permute.xlu0 %4570
        %v4574 = vsel %vm1082, %v4553, 0
        %v4577 = vsel %vm1082, %v4554, 0
        %v4580 = vsel %vm1082, %v4555, 0
        %v4583 = vsel %vm1082, %v4556, 0
        %4585 = vmatprep.subr.mxu0 0.0
        %4586 = vmatpush1.msra.mxu0 %v4545
        %4587 = vmatprep.subr.mxu0 0.0
        %4588 = vmatpush1.msra.mxu0 %v4550
        %4589 = vmatprep.subr.mxu0 0.0
        %4590 = vmatpush1.msra.mxu0 0.0
        %4591 = vmatprep.subr.mxu0 0.0
        %4592 = vmatpush1.msra.mxu0 0.0
        %4593 = vmatprep.subr.mxu0 0.0
        %4594 = vmatpush1.msra.mxu0 0.0
        %4595 = vmatprep.subr.mxu0 0.0
        %4596 = vmatpush1.msra.mxu0 0.0
        %4597 = vmatprep.subr.mxu0 0.0
        %4598 = vmatpush1.msra.mxu0 0.0
        %4599 = vmatprep.subr.mxu0 0.0
        %4600 = vmatpush1.msra.mxu0 0.0
        %4601 = vmatprep.subr.mxu0 0.0
        %4602 = vmatpush1.msra.mxu0 0.0
        %4603 = vmatprep.subr.mxu0 0.0
        %4604 = vmatpush1.msra.mxu0 0.0
        %4605 = vmatprep.subr.mxu0 0.0
        %4606 = vmatpush1.msra.mxu0 0.0
        %4607 = vmatprep.subr.mxu0 0.0
        %4608 = vmatpush1.msra.mxu0 0.0
        %4609 = vmatprep.subr.mxu0 0.0
        %4610 = vmatpush1.msra.mxu0 0.0
        %4611 = vmatprep.subr.mxu0 0.0
        %4612 = vmatpush1.msra.mxu0 0.0
        %4613 = vmatprep.subr.mxu0 0.0
        %4614 = vmatpush1.msra.mxu0 0.0
        %4615 = vmatprep.subr.mxu0 0.0
        %4616 = vmatpush1.msra.mxu0 0.0
        %4617 = vmatprep.subr.mxu0 0.0
        %4618 = vmatpush1.msra.mxu0 0.0
        %4619 = vmatprep.subr.mxu0 0.0
        %4620 = vmatpush1.msra.mxu0 0.0
        %4621 = vmatprep.subr.mxu0 0.0
        %4622 = vmatpush1.msra.mxu0 0.0
        %4623 = vmatprep.subr.mxu0 0.0
        %4624 = vmatpush1.msra.mxu0 0.0
        %4625 = vmatprep.subr.mxu0 0.0
        %4626 = vmatpush1.msra.mxu0 0.0
        %4627 = vmatprep.subr.mxu0 0.0
        %4628 = vmatpush1.msra.mxu0 0.0
        %4629 = vmatprep.subr.mxu0 0.0
        %4630 = vmatpush1.msra.mxu0 0.0
        %4631 = vmatprep.subr.mxu0 0.0
        %4632 = vmatpush1.msra.mxu0 0.0
        %4633 = vmatprep.subr.mxu0 0.0
        %4634 = vmatpush1.msra.mxu0 0.0
        %4635 = vmatprep.subr.mxu0 0.0
        %4636 = vmatpush1.msra.mxu0 0.0
        %4637 = vmatprep.subr.mxu0 0.0
        %4638 = vmatpush1.msra.mxu0 0.0
        %4639 = vmatprep.subr.mxu0 0.0
        %4640 = vmatpush1.msra.mxu0 0.0
        %4641 = vmatprep.subr.mxu0 0.0
        %4642 = vmatpush1.msra.mxu0 0.0
        %4643 = vmatprep.subr.mxu0 0.0
        %4644 = vmatpush1.msra.mxu0 0.0
        %4645 = vmatprep.subr.mxu0 0.0
        %4646 = vmatpush1.msra.mxu0 0.0
        %4647 = vmatprep.subr.mxu0 0.0
        %4648 = vmatpush1.msra.mxu0 0.0
        %4649 = vmatprep.mubr.f32.mxu0 0.0
        %4650 = vmatmul.mubr.f32.gmra.mrb[0].mxu0 %v4574
        %v4651 = vpop.f32.mrb[0].mxu0
        %v4652 = vadd.f32 %v4559, %v4651
        %v4653 = vpop.f32.mrb[0].mxu0
        %4654 = vmatprep.mubr.f32.mxu0 0.0
        %4655 = vmatmul.mubr.f32.gmra.mrb[0].mxu0 %v4577
        %v4656 = vpop.f32.mrb[0].mxu0
        %v4657 = vadd.f32 %v4563, %v4656
        %v4658 = vpop.f32.mrb[0].mxu0
        %4659 = vmatprep.mubr.f32.mxu0 0.0
        %4660 = vmatmul.mubr.f32.gmra.mrb[0].mxu0 %v4580
        %v4661 = vpop.f32.mrb[0].mxu0
        %v4662 = vadd.f32 %v4567, %v4661
        %v4663 = vpop.f32.mrb[0].mxu0
        %4664 = vmatprep.mubr.f32.mxu0 0.0
        %4665 = vmatmul.mubr.f32.gmra.mrb[0].mxu0 %v4583
        %v4666 = vpop.f32.mrb[0].mxu0
        %v4667 = vadd.f32 %v4571, %v4666
        %v4668 = vpop.f32.mrb[0].mxu0
        %4669 = vdwg.mxu0
        %v4670 = vmul.f32 %v4652, 0.5
        %v4671 = vmul.f32 %v4657, 0.5
        %v4672 = vmul.f32 %v4662, 0.5
        %v4673 = vmul.f32 %v4667, 0.5
        %v4674 = vmul.f32 %v4652, 0.70710677
        %v4675 = vmul.f32 %v4657, 0.70710677
        %v4676 = vmul.f32 %v4662, 0.70710677
        %v4677 = vmul.f32 %v4667, 0.70710677
        %vm4678 = vcmp.ge.f32.partialorder %v4674, 0.0
        %vm4679 = vcmp.ge.f32.partialorder %v4675, 0.0
        %vm4680 = vcmp.ge.f32.partialorder %v4676, 0.0
        %vm4681 = vcmp.ge.f32.partialorder %v4677, 0.0
        %v4682 = vsel %vm4678, 1.0, -1.0
        %v4683 = vsel %vm4679, 1.0, -1.0
        %v4684 = vsel %vm4680, 1.0, -1.0
        %v4685 = vsel %vm4681, 1.0, -1.0
        %v4686 = vand.u32 2147483647, %v4674
        %v4687 = vand.u32 2147483647, %v4675
        %v4688 = vand.u32 2147483647, %v4676
        %v4689 = vand.u32 2147483647, %v4677
        %v4690 = vmul.f32 %v4686, 0.3275911
        %v4691 = vmul.f32 %v4687, 0.3275911
        %v4692 = vmul.f32 %v4688, 0.3275911
        %v4693 = vmul.f32 %v4689, 0.3275911
        %v4694 = vadd.f32 %v4690, 1.0
        %v4695 = vadd.f32 %v4691, 1.0
        %v4696 = vadd.f32 %v4692, 1.0
        %v4697 = vadd.f32 %v4693, 1.0
        %v4698 = vrcp.pop %v4694
        %v4699 = vmul.f32 1.0, %v4698
        %v4700 = vrcp.pop %v4695
        %v4701 = vmul.f32 1.0, %v4700
        %v4702 = vrcp.pop %v4696
        %v4703 = vmul.f32 1.0, %v4702
        %v4704 = vrcp.pop %v4697
        %v4705 = vmul.f32 1.0, %v4704
        %v4706 = vmul.f32 %v4699, 1.0614054
        %v4707 = vmul.f32 %v4701, 1.0614054
        %v4708 = vmul.f32 %v4703, 1.0614054
        %v4709 = vmul.f32 %v4705, 1.0614054
        %v4710 = vadd.f32 %v4706, -1.4531521
        %v4711 = vadd.f32 %v4707, -1.4531521
        %v4712 = vadd.f32 %v4708, -1.4531521
        %v4713 = vadd.f32 %v4709, -1.4531521
        %v4714 = vmul.f32 %v4710, %v4699
        %v4715 = vmul.f32 %v4711, %v4701
        %v4716 = vmul.f32 %v4712, %v4703
        %v4717 = vmul.f32 %v4713, %v4705
        %v4718 = vadd.f32 %v4714, 1.4214138
        %v4719 = vadd.f32 %v4715, 1.4214138
        %v4720 = vadd.f32 %v4716, 1.4214138
        %v4721 = vadd.f32 %v4717, 1.4214138
        %v4722 = vmul.f32 %v4718, %v4699
        %v4723 = vmul.f32 %v4719, %v4701
        %v4724 = vmul.f32 %v4720, %v4703
        %v4725 = vmul.f32 %v4721, %v4705
        %v4726 = vadd.f32 %v4722, -0.28449672
        %v4727 = vadd.f32 %v4723, -0.28449672
        %v4728 = vadd.f32 %v4724, -0.28449672
        %v4729 = vadd.f32 %v4725, -0.28449672
        %v4730 = vmul.f32 %v4726, %v4699
        %v4731 = vmul.f32 %v4727, %v4701
        %v4732 = vmul.f32 %v4728, %v4703
        %v4733 = vmul.f32 %v4729, %v4705
        %v4734 = vadd.f32 %v4730, 0.2548296
        %v4735 = vadd.f32 %v4731, 0.2548296
        %v4736 = vadd.f32 %v4732, 0.2548296
        %v4737 = vadd.f32 %v4733, 0.2548296
        %v4738 = vmul.f32 %v4734, %v4699
        %v4739 = vmul.f32 %v4735, %v4701
        %v4740 = vmul.f32 %v4736, %v4703
        %v4741 = vmul.f32 %v4737, %v4705
        %v4742 = vsub.f32 0.0, %v4686
        %v4743 = vsub.f32 0.0, %v4687
        %v4744 = vsub.f32 0.0, %v4688
        %v4745 = vsub.f32 0.0, %v4689
        %v4746 = vmul.f32 %v4742, %v4686
        %v4747 = vmul.f32 %v4743, %v4687
        %v4748 = vmul.f32 %v4744, %v4688
        %v4749 = vmul.f32 %v4745, %v4689
        %v4750 = vmul.f32 %v4746, 1.442695
        %v4751 = vpow.pop %v4750
        %v4752 = vmul.f32 %v4747, 1.442695
        %v4753 = vpow.pop %v4752
        %v4754 = vmul.f32 %v4748, 1.442695
        %v4755 = vpow.pop %v4754
        %v4756 = vmul.f32 %v4749, 1.442695
        %v4757 = vpow.pop %v4756
        %v4758 = vmul.f32 %v4738, %v4751
        %v4759 = vmul.f32 %v4739, %v4753
        %v4760 = vmul.f32 %v4740, %v4755
        %v4761 = vmul.f32 %v4741, %v4757
        %v4762 = vsub.f32 1.0, %v4758
        %v4763 = vsub.f32 1.0, %v4759
        %v4764 = vsub.f32 1.0, %v4760
        %v4765 = vsub.f32 1.0, %v4761
        %v4766 = vmul.f32 %v4682, %v4762
        %v4767 = vmul.f32 %v4683, %v4763
        %v4768 = vmul.f32 %v4684, %v4764
        %v4769 = vmul.f32 %v4685, %v4765
        %v4770 = vadd.f32 %v4766, 1.0
        %v4771 = vadd.f32 %v4767, 1.0
        %v4772 = vadd.f32 %v4768, 1.0
        %v4773 = vadd.f32 %v4769, 1.0
        %v4774 = vmul.f32 %v4670, %v4770
        %v4775 = vmul.f32 %v4671, %v4771
        %v4776 = vmul.f32 %v4672, %v4772
        %v4777 = vmul.f32 %v4673, %v4773
        %v4778 = vld [vmem:[%s11] sm:$0xff]
        %v4779 = vld [vmem:[%s11 + $0x8] sm:$0xff]
        %v4780 = vld [vmem:[%s11 + $0x10] sm:$0xff]
        %v4781 = vld [vmem:[%s11 + $0x18] sm:$0xff]
        %v4782 = vld [vmem:[%s12] sm:$0xff]
        %v4783 = vld [vmem:[%s12 + $0x8] sm:$0xff]
        %v4784 = vld [vmem:[%s12 + $0x10] sm:$0xff]
        %v4785 = vld [vmem:[%s12 + $0x18] sm:$0xff]
        %4787 = vset.pattern.permute.xlu0 0
        %4788 = vperm.xlu0 %4787, %v4782
        %v4789 = vpop.permute.xlu0 %4788
        %4792 = vset.pattern.permute.xlu0 0
        %4793 = vperm.xlu0 %4792, %v4783
        %v4794 = vpop.permute.xlu0 %4793
        %4797 = vset.pattern.permute.xlu0 0
        %4798 = vperm.xlu0 %4797, %v4784
        %v4799 = vpop.permute.xlu0 %4798
        %4802 = vset.pattern.permute.xlu0 0
        %4803 = vperm.xlu0 %4802, %v4785
        %v4804 = vpop.permute.xlu0 %4803
        %v4807 = vsel %vm976, %v4778, 0
        %v4810 = vsel %vm976, %v4779, 0
        %v4813 = vsel %vm976, %v4780, 0
        %v4816 = vsel %vm976, %v4781, 0
        %4818 = vmatprep.subr.mxu0 0.0
        %4819 = vmatpush1.msra.mxu0 %v4774
        %4820 = vmatprep.subr.mxu0 0.0
        %4821 = vmatpush1.msra.mxu0 %v4775
        %4822 = vmatprep.subr.mxu0 0.0
        %4823 = vmatpush1.msra.mxu0 %v4776
        %4824 = vmatprep.subr.mxu0 0.0
        %4825 = vmatpush1.msra.mxu0 %v4777
        %4826 = vmatprep.subr.mxu0 0.0
        %4827 = vmatpush1.msra.mxu0 0.0
        %4828 = vmatprep.subr.mxu0 0.0
        %4829 = vmatpush1.msra.mxu0 0.0
        %4830 = vmatprep.subr.mxu0 0.0
        %4831 = vmatpush1.msra.mxu0 0.0
        %4832 = vmatprep.subr.mxu0 0.0
        %4833 = vmatpush1.msra.mxu0 0.0
        %4834 = vmatprep.subr.mxu0 0.0
        %4835 = vmatpush1.msra.mxu0 0.0
        %4836 = vmatprep.subr.mxu0 0.0
        %4837 = vmatpush1.msra.mxu0 0.0
        %4838 = vmatprep.subr.mxu0 0.0
        %4839 = vmatpush1.msra.mxu0 0.0
        %4840 = vmatprep.subr.mxu0 0.0
        %4841 = vmatpush1.msra.mxu0 0.0
        %4842 = vmatprep.subr.mxu0 0.0
        %4843 = vmatpush1.msra.mxu0 0.0
        %4844 = vmatprep.subr.mxu0 0.0
        %4845 = vmatpush1.msra.mxu0 0.0
        %4846 = vmatprep.subr.mxu0 0.0
        %4847 = vmatpush1.msra.mxu0 0.0
        %4848 = vmatprep.subr.mxu0 0.0
        %4849 = vmatpush1.msra.mxu0 0.0
        %4850 = vmatprep.subr.mxu0 0.0
        %4851 = vmatpush1.msra.mxu0 0.0
        %4852 = vmatprep.subr.mxu0 0.0
        %4853 = vmatpush1.msra.mxu0 0.0
        %4854 = vmatprep.subr.mxu0 0.0
        %4855 = vmatpush1.msra.mxu0 0.0
        %4856 = vmatprep.subr.mxu0 0.0
        %4857 = vmatpush1.msra.mxu0 0.0
        %4858 = vmatprep.subr.mxu0 0.0
        %4859 = vmatpush1.msra.mxu0 0.0
        %4860 = vmatprep.subr.mxu0 0.0
        %4861 = vmatpush1.msra.mxu0 0.0
        %4862 = vmatprep.subr.mxu0 0.0
        %4863 = vmatpush1.msra.mxu0 0.0
        %4864 = vmatprep.subr.mxu0 0.0
        %4865 = vmatpush1.msra.mxu0 0.0
        %4866 = vmatprep.subr.mxu0 0.0
        %4867 = vmatpush1.msra.mxu0 0.0
        %4868 = vmatprep.subr.mxu0 0.0
        %4869 = vmatpush1.msra.mxu0 0.0
        %4870 = vmatprep.subr.mxu0 0.0
        %4871 = vmatpush1.msra.mxu0 0.0
        %4872 = vmatprep.subr.mxu0 0.0
        %4873 = vmatpush1.msra.mxu0 0.0
        %4874 = vmatprep.subr.mxu0 0.0
        %4875 = vmatpush1.msra.mxu0 0.0
        %4876 = vmatprep.subr.mxu0 0.0
        %4877 = vmatpush1.msra.mxu0 0.0
        %4878 = vmatprep.subr.mxu0 0.0
        %4879 = vmatpush1.msra.mxu0 0.0
        %4880 = vmatprep.subr.mxu0 0.0
        %4881 = vmatpush1.msra.mxu0 0.0
        %4882 = vmatprep.mubr.f32.mxu0 0.0
        %4883 = vmatmul.mubr.f32.gmra.mrb[0].mxu0 %v4807
        %v4884 = vpop.f32.mrb[0].mxu0
        %v4885 = vadd.f32 %v4789, %v4884
        %v4886 = vpop.f32.mrb[0].mxu0
        %4887 = vmatprep.mubr.f32.mxu0 0.0
        %4888 = vmatmul.mubr.f32.gmra.mrb[0].mxu0 %v4810
        %v4889 = vpop.f32.mrb[0].mxu0
        %v4890 = vadd.f32 %v4794, %v4889
        %v4891 = vpop.f32.mrb[0].mxu0
        %4892 = vmatprep.mubr.f32.mxu0 0.0
        %4893 = vmatmul.mubr.f32.gmra.mrb[0].mxu0 %v4813
        %v4894 = vpop.f32.mrb[0].mxu0
        %v4895 = vadd.f32 %v4799, %v4894
        %v4896 = vpop.f32.mrb[0].mxu0
        %4897 = vmatprep.mubr.f32.mxu0 0.0
        %4898 = vmatmul.mubr.f32.gmra.mrb[0].mxu0 %v4816
        %v4899 = vpop.f32.mrb[0].mxu0
        %v4900 = vadd.f32 %v4804, %v4899
        %v4901 = vpop.f32.mrb[0].mxu0
        %4902 = vdwg.mxu0
        %v4903 = vmul.f32 %v4885, 0.5
        %v4904 = vmul.f32 %v4890, 0.5
        %v4905 = vmul.f32 %v4895, 0.5
        %v4906 = vmul.f32 %v4900, 0.5
        %v4907 = vmul.f32 %v4885, 0.70710677
        %v4908 = vmul.f32 %v4890, 0.70710677
        %v4909 = vmul.f32 %v4895, 0.70710677
        %v4910 = vmul.f32 %v4900, 0.70710677
        %vm4911 = vcmp.ge.f32.partialorder %v4907, 0.0
        %vm4912 = vcmp.ge.f32.partialorder %v4908, 0.0
        %vm4913 = vcmp.ge.f32.partialorder %v4909, 0.0
        %vm4914 = vcmp.ge.f32.partialorder %v4910, 0.0
        %v4915 = vsel %vm4911, 1.0, -1.0
        %v4916 = vsel %vm4912, 1.0, -1.0
        %v4917 = vsel %vm4913, 1.0, -1.0
        %v4918 = vsel %vm4914, 1.0, -1.0
        %v4919 = vand.u32 2147483647, %v4907
        %v4920 = vand.u32 2147483647, %v4908
        %v4921 = vand.u32 2147483647, %v4909
        %v4922 = vand.u32 2147483647, %v4910
        %v4923 = vmul.f32 %v4919, 0.3275911
        %v4924 = vmul.f32 %v4920, 0.3275911
        %v4925 = vmul.f32 %v4921, 0.3275911
        %v4926 = vmul.f32 %v4922, 0.3275911
        %v4927 = vadd.f32 %v4923, 1.0
        %v4928 = vadd.f32 %v4924, 1.0
        %v4929 = vadd.f32 %v4925, 1.0
        %v4930 = vadd.f32 %v4926, 1.0
        %v4931 = vrcp.pop %v4927
        %v4932 = vmul.f32 1.0, %v4931
        %v4933 = vrcp.pop %v4928
        %v4934 = vmul.f32 1.0, %v4933
        %v4935 = vrcp.pop %v4929
        %v4936 = vmul.f32 1.0, %v4935
        %v4937 = vrcp.pop %v4930
        %v4938 = vmul.f32 1.0, %v4937
        %v4939 = vmul.f32 %v4932, 1.0614054
        %v4940 = vmul.f32 %v4934, 1.0614054
        %v4941 = vmul.f32 %v4936, 1.0614054
        %v4942 = vmul.f32 %v4938, 1.0614054
        %v4943 = vadd.f32 %v4939, -1.4531521
        %v4944 = vadd.f32 %v4940, -1.4531521
        %v4945 = vadd.f32 %v4941, -1.4531521
        %v4946 = vadd.f32 %v4942, -1.4531521
        %v4947 = vmul.f32 %v4943, %v4932
        %v4948 = vmul.f32 %v4944, %v4934
        %v4949 = vmul.f32 %v4945, %v4936
        %v4950 = vmul.f32 %v4946, %v4938
        %v4951 = vadd.f32 %v4947, 1.4214138
        %v4952 = vadd.f32 %v4948, 1.4214138
        %v4953 = vadd.f32 %v4949, 1.4214138
        %v4954 = vadd.f32 %v4950, 1.4214138
        %v4955 = vmul.f32 %v4951, %v4932
        %v4956 = vmul.f32 %v4952, %v4934
        %v4957 = vmul.f32 %v4953, %v4936
        %v4958 = vmul.f32 %v4954, %v4938
        %v4959 = vadd.f32 %v4955, -0.28449672
        %v4960 = vadd.f32 %v4956, -0.28449672
        %v4961 = vadd.f32 %v4957, -0.28449672
        %v4962 = vadd.f32 %v4958, -0.28449672
        %v4963 = vmul.f32 %v4959, %v4932
        %v4964 = vmul.f32 %v4960, %v4934
        %v4965 = vmul.f32 %v4961, %v4936
        %v4966 = vmul.f32 %v4962, %v4938
        %v4967 = vadd.f32 %v4963, 0.2548296
        %v4968 = vadd.f32 %v4964, 0.2548296
        %v4969 = vadd.f32 %v4965, 0.2548296
        %v4970 = vadd.f32 %v4966, 0.2548296
        %v4971 = vmul.f32 %v4967, %v4932
        %v4972 = vmul.f32 %v4968, %v4934
        %v4973 = vmul.f32 %v4969, %v4936
        %v4974 = vmul.f32 %v4970, %v4938
        %v4975 = vsub.f32 0.0, %v4919
        %v4976 = vsub.f32 0.0, %v4920
        %v4977 = vsub.f32 0.0, %v4921
        %v4978 = vsub.f32 0.0, %v4922
        %v4979 = vmul.f32 %v4975, %v4919
        %v4980 = vmul.f32 %v4976, %v4920
        %v4981 = vmul.f32 %v4977, %v4921
        %v4982 = vmul.f32 %v4978, %v4922
        %v4983 = vmul.f32 %v4979, 1.442695
        %v4984 = vpow.pop %v4983
        %v4985 = vmul.f32 %v4980, 1.442695
        %v4986 = vpow.pop %v4985
        %v4987 = vmul.f32 %v4981, 1.442695
        %v4988 = vpow.pop %v4987
        %v4989 = vmul.f32 %v4982, 1.442695
        %v4990 = vpow.pop %v4989
        %v4991 = vmul.f32 %v4971, %v4984
        %v4992 = vmul.f32 %v4972, %v4986
        %v4993 = vmul.f32 %v4973, %v4988
        %v4994 = vmul.f32 %v4974, %v4990
        %v4995 = vsub.f32 1.0, %v4991
        %v4996 = vsub.f32 1.0, %v4992
        %v4997 = vsub.f32 1.0, %v4993
        %v4998 = vsub.f32 1.0, %v4994
        %v4999 = vmul.f32 %v4915, %v4995
        %v5000 = vmul.f32 %v4916, %v4996
        %v5001 = vmul.f32 %v4917, %v4997
        %v5002 = vmul.f32 %v4918, %v4998
        %v5003 = vadd.f32 %v4999, 1.0
        %v5004 = vadd.f32 %v5000, 1.0
        %v5005 = vadd.f32 %v5001, 1.0
        %v5006 = vadd.f32 %v5002, 1.0
        %v5007 = vmul.f32 %v4903, %v5003
        %v5008 = vmul.f32 %v4904, %v5004
        %v5009 = vmul.f32 %v4905, %v5005
        %v5010 = vmul.f32 %v4906, %v5006
        %v5011 = vld [vmem:[%s13] sm:$0xff]
        %v5012 = vld [vmem:[%s14] sm:$0xff]
        %5014 = vset.pattern.permute.xlu0 0
        %5015 = vperm.xlu0 %5014, %v5012
        %v5016 = vpop.permute.xlu0 %5015
        %v5019 = vsel %vm976, %v5011, 0
        %5021 = vmatprep.subr.mxu0 0.0
        %5022 = vmatpush1.msra.mxu0 %v5007
        %5023 = vmatprep.subr.mxu0 0.0
        %5024 = vmatpush1.msra.mxu0 %v5008
        %5025 = vmatprep.subr.mxu0 0.0
        %5026 = vmatpush1.msra.mxu0 %v5009
        %5027 = vmatprep.subr.mxu0 0.0
        %5028 = vmatpush1.msra.mxu0 %v5010
        %5029 = vmatprep.subr.mxu0 0.0
        %5030 = vmatpush1.msra.mxu0 0.0
        %5031 = vmatprep.subr.mxu0 0.0
        %5032 = vmatpush1.msra.mxu0 0.0
        %5033 = vmatprep.subr.mxu0 0.0
        %5034 = vmatpush1.msra.mxu0 0.0
        %5035 = vmatprep.subr.mxu0 0.0
        %5036 = vmatpush1.msra.mxu0 0.0
        %5037 = vmatprep.subr.mxu0 0.0
        %5038 = vmatpush1.msra.mxu0 0.0
        %5039 = vmatprep.subr.mxu0 0.0
        %5040 = vmatpush1.msra.mxu0 0.0
        %5041 = vmatprep.subr.mxu0 0.0
        %5042 = vmatpush1.msra.mxu0 0.0
        %5043 = vmatprep.subr.mxu0 0.0
        %5044 = vmatpush1.msra.mxu0 0.0
        %5045 = vmatprep.subr.mxu0 0.0
        %5046 = vmatpush1.msra.mxu0 0.0
        %5047 = vmatprep.subr.mxu0 0.0
        %5048 = vmatpush1.msra.mxu0 0.0
        %5049 = vmatprep.subr.mxu0 0.0
        %5050 = vmatpush1.msra.mxu0 0.0
        %5051 = vmatprep.subr.mxu0 0.0
        %5052 = vmatpush1.msra.mxu0 0.0
        %5053 = vmatprep.subr.mxu0 0.0
        %5054 = vmatpush1.msra.mxu0 0.0
        %5055 = vmatprep.subr.mxu0 0.0
        %5056 = vmatpush1.msra.mxu0 0.0
        %5057 = vmatprep.subr.mxu0 0.0
        %5058 = vmatpush1.msra.mxu0 0.0
        %5059 = vmatprep.subr.mxu0 0.0
        %5060 = vmatpush1.msra.mxu0 0.0
        %5061 = vmatprep.subr.mxu0 0.0
        %5062 = vmatpush1.msra.mxu0 0.0
        %5063 = vmatprep.subr.mxu0 0.0
        %5064 = vmatpush1.msra.mxu0 0.0
        %5065 = vmatprep.subr.mxu0 0.0
        %5066 = vmatpush1.msra.mxu0 0.0
        %5067 = vmatprep.subr.mxu0 0.0
        %5068 = vmatpush1.msra.mxu0 0.0
        %5069 = vmatprep.subr.mxu0 0.0
        %5070 = vmatpush1.msra.mxu0 0.0
        %5071 = vmatprep.subr.mxu0 0.0
        %5072 = vmatpush1.msra.mxu0 0.0
        %5073 = vmatprep.subr.mxu0 0.0
        %5074 = vmatpush1.msra.mxu0 0.0
        %5075 = vmatprep.subr.mxu0 0.0
        %5076 = vmatpush1.msra.mxu0 0.0
        %5077 = vmatprep.subr.mxu0 0.0
        %5078 = vmatpush1.msra.mxu0 0.0
        %5079 = vmatprep.subr.mxu0 0.0
        %5080 = vmatpush1.msra.mxu0 0.0
        %5081 = vmatprep.subr.mxu0 0.0
        %5082 = vmatpush1.msra.mxu0 0.0
        %5083 = vmatprep.subr.mxu0 0.0
        %5084 = vmatpush1.msra.mxu0 0.0
        %5085 = vmatprep.mubr.f32.mxu0 0.0
        %5086 = vmatmul.mubr.f32.gmra.mrb[0].mxu0 %v5019
        %v5087 = vpop.f32.mrb[0].mxu0
        %v5088 = vadd.f32 %v5016, %v5087
        %v5089 = vpop.f32.mrb[0].mxu0
        %5090 = vdwg.mxu0
        %v5091 = vtanh.pop %v5088
        %v5092 = vmul.f32 %v5091, 4.0
        %v5093 = vadd.f32 %v5092, 0.0
        %v5094 = vmul.f32 %v5093, 0.5
        %v5095 = vmul.f32 %v5094, 1.442695
        %v5096 = vpow.pop %v5095
        %v5097 = vmul.f32 %v5096, 0.25
        %v5098 = vmul.f32 %v5088, 0.0625
        %v5099 = vadd.f32 %v4236, %v5098
        %v5101 = vrot.slane %v4277, 4
        %v5103 = vmul.f32 %v5097, %v5101
        %v5105 = vrot.slane %v5103, 4
        %v5107 = vadd.f32 %v5099, %v5105
        %v5108 = vmul.f32 %v4277, %v4277
        %v5109 = vadd.f32 %v5108, -0.93471164
        %v5111 = vrot.slane %v5093, 4
        %v5113 = vadd.f32 %v5109, %v5111
        %v5114 = vsel %vm1624, %v5113, 0.0
        %v5115 = vrot.slane %v5114, 4
        %v5116 = vadd.f32 %v5114, %v5115
        %v5117 = vrot.slane %v5116, 2
        %v5118 = vadd.f32 %v5116, %v5117
        %v5119 = vrot.slane %v5118, 1
        %v5120 = vadd.f32 %v5118, %v5119
        %v5121 = vmul.f32 %v5120, -0.5
        %s5122 = sld [smem:[#allocation3 + %s4275]]
        %s5123 = sld [smem:[#allocation5 + %s4275]]
        %s5124 = sld [smem:[#allocation7 + %s4275]]
        %v5125 = vstv %s5122
        %v5126 = vmul.f32 %v5107, %v5125
        %v5127 = vsub.f32 %v4236, %v5126
        %v5128 = vstv %s5124
        %v5129 = vmul.f32 %v5127, %v5128
        %v5130 = vmul.f32 %v5129, %v5129
        %v5131 = vadd.f32 %v5130, 1.837877
        %v5132 = vstv %s5123
        %v5133 = vadd.f32 %v5131, %v5132
        %v5134 = vsel %vm1624, %v5133, 0.0
        %v5135 = vrot.slane %v5134, 4
        %v5136 = vadd.f32 %v5134, %v5135
        %v5137 = vrot.slane %v5136, 2
        %v5138 = vadd.f32 %v5136, %v5137
        %v5139 = vrot.slane %v5138, 1
        %v5140 = vadd.f32 %v5138, %v5139
        %v5141 = vmul.f32 %v5140, -0.5
        %s5142 = scalar_lea.vmem %s680, 16
        %5143 = vst.msk [vmem:[%s5142] sm:$0xf] %vm1624, %v5107
        %5144 = vst.msk [vmem:[%s688 + $0x4] sm:$0x1] %vm1659, %v5121
        %5145 = vst.msk [vmem:[%s695 + $0x4] sm:$0x1] %vm1659, %v5141
        %s5146 = sadd.s32 %s712, 5
        %s5147 = scalar_lea.vmem %s666, 20
        %v5148 = vld [vmem:[%s5147] sm:$0xf]
        %v5149 = vld [vmem:[%s7] sm:$0xff]
        %v5150 = vld [vmem:[%s7 + $0x8] sm:$0xff]
        %v5151 = vld [vmem:[%s7 + $0x10] sm:$0xff]
        %v5152 = vld [vmem:[%s7 + $0x18] sm:$0xff]
        %v5153 = vlaneseq
        %v5154 = vshrl.u32 %v5153, 7
        %v5155 = vsub.s32 0, %v5154
        %v5156 = vrot.slane %v5107, %v5155
        %v5157 = vmul.f32 %v721, %v5156
        %v5158 = vmul.f32 %v726, %v5156
        %v5159 = vmul.f32 %v731, %v5156
        %v5160 = vmul.f32 %v736, %v5156
        %5162 = vset.pattern.permute.xlu0 0
        %5163 = vperm.xlu0 %5162, %v5149
        %v5164 = vpop.permute.xlu0 %5163
        %5167 = vset.pattern.permute.xlu0 0
        %5168 = vperm.xlu0 %5167, %v5150
        %v5169 = vpop.permute.xlu0 %5168
        %5172 = vset.pattern.permute.xlu0 0
        %5173 = vperm.xlu0 %5172, %v5151
        %v5174 = vpop.permute.xlu0 %5173
        %5177 = vset.pattern.permute.xlu0 0
        %5178 = vperm.xlu0 %5177, %v5152
        %v5179 = vpop.permute.xlu0 %5178
        %v5181 = vadd.f32 %v5164, %v5157
        %v5182 = vadd.f32 %v5169, %v5158
        %v5183 = vadd.f32 %v5174, %v5159
        %v5184 = vadd.f32 %v5179, %v5160
        %v5185 = vlaneseq
        %v5186 = vshrl.u32 %v5185, 7
        %v5187 = vsub.s32 1, %v5186
        %v5188 = vrot.slane %v5107, %v5187
        %v5189 = vmul.f32 %v772, %v5188
        %v5190 = vmul.f32 %v776, %v5188
        %v5191 = vmul.f32 %v780, %v5188
        %v5192 = vmul.f32 %v784, %v5188
        %v5193 = vadd.f32 %v5181, %v5189
        %v5194 = vadd.f32 %v5182, %v5190
        %v5195 = vadd.f32 %v5183, %v5191
        %v5196 = vadd.f32 %v5184, %v5192
        %v5197 = vlaneseq
        %v5198 = vshrl.u32 %v5197, 7
        %v5199 = vsub.s32 2, %v5198
        %v5200 = vrot.slane %v5107, %v5199
        %v5201 = vmul.f32 %v800, %v5200
        %v5202 = vmul.f32 %v804, %v5200
        %v5203 = vmul.f32 %v808, %v5200
        %v5204 = vmul.f32 %v812, %v5200
        %v5205 = vadd.f32 %v5193, %v5201
        %v5206 = vadd.f32 %v5194, %v5202
        %v5207 = vadd.f32 %v5195, %v5203
        %v5208 = vadd.f32 %v5196, %v5204
        %v5209 = vlaneseq
        %v5210 = vshrl.u32 %v5209, 7
        %v5211 = vsub.s32 3, %v5210
        %v5212 = vrot.slane %v5107, %v5211
        %v5213 = vmul.f32 %v828, %v5212
        %v5214 = vmul.f32 %v832, %v5212
        %v5215 = vmul.f32 %v836, %v5212
        %v5216 = vmul.f32 %v840, %v5212
        %v5217 = vadd.f32 %v5205, %v5213
        %v5218 = vadd.f32 %v5206, %v5214
        %v5219 = vadd.f32 %v5207, %v5215
        %v5220 = vadd.f32 %v5208, %v5216
        %v5221 = vmul.f32 %v5217, 0.5
        %v5222 = vmul.f32 %v5218, 0.5
        %v5223 = vmul.f32 %v5219, 0.5
        %v5224 = vmul.f32 %v5220, 0.5
        %v5225 = vmul.f32 %v5217, 0.70710677
        %v5226 = vmul.f32 %v5218, 0.70710677
        %v5227 = vmul.f32 %v5219, 0.70710677
        %v5228 = vmul.f32 %v5220, 0.70710677
        %vm5229 = vcmp.ge.f32.partialorder %v5225, 0.0
        %vm5230 = vcmp.ge.f32.partialorder %v5226, 0.0
        %vm5231 = vcmp.ge.f32.partialorder %v5227, 0.0
        %vm5232 = vcmp.ge.f32.partialorder %v5228, 0.0
        %v5233 = vsel %vm5229, 1.0, -1.0
        %v5234 = vsel %vm5230, 1.0, -1.0
        %v5235 = vsel %vm5231, 1.0, -1.0
        %v5236 = vsel %vm5232, 1.0, -1.0
        %v5237 = vand.u32 2147483647, %v5225
        %v5238 = vand.u32 2147483647, %v5226
        %v5239 = vand.u32 2147483647, %v5227
        %v5240 = vand.u32 2147483647, %v5228
        %v5241 = vmul.f32 %v5237, 0.3275911
        %v5242 = vmul.f32 %v5238, 0.3275911
        %v5243 = vmul.f32 %v5239, 0.3275911
        %v5244 = vmul.f32 %v5240, 0.3275911
        %v5245 = vadd.f32 %v5241, 1.0
        %v5246 = vadd.f32 %v5242, 1.0
        %v5247 = vadd.f32 %v5243, 1.0
        %v5248 = vadd.f32 %v5244, 1.0
        %v5249 = vrcp.pop %v5245
        %v5250 = vmul.f32 1.0, %v5249
        %v5251 = vrcp.pop %v5246
        %v5252 = vmul.f32 1.0, %v5251
        %v5253 = vrcp.pop %v5247
        %v5254 = vmul.f32 1.0, %v5253
        %v5255 = vrcp.pop %v5248
        %v5256 = vmul.f32 1.0, %v5255
        %v5257 = vmul.f32 %v5250, 1.0614054
        %v5258 = vmul.f32 %v5252, 1.0614054
        %v5259 = vmul.f32 %v5254, 1.0614054
        %v5260 = vmul.f32 %v5256, 1.0614054
        %v5261 = vadd.f32 %v5257, -1.4531521
        %v5262 = vadd.f32 %v5258, -1.4531521
        %v5263 = vadd.f32 %v5259, -1.4531521
        %v5264 = vadd.f32 %v5260, -1.4531521
        %v5265 = vmul.f32 %v5261, %v5250
        %v5266 = vmul.f32 %v5262, %v5252
        %v5267 = vmul.f32 %v5263, %v5254
        %v5268 = vmul.f32 %v5264, %v5256
        %v5269 = vadd.f32 %v5265, 1.4214138
        %v5270 = vadd.f32 %v5266, 1.4214138
        %v5271 = vadd.f32 %v5267, 1.4214138
        %v5272 = vadd.f32 %v5268, 1.4214138
        %v5273 = vmul.f32 %v5269, %v5250
        %v5274 = vmul.f32 %v5270, %v5252
        %v5275 = vmul.f32 %v5271, %v5254
        %v5276 = vmul.f32 %v5272, %v5256
        %v5277 = vadd.f32 %v5273, -0.28449672
        %v5278 = vadd.f32 %v5274, -0.28449672
        %v5279 = vadd.f32 %v5275, -0.28449672
        %v5280 = vadd.f32 %v5276, -0.28449672
        %v5281 = vmul.f32 %v5277, %v5250
        %v5282 = vmul.f32 %v5278, %v5252
        %v5283 = vmul.f32 %v5279, %v5254
        %v5284 = vmul.f32 %v5280, %v5256
        %v5285 = vadd.f32 %v5281, 0.2548296
        %v5286 = vadd.f32 %v5282, 0.2548296
        %v5287 = vadd.f32 %v5283, 0.2548296
        %v5288 = vadd.f32 %v5284, 0.2548296
        %v5289 = vmul.f32 %v5285, %v5250
        %v5290 = vmul.f32 %v5286, %v5252
        %v5291 = vmul.f32 %v5287, %v5254
        %v5292 = vmul.f32 %v5288, %v5256
        %v5293 = vsub.f32 0.0, %v5237
        %v5294 = vsub.f32 0.0, %v5238
        %v5295 = vsub.f32 0.0, %v5239
        %v5296 = vsub.f32 0.0, %v5240
        %v5297 = vmul.f32 %v5293, %v5237
        %v5298 = vmul.f32 %v5294, %v5238
        %v5299 = vmul.f32 %v5295, %v5239
        %v5300 = vmul.f32 %v5296, %v5240
        %v5301 = vmul.f32 %v5297, 1.442695
        %v5302 = vpow.pop %v5301
        %v5303 = vmul.f32 %v5298, 1.442695
        %v5304 = vpow.pop %v5303
        %v5305 = vmul.f32 %v5299, 1.442695
        %v5306 = vpow.pop %v5305
        %v5307 = vmul.f32 %v5300, 1.442695
        %v5308 = vpow.pop %v5307
        %v5309 = vmul.f32 %v5289, %v5302
        %v5310 = vmul.f32 %v5290, %v5304
        %v5311 = vmul.f32 %v5291, %v5306
        %v5312 = vmul.f32 %v5292, %v5308
        %v5313 = vsub.f32 1.0, %v5309
        %v5314 = vsub.f32 1.0, %v5310
        %v5315 = vsub.f32 1.0, %v5311
        %v5316 = vsub.f32 1.0, %v5312
        %v5317 = vmul.f32 %v5233, %v5313
        %v5318 = vmul.f32 %v5234, %v5314
        %v5319 = vmul.f32 %v5235, %v5315
        %v5320 = vmul.f32 %v5236, %v5316
        %v5321 = vadd.f32 %v5317, 1.0
        %v5322 = vadd.f32 %v5318, 1.0
        %v5323 = vadd.f32 %v5319, 1.0
        %v5324 = vadd.f32 %v5320, 1.0
        %v5325 = vmul.f32 %v5221, %v5321
        %v5326 = vmul.f32 %v5222, %v5322
        %v5327 = vmul.f32 %v5223, %v5323
        %v5328 = vmul.f32 %v5224, %v5324
        %v5329 = vld [vmem:[%s8] sm:$0xff]
        %v5330 = vld [vmem:[%s8 + $0x8] sm:$0xff]
        %v5331 = vld [vmem:[%s9] sm:$0xff]
        %v5332 = vld [vmem:[%s9 + $0x8] sm:$0xff]
        %5334 = vset.pattern.permute.xlu0 0
        %5335 = vperm.xlu0 %5334, %v5331
        %v5336 = vpop.permute.xlu0 %5335
        %5339 = vset.pattern.permute.xlu0 0
        %5340 = vperm.xlu0 %5339, %v5332
        %v5341 = vpop.permute.xlu0 %5340
        %v5344 = vsel %vm976, %v5329, 0
        %v5347 = vsel %vm976, %v5330, 0
        %5349 = vmatprep.subr.mxu0 0.0
        %5350 = vmatpush1.msra.mxu0 %v5325
        %5351 = vmatprep.subr.mxu0 0.0
        %5352 = vmatpush1.msra.mxu0 %v5326
        %5353 = vmatprep.subr.mxu0 0.0
        %5354 = vmatpush1.msra.mxu0 %v5327
        %5355 = vmatprep.subr.mxu0 0.0
        %5356 = vmatpush1.msra.mxu0 %v5328
        %5357 = vmatprep.subr.mxu0 0.0
        %5358 = vmatpush1.msra.mxu0 0.0
        %5359 = vmatprep.subr.mxu0 0.0
        %5360 = vmatpush1.msra.mxu0 0.0
        %5361 = vmatprep.subr.mxu0 0.0
        %5362 = vmatpush1.msra.mxu0 0.0
        %5363 = vmatprep.subr.mxu0 0.0
        %5364 = vmatpush1.msra.mxu0 0.0
        %5365 = vmatprep.subr.mxu0 0.0
        %5366 = vmatpush1.msra.mxu0 0.0
        %5367 = vmatprep.subr.mxu0 0.0
        %5368 = vmatpush1.msra.mxu0 0.0
        %5369 = vmatprep.subr.mxu0 0.0
        %5370 = vmatpush1.msra.mxu0 0.0
        %5371 = vmatprep.subr.mxu0 0.0
        %5372 = vmatpush1.msra.mxu0 0.0
        %5373 = vmatprep.subr.mxu0 0.0
        %5374 = vmatpush1.msra.mxu0 0.0
        %5375 = vmatprep.subr.mxu0 0.0
        %5376 = vmatpush1.msra.mxu0 0.0
        %5377 = vmatprep.subr.mxu0 0.0
        %5378 = vmatpush1.msra.mxu0 0.0
        %5379 = vmatprep.subr.mxu0 0.0
        %5380 = vmatpush1.msra.mxu0 0.0
        %5381 = vmatprep.subr.mxu0 0.0
        %5382 = vmatpush1.msra.mxu0 0.0
        %5383 = vmatprep.subr.mxu0 0.0
        %5384 = vmatpush1.msra.mxu0 0.0
        %5385 = vmatprep.subr.mxu0 0.0
        %5386 = vmatpush1.msra.mxu0 0.0
        %5387 = vmatprep.subr.mxu0 0.0
        %5388 = vmatpush1.msra.mxu0 0.0
        %5389 = vmatprep.subr.mxu0 0.0
        %5390 = vmatpush1.msra.mxu0 0.0
        %5391 = vmatprep.subr.mxu0 0.0
        %5392 = vmatpush1.msra.mxu0 0.0
        %5393 = vmatprep.subr.mxu0 0.0
        %5394 = vmatpush1.msra.mxu0 0.0
        %5395 = vmatprep.subr.mxu0 0.0
        %5396 = vmatpush1.msra.mxu0 0.0
        %5397 = vmatprep.subr.mxu0 0.0
        %5398 = vmatpush1.msra.mxu0 0.0
        %5399 = vmatprep.subr.mxu0 0.0
        %5400 = vmatpush1.msra.mxu0 0.0
        %5401 = vmatprep.subr.mxu0 0.0
        %5402 = vmatpush1.msra.mxu0 0.0
        %5403 = vmatprep.subr.mxu0 0.0
        %5404 = vmatpush1.msra.mxu0 0.0
        %5405 = vmatprep.subr.mxu0 0.0
        %5406 = vmatpush1.msra.mxu0 0.0
        %5407 = vmatprep.subr.mxu0 0.0
        %5408 = vmatpush1.msra.mxu0 0.0
        %5409 = vmatprep.subr.mxu0 0.0
        %5410 = vmatpush1.msra.mxu0 0.0
        %5411 = vmatprep.subr.mxu0 0.0
        %5412 = vmatpush1.msra.mxu0 0.0
        %5413 = vmatprep.mubr.f32.mxu0 0.0
        %5414 = vmatmul.mubr.f32.gmra.mrb[0].mxu0 %v5344
        %v5415 = vpop.f32.mrb[0].mxu0
        %v5416 = vadd.f32 %v5336, %v5415
        %v5417 = vpop.f32.mrb[0].mxu0
        %5418 = vmatprep.mubr.f32.mxu0 0.0
        %5419 = vmatmul.mubr.f32.gmra.mrb[0].mxu0 %v5347
        %v5420 = vpop.f32.mrb[0].mxu0
        %v5421 = vadd.f32 %v5341, %v5420
        %v5422 = vpop.f32.mrb[0].mxu0
        %5423 = vdwg.mxu0
        %v5424 = vld [vmem:[%s10] sm:$0xff]
        %v5425 = vld [vmem:[%s10 + $0x8] sm:$0xff]
        %v5426 = vld [vmem:[%s10 + $0x10] sm:$0xff]
        %v5427 = vld [vmem:[%s10 + $0x18] sm:$0xff]
        %5428 = vset.pattern.permute.xlu0 5
        %5429 = vperm.xlu0 %5428, %v703
        %v5430 = vpop.permute.xlu0 %5429
        %5432 = vset.pattern.permute.xlu0 5
        %5433 = vperm.xlu0 %5432, %v704
        %v5434 = vpop.permute.xlu0 %5433
        %5436 = vset.pattern.permute.xlu0 5
        %5437 = vperm.xlu0 %5436, %v705
        %v5438 = vpop.permute.xlu0 %5437
        %5440 = vset.pattern.permute.xlu0 5
        %5441 = vperm.xlu0 %5440, %v706
        %v5442 = vpop.permute.xlu0 %5441
        %v5445 = vsel %vm1082, %v5424, 0
        %v5448 = vsel %vm1082, %v5425, 0
        %v5451 = vsel %vm1082, %v5426, 0
        %v5454 = vsel %vm1082, %v5427, 0
        %5456 = vmatprep.subr.mxu0 0.0
        %5457 = vmatpush1.msra.mxu0 %v5416
        %5458 = vmatprep.subr.mxu0 0.0
        %5459 = vmatpush1.msra.mxu0 %v5421
        %5460 = vmatprep.subr.mxu0 0.0
        %5461 = vmatpush1.msra.mxu0 0.0
        %5462 = vmatprep.subr.mxu0 0.0
        %5463 = vmatpush1.msra.mxu0 0.0
        %5464 = vmatprep.subr.mxu0 0.0
        %5465 = vmatpush1.msra.mxu0 0.0
        %5466 = vmatprep.subr.mxu0 0.0
        %5467 = vmatpush1.msra.mxu0 0.0
        %5468 = vmatprep.subr.mxu0 0.0
        %5469 = vmatpush1.msra.mxu0 0.0
        %5470 = vmatprep.subr.mxu0 0.0
        %5471 = vmatpush1.msra.mxu0 0.0
        %5472 = vmatprep.subr.mxu0 0.0
        %5473 = vmatpush1.msra.mxu0 0.0
        %5474 = vmatprep.subr.mxu0 0.0
        %5475 = vmatpush1.msra.mxu0 0.0
        %5476 = vmatprep.subr.mxu0 0.0
        %5477 = vmatpush1.msra.mxu0 0.0
        %5478 = vmatprep.subr.mxu0 0.0
        %5479 = vmatpush1.msra.mxu0 0.0
        %5480 = vmatprep.subr.mxu0 0.0
        %5481 = vmatpush1.msra.mxu0 0.0
        %5482 = vmatprep.subr.mxu0 0.0
        %5483 = vmatpush1.msra.mxu0 0.0
        %5484 = vmatprep.subr.mxu0 0.0
        %5485 = vmatpush1.msra.mxu0 0.0
        %5486 = vmatprep.subr.mxu0 0.0
        %5487 = vmatpush1.msra.mxu0 0.0
        %5488 = vmatprep.subr.mxu0 0.0
        %5489 = vmatpush1.msra.mxu0 0.0
        %5490 = vmatprep.subr.mxu0 0.0
        %5491 = vmatpush1.msra.mxu0 0.0
        %5492 = vmatprep.subr.mxu0 0.0
        %5493 = vmatpush1.msra.mxu0 0.0
        %5494 = vmatprep.subr.mxu0 0.0
        %5495 = vmatpush1.msra.mxu0 0.0
        %5496 = vmatprep.subr.mxu0 0.0
        %5497 = vmatpush1.msra.mxu0 0.0
        %5498 = vmatprep.subr.mxu0 0.0
        %5499 = vmatpush1.msra.mxu0 0.0
        %5500 = vmatprep.subr.mxu0 0.0
        %5501 = vmatpush1.msra.mxu0 0.0
        %5502 = vmatprep.subr.mxu0 0.0
        %5503 = vmatpush1.msra.mxu0 0.0
        %5504 = vmatprep.subr.mxu0 0.0
        %5505 = vmatpush1.msra.mxu0 0.0
        %5506 = vmatprep.subr.mxu0 0.0
        %5507 = vmatpush1.msra.mxu0 0.0
        %5508 = vmatprep.subr.mxu0 0.0
        %5509 = vmatpush1.msra.mxu0 0.0
        %5510 = vmatprep.subr.mxu0 0.0
        %5511 = vmatpush1.msra.mxu0 0.0
        %5512 = vmatprep.subr.mxu0 0.0
        %5513 = vmatpush1.msra.mxu0 0.0
        %5514 = vmatprep.subr.mxu0 0.0
        %5515 = vmatpush1.msra.mxu0 0.0
        %5516 = vmatprep.subr.mxu0 0.0
        %5517 = vmatpush1.msra.mxu0 0.0
        %5518 = vmatprep.subr.mxu0 0.0
        %5519 = vmatpush1.msra.mxu0 0.0
        %5520 = vmatprep.mubr.f32.mxu0 0.0
        %5521 = vmatmul.mubr.f32.gmra.mrb[0].mxu0 %v5445
        %v5522 = vpop.f32.mrb[0].mxu0
        %v5523 = vadd.f32 %v5430, %v5522
        %v5524 = vpop.f32.mrb[0].mxu0
        %5525 = vmatprep.mubr.f32.mxu0 0.0
        %5526 = vmatmul.mubr.f32.gmra.mrb[0].mxu0 %v5448
        %v5527 = vpop.f32.mrb[0].mxu0
        %v5528 = vadd.f32 %v5434, %v5527
        %v5529 = vpop.f32.mrb[0].mxu0
        %5530 = vmatprep.mubr.f32.mxu0 0.0
        %5531 = vmatmul.mubr.f32.gmra.mrb[0].mxu0 %v5451
        %v5532 = vpop.f32.mrb[0].mxu0
        %v5533 = vadd.f32 %v5438, %v5532
        %v5534 = vpop.f32.mrb[0].mxu0
        %5535 = vmatprep.mubr.f32.mxu0 0.0
        %5536 = vmatmul.mubr.f32.gmra.mrb[0].mxu0 %v5454
        %v5537 = vpop.f32.mrb[0].mxu0
        %v5538 = vadd.f32 %v5442, %v5537
        %v5539 = vpop.f32.mrb[0].mxu0
        %5540 = vdwg.mxu0
        %v5541 = vmul.f32 %v5523, 0.5
        %v5542 = vmul.f32 %v5528, 0.5
        %v5543 = vmul.f32 %v5533, 0.5
        %v5544 = vmul.f32 %v5538, 0.5
        %v5545 = vmul.f32 %v5523, 0.70710677
        %v5546 = vmul.f32 %v5528, 0.70710677
        %v5547 = vmul.f32 %v5533, 0.70710677
        %v5548 = vmul.f32 %v5538, 0.70710677
        %vm5549 = vcmp.ge.f32.partialorder %v5545, 0.0
        %vm5550 = vcmp.ge.f32.partialorder %v5546, 0.0
        %vm5551 = vcmp.ge.f32.partialorder %v5547, 0.0
        %vm5552 = vcmp.ge.f32.partialorder %v5548, 0.0
        %v5553 = vsel %vm5549, 1.0, -1.0
        %v5554 = vsel %vm5550, 1.0, -1.0
        %v5555 = vsel %vm5551, 1.0, -1.0
        %v5556 = vsel %vm5552, 1.0, -1.0
        %v5557 = vand.u32 2147483647, %v5545
        %v5558 = vand.u32 2147483647, %v5546
        %v5559 = vand.u32 2147483647, %v5547
        %v5560 = vand.u32 2147483647, %v5548
        %v5561 = vmul.f32 %v5557, 0.3275911
        %v5562 = vmul.f32 %v5558, 0.3275911
        %v5563 = vmul.f32 %v5559, 0.3275911
        %v5564 = vmul.f32 %v5560, 0.3275911
        %v5565 = vadd.f32 %v5561, 1.0
        %v5566 = vadd.f32 %v5562, 1.0
        %v5567 = vadd.f32 %v5563, 1.0
        %v5568 = vadd.f32 %v5564, 1.0
        %v5569 = vrcp.pop %v5565
        %v5570 = vmul.f32 1.0, %v5569
        %v5571 = vrcp.pop %v5566
        %v5572 = vmul.f32 1.0, %v5571
        %v5573 = vrcp.pop %v5567
        %v5574 = vmul.f32 1.0, %v5573
        %v5575 = vrcp.pop %v5568
        %v5576 = vmul.f32 1.0, %v5575
        %v5577 = vmul.f32 %v5570, 1.0614054
        %v5578 = vmul.f32 %v5572, 1.0614054
        %v5579 = vmul.f32 %v5574, 1.0614054
        %v5580 = vmul.f32 %v5576, 1.0614054
        %v5581 = vadd.f32 %v5577, -1.4531521
        %v5582 = vadd.f32 %v5578, -1.4531521
        %v5583 = vadd.f32 %v5579, -1.4531521
        %v5584 = vadd.f32 %v5580, -1.4531521
        %v5585 = vmul.f32 %v5581, %v5570
        %v5586 = vmul.f32 %v5582, %v5572
        %v5587 = vmul.f32 %v5583, %v5574
        %v5588 = vmul.f32 %v5584, %v5576
        %v5589 = vadd.f32 %v5585, 1.4214138
        %v5590 = vadd.f32 %v5586, 1.4214138
        %v5591 = vadd.f32 %v5587, 1.4214138
        %v5592 = vadd.f32 %v5588, 1.4214138
        %v5593 = vmul.f32 %v5589, %v5570
        %v5594 = vmul.f32 %v5590, %v5572
        %v5595 = vmul.f32 %v5591, %v5574
        %v5596 = vmul.f32 %v5592, %v5576
        %v5597 = vadd.f32 %v5593, -0.28449672
        %v5598 = vadd.f32 %v5594, -0.28449672
        %v5599 = vadd.f32 %v5595, -0.28449672
        %v5600 = vadd.f32 %v5596, -0.28449672
        %v5601 = vmul.f32 %v5597, %v5570
        %v5602 = vmul.f32 %v5598, %v5572
        %v5603 = vmul.f32 %v5599, %v5574
        %v5604 = vmul.f32 %v5600, %v5576
        %v5605 = vadd.f32 %v5601, 0.2548296
        %v5606 = vadd.f32 %v5602, 0.2548296
        %v5607 = vadd.f32 %v5603, 0.2548296
        %v5608 = vadd.f32 %v5604, 0.2548296
        %v5609 = vmul.f32 %v5605, %v5570
        %v5610 = vmul.f32 %v5606, %v5572
        %v5611 = vmul.f32 %v5607, %v5574
        %v5612 = vmul.f32 %v5608, %v5576
        %v5613 = vsub.f32 0.0, %v5557
        %v5614 = vsub.f32 0.0, %v5558
        %v5615 = vsub.f32 0.0, %v5559
        %v5616 = vsub.f32 0.0, %v5560
        %v5617 = vmul.f32 %v5613, %v5557
        %v5618 = vmul.f32 %v5614, %v5558
        %v5619 = vmul.f32 %v5615, %v5559
        %v5620 = vmul.f32 %v5616, %v5560
        %v5621 = vmul.f32 %v5617, 1.442695
        %v5622 = vpow.pop %v5621
        %v5623 = vmul.f32 %v5618, 1.442695
        %v5624 = vpow.pop %v5623
        %v5625 = vmul.f32 %v5619, 1.442695
        %v5626 = vpow.pop %v5625
        %v5627 = vmul.f32 %v5620, 1.442695
        %v5628 = vpow.pop %v5627
        %v5629 = vmul.f32 %v5609, %v5622
        %v5630 = vmul.f32 %v5610, %v5624
        %v5631 = vmul.f32 %v5611, %v5626
        %v5632 = vmul.f32 %v5612, %v5628
        %v5633 = vsub.f32 1.0, %v5629
        %v5634 = vsub.f32 1.0, %v5630
        %v5635 = vsub.f32 1.0, %v5631
        %v5636 = vsub.f32 1.0, %v5632
        %v5637 = vmul.f32 %v5553, %v5633
        %v5638 = vmul.f32 %v5554, %v5634
        %v5639 = vmul.f32 %v5555, %v5635
        %v5640 = vmul.f32 %v5556, %v5636
        %v5641 = vadd.f32 %v5637, 1.0
        %v5642 = vadd.f32 %v5638, 1.0
        %v5643 = vadd.f32 %v5639, 1.0
        %v5644 = vadd.f32 %v5640, 1.0
        %v5645 = vmul.f32 %v5541, %v5641
        %v5646 = vmul.f32 %v5542, %v5642
        %v5647 = vmul.f32 %v5543, %v5643
        %v5648 = vmul.f32 %v5544, %v5644
        %v5649 = vld [vmem:[%s11] sm:$0xff]
        %v5650 = vld [vmem:[%s11 + $0x8] sm:$0xff]
        %v5651 = vld [vmem:[%s11 + $0x10] sm:$0xff]
        %v5652 = vld [vmem:[%s11 + $0x18] sm:$0xff]
        %v5653 = vld [vmem:[%s12] sm:$0xff]
        %v5654 = vld [vmem:[%s12 + $0x8] sm:$0xff]
        %v5655 = vld [vmem:[%s12 + $0x10] sm:$0xff]
        %v5656 = vld [vmem:[%s12 + $0x18] sm:$0xff]
        %5658 = vset.pattern.permute.xlu0 0
        %5659 = vperm.xlu0 %5658, %v5653
        %v5660 = vpop.permute.xlu0 %5659
        %5663 = vset.pattern.permute.xlu0 0
        %5664 = vperm.xlu0 %5663, %v5654
        %v5665 = vpop.permute.xlu0 %5664
        %5668 = vset.pattern.permute.xlu0 0
        %5669 = vperm.xlu0 %5668, %v5655
        %v5670 = vpop.permute.xlu0 %5669
        %5673 = vset.pattern.permute.xlu0 0
        %5674 = vperm.xlu0 %5673, %v5656
        %v5675 = vpop.permute.xlu0 %5674
        %v5678 = vsel %vm976, %v5649, 0
        %v5681 = vsel %vm976, %v5650, 0
        %v5684 = vsel %vm976, %v5651, 0
        %v5687 = vsel %vm976, %v5652, 0
        %5689 = vmatprep.subr.mxu0 0.0
        %5690 = vmatpush1.msra.mxu0 %v5645
        %5691 = vmatprep.subr.mxu0 0.0
        %5692 = vmatpush1.msra.mxu0 %v5646
        %5693 = vmatprep.subr.mxu0 0.0
        %5694 = vmatpush1.msra.mxu0 %v5647
        %5695 = vmatprep.subr.mxu0 0.0
        %5696 = vmatpush1.msra.mxu0 %v5648
        %5697 = vmatprep.subr.mxu0 0.0
        %5698 = vmatpush1.msra.mxu0 0.0
        %5699 = vmatprep.subr.mxu0 0.0
        %5700 = vmatpush1.msra.mxu0 0.0
        %5701 = vmatprep.subr.mxu0 0.0
        %5702 = vmatpush1.msra.mxu0 0.0
        %5703 = vmatprep.subr.mxu0 0.0
        %5704 = vmatpush1.msra.mxu0 0.0
        %5705 = vmatprep.subr.mxu0 0.0
        %5706 = vmatpush1.msra.mxu0 0.0
        %5707 = vmatprep.subr.mxu0 0.0
        %5708 = vmatpush1.msra.mxu0 0.0
        %5709 = vmatprep.subr.mxu0 0.0
        %5710 = vmatpush1.msra.mxu0 0.0
        %5711 = vmatprep.subr.mxu0 0.0
        %5712 = vmatpush1.msra.mxu0 0.0
        %5713 = vmatprep.subr.mxu0 0.0
        %5714 = vmatpush1.msra.mxu0 0.0
        %5715 = vmatprep.subr.mxu0 0.0
        %5716 = vmatpush1.msra.mxu0 0.0
        %5717 = vmatprep.subr.mxu0 0.0
        %5718 = vmatpush1.msra.mxu0 0.0
        %5719 = vmatprep.subr.mxu0 0.0
        %5720 = vmatpush1.msra.mxu0 0.0
        %5721 = vmatprep.subr.mxu0 0.0
        %5722 = vmatpush1.msra.mxu0 0.0
        %5723 = vmatprep.subr.mxu0 0.0
        %5724 = vmatpush1.msra.mxu0 0.0
        %5725 = vmatprep.subr.mxu0 0.0
        %5726 = vmatpush1.msra.mxu0 0.0
        %5727 = vmatprep.subr.mxu0 0.0
        %5728 = vmatpush1.msra.mxu0 0.0
        %5729 = vmatprep.subr.mxu0 0.0
        %5730 = vmatpush1.msra.mxu0 0.0
        %5731 = vmatprep.subr.mxu0 0.0
        %5732 = vmatpush1.msra.mxu0 0.0
        %5733 = vmatprep.subr.mxu0 0.0
        %5734 = vmatpush1.msra.mxu0 0.0
        %5735 = vmatprep.subr.mxu0 0.0
        %5736 = vmatpush1.msra.mxu0 0.0
        %5737 = vmatprep.subr.mxu0 0.0
        %5738 = vmatpush1.msra.mxu0 0.0
        %5739 = vmatprep.subr.mxu0 0.0
        %5740 = vmatpush1.msra.mxu0 0.0
        %5741 = vmatprep.subr.mxu0 0.0
        %5742 = vmatpush1.msra.mxu0 0.0
        %5743 = vmatprep.subr.mxu0 0.0
        %5744 = vmatpush1.msra.mxu0 0.0
        %5745 = vmatprep.subr.mxu0 0.0
        %5746 = vmatpush1.msra.mxu0 0.0
        %5747 = vmatprep.subr.mxu0 0.0
        %5748 = vmatpush1.msra.mxu0 0.0
        %5749 = vmatprep.subr.mxu0 0.0
        %5750 = vmatpush1.msra.mxu0 0.0
        %5751 = vmatprep.subr.mxu0 0.0
        %5752 = vmatpush1.msra.mxu0 0.0
        %5753 = vmatprep.mubr.f32.mxu0 0.0
        %5754 = vmatmul.mubr.f32.gmra.mrb[0].mxu0 %v5678
        %v5755 = vpop.f32.mrb[0].mxu0
        %v5756 = vadd.f32 %v5660, %v5755
        %v5757 = vpop.f32.mrb[0].mxu0
        %5758 = vmatprep.mubr.f32.mxu0 0.0
        %5759 = vmatmul.mubr.f32.gmra.mrb[0].mxu0 %v5681
        %v5760 = vpop.f32.mrb[0].mxu0
        %v5761 = vadd.f32 %v5665, %v5760
        %v5762 = vpop.f32.mrb[0].mxu0
        %5763 = vmatprep.mubr.f32.mxu0 0.0
        %5764 = vmatmul.mubr.f32.gmra.mrb[0].mxu0 %v5684
        %v5765 = vpop.f32.mrb[0].mxu0
        %v5766 = vadd.f32 %v5670, %v5765
        %v5767 = vpop.f32.mrb[0].mxu0
        %5768 = vmatprep.mubr.f32.mxu0 0.0
        %5769 = vmatmul.mubr.f32.gmra.mrb[0].mxu0 %v5687
        %v5770 = vpop.f32.mrb[0].mxu0
        %v5771 = vadd.f32 %v5675, %v5770
        %v5772 = vpop.f32.mrb[0].mxu0
        %5773 = vdwg.mxu0
        %v5774 = vmul.f32 %v5756, 0.5
        %v5775 = vmul.f32 %v5761, 0.5
        %v5776 = vmul.f32 %v5766, 0.5
        %v5777 = vmul.f32 %v5771, 0.5
        %v5778 = vmul.f32 %v5756, 0.70710677
        %v5779 = vmul.f32 %v5761, 0.70710677
        %v5780 = vmul.f32 %v5766, 0.70710677
        %v5781 = vmul.f32 %v5771, 0.70710677
        %vm5782 = vcmp.ge.f32.partialorder %v5778, 0.0
        %vm5783 = vcmp.ge.f32.partialorder %v5779, 0.0
        %vm5784 = vcmp.ge.f32.partialorder %v5780, 0.0
        %vm5785 = vcmp.ge.f32.partialorder %v5781, 0.0
        %v5786 = vsel %vm5782, 1.0, -1.0
        %v5787 = vsel %vm5783, 1.0, -1.0
        %v5788 = vsel %vm5784, 1.0, -1.0
        %v5789 = vsel %vm5785, 1.0, -1.0
        %v5790 = vand.u32 2147483647, %v5778
        %v5791 = vand.u32 2147483647, %v5779
        %v5792 = vand.u32 2147483647, %v5780
        %v5793 = vand.u32 2147483647, %v5781
        %v5794 = vmul.f32 %v5790, 0.3275911
        %v5795 = vmul.f32 %v5791, 0.3275911
        %v5796 = vmul.f32 %v5792, 0.3275911
        %v5797 = vmul.f32 %v5793, 0.3275911
        %v5798 = vadd.f32 %v5794, 1.0
        %v5799 = vadd.f32 %v5795, 1.0
        %v5800 = vadd.f32 %v5796, 1.0
        %v5801 = vadd.f32 %v5797, 1.0
        %v5802 = vrcp.pop %v5798
        %v5803 = vmul.f32 1.0, %v5802
        %v5804 = vrcp.pop %v5799
        %v5805 = vmul.f32 1.0, %v5804
        %v5806 = vrcp.pop %v5800
        %v5807 = vmul.f32 1.0, %v5806
        %v5808 = vrcp.pop %v5801
        %v5809 = vmul.f32 1.0, %v5808
        %v5810 = vmul.f32 %v5803, 1.0614054
        %v5811 = vmul.f32 %v5805, 1.0614054
        %v5812 = vmul.f32 %v5807, 1.0614054
        %v5813 = vmul.f32 %v5809, 1.0614054
        %v5814 = vadd.f32 %v5810, -1.4531521
        %v5815 = vadd.f32 %v5811, -1.4531521
        %v5816 = vadd.f32 %v5812, -1.4531521
        %v5817 = vadd.f32 %v5813, -1.4531521
        %v5818 = vmul.f32 %v5814, %v5803
        %v5819 = vmul.f32 %v5815, %v5805
        %v5820 = vmul.f32 %v5816, %v5807
        %v5821 = vmul.f32 %v5817, %v5809
        %v5822 = vadd.f32 %v5818, 1.4214138
        %v5823 = vadd.f32 %v5819, 1.4214138
        %v5824 = vadd.f32 %v5820, 1.4214138
        %v5825 = vadd.f32 %v5821, 1.4214138
        %v5826 = vmul.f32 %v5822, %v5803
        %v5827 = vmul.f32 %v5823, %v5805
        %v5828 = vmul.f32 %v5824, %v5807
        %v5829 = vmul.f32 %v5825, %v5809
        %v5830 = vadd.f32 %v5826, -0.28449672
        %v5831 = vadd.f32 %v5827, -0.28449672
        %v5832 = vadd.f32 %v5828, -0.28449672
        %v5833 = vadd.f32 %v5829, -0.28449672
        %v5834 = vmul.f32 %v5830, %v5803
        %v5835 = vmul.f32 %v5831, %v5805
        %v5836 = vmul.f32 %v5832, %v5807
        %v5837 = vmul.f32 %v5833, %v5809
        %v5838 = vadd.f32 %v5834, 0.2548296
        %v5839 = vadd.f32 %v5835, 0.2548296
        %v5840 = vadd.f32 %v5836, 0.2548296
        %v5841 = vadd.f32 %v5837, 0.2548296
        %v5842 = vmul.f32 %v5838, %v5803
        %v5843 = vmul.f32 %v5839, %v5805
        %v5844 = vmul.f32 %v5840, %v5807
        %v5845 = vmul.f32 %v5841, %v5809
        %v5846 = vsub.f32 0.0, %v5790
        %v5847 = vsub.f32 0.0, %v5791
        %v5848 = vsub.f32 0.0, %v5792
        %v5849 = vsub.f32 0.0, %v5793
        %v5850 = vmul.f32 %v5846, %v5790
        %v5851 = vmul.f32 %v5847, %v5791
        %v5852 = vmul.f32 %v5848, %v5792
        %v5853 = vmul.f32 %v5849, %v5793
        %v5854 = vmul.f32 %v5850, 1.442695
        %v5855 = vpow.pop %v5854
        %v5856 = vmul.f32 %v5851, 1.442695
        %v5857 = vpow.pop %v5856
        %v5858 = vmul.f32 %v5852, 1.442695
        %v5859 = vpow.pop %v5858
        %v5860 = vmul.f32 %v5853, 1.442695
        %v5861 = vpow.pop %v5860
        %v5862 = vmul.f32 %v5842, %v5855
        %v5863 = vmul.f32 %v5843, %v5857
        %v5864 = vmul.f32 %v5844, %v5859
        %v5865 = vmul.f32 %v5845, %v5861
        %v5866 = vsub.f32 1.0, %v5862
        %v5867 = vsub.f32 1.0, %v5863
        %v5868 = vsub.f32 1.0, %v5864
        %v5869 = vsub.f32 1.0, %v5865
        %v5870 = vmul.f32 %v5786, %v5866
        %v5871 = vmul.f32 %v5787, %v5867
        %v5872 = vmul.f32 %v5788, %v5868
        %v5873 = vmul.f32 %v5789, %v5869
        %v5874 = vadd.f32 %v5870, 1.0
        %v5875 = vadd.f32 %v5871, 1.0
        %v5876 = vadd.f32 %v5872, 1.0
        %v5877 = vadd.f32 %v5873, 1.0
        %v5878 = vmul.f32 %v5774, %v5874
        %v5879 = vmul.f32 %v5775, %v5875
        %v5880 = vmul.f32 %v5776, %v5876
        %v5881 = vmul.f32 %v5777, %v5877
        %v5882 = vld [vmem:[%s13] sm:$0xff]
        %v5883 = vld [vmem:[%s14] sm:$0xff]
        %5885 = vset.pattern.permute.xlu0 0
        %5886 = vperm.xlu0 %5885, %v5883
        %v5887 = vpop.permute.xlu0 %5886
        %v5890 = vsel %vm976, %v5882, 0
        %5892 = vmatprep.subr.mxu0 0.0
        %5893 = vmatpush1.msra.mxu0 %v5878
        %5894 = vmatprep.subr.mxu0 0.0
        %5895 = vmatpush1.msra.mxu0 %v5879
        %5896 = vmatprep.subr.mxu0 0.0
        %5897 = vmatpush1.msra.mxu0 %v5880
        %5898 = vmatprep.subr.mxu0 0.0
        %5899 = vmatpush1.msra.mxu0 %v5881
        %5900 = vmatprep.subr.mxu0 0.0
        %5901 = vmatpush1.msra.mxu0 0.0
        %5902 = vmatprep.subr.mxu0 0.0
        %5903 = vmatpush1.msra.mxu0 0.0
        %5904 = vmatprep.subr.mxu0 0.0
        %5905 = vmatpush1.msra.mxu0 0.0
        %5906 = vmatprep.subr.mxu0 0.0
        %5907 = vmatpush1.msra.mxu0 0.0
        %5908 = vmatprep.subr.mxu0 0.0
        %5909 = vmatpush1.msra.mxu0 0.0
        %5910 = vmatprep.subr.mxu0 0.0
        %5911 = vmatpush1.msra.mxu0 0.0
        %5912 = vmatprep.subr.mxu0 0.0
        %5913 = vmatpush1.msra.mxu0 0.0
        %5914 = vmatprep.subr.mxu0 0.0
        %5915 = vmatpush1.msra.mxu0 0.0
        %5916 = vmatprep.subr.mxu0 0.0
        %5917 = vmatpush1.msra.mxu0 0.0
        %5918 = vmatprep.subr.mxu0 0.0
        %5919 = vmatpush1.msra.mxu0 0.0
        %5920 = vmatprep.subr.mxu0 0.0
        %5921 = vmatpush1.msra.mxu0 0.0
        %5922 = vmatprep.subr.mxu0 0.0
        %5923 = vmatpush1.msra.mxu0 0.0
        %5924 = vmatprep.subr.mxu0 0.0
        %5925 = vmatpush1.msra.mxu0 0.0
        %5926 = vmatprep.subr.mxu0 0.0
        %5927 = vmatpush1.msra.mxu0 0.0
        %5928 = vmatprep.subr.mxu0 0.0
        %5929 = vmatpush1.msra.mxu0 0.0
        %5930 = vmatprep.subr.mxu0 0.0
        %5931 = vmatpush1.msra.mxu0 0.0
        %5932 = vmatprep.subr.mxu0 0.0
        %5933 = vmatpush1.msra.mxu0 0.0
        %5934 = vmatprep.subr.mxu0 0.0
        %5935 = vmatpush1.msra.mxu0 0.0
        %5936 = vmatprep.subr.mxu0 0.0
        %5937 = vmatpush1.msra.mxu0 0.0
        %5938 = vmatprep.subr.mxu0 0.0
        %5939 = vmatpush1.msra.mxu0 0.0
        %5940 = vmatprep.subr.mxu0 0.0
        %5941 = vmatpush1.msra.mxu0 0.0
        %5942 = vmatprep.subr.mxu0 0.0
        %5943 = vmatpush1.msra.mxu0 0.0
        %5944 = vmatprep.subr.mxu0 0.0
        %5945 = vmatpush1.msra.mxu0 0.0
        %5946 = vmatprep.subr.mxu0 0.0
        %5947 = vmatpush1.msra.mxu0 0.0
        %5948 = vmatprep.subr.mxu0 0.0
        %5949 = vmatpush1.msra.mxu0 0.0
        %5950 = vmatprep.subr.mxu0 0.0
        %5951 = vmatpush1.msra.mxu0 0.0
        %5952 = vmatprep.subr.mxu0 0.0
        %5953 = vmatpush1.msra.mxu0 0.0
        %5954 = vmatprep.subr.mxu0 0.0
        %5955 = vmatpush1.msra.mxu0 0.0
        %5956 = vmatprep.mubr.f32.mxu0 0.0
        %5957 = vmatmul.mubr.f32.gmra.mrb[0].mxu0 %v5890
        %v5958 = vpop.f32.mrb[0].mxu0
        %v5959 = vadd.f32 %v5887, %v5958
        %v5960 = vpop.f32.mrb[0].mxu0
        %5961 = vdwg.mxu0
        %v5962 = vtanh.pop %v5959
        %v5963 = vmul.f32 %v5962, 4.0
        %v5964 = vadd.f32 %v5963, 0.0
        %v5965 = vmul.f32 %v5964, 0.5
        %v5966 = vmul.f32 %v5965, 1.442695
        %v5967 = vpow.pop %v5966
        %v5968 = vmul.f32 %v5967, 0.25
        %v5969 = vmul.f32 %v5959, 0.0625
        %v5970 = vadd.f32 %v5107, %v5969
        %v5972 = vrot.slane %v5148, 4
        %v5974 = vmul.f32 %v5968, %v5972
        %v5976 = vrot.slane %v5974, 4
        %v5978 = vadd.f32 %v5970, %v5976
        %v5979 = vmul.f32 %v5148, %v5148
        %v5980 = vadd.f32 %v5979, -0.93471164
        %v5982 = vrot.slane %v5964, 4
        %v5984 = vadd.f32 %v5980, %v5982
        %v5985 = vsel %vm1624, %v5984, 0.0
        %v5986 = vrot.slane %v5985, 4
        %v5987 = vadd.f32 %v5985, %v5986
        %v5988 = vrot.slane %v5987, 2
        %v5989 = vadd.f32 %v5987, %v5988
        %v5990 = vrot.slane %v5989, 1
        %v5991 = vadd.f32 %v5989, %v5990
        %v5992 = vmul.f32 %v5991, -0.5
        %s5993 = sld [smem:[#allocation3 + %s5146]]
        %s5994 = sld [smem:[#allocation5 + %s5146]]
        %s5995 = sld [smem:[#allocation7 + %s5146]]
        %v5996 = vstv %s5993
        %v5997 = vmul.f32 %v5978, %v5996
        %v5998 = vsub.f32 %v5107, %v5997
        %v5999 = vstv %s5995
        %v6000 = vmul.f32 %v5998, %v5999
        %v6001 = vmul.f32 %v6000, %v6000
        %v6002 = vadd.f32 %v6001, 1.837877
        %v6003 = vstv %s5994
        %v6004 = vadd.f32 %v6002, %v6003
        %v6005 = vsel %vm1624, %v6004, 0.0
        %v6006 = vrot.slane %v6005, 4
        %v6007 = vadd.f32 %v6005, %v6006
        %v6008 = vrot.slane %v6007, 2
        %v6009 = vadd.f32 %v6007, %v6008
        %v6010 = vrot.slane %v6009, 1
        %v6011 = vadd.f32 %v6009, %v6010
        %v6012 = vmul.f32 %v6011, -0.5
        %s6013 = scalar_lea.vmem %s680, 20
        %6014 = vst.msk [vmem:[%s6013] sm:$0xf] %vm1624, %v5978
        %6015 = vst.msk [vmem:[%s688 + $0x5] sm:$0x1] %vm1659, %v5992
        %6016 = vst.msk [vmem:[%s695 + $0x5] sm:$0x1] %vm1659, %v6012
        %s6017 = sadd.s32 %s712, 6
        %s6018 = scalar_lea.vmem %s666, 24
        %v6019 = vld [vmem:[%s6018] sm:$0xf]
        %v6020 = vld [vmem:[%s7] sm:$0xff]
        %v6021 = vld [vmem:[%s7 + $0x8] sm:$0xff]
        %v6022 = vld [vmem:[%s7 + $0x10] sm:$0xff]
        %v6023 = vld [vmem:[%s7 + $0x18] sm:$0xff]
        %v6024 = vlaneseq
        %v6025 = vshrl.u32 %v6024, 7
        %v6026 = vsub.s32 0, %v6025
        %v6027 = vrot.slane %v5978, %v6026
        %v6028 = vmul.f32 %v721, %v6027
        %v6029 = vmul.f32 %v726, %v6027
        %v6030 = vmul.f32 %v731, %v6027
        %v6031 = vmul.f32 %v736, %v6027
        %6033 = vset.pattern.permute.xlu0 0
        %6034 = vperm.xlu0 %6033, %v6020
        %v6035 = vpop.permute.xlu0 %6034
        %6038 = vset.pattern.permute.xlu0 0
        %6039 = vperm.xlu0 %6038, %v6021
        %v6040 = vpop.permute.xlu0 %6039
        %6043 = vset.pattern.permute.xlu0 0
        %6044 = vperm.xlu0 %6043, %v6022
        %v6045 = vpop.permute.xlu0 %6044
        %6048 = vset.pattern.permute.xlu0 0
        %6049 = vperm.xlu0 %6048, %v6023
        %v6050 = vpop.permute.xlu0 %6049
        %v6052 = vadd.f32 %v6035, %v6028
        %v6053 = vadd.f32 %v6040, %v6029
        %v6054 = vadd.f32 %v6045, %v6030
        %v6055 = vadd.f32 %v6050, %v6031
        %v6056 = vlaneseq
        %v6057 = vshrl.u32 %v6056, 7
        %v6058 = vsub.s32 1, %v6057
        %v6059 = vrot.slane %v5978, %v6058
        %v6060 = vmul.f32 %v772, %v6059
        %v6061 = vmul.f32 %v776, %v6059
        %v6062 = vmul.f32 %v780, %v6059
        %v6063 = vmul.f32 %v784, %v6059
        %v6064 = vadd.f32 %v6052, %v6060
        %v6065 = vadd.f32 %v6053, %v6061
        %v6066 = vadd.f32 %v6054, %v6062
        %v6067 = vadd.f32 %v6055, %v6063
        %v6068 = vlaneseq
        %v6069 = vshrl.u32 %v6068, 7
        %v6070 = vsub.s32 2, %v6069
        %v6071 = vrot.slane %v5978, %v6070
        %v6072 = vmul.f32 %v800, %v6071
        %v6073 = vmul.f32 %v804, %v6071
        %v6074 = vmul.f32 %v808, %v6071
        %v6075 = vmul.f32 %v812, %v6071
        %v6076 = vadd.f32 %v6064, %v6072
        %v6077 = vadd.f32 %v6065, %v6073
        %v6078 = vadd.f32 %v6066, %v6074
        %v6079 = vadd.f32 %v6067, %v6075
        %v6080 = vlaneseq
        %v6081 = vshrl.u32 %v6080, 7
        %v6082 = vsub.s32 3, %v6081
        %v6083 = vrot.slane %v5978, %v6082
        %v6084 = vmul.f32 %v828, %v6083
        %v6085 = vmul.f32 %v832, %v6083
        %v6086 = vmul.f32 %v836, %v6083
        %v6087 = vmul.f32 %v840, %v6083
        %v6088 = vadd.f32 %v6076, %v6084
        %v6089 = vadd.f32 %v6077, %v6085
        %v6090 = vadd.f32 %v6078, %v6086
        %v6091 = vadd.f32 %v6079, %v6087
        %v6092 = vmul.f32 %v6088, 0.5
        %v6093 = vmul.f32 %v6089, 0.5
        %v6094 = vmul.f32 %v6090, 0.5
        %v6095 = vmul.f32 %v6091, 0.5
        %v6096 = vmul.f32 %v6088, 0.70710677
        %v6097 = vmul.f32 %v6089, 0.70710677
        %v6098 = vmul.f32 %v6090, 0.70710677
        %v6099 = vmul.f32 %v6091, 0.70710677
        %vm6100 = vcmp.ge.f32.partialorder %v6096, 0.0
        %vm6101 = vcmp.ge.f32.partialorder %v6097, 0.0
        %vm6102 = vcmp.ge.f32.partialorder %v6098, 0.0
        %vm6103 = vcmp.ge.f32.partialorder %v6099, 0.0
        %v6104 = vsel %vm6100, 1.0, -1.0
        %v6105 = vsel %vm6101, 1.0, -1.0
        %v6106 = vsel %vm6102, 1.0, -1.0
        %v6107 = vsel %vm6103, 1.0, -1.0
        %v6108 = vand.u32 2147483647, %v6096
        %v6109 = vand.u32 2147483647, %v6097
        %v6110 = vand.u32 2147483647, %v6098
        %v6111 = vand.u32 2147483647, %v6099
        %v6112 = vmul.f32 %v6108, 0.3275911
        %v6113 = vmul.f32 %v6109, 0.3275911
        %v6114 = vmul.f32 %v6110, 0.3275911
        %v6115 = vmul.f32 %v6111, 0.3275911
        %v6116 = vadd.f32 %v6112, 1.0
        %v6117 = vadd.f32 %v6113, 1.0
        %v6118 = vadd.f32 %v6114, 1.0
        %v6119 = vadd.f32 %v6115, 1.0
        %v6120 = vrcp.pop %v6116
        %v6121 = vmul.f32 1.0, %v6120
        %v6122 = vrcp.pop %v6117
        %v6123 = vmul.f32 1.0, %v6122
        %v6124 = vrcp.pop %v6118
        %v6125 = vmul.f32 1.0, %v6124
        %v6126 = vrcp.pop %v6119
        %v6127 = vmul.f32 1.0, %v6126
        %v6128 = vmul.f32 %v6121, 1.0614054
        %v6129 = vmul.f32 %v6123, 1.0614054
        %v6130 = vmul.f32 %v6125, 1.0614054
        %v6131 = vmul.f32 %v6127, 1.0614054
        %v6132 = vadd.f32 %v6128, -1.4531521
        %v6133 = vadd.f32 %v6129, -1.4531521
        %v6134 = vadd.f32 %v6130, -1.4531521
        %v6135 = vadd.f32 %v6131, -1.4531521
        %v6136 = vmul.f32 %v6132, %v6121
        %v6137 = vmul.f32 %v6133, %v6123
        %v6138 = vmul.f32 %v6134, %v6125
        %v6139 = vmul.f32 %v6135, %v6127
        %v6140 = vadd.f32 %v6136, 1.4214138
        %v6141 = vadd.f32 %v6137, 1.4214138
        %v6142 = vadd.f32 %v6138, 1.4214138
        %v6143 = vadd.f32 %v6139, 1.4214138
        %v6144 = vmul.f32 %v6140, %v6121
        %v6145 = vmul.f32 %v6141, %v6123
        %v6146 = vmul.f32 %v6142, %v6125
        %v6147 = vmul.f32 %v6143, %v6127
        %v6148 = vadd.f32 %v6144, -0.28449672
        %v6149 = vadd.f32 %v6145, -0.28449672
        %v6150 = vadd.f32 %v6146, -0.28449672
        %v6151 = vadd.f32 %v6147, -0.28449672
        %v6152 = vmul.f32 %v6148, %v6121
        %v6153 = vmul.f32 %v6149, %v6123
        %v6154 = vmul.f32 %v6150, %v6125
        %v6155 = vmul.f32 %v6151, %v6127
        %v6156 = vadd.f32 %v6152, 0.2548296
        %v6157 = vadd.f32 %v6153, 0.2548296
        %v6158 = vadd.f32 %v6154, 0.2548296
        %v6159 = vadd.f32 %v6155, 0.2548296
        %v6160 = vmul.f32 %v6156, %v6121
        %v6161 = vmul.f32 %v6157, %v6123
        %v6162 = vmul.f32 %v6158, %v6125
        %v6163 = vmul.f32 %v6159, %v6127
        %v6164 = vsub.f32 0.0, %v6108
        %v6165 = vsub.f32 0.0, %v6109
        %v6166 = vsub.f32 0.0, %v6110
        %v6167 = vsub.f32 0.0, %v6111
        %v6168 = vmul.f32 %v6164, %v6108
        %v6169 = vmul.f32 %v6165, %v6109
        %v6170 = vmul.f32 %v6166, %v6110
        %v6171 = vmul.f32 %v6167, %v6111
        %v6172 = vmul.f32 %v6168, 1.442695
        %v6173 = vpow.pop %v6172
        %v6174 = vmul.f32 %v6169, 1.442695
        %v6175 = vpow.pop %v6174
        %v6176 = vmul.f32 %v6170, 1.442695
        %v6177 = vpow.pop %v6176
        %v6178 = vmul.f32 %v6171, 1.442695
        %v6179 = vpow.pop %v6178
        %v6180 = vmul.f32 %v6160, %v6173
        %v6181 = vmul.f32 %v6161, %v6175
        %v6182 = vmul.f32 %v6162, %v6177
        %v6183 = vmul.f32 %v6163, %v6179
        %v6184 = vsub.f32 1.0, %v6180
        %v6185 = vsub.f32 1.0, %v6181
        %v6186 = vsub.f32 1.0, %v6182
        %v6187 = vsub.f32 1.0, %v6183
        %v6188 = vmul.f32 %v6104, %v6184
        %v6189 = vmul.f32 %v6105, %v6185
        %v6190 = vmul.f32 %v6106, %v6186
        %v6191 = vmul.f32 %v6107, %v6187
        %v6192 = vadd.f32 %v6188, 1.0
        %v6193 = vadd.f32 %v6189, 1.0
        %v6194 = vadd.f32 %v6190, 1.0
        %v6195 = vadd.f32 %v6191, 1.0
        %v6196 = vmul.f32 %v6092, %v6192
        %v6197 = vmul.f32 %v6093, %v6193
        %v6198 = vmul.f32 %v6094, %v6194
        %v6199 = vmul.f32 %v6095, %v6195
        %v6200 = vld [vmem:[%s8] sm:$0xff]
        %v6201 = vld [vmem:[%s8 + $0x8] sm:$0xff]
        %v6202 = vld [vmem:[%s9] sm:$0xff]
        %v6203 = vld [vmem:[%s9 + $0x8] sm:$0xff]
        %6205 = vset.pattern.permute.xlu0 0
        %6206 = vperm.xlu0 %6205, %v6202
        %v6207 = vpop.permute.xlu0 %6206
        %6210 = vset.pattern.permute.xlu0 0
        %6211 = vperm.xlu0 %6210, %v6203
        %v6212 = vpop.permute.xlu0 %6211
        %v6215 = vsel %vm976, %v6200, 0
        %v6218 = vsel %vm976, %v6201, 0
        %6220 = vmatprep.subr.mxu0 0.0
        %6221 = vmatpush1.msra.mxu0 %v6196
        %6222 = vmatprep.subr.mxu0 0.0
        %6223 = vmatpush1.msra.mxu0 %v6197
        %6224 = vmatprep.subr.mxu0 0.0
        %6225 = vmatpush1.msra.mxu0 %v6198
        %6226 = vmatprep.subr.mxu0 0.0
        %6227 = vmatpush1.msra.mxu0 %v6199
        %6228 = vmatprep.subr.mxu0 0.0
        %6229 = vmatpush1.msra.mxu0 0.0
        %6230 = vmatprep.subr.mxu0 0.0
        %6231 = vmatpush1.msra.mxu0 0.0
        %6232 = vmatprep.subr.mxu0 0.0
        %6233 = vmatpush1.msra.mxu0 0.0
        %6234 = vmatprep.subr.mxu0 0.0
        %6235 = vmatpush1.msra.mxu0 0.0
        %6236 = vmatprep.subr.mxu0 0.0
        %6237 = vmatpush1.msra.mxu0 0.0
        %6238 = vmatprep.subr.mxu0 0.0
        %6239 = vmatpush1.msra.mxu0 0.0
        %6240 = vmatprep.subr.mxu0 0.0
        %6241 = vmatpush1.msra.mxu0 0.0
        %6242 = vmatprep.subr.mxu0 0.0
        %6243 = vmatpush1.msra.mxu0 0.0
        %6244 = vmatprep.subr.mxu0 0.0
        %6245 = vmatpush1.msra.mxu0 0.0
        %6246 = vmatprep.subr.mxu0 0.0
        %6247 = vmatpush1.msra.mxu0 0.0
        %6248 = vmatprep.subr.mxu0 0.0
        %6249 = vmatpush1.msra.mxu0 0.0
        %6250 = vmatprep.subr.mxu0 0.0
        %6251 = vmatpush1.msra.mxu0 0.0
        %6252 = vmatprep.subr.mxu0 0.0
        %6253 = vmatpush1.msra.mxu0 0.0
        %6254 = vmatprep.subr.mxu0 0.0
        %6255 = vmatpush1.msra.mxu0 0.0
        %6256 = vmatprep.subr.mxu0 0.0
        %6257 = vmatpush1.msra.mxu0 0.0
        %6258 = vmatprep.subr.mxu0 0.0
        %6259 = vmatpush1.msra.mxu0 0.0
        %6260 = vmatprep.subr.mxu0 0.0
        %6261 = vmatpush1.msra.mxu0 0.0
        %6262 = vmatprep.subr.mxu0 0.0
        %6263 = vmatpush1.msra.mxu0 0.0
        %6264 = vmatprep.subr.mxu0 0.0
        %6265 = vmatpush1.msra.mxu0 0.0
        %6266 = vmatprep.subr.mxu0 0.0
        %6267 = vmatpush1.msra.mxu0 0.0
        %6268 = vmatprep.subr.mxu0 0.0
        %6269 = vmatpush1.msra.mxu0 0.0
        %6270 = vmatprep.subr.mxu0 0.0
        %6271 = vmatpush1.msra.mxu0 0.0
        %6272 = vmatprep.subr.mxu0 0.0
        %6273 = vmatpush1.msra.mxu0 0.0
        %6274 = vmatprep.subr.mxu0 0.0
        %6275 = vmatpush1.msra.mxu0 0.0
        %6276 = vmatprep.subr.mxu0 0.0
        %6277 = vmatpush1.msra.mxu0 0.0
        %6278 = vmatprep.subr.mxu0 0.0
        %6279 = vmatpush1.msra.mxu0 0.0
        %6280 = vmatprep.subr.mxu0 0.0
        %6281 = vmatpush1.msra.mxu0 0.0
        %6282 = vmatprep.subr.mxu0 0.0
        %6283 = vmatpush1.msra.mxu0 0.0
        %6284 = vmatprep.mubr.f32.mxu0 0.0
        %6285 = vmatmul.mubr.f32.gmra.mrb[0].mxu0 %v6215
        %v6286 = vpop.f32.mrb[0].mxu0
        %v6287 = vadd.f32 %v6207, %v6286
        %v6288 = vpop.f32.mrb[0].mxu0
        %6289 = vmatprep.mubr.f32.mxu0 0.0
        %6290 = vmatmul.mubr.f32.gmra.mrb[0].mxu0 %v6218
        %v6291 = vpop.f32.mrb[0].mxu0
        %v6292 = vadd.f32 %v6212, %v6291
        %v6293 = vpop.f32.mrb[0].mxu0
        %6294 = vdwg.mxu0
        %v6295 = vld [vmem:[%s10] sm:$0xff]
        %v6296 = vld [vmem:[%s10 + $0x8] sm:$0xff]
        %v6297 = vld [vmem:[%s10 + $0x10] sm:$0xff]
        %v6298 = vld [vmem:[%s10 + $0x18] sm:$0xff]
        %6299 = vset.pattern.permute.xlu0 6
        %6300 = vperm.xlu0 %6299, %v703
        %v6301 = vpop.permute.xlu0 %6300
        %6303 = vset.pattern.permute.xlu0 6
        %6304 = vperm.xlu0 %6303, %v704
        %v6305 = vpop.permute.xlu0 %6304
        %6307 = vset.pattern.permute.xlu0 6
        %6308 = vperm.xlu0 %6307, %v705
        %v6309 = vpop.permute.xlu0 %6308
        %6311 = vset.pattern.permute.xlu0 6
        %6312 = vperm.xlu0 %6311, %v706
        %v6313 = vpop.permute.xlu0 %6312
        %v6316 = vsel %vm1082, %v6295, 0
        %v6319 = vsel %vm1082, %v6296, 0
        %v6322 = vsel %vm1082, %v6297, 0
        %v6325 = vsel %vm1082, %v6298, 0
        %6327 = vmatprep.subr.mxu0 0.0
        %6328 = vmatpush1.msra.mxu0 %v6287
        %6329 = vmatprep.subr.mxu0 0.0
        %6330 = vmatpush1.msra.mxu0 %v6292
        %6331 = vmatprep.subr.mxu0 0.0
        %6332 = vmatpush1.msra.mxu0 0.0
        %6333 = vmatprep.subr.mxu0 0.0
        %6334 = vmatpush1.msra.mxu0 0.0
        %6335 = vmatprep.subr.mxu0 0.0
        %6336 = vmatpush1.msra.mxu0 0.0
        %6337 = vmatprep.subr.mxu0 0.0
        %6338 = vmatpush1.msra.mxu0 0.0
        %6339 = vmatprep.subr.mxu0 0.0
        %6340 = vmatpush1.msra.mxu0 0.0
        %6341 = vmatprep.subr.mxu0 0.0
        %6342 = vmatpush1.msra.mxu0 0.0
        %6343 = vmatprep.subr.mxu0 0.0
        %6344 = vmatpush1.msra.mxu0 0.0
        %6345 = vmatprep.subr.mxu0 0.0
        %6346 = vmatpush1.msra.mxu0 0.0
        %6347 = vmatprep.subr.mxu0 0.0
        %6348 = vmatpush1.msra.mxu0 0.0
        %6349 = vmatprep.subr.mxu0 0.0
        %6350 = vmatpush1.msra.mxu0 0.0
        %6351 = vmatprep.subr.mxu0 0.0
        %6352 = vmatpush1.msra.mxu0 0.0
        %6353 = vmatprep.subr.mxu0 0.0
        %6354 = vmatpush1.msra.mxu0 0.0
        %6355 = vmatprep.subr.mxu0 0.0
        %6356 = vmatpush1.msra.mxu0 0.0
        %6357 = vmatprep.subr.mxu0 0.0
        %6358 = vmatpush1.msra.mxu0 0.0
        %6359 = vmatprep.subr.mxu0 0.0
        %6360 = vmatpush1.msra.mxu0 0.0
        %6361 = vmatprep.subr.mxu0 0.0
        %6362 = vmatpush1.msra.mxu0 0.0
        %6363 = vmatprep.subr.mxu0 0.0
        %6364 = vmatpush1.msra.mxu0 0.0
        %6365 = vmatprep.subr.mxu0 0.0
        %6366 = vmatpush1.msra.mxu0 0.0
        %6367 = vmatprep.subr.mxu0 0.0
        %6368 = vmatpush1.msra.mxu0 0.0
        %6369 = vmatprep.subr.mxu0 0.0
        %6370 = vmatpush1.msra.mxu0 0.0
        %6371 = vmatprep.subr.mxu0 0.0
        %6372 = vmatpush1.msra.mxu0 0.0
        %6373 = vmatprep.subr.mxu0 0.0
        %6374 = vmatpush1.msra.mxu0 0.0
        %6375 = vmatprep.subr.mxu0 0.0
        %6376 = vmatpush1.msra.mxu0 0.0
        %6377 = vmatprep.subr.mxu0 0.0
        %6378 = vmatpush1.msra.mxu0 0.0
        %6379 = vmatprep.subr.mxu0 0.0
        %6380 = vmatpush1.msra.mxu0 0.0
        %6381 = vmatprep.subr.mxu0 0.0
        %6382 = vmatpush1.msra.mxu0 0.0
        %6383 = vmatprep.subr.mxu0 0.0
        %6384 = vmatpush1.msra.mxu0 0.0
        %6385 = vmatprep.subr.mxu0 0.0
        %6386 = vmatpush1.msra.mxu0 0.0
        %6387 = vmatprep.subr.mxu0 0.0
        %6388 = vmatpush1.msra.mxu0 0.0
        %6389 = vmatprep.subr.mxu0 0.0
        %6390 = vmatpush1.msra.mxu0 0.0
        %6391 = vmatprep.mubr.f32.mxu0 0.0
        %6392 = vmatmul.mubr.f32.gmra.mrb[0].mxu0 %v6316
        %v6393 = vpop.f32.mrb[0].mxu0
        %v6394 = vadd.f32 %v6301, %v6393
        %v6395 = vpop.f32.mrb[0].mxu0
        %6396 = vmatprep.mubr.f32.mxu0 0.0
        %6397 = vmatmul.mubr.f32.gmra.mrb[0].mxu0 %v6319
        %v6398 = vpop.f32.mrb[0].mxu0
        %v6399 = vadd.f32 %v6305, %v6398
        %v6400 = vpop.f32.mrb[0].mxu0
        %6401 = vmatprep.mubr.f32.mxu0 0.0
        %6402 = vmatmul.mubr.f32.gmra.mrb[0].mxu0 %v6322
        %v6403 = vpop.f32.mrb[0].mxu0
        %v6404 = vadd.f32 %v6309, %v6403
        %v6405 = vpop.f32.mrb[0].mxu0
        %6406 = vmatprep.mubr.f32.mxu0 0.0
        %6407 = vmatmul.mubr.f32.gmra.mrb[0].mxu0 %v6325
        %v6408 = vpop.f32.mrb[0].mxu0
        %v6409 = vadd.f32 %v6313, %v6408
        %v6410 = vpop.f32.mrb[0].mxu0
        %6411 = vdwg.mxu0
        %v6412 = vmul.f32 %v6394, 0.5
        %v6413 = vmul.f32 %v6399, 0.5
        %v6414 = vmul.f32 %v6404, 0.5
        %v6415 = vmul.f32 %v6409, 0.5
        %v6416 = vmul.f32 %v6394, 0.70710677
        %v6417 = vmul.f32 %v6399, 0.70710677
        %v6418 = vmul.f32 %v6404, 0.70710677
        %v6419 = vmul.f32 %v6409, 0.70710677
        %vm6420 = vcmp.ge.f32.partialorder %v6416, 0.0
        %vm6421 = vcmp.ge.f32.partialorder %v6417, 0.0
        %vm6422 = vcmp.ge.f32.partialorder %v6418, 0.0
        %vm6423 = vcmp.ge.f32.partialorder %v6419, 0.0
        %v6424 = vsel %vm6420, 1.0, -1.0
        %v6425 = vsel %vm6421, 1.0, -1.0
        %v6426 = vsel %vm6422, 1.0, -1.0
        %v6427 = vsel %vm6423, 1.0, -1.0
        %v6428 = vand.u32 2147483647, %v6416
        %v6429 = vand.u32 2147483647, %v6417
        %v6430 = vand.u32 2147483647, %v6418
        %v6431 = vand.u32 2147483647, %v6419
        %v6432 = vmul.f32 %v6428, 0.3275911
        %v6433 = vmul.f32 %v6429, 0.3275911
        %v6434 = vmul.f32 %v6430, 0.3275911
        %v6435 = vmul.f32 %v6431, 0.3275911
        %v6436 = vadd.f32 %v6432, 1.0
        %v6437 = vadd.f32 %v6433, 1.0
        %v6438 = vadd.f32 %v6434, 1.0
        %v6439 = vadd.f32 %v6435, 1.0
        %v6440 = vrcp.pop %v6436
        %v6441 = vmul.f32 1.0, %v6440
        %v6442 = vrcp.pop %v6437
        %v6443 = vmul.f32 1.0, %v6442
        %v6444 = vrcp.pop %v6438
        %v6445 = vmul.f32 1.0, %v6444
        %v6446 = vrcp.pop %v6439
        %v6447 = vmul.f32 1.0, %v6446
        %v6448 = vmul.f32 %v6441, 1.0614054
        %v6449 = vmul.f32 %v6443, 1.0614054
        %v6450 = vmul.f32 %v6445, 1.0614054
        %v6451 = vmul.f32 %v6447, 1.0614054
        %v6452 = vadd.f32 %v6448, -1.4531521
        %v6453 = vadd.f32 %v6449, -1.4531521
        %v6454 = vadd.f32 %v6450, -1.4531521
        %v6455 = vadd.f32 %v6451, -1.4531521
        %v6456 = vmul.f32 %v6452, %v6441
        %v6457 = vmul.f32 %v6453, %v6443
        %v6458 = vmul.f32 %v6454, %v6445
        %v6459 = vmul.f32 %v6455, %v6447
        %v6460 = vadd.f32 %v6456, 1.4214138
        %v6461 = vadd.f32 %v6457, 1.4214138
        %v6462 = vadd.f32 %v6458, 1.4214138
        %v6463 = vadd.f32 %v6459, 1.4214138
        %v6464 = vmul.f32 %v6460, %v6441
        %v6465 = vmul.f32 %v6461, %v6443
        %v6466 = vmul.f32 %v6462, %v6445
        %v6467 = vmul.f32 %v6463, %v6447
        %v6468 = vadd.f32 %v6464, -0.28449672
        %v6469 = vadd.f32 %v6465, -0.28449672
        %v6470 = vadd.f32 %v6466, -0.28449672
        %v6471 = vadd.f32 %v6467, -0.28449672
        %v6472 = vmul.f32 %v6468, %v6441
        %v6473 = vmul.f32 %v6469, %v6443
        %v6474 = vmul.f32 %v6470, %v6445
        %v6475 = vmul.f32 %v6471, %v6447
        %v6476 = vadd.f32 %v6472, 0.2548296
        %v6477 = vadd.f32 %v6473, 0.2548296
        %v6478 = vadd.f32 %v6474, 0.2548296
        %v6479 = vadd.f32 %v6475, 0.2548296
        %v6480 = vmul.f32 %v6476, %v6441
        %v6481 = vmul.f32 %v6477, %v6443
        %v6482 = vmul.f32 %v6478, %v6445
        %v6483 = vmul.f32 %v6479, %v6447
        %v6484 = vsub.f32 0.0, %v6428
        %v6485 = vsub.f32 0.0, %v6429
        %v6486 = vsub.f32 0.0, %v6430
        %v6487 = vsub.f32 0.0, %v6431
        %v6488 = vmul.f32 %v6484, %v6428
        %v6489 = vmul.f32 %v6485, %v6429
        %v6490 = vmul.f32 %v6486, %v6430
        %v6491 = vmul.f32 %v6487, %v6431
        %v6492 = vmul.f32 %v6488, 1.442695
        %v6493 = vpow.pop %v6492
        %v6494 = vmul.f32 %v6489, 1.442695
        %v6495 = vpow.pop %v6494
        %v6496 = vmul.f32 %v6490, 1.442695
        %v6497 = vpow.pop %v6496
        %v6498 = vmul.f32 %v6491, 1.442695
        %v6499 = vpow.pop %v6498
        %v6500 = vmul.f32 %v6480, %v6493
        %v6501 = vmul.f32 %v6481, %v6495
        %v6502 = vmul.f32 %v6482, %v6497
        %v6503 = vmul.f32 %v6483, %v6499
        %v6504 = vsub.f32 1.0, %v6500
        %v6505 = vsub.f32 1.0, %v6501
        %v6506 = vsub.f32 1.0, %v6502
        %v6507 = vsub.f32 1.0, %v6503
        %v6508 = vmul.f32 %v6424, %v6504
        %v6509 = vmul.f32 %v6425, %v6505
        %v6510 = vmul.f32 %v6426, %v6506
        %v6511 = vmul.f32 %v6427, %v6507
        %v6512 = vadd.f32 %v6508, 1.0
        %v6513 = vadd.f32 %v6509, 1.0
        %v6514 = vadd.f32 %v6510, 1.0
        %v6515 = vadd.f32 %v6511, 1.0
        %v6516 = vmul.f32 %v6412, %v6512
        %v6517 = vmul.f32 %v6413, %v6513
        %v6518 = vmul.f32 %v6414, %v6514
        %v6519 = vmul.f32 %v6415, %v6515
        %v6520 = vld [vmem:[%s11] sm:$0xff]
        %v6521 = vld [vmem:[%s11 + $0x8] sm:$0xff]
        %v6522 = vld [vmem:[%s11 + $0x10] sm:$0xff]
        %v6523 = vld [vmem:[%s11 + $0x18] sm:$0xff]
        %v6524 = vld [vmem:[%s12] sm:$0xff]
        %v6525 = vld [vmem:[%s12 + $0x8] sm:$0xff]
        %v6526 = vld [vmem:[%s12 + $0x10] sm:$0xff]
        %v6527 = vld [vmem:[%s12 + $0x18] sm:$0xff]
        %6529 = vset.pattern.permute.xlu0 0
        %6530 = vperm.xlu0 %6529, %v6524
        %v6531 = vpop.permute.xlu0 %6530
        %6534 = vset.pattern.permute.xlu0 0
        %6535 = vperm.xlu0 %6534, %v6525
        %v6536 = vpop.permute.xlu0 %6535
        %6539 = vset.pattern.permute.xlu0 0
        %6540 = vperm.xlu0 %6539, %v6526
        %v6541 = vpop.permute.xlu0 %6540
        %6544 = vset.pattern.permute.xlu0 0
        %6545 = vperm.xlu0 %6544, %v6527
        %v6546 = vpop.permute.xlu0 %6545
        %v6549 = vsel %vm976, %v6520, 0
        %v6552 = vsel %vm976, %v6521, 0
        %v6555 = vsel %vm976, %v6522, 0
        %v6558 = vsel %vm976, %v6523, 0
        %6560 = vmatprep.subr.mxu0 0.0
        %6561 = vmatpush1.msra.mxu0 %v6516
        %6562 = vmatprep.subr.mxu0 0.0
        %6563 = vmatpush1.msra.mxu0 %v6517
        %6564 = vmatprep.subr.mxu0 0.0
        %6565 = vmatpush1.msra.mxu0 %v6518
        %6566 = vmatprep.subr.mxu0 0.0
        %6567 = vmatpush1.msra.mxu0 %v6519
        %6568 = vmatprep.subr.mxu0 0.0
        %6569 = vmatpush1.msra.mxu0 0.0
        %6570 = vmatprep.subr.mxu0 0.0
        %6571 = vmatpush1.msra.mxu0 0.0
        %6572 = vmatprep.subr.mxu0 0.0
        %6573 = vmatpush1.msra.mxu0 0.0
        %6574 = vmatprep.subr.mxu0 0.0
        %6575 = vmatpush1.msra.mxu0 0.0
        %6576 = vmatprep.subr.mxu0 0.0
        %6577 = vmatpush1.msra.mxu0 0.0
        %6578 = vmatprep.subr.mxu0 0.0
        %6579 = vmatpush1.msra.mxu0 0.0
        %6580 = vmatprep.subr.mxu0 0.0
        %6581 = vmatpush1.msra.mxu0 0.0
        %6582 = vmatprep.subr.mxu0 0.0
        %6583 = vmatpush1.msra.mxu0 0.0
        %6584 = vmatprep.subr.mxu0 0.0
        %6585 = vmatpush1.msra.mxu0 0.0
        %6586 = vmatprep.subr.mxu0 0.0
        %6587 = vmatpush1.msra.mxu0 0.0
        %6588 = vmatprep.subr.mxu0 0.0
        %6589 = vmatpush1.msra.mxu0 0.0
        %6590 = vmatprep.subr.mxu0 0.0
        %6591 = vmatpush1.msra.mxu0 0.0
        %6592 = vmatprep.subr.mxu0 0.0
        %6593 = vmatpush1.msra.mxu0 0.0
        %6594 = vmatprep.subr.mxu0 0.0
        %6595 = vmatpush1.msra.mxu0 0.0
        %6596 = vmatprep.subr.mxu0 0.0
        %6597 = vmatpush1.msra.mxu0 0.0
        %6598 = vmatprep.subr.mxu0 0.0
        %6599 = vmatpush1.msra.mxu0 0.0
        %6600 = vmatprep.subr.mxu0 0.0
        %6601 = vmatpush1.msra.mxu0 0.0
        %6602 = vmatprep.subr.mxu0 0.0
        %6603 = vmatpush1.msra.mxu0 0.0
        %6604 = vmatprep.subr.mxu0 0.0
        %6605 = vmatpush1.msra.mxu0 0.0
        %6606 = vmatprep.subr.mxu0 0.0
        %6607 = vmatpush1.msra.mxu0 0.0
        %6608 = vmatprep.subr.mxu0 0.0
        %6609 = vmatpush1.msra.mxu0 0.0
        %6610 = vmatprep.subr.mxu0 0.0
        %6611 = vmatpush1.msra.mxu0 0.0
        %6612 = vmatprep.subr.mxu0 0.0
        %6613 = vmatpush1.msra.mxu0 0.0
        %6614 = vmatprep.subr.mxu0 0.0
        %6615 = vmatpush1.msra.mxu0 0.0
        %6616 = vmatprep.subr.mxu0 0.0
        %6617 = vmatpush1.msra.mxu0 0.0
        %6618 = vmatprep.subr.mxu0 0.0
        %6619 = vmatpush1.msra.mxu0 0.0
        %6620 = vmatprep.subr.mxu0 0.0
        %6621 = vmatpush1.msra.mxu0 0.0
        %6622 = vmatprep.subr.mxu0 0.0
        %6623 = vmatpush1.msra.mxu0 0.0
        %6624 = vmatprep.mubr.f32.mxu0 0.0
        %6625 = vmatmul.mubr.f32.gmra.mrb[0].mxu0 %v6549
        %v6626 = vpop.f32.mrb[0].mxu0
        %v6627 = vadd.f32 %v6531, %v6626
        %v6628 = vpop.f32.mrb[0].mxu0
        %6629 = vmatprep.mubr.f32.mxu0 0.0
        %6630 = vmatmul.mubr.f32.gmra.mrb[0].mxu0 %v6552
        %v6631 = vpop.f32.mrb[0].mxu0
        %v6632 = vadd.f32 %v6536, %v6631
        %v6633 = vpop.f32.mrb[0].mxu0
        %6634 = vmatprep.mubr.f32.mxu0 0.0
        %6635 = vmatmul.mubr.f32.gmra.mrb[0].mxu0 %v6555
        %v6636 = vpop.f32.mrb[0].mxu0
        %v6637 = vadd.f32 %v6541, %v6636
        %v6638 = vpop.f32.mrb[0].mxu0
        %6639 = vmatprep.mubr.f32.mxu0 0.0
        %6640 = vmatmul.mubr.f32.gmra.mrb[0].mxu0 %v6558
        %v6641 = vpop.f32.mrb[0].mxu0
        %v6642 = vadd.f32 %v6546, %v6641
        %v6643 = vpop.f32.mrb[0].mxu0
        %6644 = vdwg.mxu0
        %v6645 = vmul.f32 %v6627, 0.5
        %v6646 = vmul.f32 %v6632, 0.5
        %v6647 = vmul.f32 %v6637, 0.5
        %v6648 = vmul.f32 %v6642, 0.5
        %v6649 = vmul.f32 %v6627, 0.70710677
        %v6650 = vmul.f32 %v6632, 0.70710677
        %v6651 = vmul.f32 %v6637, 0.70710677
        %v6652 = vmul.f32 %v6642, 0.70710677
        %vm6653 = vcmp.ge.f32.partialorder %v6649, 0.0
        %vm6654 = vcmp.ge.f32.partialorder %v6650, 0.0
        %vm6655 = vcmp.ge.f32.partialorder %v6651, 0.0
        %vm6656 = vcmp.ge.f32.partialorder %v6652, 0.0
        %v6657 = vsel %vm6653, 1.0, -1.0
        %v6658 = vsel %vm6654, 1.0, -1.0
        %v6659 = vsel %vm6655, 1.0, -1.0
        %v6660 = vsel %vm6656, 1.0, -1.0
        %v6661 = vand.u32 2147483647, %v6649
        %v6662 = vand.u32 2147483647, %v6650
        %v6663 = vand.u32 2147483647, %v6651
        %v6664 = vand.u32 2147483647, %v6652
        %v6665 = vmul.f32 %v6661, 0.3275911
        %v6666 = vmul.f32 %v6662, 0.3275911
        %v6667 = vmul.f32 %v6663, 0.3275911
        %v6668 = vmul.f32 %v6664, 0.3275911
        %v6669 = vadd.f32 %v6665, 1.0
        %v6670 = vadd.f32 %v6666, 1.0
        %v6671 = vadd.f32 %v6667, 1.0
        %v6672 = vadd.f32 %v6668, 1.0
        %v6673 = vrcp.pop %v6669
        %v6674 = vmul.f32 1.0, %v6673
        %v6675 = vrcp.pop %v6670
        %v6676 = vmul.f32 1.0, %v6675
        %v6677 = vrcp.pop %v6671
        %v6678 = vmul.f32 1.0, %v6677
        %v6679 = vrcp.pop %v6672
        %v6680 = vmul.f32 1.0, %v6679
        %v6681 = vmul.f32 %v6674, 1.0614054
        %v6682 = vmul.f32 %v6676, 1.0614054
        %v6683 = vmul.f32 %v6678, 1.0614054
        %v6684 = vmul.f32 %v6680, 1.0614054
        %v6685 = vadd.f32 %v6681, -1.4531521
        %v6686 = vadd.f32 %v6682, -1.4531521
        %v6687 = vadd.f32 %v6683, -1.4531521
        %v6688 = vadd.f32 %v6684, -1.4531521
        %v6689 = vmul.f32 %v6685, %v6674
        %v6690 = vmul.f32 %v6686, %v6676
        %v6691 = vmul.f32 %v6687, %v6678
        %v6692 = vmul.f32 %v6688, %v6680
        %v6693 = vadd.f32 %v6689, 1.4214138
        %v6694 = vadd.f32 %v6690, 1.4214138
        %v6695 = vadd.f32 %v6691, 1.4214138
        %v6696 = vadd.f32 %v6692, 1.4214138
        %v6697 = vmul.f32 %v6693, %v6674
        %v6698 = vmul.f32 %v6694, %v6676
        %v6699 = vmul.f32 %v6695, %v6678
        %v6700 = vmul.f32 %v6696, %v6680
        %v6701 = vadd.f32 %v6697, -0.28449672
        %v6702 = vadd.f32 %v6698, -0.28449672
        %v6703 = vadd.f32 %v6699, -0.28449672
        %v6704 = vadd.f32 %v6700, -0.28449672
        %v6705 = vmul.f32 %v6701, %v6674
        %v6706 = vmul.f32 %v6702, %v6676
        %v6707 = vmul.f32 %v6703, %v6678
        %v6708 = vmul.f32 %v6704, %v6680
        %v6709 = vadd.f32 %v6705, 0.2548296
        %v6710 = vadd.f32 %v6706, 0.2548296
        %v6711 = vadd.f32 %v6707, 0.2548296
        %v6712 = vadd.f32 %v6708, 0.2548296
        %v6713 = vmul.f32 %v6709, %v6674
        %v6714 = vmul.f32 %v6710, %v6676
        %v6715 = vmul.f32 %v6711, %v6678
        %v6716 = vmul.f32 %v6712, %v6680
        %v6717 = vsub.f32 0.0, %v6661
        %v6718 = vsub.f32 0.0, %v6662
        %v6719 = vsub.f32 0.0, %v6663
        %v6720 = vsub.f32 0.0, %v6664
        %v6721 = vmul.f32 %v6717, %v6661
        %v6722 = vmul.f32 %v6718, %v6662
        %v6723 = vmul.f32 %v6719, %v6663
        %v6724 = vmul.f32 %v6720, %v6664
        %v6725 = vmul.f32 %v6721, 1.442695
        %v6726 = vpow.pop %v6725
        %v6727 = vmul.f32 %v6722, 1.442695
        %v6728 = vpow.pop %v6727
        %v6729 = vmul.f32 %v6723, 1.442695
        %v6730 = vpow.pop %v6729
        %v6731 = vmul.f32 %v6724, 1.442695
        %v6732 = vpow.pop %v6731
        %v6733 = vmul.f32 %v6713, %v6726
        %v6734 = vmul.f32 %v6714, %v6728
        %v6735 = vmul.f32 %v6715, %v6730
        %v6736 = vmul.f32 %v6716, %v6732
        %v6737 = vsub.f32 1.0, %v6733
        %v6738 = vsub.f32 1.0, %v6734
        %v6739 = vsub.f32 1.0, %v6735
        %v6740 = vsub.f32 1.0, %v6736
        %v6741 = vmul.f32 %v6657, %v6737
        %v6742 = vmul.f32 %v6658, %v6738
        %v6743 = vmul.f32 %v6659, %v6739
        %v6744 = vmul.f32 %v6660, %v6740
        %v6745 = vadd.f32 %v6741, 1.0
        %v6746 = vadd.f32 %v6742, 1.0
        %v6747 = vadd.f32 %v6743, 1.0
        %v6748 = vadd.f32 %v6744, 1.0
        %v6749 = vmul.f32 %v6645, %v6745
        %v6750 = vmul.f32 %v6646, %v6746
        %v6751 = vmul.f32 %v6647, %v6747
        %v6752 = vmul.f32 %v6648, %v6748
        %v6753 = vld [vmem:[%s13] sm:$0xff]
        %v6754 = vld [vmem:[%s14] sm:$0xff]
        %6756 = vset.pattern.permute.xlu0 0
        %6757 = vperm.xlu0 %6756, %v6754
        %v6758 = vpop.permute.xlu0 %6757
        %v6761 = vsel %vm976, %v6753, 0
        %6763 = vmatprep.subr.mxu0 0.0
        %6764 = vmatpush1.msra.mxu0 %v6749
        %6765 = vmatprep.subr.mxu0 0.0
        %6766 = vmatpush1.msra.mxu0 %v6750
        %6767 = vmatprep.subr.mxu0 0.0
        %6768 = vmatpush1.msra.mxu0 %v6751
        %6769 = vmatprep.subr.mxu0 0.0
        %6770 = vmatpush1.msra.mxu0 %v6752
        %6771 = vmatprep.subr.mxu0 0.0
        %6772 = vmatpush1.msra.mxu0 0.0
        %6773 = vmatprep.subr.mxu0 0.0
        %6774 = vmatpush1.msra.mxu0 0.0
        %6775 = vmatprep.subr.mxu0 0.0
        %6776 = vmatpush1.msra.mxu0 0.0
        %6777 = vmatprep.subr.mxu0 0.0
        %6778 = vmatpush1.msra.mxu0 0.0
        %6779 = vmatprep.subr.mxu0 0.0
        %6780 = vmatpush1.msra.mxu0 0.0
        %6781 = vmatprep.subr.mxu0 0.0
        %6782 = vmatpush1.msra.mxu0 0.0
        %6783 = vmatprep.subr.mxu0 0.0
        %6784 = vmatpush1.msra.mxu0 0.0
        %6785 = vmatprep.subr.mxu0 0.0
        %6786 = vmatpush1.msra.mxu0 0.0
        %6787 = vmatprep.subr.mxu0 0.0
        %6788 = vmatpush1.msra.mxu0 0.0
        %6789 = vmatprep.subr.mxu0 0.0
        %6790 = vmatpush1.msra.mxu0 0.0
        %6791 = vmatprep.subr.mxu0 0.0
        %6792 = vmatpush1.msra.mxu0 0.0
        %6793 = vmatprep.subr.mxu0 0.0
        %6794 = vmatpush1.msra.mxu0 0.0
        %6795 = vmatprep.subr.mxu0 0.0
        %6796 = vmatpush1.msra.mxu0 0.0
        %6797 = vmatprep.subr.mxu0 0.0
        %6798 = vmatpush1.msra.mxu0 0.0
        %6799 = vmatprep.subr.mxu0 0.0
        %6800 = vmatpush1.msra.mxu0 0.0
        %6801 = vmatprep.subr.mxu0 0.0
        %6802 = vmatpush1.msra.mxu0 0.0
        %6803 = vmatprep.subr.mxu0 0.0
        %6804 = vmatpush1.msra.mxu0 0.0
        %6805 = vmatprep.subr.mxu0 0.0
        %6806 = vmatpush1.msra.mxu0 0.0
        %6807 = vmatprep.subr.mxu0 0.0
        %6808 = vmatpush1.msra.mxu0 0.0
        %6809 = vmatprep.subr.mxu0 0.0
        %6810 = vmatpush1.msra.mxu0 0.0
        %6811 = vmatprep.subr.mxu0 0.0
        %6812 = vmatpush1.msra.mxu0 0.0
        %6813 = vmatprep.subr.mxu0 0.0
        %6814 = vmatpush1.msra.mxu0 0.0
        %6815 = vmatprep.subr.mxu0 0.0
        %6816 = vmatpush1.msra.mxu0 0.0
        %6817 = vmatprep.subr.mxu0 0.0
        %6818 = vmatpush1.msra.mxu0 0.0
        %6819 = vmatprep.subr.mxu0 0.0
        %6820 = vmatpush1.msra.mxu0 0.0
        %6821 = vmatprep.subr.mxu0 0.0
        %6822 = vmatpush1.msra.mxu0 0.0
        %6823 = vmatprep.subr.mxu0 0.0
        %6824 = vmatpush1.msra.mxu0 0.0
        %6825 = vmatprep.subr.mxu0 0.0
        %6826 = vmatpush1.msra.mxu0 0.0
        %6827 = vmatprep.mubr.f32.mxu0 0.0
        %6828 = vmatmul.mubr.f32.gmra.mrb[0].mxu0 %v6761
        %v6829 = vpop.f32.mrb[0].mxu0
        %v6830 = vadd.f32 %v6758, %v6829
        %v6831 = vpop.f32.mrb[0].mxu0
        %6832 = vdwg.mxu0
        %v6833 = vtanh.pop %v6830
        %v6834 = vmul.f32 %v6833, 4.0
        %v6835 = vadd.f32 %v6834, 0.0
        %v6836 = vmul.f32 %v6835, 0.5
        %v6837 = vmul.f32 %v6836, 1.442695
        %v6838 = vpow.pop %v6837
        %v6839 = vmul.f32 %v6838, 0.25
        %v6840 = vmul.f32 %v6830, 0.0625
        %v6841 = vadd.f32 %v5978, %v6840
        %v6843 = vrot.slane %v6019, 4
        %v6845 = vmul.f32 %v6839, %v6843
        %v6847 = vrot.slane %v6845, 4
        %v6849 = vadd.f32 %v6841, %v6847
        %v6850 = vmul.f32 %v6019, %v6019
        %v6851 = vadd.f32 %v6850, -0.93471164
        %v6853 = vrot.slane %v6835, 4
        %v6855 = vadd.f32 %v6851, %v6853
        %v6856 = vsel %vm1624, %v6855, 0.0
        %v6857 = vrot.slane %v6856, 4
        %v6858 = vadd.f32 %v6856, %v6857
        %v6859 = vrot.slane %v6858, 2
        %v6860 = vadd.f32 %v6858, %v6859
        %v6861 = vrot.slane %v6860, 1
        %v6862 = vadd.f32 %v6860, %v6861
        %v6863 = vmul.f32 %v6862, -0.5
        %s6864 = sld [smem:[#allocation3 + %s6017]]
        %s6865 = sld [smem:[#allocation5 + %s6017]]
        %s6866 = sld [smem:[#allocation7 + %s6017]]
        %v6867 = vstv %s6864
        %v6868 = vmul.f32 %v6849, %v6867
        %v6869 = vsub.f32 %v5978, %v6868
        %v6870 = vstv %s6866
        %v6871 = vmul.f32 %v6869, %v6870
        %v6872 = vmul.f32 %v6871, %v6871
        %v6873 = vadd.f32 %v6872, 1.837877
        %v6874 = vstv %s6865
        %v6875 = vadd.f32 %v6873, %v6874
        %v6876 = vsel %vm1624, %v6875, 0.0
        %v6877 = vrot.slane %v6876, 4
        %v6878 = vadd.f32 %v6876, %v6877
        %v6879 = vrot.slane %v6878, 2
        %v6880 = vadd.f32 %v6878, %v6879
        %v6881 = vrot.slane %v6880, 1
        %v6882 = vadd.f32 %v6880, %v6881
        %v6883 = vmul.f32 %v6882, -0.5
        %s6884 = scalar_lea.vmem %s680, 24
        %6885 = vst.msk [vmem:[%s6884] sm:$0xf] %vm1624, %v6849
        %6886 = vst.msk [vmem:[%s688 + $0x6] sm:$0x1] %vm1659, %v6863
        %6887 = vst.msk [vmem:[%s695 + $0x6] sm:$0x1] %vm1659, %v6883
        %s6888 = sadd.s32 %s712, 7
        %s6889 = scalar_lea.vmem %s666, 28
        %v6890 = vld [vmem:[%s6889] sm:$0xf]
        %v6891 = vld [vmem:[%s7] sm:$0xff]
        %v6892 = vld [vmem:[%s7 + $0x8] sm:$0xff]
        %v6893 = vld [vmem:[%s7 + $0x10] sm:$0xff]
        %v6894 = vld [vmem:[%s7 + $0x18] sm:$0xff]
        %v6895 = vlaneseq
        %v6896 = vshrl.u32 %v6895, 7
        %v6897 = vsub.s32 0, %v6896
        %v6898 = vrot.slane %v6849, %v6897
        %v6899 = vmul.f32 %v721, %v6898
        %v6900 = vmul.f32 %v726, %v6898
        %v6901 = vmul.f32 %v731, %v6898
        %v6902 = vmul.f32 %v736, %v6898
        %6904 = vset.pattern.permute.xlu0 0
        %6905 = vperm.xlu0 %6904, %v6891
        %v6906 = vpop.permute.xlu0 %6905
        %6909 = vset.pattern.permute.xlu0 0
        %6910 = vperm.xlu0 %6909, %v6892
        %v6911 = vpop.permute.xlu0 %6910
        %6914 = vset.pattern.permute.xlu0 0
        %6915 = vperm.xlu0 %6914, %v6893
        %v6916 = vpop.permute.xlu0 %6915
        %6919 = vset.pattern.permute.xlu0 0
        %6920 = vperm.xlu0 %6919, %v6894
        %v6921 = vpop.permute.xlu0 %6920
        %v6923 = vadd.f32 %v6906, %v6899
        %v6924 = vadd.f32 %v6911, %v6900
        %v6925 = vadd.f32 %v6916, %v6901
        %v6926 = vadd.f32 %v6921, %v6902
        %v6927 = vlaneseq
        %v6928 = vshrl.u32 %v6927, 7
        %v6929 = vsub.s32 1, %v6928
        %v6930 = vrot.slane %v6849, %v6929
        %v6931 = vmul.f32 %v772, %v6930
        %v6932 = vmul.f32 %v776, %v6930
        %v6933 = vmul.f32 %v780, %v6930
        %v6934 = vmul.f32 %v784, %v6930
        %v6935 = vadd.f32 %v6923, %v6931
        %v6936 = vadd.f32 %v6924, %v6932
        %v6937 = vadd.f32 %v6925, %v6933
        %v6938 = vadd.f32 %v6926, %v6934
        %v6939 = vlaneseq
        %v6940 = vshrl.u32 %v6939, 7
        %v6941 = vsub.s32 2, %v6940
        %v6942 = vrot.slane %v6849, %v6941
        %v6943 = vmul.f32 %v800, %v6942
        %v6944 = vmul.f32 %v804, %v6942
        %v6945 = vmul.f32 %v808, %v6942
        %v6946 = vmul.f32 %v812, %v6942
        %v6947 = vadd.f32 %v6935, %v6943
        %v6948 = vadd.f32 %v6936, %v6944
        %v6949 = vadd.f32 %v6937, %v6945
        %v6950 = vadd.f32 %v6938, %v6946
        %v6951 = vlaneseq
        %v6952 = vshrl.u32 %v6951, 7
        %v6953 = vsub.s32 3, %v6952
        %v6954 = vrot.slane %v6849, %v6953
        %v6955 = vmul.f32 %v828, %v6954
        %v6956 = vmul.f32 %v832, %v6954
        %v6957 = vmul.f32 %v836, %v6954
        %v6958 = vmul.f32 %v840, %v6954
        %v6959 = vadd.f32 %v6947, %v6955
        %v6960 = vadd.f32 %v6948, %v6956
        %v6961 = vadd.f32 %v6949, %v6957
        %v6962 = vadd.f32 %v6950, %v6958
        %v6963 = vmul.f32 %v6959, 0.5
        %v6964 = vmul.f32 %v6960, 0.5
        %v6965 = vmul.f32 %v6961, 0.5
        %v6966 = vmul.f32 %v6962, 0.5
        %v6967 = vmul.f32 %v6959, 0.70710677
        %v6968 = vmul.f32 %v6960, 0.70710677
        %v6969 = vmul.f32 %v6961, 0.70710677
        %v6970 = vmul.f32 %v6962, 0.70710677
        %vm6971 = vcmp.ge.f32.partialorder %v6967, 0.0
        %vm6972 = vcmp.ge.f32.partialorder %v6968, 0.0
        %vm6973 = vcmp.ge.f32.partialorder %v6969, 0.0
        %vm6974 = vcmp.ge.f32.partialorder %v6970, 0.0
        %v6975 = vsel %vm6971, 1.0, -1.0
        %v6976 = vsel %vm6972, 1.0, -1.0
        %v6977 = vsel %vm6973, 1.0, -1.0
        %v6978 = vsel %vm6974, 1.0, -1.0
        %v6979 = vand.u32 2147483647, %v6967
        %v6980 = vand.u32 2147483647, %v6968
        %v6981 = vand.u32 2147483647, %v6969
        %v6982 = vand.u32 2147483647, %v6970
        %v6983 = vmul.f32 %v6979, 0.3275911
        %v6984 = vmul.f32 %v6980, 0.3275911
        %v6985 = vmul.f32 %v6981, 0.3275911
        %v6986 = vmul.f32 %v6982, 0.3275911
        %v6987 = vadd.f32 %v6983, 1.0
        %v6988 = vadd.f32 %v6984, 1.0
        %v6989 = vadd.f32 %v6985, 1.0
        %v6990 = vadd.f32 %v6986, 1.0
        %v6991 = vrcp.pop %v6987
        %v6992 = vmul.f32 1.0, %v6991
        %v6993 = vrcp.pop %v6988
        %v6994 = vmul.f32 1.0, %v6993
        %v6995 = vrcp.pop %v6989
        %v6996 = vmul.f32 1.0, %v6995
        %v6997 = vrcp.pop %v6990
        %v6998 = vmul.f32 1.0, %v6997
        %v6999 = vmul.f32 %v6992, 1.0614054
        %v7000 = vmul.f32 %v6994, 1.0614054
        %v7001 = vmul.f32 %v6996, 1.0614054
        %v7002 = vmul.f32 %v6998, 1.0614054
        %v7003 = vadd.f32 %v6999, -1.4531521
        %v7004 = vadd.f32 %v7000, -1.4531521
        %v7005 = vadd.f32 %v7001, -1.4531521
        %v7006 = vadd.f32 %v7002, -1.4531521
        %v7007 = vmul.f32 %v7003, %v6992
        %v7008 = vmul.f32 %v7004, %v6994
        %v7009 = vmul.f32 %v7005, %v6996
        %v7010 = vmul.f32 %v7006, %v6998
        %v7011 = vadd.f32 %v7007, 1.4214138
        %v7012 = vadd.f32 %v7008, 1.4214138
        %v7013 = vadd.f32 %v7009, 1.4214138
        %v7014 = vadd.f32 %v7010, 1.4214138
        %v7015 = vmul.f32 %v7011, %v6992
        %v7016 = vmul.f32 %v7012, %v6994
        %v7017 = vmul.f32 %v7013, %v6996
        %v7018 = vmul.f32 %v7014, %v6998
        %v7019 = vadd.f32 %v7015, -0.28449672
        %v7020 = vadd.f32 %v7016, -0.28449672
        %v7021 = vadd.f32 %v7017, -0.28449672
        %v7022 = vadd.f32 %v7018, -0.28449672
        %v7023 = vmul.f32 %v7019, %v6992
        %v7024 = vmul.f32 %v7020, %v6994
        %v7025 = vmul.f32 %v7021, %v6996
        %v7026 = vmul.f32 %v7022, %v6998
        %v7027 = vadd.f32 %v7023, 0.2548296
        %v7028 = vadd.f32 %v7024, 0.2548296
        %v7029 = vadd.f32 %v7025, 0.2548296
        %v7030 = vadd.f32 %v7026, 0.2548296
        %v7031 = vmul.f32 %v7027, %v6992
        %v7032 = vmul.f32 %v7028, %v6994
        %v7033 = vmul.f32 %v7029, %v6996
        %v7034 = vmul.f32 %v7030, %v6998
        %v7035 = vsub.f32 0.0, %v6979
        %v7036 = vsub.f32 0.0, %v6980
        %v7037 = vsub.f32 0.0, %v6981
        %v7038 = vsub.f32 0.0, %v6982
        %v7039 = vmul.f32 %v7035, %v6979
        %v7040 = vmul.f32 %v7036, %v6980
        %v7041 = vmul.f32 %v7037, %v6981
        %v7042 = vmul.f32 %v7038, %v6982
        %v7043 = vmul.f32 %v7039, 1.442695
        %v7044 = vpow.pop %v7043
        %v7045 = vmul.f32 %v7040, 1.442695
        %v7046 = vpow.pop %v7045
        %v7047 = vmul.f32 %v7041, 1.442695
        %v7048 = vpow.pop %v7047
        %v7049 = vmul.f32 %v7042, 1.442695
        %v7050 = vpow.pop %v7049
        %v7051 = vmul.f32 %v7031, %v7044
        %v7052 = vmul.f32 %v7032, %v7046
        %v7053 = vmul.f32 %v7033, %v7048
        %v7054 = vmul.f32 %v7034, %v7050
        %v7055 = vsub.f32 1.0, %v7051
        %v7056 = vsub.f32 1.0, %v7052
        %v7057 = vsub.f32 1.0, %v7053
        %v7058 = vsub.f32 1.0, %v7054
        %v7059 = vmul.f32 %v6975, %v7055
        %v7060 = vmul.f32 %v6976, %v7056
        %v7061 = vmul.f32 %v6977, %v7057
        %v7062 = vmul.f32 %v6978, %v7058
        %v7063 = vadd.f32 %v7059, 1.0
        %v7064 = vadd.f32 %v7060, 1.0
        %v7065 = vadd.f32 %v7061, 1.0
        %v7066 = vadd.f32 %v7062, 1.0
        %v7067 = vmul.f32 %v6963, %v7063
        %v7068 = vmul.f32 %v6964, %v7064
        %v7069 = vmul.f32 %v6965, %v7065
        %v7070 = vmul.f32 %v6966, %v7066
        %v7071 = vld [vmem:[%s8] sm:$0xff]
        %v7072 = vld [vmem:[%s8 + $0x8] sm:$0xff]
        %v7073 = vld [vmem:[%s9] sm:$0xff]
        %v7074 = vld [vmem:[%s9 + $0x8] sm:$0xff]
        %7076 = vset.pattern.permute.xlu0 0
        %7077 = vperm.xlu0 %7076, %v7073
        %v7078 = vpop.permute.xlu0 %7077
        %7081 = vset.pattern.permute.xlu0 0
        %7082 = vperm.xlu0 %7081, %v7074
        %v7083 = vpop.permute.xlu0 %7082
        %v7086 = vsel %vm976, %v7071, 0
        %v7089 = vsel %vm976, %v7072, 0
        %7091 = vmatprep.subr.mxu0 0.0
        %7092 = vmatpush1.msra.mxu0 %v7067
        %7093 = vmatprep.subr.mxu0 0.0
        %7094 = vmatpush1.msra.mxu0 %v7068
        %7095 = vmatprep.subr.mxu0 0.0
        %7096 = vmatpush1.msra.mxu0 %v7069
        %7097 = vmatprep.subr.mxu0 0.0
        %7098 = vmatpush1.msra.mxu0 %v7070
        %7099 = vmatprep.subr.mxu0 0.0
        %7100 = vmatpush1.msra.mxu0 0.0
        %7101 = vmatprep.subr.mxu0 0.0
        %7102 = vmatpush1.msra.mxu0 0.0
        %7103 = vmatprep.subr.mxu0 0.0
        %7104 = vmatpush1.msra.mxu0 0.0
        %7105 = vmatprep.subr.mxu0 0.0
        %7106 = vmatpush1.msra.mxu0 0.0
        %7107 = vmatprep.subr.mxu0 0.0
        %7108 = vmatpush1.msra.mxu0 0.0
        %7109 = vmatprep.subr.mxu0 0.0
        %7110 = vmatpush1.msra.mxu0 0.0
        %7111 = vmatprep.subr.mxu0 0.0
        %7112 = vmatpush1.msra.mxu0 0.0
        %7113 = vmatprep.subr.mxu0 0.0
        %7114 = vmatpush1.msra.mxu0 0.0
        %7115 = vmatprep.subr.mxu0 0.0
        %7116 = vmatpush1.msra.mxu0 0.0
        %7117 = vmatprep.subr.mxu0 0.0
        %7118 = vmatpush1.msra.mxu0 0.0
        %7119 = vmatprep.subr.mxu0 0.0
        %7120 = vmatpush1.msra.mxu0 0.0
        %7121 = vmatprep.subr.mxu0 0.0
        %7122 = vmatpush1.msra.mxu0 0.0
        %7123 = vmatprep.subr.mxu0 0.0
        %7124 = vmatpush1.msra.mxu0 0.0
        %7125 = vmatprep.subr.mxu0 0.0
        %7126 = vmatpush1.msra.mxu0 0.0
        %7127 = vmatprep.subr.mxu0 0.0
        %7128 = vmatpush1.msra.mxu0 0.0
        %7129 = vmatprep.subr.mxu0 0.0
        %7130 = vmatpush1.msra.mxu0 0.0
        %7131 = vmatprep.subr.mxu0 0.0
        %7132 = vmatpush1.msra.mxu0 0.0
        %7133 = vmatprep.subr.mxu0 0.0
        %7134 = vmatpush1.msra.mxu0 0.0
        %7135 = vmatprep.subr.mxu0 0.0
        %7136 = vmatpush1.msra.mxu0 0.0
        %7137 = vmatprep.subr.mxu0 0.0
        %7138 = vmatpush1.msra.mxu0 0.0
        %7139 = vmatprep.subr.mxu0 0.0
        %7140 = vmatpush1.msra.mxu0 0.0
        %7141 = vmatprep.subr.mxu0 0.0
        %7142 = vmatpush1.msra.mxu0 0.0
        %7143 = vmatprep.subr.mxu0 0.0
        %7144 = vmatpush1.msra.mxu0 0.0
        %7145 = vmatprep.subr.mxu0 0.0
        %7146 = vmatpush1.msra.mxu0 0.0
        %7147 = vmatprep.subr.mxu0 0.0
        %7148 = vmatpush1.msra.mxu0 0.0
        %7149 = vmatprep.subr.mxu0 0.0
        %7150 = vmatpush1.msra.mxu0 0.0
        %7151 = vmatprep.subr.mxu0 0.0
        %7152 = vmatpush1.msra.mxu0 0.0
        %7153 = vmatprep.subr.mxu0 0.0
        %7154 = vmatpush1.msra.mxu0 0.0
        %7155 = vmatprep.mubr.f32.mxu0 0.0
        %7156 = vmatmul.mubr.f32.gmra.mrb[0].mxu0 %v7086
        %v7157 = vpop.f32.mrb[0].mxu0
        %v7158 = vadd.f32 %v7078, %v7157
        %v7159 = vpop.f32.mrb[0].mxu0
        %7160 = vmatprep.mubr.f32.mxu0 0.0
        %7161 = vmatmul.mubr.f32.gmra.mrb[0].mxu0 %v7089
        %v7162 = vpop.f32.mrb[0].mxu0
        %v7163 = vadd.f32 %v7083, %v7162
        %v7164 = vpop.f32.mrb[0].mxu0
        %7165 = vdwg.mxu0
        %v7166 = vld [vmem:[%s10] sm:$0xff]
        %v7167 = vld [vmem:[%s10 + $0x8] sm:$0xff]
        %v7168 = vld [vmem:[%s10 + $0x10] sm:$0xff]
        %v7169 = vld [vmem:[%s10 + $0x18] sm:$0xff]
        %7170 = vset.pattern.permute.xlu0 7
        %7171 = vperm.xlu0 %7170, %v703
        %v7172 = vpop.permute.xlu0 %7171
        %7174 = vset.pattern.permute.xlu0 7
        %7175 = vperm.xlu0 %7174, %v704
        %v7176 = vpop.permute.xlu0 %7175
        %7178 = vset.pattern.permute.xlu0 7
        %7179 = vperm.xlu0 %7178, %v705
        %v7180 = vpop.permute.xlu0 %7179
        %7182 = vset.pattern.permute.xlu0 7
        %7183 = vperm.xlu0 %7182, %v706
        %v7184 = vpop.permute.xlu0 %7183
        %v7187 = vsel %vm1082, %v7166, 0
        %v7190 = vsel %vm1082, %v7167, 0
        %v7193 = vsel %vm1082, %v7168, 0
        %v7196 = vsel %vm1082, %v7169, 0
        %7198 = vmatprep.subr.mxu0 0.0
        %7199 = vmatpush1.msra.mxu0 %v7158
        %7200 = vmatprep.subr.mxu0 0.0
        %7201 = vmatpush1.msra.mxu0 %v7163
        %7202 = vmatprep.subr.mxu0 0.0
        %7203 = vmatpush1.msra.mxu0 0.0
        %7204 = vmatprep.subr.mxu0 0.0
        %7205 = vmatpush1.msra.mxu0 0.0
        %7206 = vmatprep.subr.mxu0 0.0
        %7207 = vmatpush1.msra.mxu0 0.0
        %7208 = vmatprep.subr.mxu0 0.0
        %7209 = vmatpush1.msra.mxu0 0.0
        %7210 = vmatprep.subr.mxu0 0.0
        %7211 = vmatpush1.msra.mxu0 0.0
        %7212 = vmatprep.subr.mxu0 0.0
        %7213 = vmatpush1.msra.mxu0 0.0
        %7214 = vmatprep.subr.mxu0 0.0
        %7215 = vmatpush1.msra.mxu0 0.0
        %7216 = vmatprep.subr.mxu0 0.0
        %7217 = vmatpush1.msra.mxu0 0.0
        %7218 = vmatprep.subr.mxu0 0.0
        %7219 = vmatpush1.msra.mxu0 0.0
        %7220 = vmatprep.subr.mxu0 0.0
        %7221 = vmatpush1.msra.mxu0 0.0
        %7222 = vmatprep.subr.mxu0 0.0
        %7223 = vmatpush1.msra.mxu0 0.0
        %7224 = vmatprep.subr.mxu0 0.0
        %7225 = vmatpush1.msra.mxu0 0.0
        %7226 = vmatprep.subr.mxu0 0.0
        %7227 = vmatpush1.msra.mxu0 0.0
        %7228 = vmatprep.subr.mxu0 0.0
        %7229 = vmatpush1.msra.mxu0 0.0
        %7230 = vmatprep.subr.mxu0 0.0
        %7231 = vmatpush1.msra.mxu0 0.0
        %7232 = vmatprep.subr.mxu0 0.0
        %7233 = vmatpush1.msra.mxu0 0.0
        %7234 = vmatprep.subr.mxu0 0.0
        %7235 = vmatpush1.msra.mxu0 0.0
        %7236 = vmatprep.subr.mxu0 0.0
        %7237 = vmatpush1.msra.mxu0 0.0
        %7238 = vmatprep.subr.mxu0 0.0
        %7239 = vmatpush1.msra.mxu0 0.0
        %7240 = vmatprep.subr.mxu0 0.0
        %7241 = vmatpush1.msra.mxu0 0.0
        %7242 = vmatprep.subr.mxu0 0.0
        %7243 = vmatpush1.msra.mxu0 0.0
        %7244 = vmatprep.subr.mxu0 0.0
        %7245 = vmatpush1.msra.mxu0 0.0
        %7246 = vmatprep.subr.mxu0 0.0
        %7247 = vmatpush1.msra.mxu0 0.0
        %7248 = vmatprep.subr.mxu0 0.0
        %7249 = vmatpush1.msra.mxu0 0.0
        %7250 = vmatprep.subr.mxu0 0.0
        %7251 = vmatpush1.msra.mxu0 0.0
        %7252 = vmatprep.subr.mxu0 0.0
        %7253 = vmatpush1.msra.mxu0 0.0
        %7254 = vmatprep.subr.mxu0 0.0
        %7255 = vmatpush1.msra.mxu0 0.0
        %7256 = vmatprep.subr.mxu0 0.0
        %7257 = vmatpush1.msra.mxu0 0.0
        %7258 = vmatprep.subr.mxu0 0.0
        %7259 = vmatpush1.msra.mxu0 0.0
        %7260 = vmatprep.subr.mxu0 0.0
        %7261 = vmatpush1.msra.mxu0 0.0
        %7262 = vmatprep.mubr.f32.mxu0 0.0
        %7263 = vmatmul.mubr.f32.gmra.mrb[0].mxu0 %v7187
        %v7264 = vpop.f32.mrb[0].mxu0
        %v7265 = vadd.f32 %v7172, %v7264
        %v7266 = vpop.f32.mrb[0].mxu0
        %7267 = vmatprep.mubr.f32.mxu0 0.0
        %7268 = vmatmul.mubr.f32.gmra.mrb[0].mxu0 %v7190
        %v7269 = vpop.f32.mrb[0].mxu0
        %v7270 = vadd.f32 %v7176, %v7269
        %v7271 = vpop.f32.mrb[0].mxu0
        %7272 = vmatprep.mubr.f32.mxu0 0.0
        %7273 = vmatmul.mubr.f32.gmra.mrb[0].mxu0 %v7193
        %v7274 = vpop.f32.mrb[0].mxu0
        %v7275 = vadd.f32 %v7180, %v7274
        %v7276 = vpop.f32.mrb[0].mxu0
        %7277 = vmatprep.mubr.f32.mxu0 0.0
        %7278 = vmatmul.mubr.f32.gmra.mrb[0].mxu0 %v7196
        %v7279 = vpop.f32.mrb[0].mxu0
        %v7280 = vadd.f32 %v7184, %v7279
        %v7281 = vpop.f32.mrb[0].mxu0
        %7282 = vdwg.mxu0
        %v7283 = vmul.f32 %v7265, 0.5
        %v7284 = vmul.f32 %v7270, 0.5
        %v7285 = vmul.f32 %v7275, 0.5
        %v7286 = vmul.f32 %v7280, 0.5
        %v7287 = vmul.f32 %v7265, 0.70710677
        %v7288 = vmul.f32 %v7270, 0.70710677
        %v7289 = vmul.f32 %v7275, 0.70710677
        %v7290 = vmul.f32 %v7280, 0.70710677
        %vm7291 = vcmp.ge.f32.partialorder %v7287, 0.0
        %vm7292 = vcmp.ge.f32.partialorder %v7288, 0.0
        %vm7293 = vcmp.ge.f32.partialorder %v7289, 0.0
        %vm7294 = vcmp.ge.f32.partialorder %v7290, 0.0
        %v7295 = vsel %vm7291, 1.0, -1.0
        %v7296 = vsel %vm7292, 1.0, -1.0
        %v7297 = vsel %vm7293, 1.0, -1.0
        %v7298 = vsel %vm7294, 1.0, -1.0
        %v7299 = vand.u32 2147483647, %v7287
        %v7300 = vand.u32 2147483647, %v7288
        %v7301 = vand.u32 2147483647, %v7289
        %v7302 = vand.u32 2147483647, %v7290
        %v7303 = vmul.f32 %v7299, 0.3275911
        %v7304 = vmul.f32 %v7300, 0.3275911
        %v7305 = vmul.f32 %v7301, 0.3275911
        %v7306 = vmul.f32 %v7302, 0.3275911
        %v7307 = vadd.f32 %v7303, 1.0
        %v7308 = vadd.f32 %v7304, 1.0
        %v7309 = vadd.f32 %v7305, 1.0
        %v7310 = vadd.f32 %v7306, 1.0
        %v7311 = vrcp.pop %v7307
        %v7312 = vmul.f32 1.0, %v7311
        %v7313 = vrcp.pop %v7308
        %v7314 = vmul.f32 1.0, %v7313
        %v7315 = vrcp.pop %v7309
        %v7316 = vmul.f32 1.0, %v7315
        %v7317 = vrcp.pop %v7310
        %v7318 = vmul.f32 1.0, %v7317
        %v7319 = vmul.f32 %v7312, 1.0614054
        %v7320 = vmul.f32 %v7314, 1.0614054
        %v7321 = vmul.f32 %v7316, 1.0614054
        %v7322 = vmul.f32 %v7318, 1.0614054
        %v7323 = vadd.f32 %v7319, -1.4531521
        %v7324 = vadd.f32 %v7320, -1.4531521
        %v7325 = vadd.f32 %v7321, -1.4531521
        %v7326 = vadd.f32 %v7322, -1.4531521
        %v7327 = vmul.f32 %v7323, %v7312
        %v7328 = vmul.f32 %v7324, %v7314
        %v7329 = vmul.f32 %v7325, %v7316
        %v7330 = vmul.f32 %v7326, %v7318
        %v7331 = vadd.f32 %v7327, 1.4214138
        %v7332 = vadd.f32 %v7328, 1.4214138
        %v7333 = vadd.f32 %v7329, 1.4214138
        %v7334 = vadd.f32 %v7330, 1.4214138
        %v7335 = vmul.f32 %v7331, %v7312
        %v7336 = vmul.f32 %v7332, %v7314
        %v7337 = vmul.f32 %v7333, %v7316
        %v7338 = vmul.f32 %v7334, %v7318
        %v7339 = vadd.f32 %v7335, -0.28449672
        %v7340 = vadd.f32 %v7336, -0.28449672
        %v7341 = vadd.f32 %v7337, -0.28449672
        %v7342 = vadd.f32 %v7338, -0.28449672
        %v7343 = vmul.f32 %v7339, %v7312
        %v7344 = vmul.f32 %v7340, %v7314
        %v7345 = vmul.f32 %v7341, %v7316
        %v7346 = vmul.f32 %v7342, %v7318
        %v7347 = vadd.f32 %v7343, 0.2548296
        %v7348 = vadd.f32 %v7344, 0.2548296
        %v7349 = vadd.f32 %v7345, 0.2548296
        %v7350 = vadd.f32 %v7346, 0.2548296
        %v7351 = vmul.f32 %v7347, %v7312
        %v7352 = vmul.f32 %v7348, %v7314
        %v7353 = vmul.f32 %v7349, %v7316
        %v7354 = vmul.f32 %v7350, %v7318
        %v7355 = vsub.f32 0.0, %v7299
        %v7356 = vsub.f32 0.0, %v7300
        %v7357 = vsub.f32 0.0, %v7301
        %v7358 = vsub.f32 0.0, %v7302
        %v7359 = vmul.f32 %v7355, %v7299
        %v7360 = vmul.f32 %v7356, %v7300
        %v7361 = vmul.f32 %v7357, %v7301
        %v7362 = vmul.f32 %v7358, %v7302
        %v7363 = vmul.f32 %v7359, 1.442695
        %v7364 = vpow.pop %v7363
        %v7365 = vmul.f32 %v7360, 1.442695
        %v7366 = vpow.pop %v7365
        %v7367 = vmul.f32 %v7361, 1.442695
        %v7368 = vpow.pop %v7367
        %v7369 = vmul.f32 %v7362, 1.442695
        %v7370 = vpow.pop %v7369
        %v7371 = vmul.f32 %v7351, %v7364
        %v7372 = vmul.f32 %v7352, %v7366
        %v7373 = vmul.f32 %v7353, %v7368
        %v7374 = vmul.f32 %v7354, %v7370
        %v7375 = vsub.f32 1.0, %v7371
        %v7376 = vsub.f32 1.0, %v7372
        %v7377 = vsub.f32 1.0, %v7373
        %v7378 = vsub.f32 1.0, %v7374
        %v7379 = vmul.f32 %v7295, %v7375
        %v7380 = vmul.f32 %v7296, %v7376
        %v7381 = vmul.f32 %v7297, %v7377
        %v7382 = vmul.f32 %v7298, %v7378
        %v7383 = vadd.f32 %v7379, 1.0
        %v7384 = vadd.f32 %v7380, 1.0
        %v7385 = vadd.f32 %v7381, 1.0
        %v7386 = vadd.f32 %v7382, 1.0
        %v7387 = vmul.f32 %v7283, %v7383
        %v7388 = vmul.f32 %v7284, %v7384
        %v7389 = vmul.f32 %v7285, %v7385
        %v7390 = vmul.f32 %v7286, %v7386
        %v7391 = vld [vmem:[%s11] sm:$0xff]
        %v7392 = vld [vmem:[%s11 + $0x8] sm:$0xff]
        %v7393 = vld [vmem:[%s11 + $0x10] sm:$0xff]
        %v7394 = vld [vmem:[%s11 + $0x18] sm:$0xff]
        %v7395 = vld [vmem:[%s12] sm:$0xff]
        %v7396 = vld [vmem:[%s12 + $0x8] sm:$0xff]
        %v7397 = vld [vmem:[%s12 + $0x10] sm:$0xff]
        %v7398 = vld [vmem:[%s12 + $0x18] sm:$0xff]
        %7400 = vset.pattern.permute.xlu0 0
        %7401 = vperm.xlu0 %7400, %v7395
        %v7402 = vpop.permute.xlu0 %7401
        %7405 = vset.pattern.permute.xlu0 0
        %7406 = vperm.xlu0 %7405, %v7396
        %v7407 = vpop.permute.xlu0 %7406
        %7410 = vset.pattern.permute.xlu0 0
        %7411 = vperm.xlu0 %7410, %v7397
        %v7412 = vpop.permute.xlu0 %7411
        %7415 = vset.pattern.permute.xlu0 0
        %7416 = vperm.xlu0 %7415, %v7398
        %v7417 = vpop.permute.xlu0 %7416
        %v7420 = vsel %vm976, %v7391, 0
        %v7423 = vsel %vm976, %v7392, 0
        %v7426 = vsel %vm976, %v7393, 0
        %v7429 = vsel %vm976, %v7394, 0
        %7431 = vmatprep.subr.mxu0 0.0
        %7432 = vmatpush1.msra.mxu0 %v7387
        %7433 = vmatprep.subr.mxu0 0.0
        %7434 = vmatpush1.msra.mxu0 %v7388
        %7435 = vmatprep.subr.mxu0 0.0
        %7436 = vmatpush1.msra.mxu0 %v7389
        %7437 = vmatprep.subr.mxu0 0.0
        %7438 = vmatpush1.msra.mxu0 %v7390
        %7439 = vmatprep.subr.mxu0 0.0
        %7440 = vmatpush1.msra.mxu0 0.0
        %7441 = vmatprep.subr.mxu0 0.0
        %7442 = vmatpush1.msra.mxu0 0.0
        %7443 = vmatprep.subr.mxu0 0.0
        %7444 = vmatpush1.msra.mxu0 0.0
        %7445 = vmatprep.subr.mxu0 0.0
        %7446 = vmatpush1.msra.mxu0 0.0
        %7447 = vmatprep.subr.mxu0 0.0
        %7448 = vmatpush1.msra.mxu0 0.0
        %7449 = vmatprep.subr.mxu0 0.0
        %7450 = vmatpush1.msra.mxu0 0.0
        %7451 = vmatprep.subr.mxu0 0.0
        %7452 = vmatpush1.msra.mxu0 0.0
        %7453 = vmatprep.subr.mxu0 0.0
        %7454 = vmatpush1.msra.mxu0 0.0
        %7455 = vmatprep.subr.mxu0 0.0
        %7456 = vmatpush1.msra.mxu0 0.0
        %7457 = vmatprep.subr.mxu0 0.0
        %7458 = vmatpush1.msra.mxu0 0.0
        %7459 = vmatprep.subr.mxu0 0.0
        %7460 = vmatpush1.msra.mxu0 0.0
        %7461 = vmatprep.subr.mxu0 0.0
        %7462 = vmatpush1.msra.mxu0 0.0
        %7463 = vmatprep.subr.mxu0 0.0
        %7464 = vmatpush1.msra.mxu0 0.0
        %7465 = vmatprep.subr.mxu0 0.0
        %7466 = vmatpush1.msra.mxu0 0.0
        %7467 = vmatprep.subr.mxu0 0.0
        %7468 = vmatpush1.msra.mxu0 0.0
        %7469 = vmatprep.subr.mxu0 0.0
        %7470 = vmatpush1.msra.mxu0 0.0
        %7471 = vmatprep.subr.mxu0 0.0
        %7472 = vmatpush1.msra.mxu0 0.0
        %7473 = vmatprep.subr.mxu0 0.0
        %7474 = vmatpush1.msra.mxu0 0.0
        %7475 = vmatprep.subr.mxu0 0.0
        %7476 = vmatpush1.msra.mxu0 0.0
        %7477 = vmatprep.subr.mxu0 0.0
        %7478 = vmatpush1.msra.mxu0 0.0
        %7479 = vmatprep.subr.mxu0 0.0
        %7480 = vmatpush1.msra.mxu0 0.0
        %7481 = vmatprep.subr.mxu0 0.0
        %7482 = vmatpush1.msra.mxu0 0.0
        %7483 = vmatprep.subr.mxu0 0.0
        %7484 = vmatpush1.msra.mxu0 0.0
        %7485 = vmatprep.subr.mxu0 0.0
        %7486 = vmatpush1.msra.mxu0 0.0
        %7487 = vmatprep.subr.mxu0 0.0
        %7488 = vmatpush1.msra.mxu0 0.0
        %7489 = vmatprep.subr.mxu0 0.0
        %7490 = vmatpush1.msra.mxu0 0.0
        %7491 = vmatprep.subr.mxu0 0.0
        %7492 = vmatpush1.msra.mxu0 0.0
        %7493 = vmatprep.subr.mxu0 0.0
        %7494 = vmatpush1.msra.mxu0 0.0
        %7495 = vmatprep.mubr.f32.mxu0 0.0
        %7496 = vmatmul.mubr.f32.gmra.mrb[0].mxu0 %v7420
        %v7497 = vpop.f32.mrb[0].mxu0
        %v7498 = vadd.f32 %v7402, %v7497
        %v7499 = vpop.f32.mrb[0].mxu0
        %7500 = vmatprep.mubr.f32.mxu0 0.0
        %7501 = vmatmul.mubr.f32.gmra.mrb[0].mxu0 %v7423
        %v7502 = vpop.f32.mrb[0].mxu0
        %v7503 = vadd.f32 %v7407, %v7502
        %v7504 = vpop.f32.mrb[0].mxu0
        %7505 = vmatprep.mubr.f32.mxu0 0.0
        %7506 = vmatmul.mubr.f32.gmra.mrb[0].mxu0 %v7426
        %v7507 = vpop.f32.mrb[0].mxu0
        %v7508 = vadd.f32 %v7412, %v7507
        %v7509 = vpop.f32.mrb[0].mxu0
        %7510 = vmatprep.mubr.f32.mxu0 0.0
        %7511 = vmatmul.mubr.f32.gmra.mrb[0].mxu0 %v7429
        %v7512 = vpop.f32.mrb[0].mxu0
        %v7513 = vadd.f32 %v7417, %v7512
        %v7514 = vpop.f32.mrb[0].mxu0
        %7515 = vdwg.mxu0
        %v7516 = vmul.f32 %v7498, 0.5
        %v7517 = vmul.f32 %v7503, 0.5
        %v7518 = vmul.f32 %v7508, 0.5
        %v7519 = vmul.f32 %v7513, 0.5
        %v7520 = vmul.f32 %v7498, 0.70710677
        %v7521 = vmul.f32 %v7503, 0.70710677
        %v7522 = vmul.f32 %v7508, 0.70710677
        %v7523 = vmul.f32 %v7513, 0.70710677
        %vm7524 = vcmp.ge.f32.partialorder %v7520, 0.0
        %vm7525 = vcmp.ge.f32.partialorder %v7521, 0.0
        %vm7526 = vcmp.ge.f32.partialorder %v7522, 0.0
        %vm7527 = vcmp.ge.f32.partialorder %v7523, 0.0
        %v7528 = vsel %vm7524, 1.0, -1.0
        %v7529 = vsel %vm7525, 1.0, -1.0
        %v7530 = vsel %vm7526, 1.0, -1.0
        %v7531 = vsel %vm7527, 1.0, -1.0
        %v7532 = vand.u32 2147483647, %v7520
        %v7533 = vand.u32 2147483647, %v7521
        %v7534 = vand.u32 2147483647, %v7522
        %v7535 = vand.u32 2147483647, %v7523
        %v7536 = vmul.f32 %v7532, 0.3275911
        %v7537 = vmul.f32 %v7533, 0.3275911
        %v7538 = vmul.f32 %v7534, 0.3275911
        %v7539 = vmul.f32 %v7535, 0.3275911
        %v7540 = vadd.f32 %v7536, 1.0
        %v7541 = vadd.f32 %v7537, 1.0
        %v7542 = vadd.f32 %v7538, 1.0
        %v7543 = vadd.f32 %v7539, 1.0
        %v7544 = vrcp.pop %v7540
        %v7545 = vmul.f32 1.0, %v7544
        %v7546 = vrcp.pop %v7541
        %v7547 = vmul.f32 1.0, %v7546
        %v7548 = vrcp.pop %v7542
        %v7549 = vmul.f32 1.0, %v7548
        %v7550 = vrcp.pop %v7543
        %v7551 = vmul.f32 1.0, %v7550
        %v7552 = vmul.f32 %v7545, 1.0614054
        %v7553 = vmul.f32 %v7547, 1.0614054
        %v7554 = vmul.f32 %v7549, 1.0614054
        %v7555 = vmul.f32 %v7551, 1.0614054
        %v7556 = vadd.f32 %v7552, -1.4531521
        %v7557 = vadd.f32 %v7553, -1.4531521
        %v7558 = vadd.f32 %v7554, -1.4531521
        %v7559 = vadd.f32 %v7555, -1.4531521
        %v7560 = vmul.f32 %v7556, %v7545
        %v7561 = vmul.f32 %v7557, %v7547
        %v7562 = vmul.f32 %v7558, %v7549
        %v7563 = vmul.f32 %v7559, %v7551
        %v7564 = vadd.f32 %v7560, 1.4214138
        %v7565 = vadd.f32 %v7561, 1.4214138
        %v7566 = vadd.f32 %v7562, 1.4214138
        %v7567 = vadd.f32 %v7563, 1.4214138
        %v7568 = vmul.f32 %v7564, %v7545
        %v7569 = vmul.f32 %v7565, %v7547
        %v7570 = vmul.f32 %v7566, %v7549
        %v7571 = vmul.f32 %v7567, %v7551
        %v7572 = vadd.f32 %v7568, -0.28449672
        %v7573 = vadd.f32 %v7569, -0.28449672
        %v7574 = vadd.f32 %v7570, -0.28449672
        %v7575 = vadd.f32 %v7571, -0.28449672
        %v7576 = vmul.f32 %v7572, %v7545
        %v7577 = vmul.f32 %v7573, %v7547
        %v7578 = vmul.f32 %v7574, %v7549
        %v7579 = vmul.f32 %v7575, %v7551
        %v7580 = vadd.f32 %v7576, 0.2548296
        %v7581 = vadd.f32 %v7577, 0.2548296
        %v7582 = vadd.f32 %v7578, 0.2548296
        %v7583 = vadd.f32 %v7579, 0.2548296
        %v7584 = vmul.f32 %v7580, %v7545
        %v7585 = vmul.f32 %v7581, %v7547
        %v7586 = vmul.f32 %v7582, %v7549
        %v7587 = vmul.f32 %v7583, %v7551
        %v7588 = vsub.f32 0.0, %v7532
        %v7589 = vsub.f32 0.0, %v7533
        %v7590 = vsub.f32 0.0, %v7534
        %v7591 = vsub.f32 0.0, %v7535
        %v7592 = vmul.f32 %v7588, %v7532
        %v7593 = vmul.f32 %v7589, %v7533
        %v7594 = vmul.f32 %v7590, %v7534
        %v7595 = vmul.f32 %v7591, %v7535
        %v7596 = vmul.f32 %v7592, 1.442695
        %v7597 = vpow.pop %v7596
        %v7598 = vmul.f32 %v7593, 1.442695
        %v7599 = vpow.pop %v7598
        %v7600 = vmul.f32 %v7594, 1.442695
        %v7601 = vpow.pop %v7600
        %v7602 = vmul.f32 %v7595, 1.442695
        %v7603 = vpow.pop %v7602
        %v7604 = vmul.f32 %v7584, %v7597
        %v7605 = vmul.f32 %v7585, %v7599
        %v7606 = vmul.f32 %v7586, %v7601
        %v7607 = vmul.f32 %v7587, %v7603
        %v7608 = vsub.f32 1.0, %v7604
        %v7609 = vsub.f32 1.0, %v7605
        %v7610 = vsub.f32 1.0, %v7606
        %v7611 = vsub.f32 1.0, %v7607
        %v7612 = vmul.f32 %v7528, %v7608
        %v7613 = vmul.f32 %v7529, %v7609
        %v7614 = vmul.f32 %v7530, %v7610
        %v7615 = vmul.f32 %v7531, %v7611
        %v7616 = vadd.f32 %v7612, 1.0
        %v7617 = vadd.f32 %v7613, 1.0
        %v7618 = vadd.f32 %v7614, 1.0
        %v7619 = vadd.f32 %v7615, 1.0
        %v7620 = vmul.f32 %v7516, %v7616
        %v7621 = vmul.f32 %v7517, %v7617
        %v7622 = vmul.f32 %v7518, %v7618
        %v7623 = vmul.f32 %v7519, %v7619
        %v7624 = vld [vmem:[%s13] sm:$0xff]
        %v7625 = vld [vmem:[%s14] sm:$0xff]
        %7627 = vset.pattern.permute.xlu0 0
        %7628 = vperm.xlu0 %7627, %v7625
        %v7629 = vpop.permute.xlu0 %7628
        %v7632 = vsel %vm976, %v7624, 0
        %7634 = vmatprep.subr.mxu0 0.0
        %7635 = vmatpush1.msra.mxu0 %v7620
        %7636 = vmatprep.subr.mxu0 0.0
        %7637 = vmatpush1.msra.mxu0 %v7621
        %7638 = vmatprep.subr.mxu0 0.0
        %7639 = vmatpush1.msra.mxu0 %v7622
        %7640 = vmatprep.subr.mxu0 0.0
        %7641 = vmatpush1.msra.mxu0 %v7623
        %7642 = vmatprep.subr.mxu0 0.0
        %7643 = vmatpush1.msra.mxu0 0.0
        %7644 = vmatprep.subr.mxu0 0.0
        %7645 = vmatpush1.msra.mxu0 0.0
        %7646 = vmatprep.subr.mxu0 0.0
        %7647 = vmatpush1.msra.mxu0 0.0
        %7648 = vmatprep.subr.mxu0 0.0
        %7649 = vmatpush1.msra.mxu0 0.0
        %7650 = vmatprep.subr.mxu0 0.0
        %7651 = vmatpush1.msra.mxu0 0.0
        %7652 = vmatprep.subr.mxu0 0.0
        %7653 = vmatpush1.msra.mxu0 0.0
        %7654 = vmatprep.subr.mxu0 0.0
        %7655 = vmatpush1.msra.mxu0 0.0
        %7656 = vmatprep.subr.mxu0 0.0
        %7657 = vmatpush1.msra.mxu0 0.0
        %7658 = vmatprep.subr.mxu0 0.0
        %7659 = vmatpush1.msra.mxu0 0.0
        %7660 = vmatprep.subr.mxu0 0.0
        %7661 = vmatpush1.msra.mxu0 0.0
        %7662 = vmatprep.subr.mxu0 0.0
        %7663 = vmatpush1.msra.mxu0 0.0
        %7664 = vmatprep.subr.mxu0 0.0
        %7665 = vmatpush1.msra.mxu0 0.0
        %7666 = vmatprep.subr.mxu0 0.0
        %7667 = vmatpush1.msra.mxu0 0.0
        %7668 = vmatprep.subr.mxu0 0.0
        %7669 = vmatpush1.msra.mxu0 0.0
        %7670 = vmatprep.subr.mxu0 0.0
        %7671 = vmatpush1.msra.mxu0 0.0
        %7672 = vmatprep.subr.mxu0 0.0
        %7673 = vmatpush1.msra.mxu0 0.0
        %7674 = vmatprep.subr.mxu0 0.0
        %7675 = vmatpush1.msra.mxu0 0.0
        %7676 = vmatprep.subr.mxu0 0.0
        %7677 = vmatpush1.msra.mxu0 0.0
        %7678 = vmatprep.subr.mxu0 0.0
        %7679 = vmatpush1.msra.mxu0 0.0
        %7680 = vmatprep.subr.mxu0 0.0
        %7681 = vmatpush1.msra.mxu0 0.0
        %7682 = vmatprep.subr.mxu0 0.0
        %7683 = vmatpush1.msra.mxu0 0.0
        %7684 = vmatprep.subr.mxu0 0.0
        %7685 = vmatpush1.msra.mxu0 0.0
        %7686 = vmatprep.subr.mxu0 0.0
        %7687 = vmatpush1.msra.mxu0 0.0
        %7688 = vmatprep.subr.mxu0 0.0
        %7689 = vmatpush1.msra.mxu0 0.0
        %7690 = vmatprep.subr.mxu0 0.0
        %7691 = vmatpush1.msra.mxu0 0.0
        %7692 = vmatprep.subr.mxu0 0.0
        %7693 = vmatpush1.msra.mxu0 0.0
        %7694 = vmatprep.subr.mxu0 0.0
        %7695 = vmatpush1.msra.mxu0 0.0
        %7696 = vmatprep.subr.mxu0 0.0
        %7697 = vmatpush1.msra.mxu0 0.0
        %7698 = vmatprep.mubr.f32.mxu0 0.0
        %7699 = vmatmul.mubr.f32.gmra.mrb[0].mxu0 %v7632
        %v7700 = vpop.f32.mrb[0].mxu0
        %v7701 = vadd.f32 %v7629, %v7700
        %v7702 = vpop.f32.mrb[0].mxu0
        %7703 = vdwg.mxu0
        %v7704 = vtanh.pop %v7701
        %v7705 = vmul.f32 %v7704, 4.0
        %v7706 = vadd.f32 %v7705, 0.0
        %v7707 = vmul.f32 %v7706, 0.5
        %v7708 = vmul.f32 %v7707, 1.442695
        %v7709 = vpow.pop %v7708
        %v7710 = vmul.f32 %v7709, 0.25
        %v7711 = vmul.f32 %v7701, 0.0625
        %v7712 = vadd.f32 %v6849, %v7711
        %v7714 = vrot.slane %v6890, 4
        %v7716 = vmul.f32 %v7710, %v7714
        %v7718 = vrot.slane %v7716, 4
        %v7720 = vadd.f32 %v7712, %v7718
        %v7721 = vmul.f32 %v6890, %v6890
        %v7722 = vadd.f32 %v7721, -0.93471164
        %v7724 = vrot.slane %v7706, 4
        %v7726 = vadd.f32 %v7722, %v7724
        %v7727 = vsel %vm1624, %v7726, 0.0
        %v7728 = vrot.slane %v7727, 4
        %v7729 = vadd.f32 %v7727, %v7728
        %v7730 = vrot.slane %v7729, 2
        %v7731 = vadd.f32 %v7729, %v7730
        %v7732 = vrot.slane %v7731, 1
        %v7733 = vadd.f32 %v7731, %v7732
        %v7734 = vmul.f32 %v7733, -0.5
        %s7735 = sld [smem:[#allocation3 + %s6888]]
        %s7736 = sld [smem:[#allocation5 + %s6888]]
        %s7737 = sld [smem:[#allocation7 + %s6888]]
        %v7738 = vstv %s7735
        %v7739 = vmul.f32 %v7720, %v7738
        %v7740 = vsub.f32 %v6849, %v7739
        %v7741 = vstv %s7737
        %v7742 = vmul.f32 %v7740, %v7741
        %v7743 = vmul.f32 %v7742, %v7742
        %v7744 = vadd.f32 %v7743, 1.837877
        %v7745 = vstv %s7736
        %v7746 = vadd.f32 %v7744, %v7745
        %v7747 = vsel %vm1624, %v7746, 0.0
        %v7748 = vrot.slane %v7747, 4
        %v7749 = vadd.f32 %v7747, %v7748
        %v7750 = vrot.slane %v7749, 2
        %v7751 = vadd.f32 %v7749, %v7750
        %v7752 = vrot.slane %v7751, 1
        %v7753 = vadd.f32 %v7751, %v7752
        %v7754 = vmul.f32 %v7753, -0.5
        %s7755 = scalar_lea.vmem %s680, 28
        %7756 = vst.msk [vmem:[%s7755] sm:$0xf] %vm1624, %v7720
        %7757 = vst.msk [vmem:[%s688 + $0x7] sm:$0x1] %vm1659, %v7734
        %7758 = vst.msk [vmem:[%s695 + $0x7] sm:$0x1] %vm1659, %v7754
        %7759 = vst.msk [vmem:[#allocation2] sm:$0xf] %vm1624, %v7720
        %s7760 = smul.u32 8, %s36
        %p7761 = scmp.lt.s32.totalorder %s7760, 15
        %s7762 = scalar_select %p7761, %s7760, 15
        %p7763 = scmp.lt.s32.totalorder %s35, 0
        %s7764 = scalar_select %p7763, %s35, 0
        %s7765 = sadd.s32 %s7764, %s7762
        %s7766 = smul.addr %s7765, 4
        %s7767 = scalar_lea.vmem %s15, %s7766
        %p7768 = scmp.lt.s32.totalorder %s36, 1
        %s7769 = scalar_select %p7768, %s36, 1
        %p7770 = scmp.lt.s32.totalorder %s35, 0
        %s7771 = scalar_select %p7770, %s35, 0
        %s7772 = sadd.s32 %s7771, %s7769
        %s7773 = smul.addr %s7772, 8
        %s7774 = scalar_lea.vmem %s16, %s7773
        %p7775 = scmp.lt.s32.totalorder %s36, 1
        %s7776 = scalar_select %p7775, %s36, 1
        %p7777 = scmp.lt.s32.totalorder %s35, 0
        %s7778 = scalar_select %p7777, %s35, 0
        %s7779 = sadd.s32 %s7778, %s7776
        %s7780 = smul.addr %s7779, 8
        %s7781 = scalar_lea.vmem %s17, %s7780
        // Predicated region
        $region97: #{tpu_custom_call.1} parent=79 // pred_check
          %p7782 = pneg %p395
        $region98: #{tpu_custom_call.1} parent=79 // pred_check_branch
          %7784 = sbr.rel (%p7782) target = $region100
        $region99: #{tpu_custom_call.1} parent=79 // pred_region
          %s7785 = smul.u32 8, %s36
        $region100: #{tpu_custom_call.1} parent=79 // pred_fallthru
          _
        // Predicated region
        $region101: #{tpu_custom_call.1} parent=79 // pred_check
          %p7786 = pneg %p423
        $region102: #{tpu_custom_call.1} parent=79 // pred_check_branch
          %7788 = sbr.rel (%p7786) target = $region104
        $region103: #{tpu_custom_call.1} parent=79 // pred_region
          _
        $region104: #{tpu_custom_call.1} parent=79 // pred_fallthru
          _
        // Predicated region
        $region105: #{tpu_custom_call.1} parent=79 // pred_check
          %p7789 = pneg %p451
        $region106: #{tpu_custom_call.1} parent=79 // pred_check_branch
          %7791 = sbr.rel (%p7789) target = $region108
        $region107: #{tpu_custom_call.1} parent=79 // pred_region
          _
        $region108: #{tpu_custom_call.1} parent=79 // pred_fallthru
          _
      $region80: #{tpu_custom_call.1} parent=5 // pred_fallthru
        _
      %p7792 = scmp.le.s32.totalorder 2, %s26
      // Predicated region
      $region109: #{tpu_custom_call.1} parent=5 // pred_check
        %p7793 = pneg %p7792
      $region110: #{tpu_custom_call.1} parent=5 // pred_check_branch
        %7795 = sbr.rel (%p7793) target = $region112
      $region111: #{tpu_custom_call.1} parent=5 // pred_region
        %s7796 = ssub.s32 %s26, 2
        // Predicated region
        $region113: #{tpu_custom_call.1} parent=111 // pred_check
          %p7797 = pneg %p401
        $region114: #{tpu_custom_call.1} parent=111 // pred_check_branch
          %7799 = sbr.rel (%p7797) target = $region116
        $region115: #{tpu_custom_call.1} parent=111 // pred_region
          %s7800 = smul.u32 8, %s38
          %p7801 = scmp.lt.s32.totalorder %s7800, 15
          %s7802 = scalar_select %p7801, %s7800, 15
          %p7803 = scmp.lt.s32.totalorder %s37, 0
          %s7804 = scalar_select %p7803, %s37, 0
          %s7805 = sadd.s32 %s7804, %s7802
          %s7806 = smul.addr %s7805, 4
          %s7807 = scalar_lea.vmem %s15, %s7806
        $region116: #{tpu_custom_call.1} parent=111 // pred_fallthru
          _
        // Predicated region
        $region117: #{tpu_custom_call.1} parent=111 // pred_check
          %p7808 = pneg %p429
        $region118: #{tpu_custom_call.1} parent=111 // pred_check_branch
          %7810 = sbr.rel (%p7808) target = $region120
        $region119: #{tpu_custom_call.1} parent=111 // pred_region
          %p7811 = scmp.lt.s32.totalorder %s38, 1
          %s7812 = scalar_select %p7811, %s38, 1
          %p7813 = scmp.lt.s32.totalorder %s37, 0
          %s7814 = scalar_select %p7813, %s37, 0
          %s7815 = sadd.s32 %s7814, %s7812
          %s7816 = smul.addr %s7815, 8
          %s7817 = scalar_lea.vmem %s16, %s7816
        $region120: #{tpu_custom_call.1} parent=111 // pred_fallthru
          _
        // Predicated region
        $region121: #{tpu_custom_call.1} parent=111 // pred_check
          %p7818 = pneg %p457
        $region122: #{tpu_custom_call.1} parent=111 // pred_check_branch
          %7820 = sbr.rel (%p7818) target = $region124
        $region123: #{tpu_custom_call.1} parent=111 // pred_region
          %p7821 = scmp.lt.s32.totalorder %s38, 1
          %s7822 = scalar_select %p7821, %s38, 1
          %p7823 = scmp.lt.s32.totalorder %s37, 0
          %s7824 = scalar_select %p7823, %s37, 0
          %s7825 = sadd.s32 %s7824, %s7822
          %s7826 = smul.addr %s7825, 8
          %s7827 = scalar_lea.vmem %s17, %s7826
        $region124: #{tpu_custom_call.1} parent=111 // pred_fallthru
          _
      $region112: #{tpu_custom_call.1} parent=5 // pred_fallthru
        _
    $region6: #{tpu_custom_call.1} parent=1 // loop_footer
      %s30 = sadd.s32 1, %s26
    $region7: #{tpu_custom_call.1} parent=1 // loop_footer_branch
      %25 = sbr.rel target = $region3
    $region8: #{tpu_custom_call.1} parent=1 // loop_exit
      _
    %7828 = vsyncpa [#allocation4], 1
    %s7829 = scalar_lea.sflag [#allocation4], 1
    %7830 = vsyncpa %s7829, 1
    %7831 = vsyncpa [#allocation6], 1

</llo_original>
